<compile_context>
chip_gen: v7x
topology: tpu7x:2x2x1
jax: 0.10.0
libtpu: 0.0.40
codegen_flags: <defaults>
</compile_context>

<pallas_src>
import numpy as np
import jax
import jax.numpy as jnp
from jax.experimental import pallas as pl
from jax.experimental.pallas import tpu as pltpu


_MAX_BATCH_BLOCK = 64  # raise towards 128/256 for very large production batches


def _pick_batch_block(n, cap=_MAX_BATCH_BLOCK):
    """Largest divisor of n that is a multiple of 8, <= cap, with >= 2 steps."""
    for bn in range(min(n, cap), 0, -1):
        if n % bn == 0 and bn % 8 == 0 and n // bn >= 2:
            return bn
    return n  # single full-batch step (block dims == array dims: always legal)


# ---------------------------------------------------------------------------
# Fused kernel.
#
# Scratch g0/g1 hold the row-parity planes of the zero-padded conv1 output
# (h1p), bf16, with lanes packed as b*8 + c (b = padded column, c = channel):
#   g0[:, a, :] = h1p row 2a,  g1[:, a, :] = h1p row 2a+1.
# ---------------------------------------------------------------------------
def _cnn_fused_kernel(x_ref, w1p_ref, b1g_ref, sel_ref, w2_ref, b2p_ref,
                      wfc_ref, bfc_ref, o_ref, g0_ref, g1_ref):
    bn = x_ref.shape[0]
    x = x_ref[...]                                      # [bn, 9, 120] f32

    # 12 channel-tiled, column-shifted views of the 4 row-residue planes.
    # Plane r holds padded-input rows {r, r+4, ..., r+32}; tiling it 8x along
    # lanes (lane = c*30 + w) lets one FMA update all 8 conv1 channels.
    shifted = {}
    for r in range(4):
        plane = x[:, :, 30 * r:30 * (r + 1)]            # [bn, 9, 30]
        tiled = jnp.concatenate([plane] * 8, axis=-1)   # [bn, 9, 240]
        for dx in range(3):
            shifted[(r, dx)] = tiled[:, :, dx:dx + 238]

    w1p = w1p_ref[...]                                  # [9, 238]  f32
    b1g = b1g_ref[...]                                  # [1, 128]  f32
    sel = sel_ref[...]                                  # [237, 128] bf16

    # Zero the h1p padding rows of the parity planes.
    zrow = jnp.zeros((bn, 1, 128), jnp.bfloat16)
    g0_ref[:, 0:1, :] = zrow
    g0_ref[:, 8:9, :] = zrow
    g1_ref[:, 7:8, :] = zrow
    g1_ref[:, 8:9, :] = zrow

    # ---- stage 1: conv1 + bias + ReLU + 2x2 maxpool, per row-parity slab --
    # Slab t covers h1 rows I = 2u + t, u = 0..6 (row u = 7 is garbage and is
    # dropped before the store).
    for t in range(2):
        dmax = None
        for p in range(2):                    # conv1 row parity in the pool window
            acc = None
            for dy in range(3):
                m = 2 * t + p + dy
                roff = m >> 2
                for dx in range(3):
                    term = (shifted[(m & 3, dx)][:, roff:roff + 8, :]
                            * w1p[dy * 3 + dx:dy * 3 + dx + 1, :])
                    acc = term if acc is None else acc + term
            dmax = acc if dmax is None else jnp.maximum(dmax, acc)
        # Adjacent-column max; even columns hold the pooled values.
        v = jnp.maximum(dmax[:, :, 0:237], dmax[:, :, 1:238])      # [bn,8,237]
        # Stride-2 column selection + (J,c) packing + halo shift as ONE matmul.
        hp = jnp.dot(v.reshape(bn * 8, 237).astype(jnp.bfloat16), sel,
                     preferred_element_type=jnp.float32)           # [bn*8,128]
        h = jnp.maximum(hp + b1g, 0.0)
        h = h.reshape(bn, 8, 128).astype(jnp.bfloat16)
        if t == 0:
            g1_ref[:, 0:7, :] = h[:, 0:7, :]   # even h1 rows -> odd h1p rows
        else:
            g0_ref[:, 1:8, :] = h[:, 0:7, :]   # odd h1 rows  -> even h1p rows

    # ---- stage 2: conv2 + bias + ReLU + 2x2 maxpool + fc1 -----------------
    # The 4 distinct row taps of the padded h1 parity planes (tap m = h1p rows
    # 2A + m, A = 0..7; A = 7 is garbage and is excluded from the fc).
    taps = [
        g0_ref[:, 0:8, :].reshape(bn * 8, 128),
        g1_ref[:, 0:8, :].reshape(bn * 8, 128),
        g0_ref[:, 1:9, :].reshape(bn * 8, 128),
        g1_ref[:, 1:9, :].reshape(bn * 8, 128),
    ]
    outs = []
    for p in range(2):                          # conv2 output-row parity
        acc = None
        for dy in range(3):
            d = jnp.dot(taps[p + dy], w2_ref[dy],
                        preferred_element_type=jnp.float32)        # [bn*8,224]
            acc = d if acc is None else acc + d
        outs.append(acc)
    v2 = jnp.maximum(outs[0], outs[1])                             # row-pair max
    w2p = jnp.maximum(v2[:, 0:208], v2[:, 16:224])                 # col-pair max
    h2 = jnp.maximum(w2p + b2p_ref[...], 0.0)                      # [bn*8,208]
    h2 = h2.reshape(bn, 8, 208).astype(jnp.bfloat16)

    logits = None
    for a in range(7):                          # reduce over pooled rows A
        d = jnp.dot(h2[:, a, :], wfc_ref[a], preferred_element_type=jnp.float32)
        logits = d if logits is None else logits + d               # [bn,128]
    o_ref[...] = logits + bfc_ref[...]


# ---------------------------------------------------------------------------
# Constant 0/1 selector: row c*30 + 2J -> lane (J+1)*8 + c.
# ---------------------------------------------------------------------------
_SEL_NP = np.zeros((237, 128), np.float32)
for _c in range(8):
    for _j in range(14):
        _SEL_NP[_c * 30 + 2 * _j, (_j + 1) * 8 + _c] = 1.0


def _build_tables(params, num_classes):
    f32, bf16 = jnp.float32, jnp.bfloat16

    # conv1: per-tap lane pattern (lane c*30 + x -> weight w1[c, dy, dx]).
    w1 = params["conv1_w"].reshape(8, 9).astype(f32)              # [c, tap]
    w1pat = jnp.repeat(w1.T, 30, axis=1)[:, :238]                 # [9, 238]
    b1 = params["conv1_b"].astype(f32)
    b1g = jnp.concatenate([jnp.zeros((8,), f32), jnp.tile(b1, 14),
                           jnp.zeros((8,), f32)]).reshape(1, 128)

    sel = jnp.asarray(_SEL_NP, dtype=bf16)                        # [237, 128]

    # conv2 block-Toeplitz weight: [3(dy), 128(b*8+c), 224(x2*16+o)].
    w2 = params["conv2_w"].astype(f32)                            # [o, c, dy, dx]
    w2big = jnp.stack([
        sum(jnp.kron(jnp.asarray(np.eye(16, 14, k=-dx), np.float32),
                     w2[:, :, dy, dx].T)
            for dx in range(3))
        for dy in range(3)
    ]).astype(bf16)                                               # [3, 128, 224]
    b2p = jnp.tile(params["conv2_b"].astype(f32), 13).reshape(1, 208)

    # fc weight in the kernel's pooled layout (A-sliced); odd-x2 rows are
    # exactly zero because those lanes hold pooling garbage.
    fcw = params["fc1_w"].astype(f32).reshape(num_classes, 16, 7, 7)  # [out,o,A,B]
    wfc_rows = []
    for a in range(7):
        m = jnp.zeros((208, 128), f32)
        for b in range(7):
            m = m.at[2 * b * 16:(2 * b + 1) * 16, :num_classes].set(fcw[:, :, a, b].T)
        wfc_rows.append(m)
    wfc = jnp.stack(wfc_rows).astype(bf16)                        # [7, 208, 128]
    bfc = jnp.pad(params["fc1_b"].astype(f32),
                  (0, 128 - num_classes)).reshape(1, 128)
    return w1pat, b1g, sel, w2big, b2p, wfc, bfc


def init_params(key, num_classes=10):
    """Deterministic synthetic parameters in PyTorch layout conventions."""
    k1, k2, k3, k4, k5, k6 = jax.random.split(key, 6)
    return {
        "conv1_w": jax.random.normal(k1, (8, 1, 3, 3), jnp.float32) * 0.1,
        "conv1_b": jax.random.normal(k2, (8,), jnp.float32) * 0.1,
        "conv2_w": jax.random.normal(k3, (16, 8, 3, 3), jnp.float32) * 0.1,
        "conv2_b": jax.random.normal(k4, (16,), jnp.float32) * 0.1,
        "fc1_w": jax.random.normal(k5, (num_classes, 16 * 7 * 7), jnp.float32) * 0.05,
        "fc1_b": jax.random.normal(k6, (num_classes,), jnp.float32) * 0.05,
    }


def cnn_forward(x_nchw, params, *, block_n=None):
    """Forward pass matching CNN.forward for x_nchw: [N, 1, 28, 28]."""
    N = x_nchw.shape[0]
    num_classes = params["fc1_b"].shape[0]
    assert num_classes <= 128
    bn = block_n if block_n is not None else _pick_batch_block(N)
    assert N % bn == 0 and (bn % 8 == 0 or bn == N)

    # Single contiguous input: pad to 36x30 and group rows mod 4 (free reshape)
    # so every in-kernel tap is a static unit-stride slice.
    x = x_nchw.reshape(N, 28, 28).astype(jnp.float32)
    xr = jnp.pad(x, ((0, 0), (1, 7), (1, 1))).reshape(N, 9, 120)

    w1pat, b1g, sel, w2big, b2p, wfc, bfc = _build_tables(params, num_classes)

    def _pinned(shape):
        zeros = (0,) * len(shape)
        return pl.BlockSpec(shape, lambda i: zeros)

    flops_per_img = (2 * 28 * 28 * 9 * 8          # conv1 (useful work)
                     + 2 * 2 * 8 * 237 * 128      # pool/pack selector matmuls
                     + 6 * 2 * 8 * 128 * 224      # conv2 (block-Toeplitz)
                     + 7 * 2 * 208 * 128)         # fc1
    weight_bytes = (w1pat.size * 4 + b1g.size * 4 + sel.size * 2 + w2big.size * 2
                    + b2p.size * 4 + wfc.size * 2 + bfc.size * 4)
    cost = pl.CostEstimate(
        flops=N * flops_per_img,
        transcendentals=0,
        bytes_accessed=N * (9 * 120 * 4 + 128 * 4) + weight_bytes)

    out = pl.pallas_call(
        _cnn_fused_kernel,
        grid=(N // bn,),
        in_specs=[
            pl.BlockSpec((bn, 9, 120), lambda i: (i, 0, 0)),
            _pinned((9, 238)), _pinned((1, 128)), _pinned((237, 128)),
            _pinned((3, 128, 224)), _pinned((1, 208)),
            _pinned((7, 208, 128)), _pinned((1, 128)),
        ],
        out_specs=pl.BlockSpec((bn, 128), lambda i: (i, 0)),
        out_shape=jax.ShapeDtypeStruct((N, 128), jnp.float32),
        scratch_shapes=[pltpu.VMEM((bn, 9, 128), jnp.bfloat16),
                        pltpu.VMEM((bn, 9, 128), jnp.bfloat16)],
        compiler_params=pltpu.CompilerParams(
            dimension_semantics=("parallel",),
            vmem_limit_bytes=48 * 1024 * 1024),
        cost_estimate=cost,
    )(xr, w1pat, b1g, sel, w2big, b2p, wfc, bfc)

    return out[:, :num_classes]


def cnn_reference(x_nchw, params):
    """Pure-JAX (XLA) reference identical to the PyTorch module, f32 throughout."""
    def conv(x, w, b):
        y = jax.lax.conv_general_dilated(
            x, w, window_strides=(1, 1), padding=((1, 1), (1, 1)),
            dimension_numbers=("NCHW", "OIHW", "NCHW"))
        return jax.nn.relu(y + b.reshape(1, -1, 1, 1))

    def pool(y):
        n, c, h, w = y.shape
        return y.reshape(n, c, h // 2, 2, w // 2, 2).max(axis=(3, 5))

    y = pool(conv(x_nchw.astype(jnp.float32), params["conv1_w"], params["conv1_b"]))
    y = pool(conv(y, params["conv2_w"], params["conv2_b"]))
    y = y.reshape(y.shape[0], -1)
    return y @ params["fc1_w"].T + params["fc1_b"]


if __name__ == "__main__":
    key = jax.random.PRNGKey(0)
    k_param, k_x = jax.random.split(key)

    params = init_params(k_param, num_classes=10)
    # 28x28 input implied by fc1 = Linear(16*7*7, 10); batch 16 -> 2 grid steps
    # of 8 images each (keeps both TensorCores busy on v7x).
    x = jax.random.normal(k_x, (16, 1, 28, 28), jnp.float32)

    logits = jax.jit(cnn_forward)(x, params)
    jax.block_until_ready(logits)

    assert logits.shape == (16, 10), logits.shape
    assert logits.dtype == jnp.float32

    # Loose-tolerance check vs the f32 XLA reference (bf16 activations/weights
    # inside the kernel introduce small numerical differences).
    ref = cnn_reference(x, params)
    err = float(jnp.max(jnp.abs(logits - ref)))
    assert err < 0.25, f"max abs error vs reference too large: {err}"

    print("KERNEL_OK")
</pallas_src>

<mosaic_0001>
module attributes {stable_mosaic.version = 11 : i64} {
  func.func @_cnn_fused_kernel(%arg0: i32, %arg1: memref<8x9x120xf32, #tpu.memory_space<vmem>>, %arg2: memref<9x238xf32, #tpu.memory_space<vmem>>, %arg3: memref<1x128xf32, #tpu.memory_space<vmem>>, %arg4: memref<237x128xbf16, #tpu.memory_space<vmem>>, %arg5: memref<3x128x224xbf16, #tpu.memory_space<vmem>>, %arg6: memref<1x208xf32, #tpu.memory_space<vmem>>, %arg7: memref<7x208x128xbf16, #tpu.memory_space<vmem>>, %arg8: memref<1x128xf32, #tpu.memory_space<vmem>>, %arg9: memref<8x128xf32, #tpu.memory_space<vmem>>, %arg10: memref<8x9x128xbf16, #tpu.memory_space<vmem>>, %arg11: memref<8x9x128xbf16, #tpu.memory_space<vmem>>) attributes {dimension_semantics = [#tpu.dimension_semantics<parallel>], iteration_bounds = array<i64: 2>, scalar_prefetch = 0 : i64, scratch_operands = 2 : i64, tpu.core_type = #tpu.core_type<tc>, window_params = [{transform_indices = @transform_0, window_bounds = array<i64: 8, 9, 120>}, {pipeline_mode = #tpu.pipeline_mode<synchronous>, transform_indices = @transform_1, window_bounds = array<i64: 9, 238>}, {pipeline_mode = #tpu.pipeline_mode<synchronous>, transform_indices = @transform_2, window_bounds = array<i64: 1, 128>}, {pipeline_mode = #tpu.pipeline_mode<synchronous>, transform_indices = @transform_3, window_bounds = array<i64: 237, 128>}, {pipeline_mode = #tpu.pipeline_mode<synchronous>, transform_indices = @transform_4, window_bounds = array<i64: 3, 128, 224>}, {pipeline_mode = #tpu.pipeline_mode<synchronous>, transform_indices = @transform_5, window_bounds = array<i64: 1, 208>}, {pipeline_mode = #tpu.pipeline_mode<synchronous>, transform_indices = @transform_6, window_bounds = array<i64: 7, 208, 128>}, {pipeline_mode = #tpu.pipeline_mode<synchronous>, transform_indices = @transform_7, window_bounds = array<i64: 1, 128>}, {transform_indices = @transform_8, window_bounds = array<i64: 8, 128>}]} {
    %c0 = arith.constant 0 : index
    %c0_0 = arith.constant 0 : index
    %c0_1 = arith.constant 0 : index
    %0 = vector.load %arg1[%c0, %c0_0, %c0_1] : memref<8x9x120xf32, #tpu.memory_space<vmem>>, vector<8x9x120xf32>
    %1 = vector.extract_strided_slice %0 {offsets = [0, 0, 0], sizes = [8, 9, 30], strides = [1, 1, 1]} : vector<8x9x120xf32> to vector<8x9x30xf32>
    %2 = tpu.concatenate %1, %1, %1, %1, %1, %1, %1, %1 in 2 : vector<8x9x30xf32>, vector<8x9x30xf32>, vector<8x9x30xf32>, vector<8x9x30xf32>, vector<8x9x30xf32>, vector<8x9x30xf32>, vector<8x9x30xf32>, vector<8x9x30xf32> -> vector<8x9x240xf32>
    %3 = vector.extract_strided_slice %2 {offsets = [0, 0, 0], sizes = [8, 9, 238], strides = [1, 1, 1]} : vector<8x9x240xf32> to vector<8x9x238xf32>
    %4 = vector.extract_strided_slice %2 {offsets = [0, 0, 1], sizes = [8, 9, 238], strides = [1, 1, 1]} : vector<8x9x240xf32> to vector<8x9x238xf32>
    %5 = vector.extract_strided_slice %2 {offsets = [0, 0, 2], sizes = [8, 9, 238], strides = [1, 1, 1]} : vector<8x9x240xf32> to vector<8x9x238xf32>
    %6 = vector.extract_strided_slice %0 {offsets = [0, 0, 30], sizes = [8, 9, 30], strides = [1, 1, 1]} : vector<8x9x120xf32> to vector<8x9x30xf32>
    %7 = tpu.concatenate %6, %6, %6, %6, %6, %6, %6, %6 in 2 : vector<8x9x30xf32>, vector<8x9x30xf32>, vector<8x9x30xf32>, vector<8x9x30xf32>, vector<8x9x30xf32>, vector<8x9x30xf32>, vector<8x9x30xf32>, vector<8x9x30xf32> -> vector<8x9x240xf32>
    %8 = vector.extract_strided_slice %7 {offsets = [0, 0, 0], sizes = [8, 9, 238], strides = [1, 1, 1]} : vector<8x9x240xf32> to vector<8x9x238xf32>
    %9 = vector.extract_strided_slice %7 {offsets = [0, 0, 1], sizes = [8, 9, 238], strides = [1, 1, 1]} : vector<8x9x240xf32> to vector<8x9x238xf32>
    %10 = vector.extract_strided_slice %7 {offsets = [0, 0, 2], sizes = [8, 9, 238], strides = [1, 1, 1]} : vector<8x9x240xf32> to vector<8x9x238xf32>
    %11 = vector.extract_strided_slice %0 {offsets = [0, 0, 60], sizes = [8, 9, 30], strides = [1, 1, 1]} : vector<8x9x120xf32> to vector<8x9x30xf32>
    %12 = tpu.concatenate %11, %11, %11, %11, %11, %11, %11, %11 in 2 : vector<8x9x30xf32>, vector<8x9x30xf32>, vector<8x9x30xf32>, vector<8x9x30xf32>, vector<8x9x30xf32>, vector<8x9x30xf32>, vector<8x9x30xf32>, vector<8x9x30xf32> -> vector<8x9x240xf32>
    %13 = vector.extract_strided_slice %12 {offsets = [0, 0, 0], sizes = [8, 9, 238], strides = [1, 1, 1]} : vector<8x9x240xf32> to vector<8x9x238xf32>
    %14 = vector.extract_strided_slice %12 {offsets = [0, 0, 1], sizes = [8, 9, 238], strides = [1, 1, 1]} : vector<8x9x240xf32> to vector<8x9x238xf32>
    %15 = vector.extract_strided_slice %12 {offsets = [0, 0, 2], sizes = [8, 9, 238], strides = [1, 1, 1]} : vector<8x9x240xf32> to vector<8x9x238xf32>
    %16 = vector.extract_strided_slice %0 {offsets = [0, 0, 90], sizes = [8, 9, 30], strides = [1, 1, 1]} : vector<8x9x120xf32> to vector<8x9x30xf32>
    %17 = tpu.concatenate %16, %16, %16, %16, %16, %16, %16, %16 in 2 : vector<8x9x30xf32>, vector<8x9x30xf32>, vector<8x9x30xf32>, vector<8x9x30xf32>, vector<8x9x30xf32>, vector<8x9x30xf32>, vector<8x9x30xf32>, vector<8x9x30xf32> -> vector<8x9x240xf32>
    %18 = vector.extract_strided_slice %17 {offsets = [0, 0, 0], sizes = [8, 9, 238], strides = [1, 1, 1]} : vector<8x9x240xf32> to vector<8x9x238xf32>
    %19 = vector.extract_strided_slice %17 {offsets = [0, 0, 1], sizes = [8, 9, 238], strides = [1, 1, 1]} : vector<8x9x240xf32> to vector<8x9x238xf32>
    %20 = vector.extract_strided_slice %17 {offsets = [0, 0, 2], sizes = [8, 9, 238], strides = [1, 1, 1]} : vector<8x9x240xf32> to vector<8x9x238xf32>
    %c0_2 = arith.constant 0 : index
    %c0_3 = arith.constant 0 : index
    %21 = vector.load %arg2[%c0_2, %c0_3] : memref<9x238xf32, #tpu.memory_space<vmem>>, vector<9x238xf32>
    %c0_4 = arith.constant 0 : index
    %c0_5 = arith.constant 0 : index
    %22 = vector.load %arg3[%c0_4, %c0_5] : memref<1x128xf32, #tpu.memory_space<vmem>>, vector<1x128xf32>
    %c0_6 = arith.constant 0 : index
    %c0_7 = arith.constant 0 : index
    %23 = vector.load %arg4[%c0_6, %c0_7] : memref<237x128xbf16, #tpu.memory_space<vmem>>, vector<237x128xbf16>
    %cst = arith.constant 0.000000e+00 : bf16
    %24 = vector.broadcast %cst : bf16 to vector<8x1x128xbf16>
    %c0_8 = arith.constant 0 : index
    %c0_9 = arith.constant 0 : index
    %c0_10 = arith.constant 0 : index
    %25 = vector.load %arg10[%c0_8, %c0_9, %c0_10] : memref<8x9x128xbf16, #tpu.memory_space<vmem>>, vector<8x1x128xbf16>
    tpu.vector_store %arg10[%c0_8, %c0_9, %c0_10], %24 {strides = array<i32>} : memref<8x9x128xbf16, #tpu.memory_space<vmem>>, vector<8x1x128xbf16>,
    %c0_11 = arith.constant 0 : index
    %c8 = arith.constant 8 : index
    %c0_12 = arith.constant 0 : index
    %26 = vector.load %arg10[%c0_11, %c8, %c0_12] : memref<8x9x128xbf16, #tpu.memory_space<vmem>>, vector<8x1x128xbf16>
    tpu.vector_store %arg10[%c0_11, %c8, %c0_12], %24 {strides = array<i32>} : memref<8x9x128xbf16, #tpu.memory_space<vmem>>, vector<8x1x128xbf16>,
    %c0_13 = arith.constant 0 : index
    %c7 = arith.constant 7 : index
    %c0_14 = arith.constant 0 : index
    %27 = vector.load %arg11[%c0_13, %c7, %c0_14] : memref<8x9x128xbf16, #tpu.memory_space<vmem>>, vector<8x1x128xbf16>
    tpu.vector_store %arg11[%c0_13, %c7, %c0_14], %24 {strides = array<i32>} : memref<8x9x128xbf16, #tpu.memory_space<vmem>>, vector<8x1x128xbf16>,
    %c0_15 = arith.constant 0 : index
    %c8_16 = arith.constant 8 : index
    %c0_17 = arith.constant 0 : index
    %28 = vector.load %arg11[%c0_15, %c8_16, %c0_17] : memref<8x9x128xbf16, #tpu.memory_space<vmem>>, vector<8x1x128xbf16>
    tpu.vector_store %arg11[%c0_15, %c8_16, %c0_17], %24 {strides = array<i32>} : memref<8x9x128xbf16, #tpu.memory_space<vmem>>, vector<8x1x128xbf16>,
    %29 = vector.extract_strided_slice %3 {offsets = [0, 0, 0], sizes = [8, 8, 238], strides = [1, 1, 1]} : vector<8x9x238xf32> to vector<8x8x238xf32>
    %30 = vector.extract_strided_slice %21 {offsets = [0, 0], sizes = [1, 238], strides = [1, 1]} : vector<9x238xf32> to vector<1x238xf32>
    %31 = vector.shape_cast %30 : vector<1x238xf32> to vector<1x1x238xf32>
    %32 = vector.broadcast %31 : vector<1x1x238xf32> to vector<8x8x238xf32>
    %33 = arith.mulf %29, %32 : vector<8x8x238xf32>
    %34 = vector.extract_strided_slice %4 {offsets = [0, 0, 0], sizes = [8, 8, 238], strides = [1, 1, 1]} : vector<8x9x238xf32> to vector<8x8x238xf32>
    %35 = vector.extract_strided_slice %21 {offsets = [1, 0], sizes = [1, 238], strides = [1, 1]} : vector<9x238xf32> to vector<1x238xf32>
    %36 = vector.shape_cast %35 : vector<1x238xf32> to vector<1x1x238xf32>
    %37 = vector.broadcast %36 : vector<1x1x238xf32> to vector<8x8x238xf32>
    %38 = arith.mulf %34, %37 : vector<8x8x238xf32>
    %39 = arith.addf %33, %38 : vector<8x8x238xf32>
    %40 = vector.extract_strided_slice %5 {offsets = [0, 0, 0], sizes = [8, 8, 238], strides = [1, 1, 1]} : vector<8x9x238xf32> to vector<8x8x238xf32>
    %41 = vector.extract_strided_slice %21 {offsets = [2, 0], sizes = [1, 238], strides = [1, 1]} : vector<9x238xf32> to vector<1x238xf32>
    %42 = vector.shape_cast %41 : vector<1x238xf32> to vector<1x1x238xf32>
    %43 = vector.broadcast %42 : vector<1x1x238xf32> to vector<8x8x238xf32>
    %44 = arith.mulf %40, %43 : vector<8x8x238xf32>
    %45 = arith.addf %39, %44 : vector<8x8x238xf32>
    %46 = vector.extract_strided_slice %8 {offsets = [0, 0, 0], sizes = [8, 8, 238], strides = [1, 1, 1]} : vector<8x9x238xf32> to vector<8x8x238xf32>
    %47 = vector.extract_strided_slice %21 {offsets = [3, 0], sizes = [1, 238], strides = [1, 1]} : vector<9x238xf32> to vector<1x238xf32>
    %48 = vector.shape_cast %47 : vector<1x238xf32> to vector<1x1x238xf32>
    %49 = vector.broadcast %48 : vector<1x1x238xf32> to vector<8x8x238xf32>
    %50 = arith.mulf %46, %49 : vector<8x8x238xf32>
    %51 = arith.addf %45, %50 : vector<8x8x238xf32>
    %52 = vector.extract_strided_slice %9 {offsets = [0, 0, 0], sizes = [8, 8, 238], strides = [1, 1, 1]} : vector<8x9x238xf32> to vector<8x8x238xf32>
    %53 = vector.extract_strided_slice %21 {offsets = [4, 0], sizes = [1, 238], strides = [1, 1]} : vector<9x238xf32> to vector<1x238xf32>
    %54 = vector.shape_cast %53 : vector<1x238xf32> to vector<1x1x238xf32>
    %55 = vector.broadcast %54 : vector<1x1x238xf32> to vector<8x8x238xf32>
    %56 = arith.mulf %52, %55 : vector<8x8x238xf32>
    %57 = arith.addf %51, %56 : vector<8x8x238xf32>
    %58 = vector.extract_strided_slice %10 {offsets = [0, 0, 0], sizes = [8, 8, 238], strides = [1, 1, 1]} : vector<8x9x238xf32> to vector<8x8x238xf32>
    %59 = vector.extract_strided_slice %21 {offsets = [5, 0], sizes = [1, 238], strides = [1, 1]} : vector<9x238xf32> to vector<1x238xf32>
    %60 = vector.shape_cast %59 : vector<1x238xf32> to vector<1x1x238xf32>
    %61 = vector.broadcast %60 : vector<1x1x238xf32> to vector<8x8x238xf32>
    %62 = arith.mulf %58, %61 : vector<8x8x238xf32>
    %63 = arith.addf %57, %62 : vector<8x8x238xf32>
    %64 = vector.extract_strided_slice %13 {offsets = [0, 0, 0], sizes = [8, 8, 238], strides = [1, 1, 1]} : vector<8x9x238xf32> to vector<8x8x238xf32>
    %65 = vector.extract_strided_slice %21 {offsets = [6, 0], sizes = [1, 238], strides = [1, 1]} : vector<9x238xf32> to vector<1x238xf32>
    %66 = vector.shape_cast %65 : vector<1x238xf32> to vector<1x1x238xf32>
    %67 = vector.broadcast %66 : vector<1x1x238xf32> to vector<8x8x238xf32>
    %68 = arith.mulf %64, %67 : vector<8x8x238xf32>
    %69 = arith.addf %63, %68 : vector<8x8x238xf32>
    %70 = vector.extract_strided_slice %14 {offsets = [0, 0, 0], sizes = [8, 8, 238], strides = [1, 1, 1]} : vector<8x9x238xf32> to vector<8x8x238xf32>
    %71 = vector.extract_strided_slice %21 {offsets = [7, 0], sizes = [1, 238], strides = [1, 1]} : vector<9x238xf32> to vector<1x238xf32>
    %72 = vector.shape_cast %71 : vector<1x238xf32> to vector<1x1x238xf32>
    %73 = vector.broadcast %72 : vector<1x1x238xf32> to vector<8x8x238xf32>
    %74 = arith.mulf %70, %73 : vector<8x8x238xf32>
    %75 = arith.addf %69, %74 : vector<8x8x238xf32>
    %76 = vector.extract_strided_slice %15 {offsets = [0, 0, 0], sizes = [8, 8, 238], strides = [1, 1, 1]} : vector<8x9x238xf32> to vector<8x8x238xf32>
    %77 = vector.extract_strided_slice %21 {offsets = [8, 0], sizes = [1, 238], strides = [1, 1]} : vector<9x238xf32> to vector<1x238xf32>
    %78 = vector.shape_cast %77 : vector<1x238xf32> to vector<1x1x238xf32>
    %79 = vector.broadcast %78 : vector<1x1x238xf32> to vector<8x8x238xf32>
    %80 = arith.mulf %76, %79 : vector<8x8x238xf32>
    %81 = arith.addf %75, %80 : vector<8x8x238xf32>
    %82 = vector.extract_strided_slice %8 {offsets = [0, 0, 0], sizes = [8, 8, 238], strides = [1, 1, 1]} : vector<8x9x238xf32> to vector<8x8x238xf32>
    %83 = vector.extract_strided_slice %21 {offsets = [0, 0], sizes = [1, 238], strides = [1, 1]} : vector<9x238xf32> to vector<1x238xf32>
    %84 = vector.shape_cast %83 : vector<1x238xf32> to vector<1x1x238xf32>
    %85 = vector.broadcast %84 : vector<1x1x238xf32> to vector<8x8x238xf32>
    %86 = arith.mulf %82, %85 : vector<8x8x238xf32>
    %87 = vector.extract_strided_slice %9 {offsets = [0, 0, 0], sizes = [8, 8, 238], strides = [1, 1, 1]} : vector<8x9x238xf32> to vector<8x8x238xf32>
    %88 = vector.extract_strided_slice %21 {offsets = [1, 0], sizes = [1, 238], strides = [1, 1]} : vector<9x238xf32> to vector<1x238xf32>
    %89 = vector.shape_cast %88 : vector<1x238xf32> to vector<1x1x238xf32>
    %90 = vector.broadcast %89 : vector<1x1x238xf32> to vector<8x8x238xf32>
    %91 = arith.mulf %87, %90 : vector<8x8x238xf32>
    %92 = arith.addf %86, %91 : vector<8x8x238xf32>
    %93 = vector.extract_strided_slice %10 {offsets = [0, 0, 0], sizes = [8, 8, 238], strides = [1, 1, 1]} : vector<8x9x238xf32> to vector<8x8x238xf32>
    %94 = vector.extract_strided_slice %21 {offsets = [2, 0], sizes = [1, 238], strides = [1, 1]} : vector<9x238xf32> to vector<1x238xf32>
    %95 = vector.shape_cast %94 : vector<1x238xf32> to vector<1x1x238xf32>
    %96 = vector.broadcast %95 : vector<1x1x238xf32> to vector<8x8x238xf32>
    %97 = arith.mulf %93, %96 : vector<8x8x238xf32>
    %98 = arith.addf %92, %97 : vector<8x8x238xf32>
    %99 = vector.extract_strided_slice %13 {offsets = [0, 0, 0], sizes = [8, 8, 238], strides = [1, 1, 1]} : vector<8x9x238xf32> to vector<8x8x238xf32>
    %100 = vector.extract_strided_slice %21 {offsets = [3, 0], sizes = [1, 238], strides = [1, 1]} : vector<9x238xf32> to vector<1x238xf32>
    %101 = vector.shape_cast %100 : vector<1x238xf32> to vector<1x1x238xf32>
    %102 = vector.broadcast %101 : vector<1x1x238xf32> to vector<8x8x238xf32>
    %103 = arith.mulf %99, %102 : vector<8x8x238xf32>
    %104 = arith.addf %98, %103 : vector<8x8x238xf32>
    %105 = vector.extract_strided_slice %14 {offsets = [0, 0, 0], sizes = [8, 8, 238], strides = [1, 1, 1]} : vector<8x9x238xf32> to vector<8x8x238xf32>
    %106 = vector.extract_strided_slice %21 {offsets = [4, 0], sizes = [1, 238], strides = [1, 1]} : vector<9x238xf32> to vector<1x238xf32>
    %107 = vector.shape_cast %106 : vector<1x238xf32> to vector<1x1x238xf32>
    %108 = vector.broadcast %107 : vector<1x1x238xf32> to vector<8x8x238xf32>
    %109 = arith.mulf %105, %108 : vector<8x8x238xf32>
    %110 = arith.addf %104, %109 : vector<8x8x238xf32>
    %111 = vector.extract_strided_slice %15 {offsets = [0, 0, 0], sizes = [8, 8, 238], strides = [1, 1, 1]} : vector<8x9x238xf32> to vector<8x8x238xf32>
    %112 = vector.extract_strided_slice %21 {offsets = [5, 0], sizes = [1, 238], strides = [1, 1]} : vector<9x238xf32> to vector<1x238xf32>
    %113 = vector.shape_cast %112 : vector<1x238xf32> to vector<1x1x238xf32>
    %114 = vector.broadcast %113 : vector<1x1x238xf32> to vector<8x8x238xf32>
    %115 = arith.mulf %111, %114 : vector<8x8x238xf32>
    %116 = arith.addf %110, %115 : vector<8x8x238xf32>
    %117 = vector.extract_strided_slice %18 {offsets = [0, 0, 0], sizes = [8, 8, 238], strides = [1, 1, 1]} : vector<8x9x238xf32> to vector<8x8x238xf32>
    %118 = vector.extract_strided_slice %21 {offsets = [6, 0], sizes = [1, 238], strides = [1, 1]} : vector<9x238xf32> to vector<1x238xf32>
    %119 = vector.shape_cast %118 : vector<1x238xf32> to vector<1x1x238xf32>
    %120 = vector.broadcast %119 : vector<1x1x238xf32> to vector<8x8x238xf32>
    %121 = arith.mulf %117, %120 : vector<8x8x238xf32>
    %122 = arith.addf %116, %121 : vector<8x8x238xf32>
    %123 = vector.extract_strided_slice %19 {offsets = [0, 0, 0], sizes = [8, 8, 238], strides = [1, 1, 1]} : vector<8x9x238xf32> to vector<8x8x238xf32>
    %124 = vector.extract_strided_slice %21 {offsets = [7, 0], sizes = [1, 238], strides = [1, 1]} : vector<9x238xf32> to vector<1x238xf32>
    %125 = vector.shape_cast %124 : vector<1x238xf32> to vector<1x1x238xf32>
    %126 = vector.broadcast %125 : vector<1x1x238xf32> to vector<8x8x238xf32>
    %127 = arith.mulf %123, %126 : vector<8x8x238xf32>
    %128 = arith.addf %122, %127 : vector<8x8x238xf32>
    %129 = vector.extract_strided_slice %20 {offsets = [0, 0, 0], sizes = [8, 8, 238], strides = [1, 1, 1]} : vector<8x9x238xf32> to vector<8x8x238xf32>
    %130 = vector.extract_strided_slice %21 {offsets = [8, 0], sizes = [1, 238], strides = [1, 1]} : vector<9x238xf32> to vector<1x238xf32>
    %131 = vector.shape_cast %130 : vector<1x238xf32> to vector<1x1x238xf32>
    %132 = vector.broadcast %131 : vector<1x1x238xf32> to vector<8x8x238xf32>
    %133 = arith.mulf %129, %132 : vector<8x8x238xf32>
    %134 = arith.addf %128, %133 : vector<8x8x238xf32>
    %135 = arith.maximumf %81, %134 : vector<8x8x238xf32>
    %136 = vector.extract_strided_slice %135 {offsets = [0, 0, 0], sizes = [8, 8, 237], strides = [1, 1, 1]} : vector<8x8x238xf32> to vector<8x8x237xf32>
    %137 = vector.extract_strided_slice %135 {offsets = [0, 0, 1], sizes = [8, 8, 237], strides = [1, 1, 1]} : vector<8x8x238xf32> to vector<8x8x237xf32>
    %138 = arith.maximumf %136, %137 : vector<8x8x237xf32>
    %139 = vector.shape_cast %138 : vector<8x8x237xf32> to vector<64x237xf32>
    %140 = arith.truncf %139 : vector<64x237xf32> to vector<64x237xbf16>
    %cst_18 = arith.constant dense<0.000000e+00> : vector<64x128xf32>
    %141 = tpu.matmul %140, %23, %cst_18 {dimension_numbers = #tpu.dot_dimension_numbers<[1], [0], [0], [1], [0, 0, 1, 1], [], []>} : vector<64x237xbf16>, vector<237x128xbf16>, vector<64x128xf32> -> vector<64x128xf32>
    %142 = vector.broadcast %22 : vector<1x128xf32> to vector<64x128xf32>
    %143 = arith.addf %141, %142 : vector<64x128xf32>
    %cst_19 = arith.constant 0.000000e+00 : f32
    %144 = vector.broadcast %cst_19 : f32 to vector<64x128xf32>
    %145 = arith.maximumf %143, %144 : vector<64x128xf32>
    %146 = vector.shape_cast %145 : vector<64x128xf32> to vector<8x8x128xf32>
    %147 = arith.truncf %146 : vector<8x8x128xf32> to vector<8x8x128xbf16>
    %148 = vector.extract_strided_slice %147 {offsets = [0, 0, 0], sizes = [8, 7, 128], strides = [1, 1, 1]} : vector<8x8x128xbf16> to vector<8x7x128xbf16>
    %c0_20 = arith.constant 0 : index
    %c0_21 = arith.constant 0 : index
    %c0_22 = arith.constant 0 : index
    %149 = vector.load %arg11[%c0_20, %c0_21, %c0_22] : memref<8x9x128xbf16, #tpu.memory_space<vmem>>, vector<8x7x128xbf16>
    tpu.vector_store %arg11[%c0_20, %c0_21, %c0_22], %148 {strides = array<i32>} : memref<8x9x128xbf16, #tpu.memory_space<vmem>>, vector<8x7x128xbf16>,
    %150 = vector.extract_strided_slice %13 {offsets = [0, 0, 0], sizes = [8, 8, 238], strides = [1, 1, 1]} : vector<8x9x238xf32> to vector<8x8x238xf32>
    %151 = vector.extract_strided_slice %21 {offsets = [0, 0], sizes = [1, 238], strides = [1, 1]} : vector<9x238xf32> to vector<1x238xf32>
    %152 = vector.shape_cast %151 : vector<1x238xf32> to vector<1x1x238xf32>
    %153 = vector.broadcast %152 : vector<1x1x238xf32> to vector<8x8x238xf32>
    %154 = arith.mulf %150, %153 : vector<8x8x238xf32>
    %155 = vector.extract_strided_slice %14 {offsets = [0, 0, 0], sizes = [8, 8, 238], strides = [1, 1, 1]} : vector<8x9x238xf32> to vector<8x8x238xf32>
    %156 = vector.extract_strided_slice %21 {offsets = [1, 0], sizes = [1, 238], strides = [1, 1]} : vector<9x238xf32> to vector<1x238xf32>
    %157 = vector.shape_cast %156 : vector<1x238xf32> to vector<1x1x238xf32>
    %158 = vector.broadcast %157 : vector<1x1x238xf32> to vector<8x8x238xf32>
    %159 = arith.mulf %155, %158 : vector<8x8x238xf32>
    %160 = arith.addf %154, %159 : vector<8x8x238xf32>
    %161 = vector.extract_strided_slice %15 {offsets = [0, 0, 0], sizes = [8, 8, 238], strides = [1, 1, 1]} : vector<8x9x238xf32> to vector<8x8x238xf32>
    %162 = vector.extract_strided_slice %21 {offsets = [2, 0], sizes = [1, 238], strides = [1, 1]} : vector<9x238xf32> to vector<1x238xf32>
    %163 = vector.shape_cast %162 : vector<1x238xf32> to vector<1x1x238xf32>
    %164 = vector.broadcast %163 : vector<1x1x238xf32> to vector<8x8x238xf32>
    %165 = arith.mulf %161, %164 : vector<8x8x238xf32>
    %166 = arith.addf %160, %165 : vector<8x8x238xf32>
    %167 = vector.extract_strided_slice %18 {offsets = [0, 0, 0], sizes = [8, 8, 238], strides = [1, 1, 1]} : vector<8x9x238xf32> to vector<8x8x238xf32>
    %168 = vector.extract_strided_slice %21 {offsets = [3, 0], sizes = [1, 238], strides = [1, 1]} : vector<9x238xf32> to vector<1x238xf32>
    %169 = vector.shape_cast %168 : vector<1x238xf32> to vector<1x1x238xf32>
    %170 = vector.broadcast %169 : vector<1x1x238xf32> to vector<8x8x238xf32>
    %171 = arith.mulf %167, %170 : vector<8x8x238xf32>
    %172 = arith.addf %166, %171 : vector<8x8x238xf32>
    %173 = vector.extract_strided_slice %19 {offsets = [0, 0, 0], sizes = [8, 8, 238], strides = [1, 1, 1]} : vector<8x9x238xf32> to vector<8x8x238xf32>
    %174 = vector.extract_strided_slice %21 {offsets = [4, 0], sizes = [1, 238], strides = [1, 1]} : vector<9x238xf32> to vector<1x238xf32>
    %175 = vector.shape_cast %174 : vector<1x238xf32> to vector<1x1x238xf32>
    %176 = vector.broadcast %175 : vector<1x1x238xf32> to vector<8x8x238xf32>
    %177 = arith.mulf %173, %176 : vector<8x8x238xf32>
    %178 = arith.addf %172, %177 : vector<8x8x238xf32>
    %179 = vector.extract_strided_slice %20 {offsets = [0, 0, 0], sizes = [8, 8, 238], strides = [1, 1, 1]} : vector<8x9x238xf32> to vector<8x8x238xf32>
    %180 = vector.extract_strided_slice %21 {offsets = [5, 0], sizes = [1, 238], strides = [1, 1]} : vector<9x238xf32> to vector<1x238xf32>
    %181 = vector.shape_cast %180 : vector<1x238xf32> to vector<1x1x238xf32>
    %182 = vector.broadcast %181 : vector<1x1x238xf32> to vector<8x8x238xf32>
    %183 = arith.mulf %179, %182 : vector<8x8x238xf32>
    %184 = arith.addf %178, %183 : vector<8x8x238xf32>
    %185 = vector.extract_strided_slice %3 {offsets = [0, 1, 0], sizes = [8, 8, 238], strides = [1, 1, 1]} : vector<8x9x238xf32> to vector<8x8x238xf32>
    %186 = vector.extract_strided_slice %21 {offsets = [6, 0], sizes = [1, 238], strides = [1, 1]} : vector<9x238xf32> to vector<1x238xf32>
    %187 = vector.shape_cast %186 : vector<1x238xf32> to vector<1x1x238xf32>
    %188 = vector.broadcast %187 : vector<1x1x238xf32> to vector<8x8x238xf32>
    %189 = arith.mulf %185, %188 : vector<8x8x238xf32>
    %190 = arith.addf %184, %189 : vector<8x8x238xf32>
    %191 = vector.extract_strided_slice %4 {offsets = [0, 1, 0], sizes = [8, 8, 238], strides = [1, 1, 1]} : vector<8x9x238xf32> to vector<8x8x238xf32>
    %192 = vector.extract_strided_slice %21 {offsets = [7, 0], sizes = [1, 238], strides = [1, 1]} : vector<9x238xf32> to vector<1x238xf32>
    %193 = vector.shape_cast %192 : vector<1x238xf32> to vector<1x1x238xf32>
    %194 = vector.broadcast %193 : vector<1x1x238xf32> to vector<8x8x238xf32>
    %195 = arith.mulf %191, %194 : vector<8x8x238xf32>
    %196 = arith.addf %190, %195 : vector<8x8x238xf32>
    %197 = vector.extract_strided_slice %5 {offsets = [0, 1, 0], sizes = [8, 8, 238], strides = [1, 1, 1]} : vector<8x9x238xf32> to vector<8x8x238xf32>
    %198 = vector.extract_strided_slice %21 {offsets = [8, 0], sizes = [1, 238], strides = [1, 1]} : vector<9x238xf32> to vector<1x238xf32>
    %199 = vector.shape_cast %198 : vector<1x238xf32> to vector<1x1x238xf32>
    %200 = vector.broadcast %199 : vector<1x1x238xf32> to vector<8x8x238xf32>
    %201 = arith.mulf %197, %200 : vector<8x8x238xf32>
    %202 = arith.addf %196, %201 : vector<8x8x238xf32>
    %203 = vector.extract_strided_slice %18 {offsets = [0, 0, 0], sizes = [8, 8, 238], strides = [1, 1, 1]} : vector<8x9x238xf32> to vector<8x8x238xf32>
    %204 = vector.extract_strided_slice %21 {offsets = [0, 0], sizes = [1, 238], strides = [1, 1]} : vector<9x238xf32> to vector<1x238xf32>
    %205 = vector.shape_cast %204 : vector<1x238xf32> to vector<1x1x238xf32>
    %206 = vector.broadcast %205 : vector<1x1x238xf32> to vector<8x8x238xf32>
    %207 = arith.mulf %203, %206 : vector<8x8x238xf32>
    %208 = vector.extract_strided_slice %19 {offsets = [0, 0, 0], sizes = [8, 8, 238], strides = [1, 1, 1]} : vector<8x9x238xf32> to vector<8x8x238xf32>
    %209 = vector.extract_strided_slice %21 {offsets = [1, 0], sizes = [1, 238], strides = [1, 1]} : vector<9x238xf32> to vector<1x238xf32>
    %210 = vector.shape_cast %209 : vector<1x238xf32> to vector<1x1x238xf32>
    %211 = vector.broadcast %210 : vector<1x1x238xf32> to vector<8x8x238xf32>
    %212 = arith.mulf %208, %211 : vector<8x8x238xf32>
    %213 = arith.addf %207, %212 : vector<8x8x238xf32>
    %214 = vector.extract_strided_slice %20 {offsets = [0, 0, 0], sizes = [8, 8, 238], strides = [1, 1, 1]} : vector<8x9x238xf32> to vector<8x8x238xf32>
    %215 = vector.extract_strided_slice %21 {offsets = [2, 0], sizes = [1, 238], strides = [1, 1]} : vector<9x238xf32> to vector<1x238xf32>
    %216 = vector.shape_cast %215 : vector<1x238xf32> to vector<1x1x238xf32>
    %217 = vector.broadcast %216 : vector<1x1x238xf32> to vector<8x8x238xf32>
    %218 = arith.mulf %214, %217 : vector<8x8x238xf32>
    %219 = arith.addf %213, %218 : vector<8x8x238xf32>
    %220 = vector.extract_strided_slice %3 {offsets = [0, 1, 0], sizes = [8, 8, 238], strides = [1, 1, 1]} : vector<8x9x238xf32> to vector<8x8x238xf32>
    %221 = vector.extract_strided_slice %21 {offsets = [3, 0], sizes = [1, 238], strides = [1, 1]} : vector<9x238xf32> to vector<1x238xf32>
    %222 = vector.shape_cast %221 : vector<1x238xf32> to vector<1x1x238xf32>
    %223 = vector.broadcast %222 : vector<1x1x238xf32> to vector<8x8x238xf32>
    %224 = arith.mulf %220, %223 : vector<8x8x238xf32>
    %225 = arith.addf %219, %224 : vector<8x8x238xf32>
    %226 = vector.extract_strided_slice %4 {offsets = [0, 1, 0], sizes = [8, 8, 238], strides = [1, 1, 1]} : vector<8x9x238xf32> to vector<8x8x238xf32>
    %227 = vector.extract_strided_slice %21 {offsets = [4, 0], sizes = [1, 238], strides = [1, 1]} : vector<9x238xf32> to vector<1x238xf32>
    %228 = vector.shape_cast %227 : vector<1x238xf32> to vector<1x1x238xf32>
    %229 = vector.broadcast %228 : vector<1x1x238xf32> to vector<8x8x238xf32>
    %230 = arith.mulf %226, %229 : vector<8x8x238xf32>
    %231 = arith.addf %225, %230 : vector<8x8x238xf32>
    %232 = vector.extract_strided_slice %5 {offsets = [0, 1, 0], sizes = [8, 8, 238], strides = [1, 1, 1]} : vector<8x9x238xf32> to vector<8x8x238xf32>
    %233 = vector.extract_strided_slice %21 {offsets = [5, 0], sizes = [1, 238], strides = [1, 1]} : vector<9x238xf32> to vector<1x238xf32>
    %234 = vector.shape_cast %233 : vector<1x238xf32> to vector<1x1x238xf32>
    %235 = vector.broadcast %234 : vector<1x1x238xf32> to vector<8x8x238xf32>
    %236 = arith.mulf %232, %235 : vector<8x8x238xf32>
    %237 = arith.addf %231, %236 : vector<8x8x238xf32>
    %238 = vector.extract_strided_slice %8 {offsets = [0, 1, 0], sizes = [8, 8, 238], strides = [1, 1, 1]} : vector<8x9x238xf32> to vector<8x8x238xf32>
    %239 = vector.extract_strided_slice %21 {offsets = [6, 0], sizes = [1, 238], strides = [1, 1]} : vector<9x238xf32> to vector<1x238xf32>
    %240 = vector.shape_cast %239 : vector<1x238xf32> to vector<1x1x238xf32>
    %241 = vector.broadcast %240 : vector<1x1x238xf32> to vector<8x8x238xf32>
    %242 = arith.mulf %238, %241 : vector<8x8x238xf32>
    %243 = arith.addf %237, %242 : vector<8x8x238xf32>
    %244 = vector.extract_strided_slice %9 {offsets = [0, 1, 0], sizes = [8, 8, 238], strides = [1, 1, 1]} : vector<8x9x238xf32> to vector<8x8x238xf32>
    %245 = vector.extract_strided_slice %21 {offsets = [7, 0], sizes = [1, 238], strides = [1, 1]} : vector<9x238xf32> to vector<1x238xf32>
    %246 = vector.shape_cast %245 : vector<1x238xf32> to vector<1x1x238xf32>
    %247 = vector.broadcast %246 : vector<1x1x238xf32> to vector<8x8x238xf32>
    %248 = arith.mulf %244, %247 : vector<8x8x238xf32>
    %249 = arith.addf %243, %248 : vector<8x8x238xf32>
    %250 = vector.extract_strided_slice %10 {offsets = [0, 1, 0], sizes = [8, 8, 238], strides = [1, 1, 1]} : vector<8x9x238xf32> to vector<8x8x238xf32>
    %251 = vector.extract_strided_slice %21 {offsets = [8, 0], sizes = [1, 238], strides = [1, 1]} : vector<9x238xf32> to vector<1x238xf32>
    %252 = vector.shape_cast %251 : vector<1x238xf32> to vector<1x1x238xf32>
    %253 = vector.broadcast %252 : vector<1x1x238xf32> to vector<8x8x238xf32>
    %254 = arith.mulf %250, %253 : vector<8x8x238xf32>
    %255 = arith.addf %249, %254 : vector<8x8x238xf32>
    %256 = arith.maximumf %202, %255 : vector<8x8x238xf32>
    %257 = vector.extract_strided_slice %256 {offsets = [0, 0, 0], sizes = [8, 8, 237], strides = [1, 1, 1]} : vector<8x8x238xf32> to vector<8x8x237xf32>
    %258 = vector.extract_strided_slice %256 {offsets = [0, 0, 1], sizes = [8, 8, 237], strides = [1, 1, 1]} : vector<8x8x238xf32> to vector<8x8x237xf32>
    %259 = arith.maximumf %257, %258 : vector<8x8x237xf32>
    %260 = vector.shape_cast %259 : vector<8x8x237xf32> to vector<64x237xf32>
    %261 = arith.truncf %260 : vector<64x237xf32> to vector<64x237xbf16>
    %cst_23 = arith.constant dense<0.000000e+00> : vector<64x128xf32>
    %262 = tpu.matmul %261, %23, %cst_23 {dimension_numbers = #tpu.dot_dimension_numbers<[1], [0], [0], [1], [0, 0, 1, 1], [], []>} : vector<64x237xbf16>, vector<237x128xbf16>, vector<64x128xf32> -> vector<64x128xf32>
    %263 = vector.broadcast %22 : vector<1x128xf32> to vector<64x128xf32>
    %264 = arith.addf %262, %263 : vector<64x128xf32>
    %cst_24 = arith.constant 0.000000e+00 : f32
    %265 = vector.broadcast %cst_24 : f32 to vector<64x128xf32>
    %266 = arith.maximumf %264, %265 : vector<64x128xf32>
    %267 = vector.shape_cast %266 : vector<64x128xf32> to vector<8x8x128xf32>
    %268 = arith.truncf %267 : vector<8x8x128xf32> to vector<8x8x128xbf16>
    %269 = vector.extract_strided_slice %268 {offsets = [0, 0, 0], sizes = [8, 7, 128], strides = [1, 1, 1]} : vector<8x8x128xbf16> to vector<8x7x128xbf16>
    %c0_25 = arith.constant 0 : index
    %c1 = arith.constant 1 : index
    %c0_26 = arith.constant 0 : index
    %270 = vector.load %arg10[%c0_25, %c1, %c0_26] : memref<8x9x128xbf16, #tpu.memory_space<vmem>>, vector<8x7x128xbf16>
    tpu.vector_store %arg10[%c0_25, %c1, %c0_26], %269 {strides = array<i32>} : memref<8x9x128xbf16, #tpu.memory_space<vmem>>, vector<8x7x128xbf16>,
    %c0_27 = arith.constant 0 : index
    %c0_28 = arith.constant 0 : index
    %c0_29 = arith.constant 0 : index
    %271 = vector.load %arg10[%c0_27, %c0_28, %c0_29] : memref<8x9x128xbf16, #tpu.memory_space<vmem>>, vector<8x8x128xbf16>
    %272 = vector.shape_cast %271 : vector<8x8x128xbf16> to vector<64x128xbf16>
    %c0_30 = arith.constant 0 : index
    %c0_31 = arith.constant 0 : index
    %c0_32 = arith.constant 0 : index
    %273 = vector.load %arg11[%c0_30, %c0_31, %c0_32] : memref<8x9x128xbf16, #tpu.memory_space<vmem>>, vector<8x8x128xbf16>
    %274 = vector.shape_cast %273 : vector<8x8x128xbf16> to vector<64x128xbf16>
    %c0_33 = arith.constant 0 : index
    %c1_34 = arith.constant 1 : index
    %c0_35 = arith.constant 0 : index
    %275 = vector.load %arg10[%c0_33, %c1_34, %c0_35] : memref<8x9x128xbf16, #tpu.memory_space<vmem>>, vector<8x8x128xbf16>
    %276 = vector.shape_cast %275 : vector<8x8x128xbf16> to vector<64x128xbf16>
    %c0_36 = arith.constant 0 : index
    %c1_37 = arith.constant 1 : index
    %c0_38 = arith.constant 0 : index
    %277 = vector.load %arg11[%c0_36, %c1_37, %c0_38] : memref<8x9x128xbf16, #tpu.memory_space<vmem>>, vector<8x8x128xbf16>
    %278 = vector.shape_cast %277 : vector<8x8x128xbf16> to vector<64x128xbf16>
    %c0_39 = arith.constant 0 : index
    %c0_40 = arith.constant 0 : index
    %c0_41 = arith.constant 0 : index
    %279 = vector.load %arg5[%c0_39, %c0_40, %c0_41] : memref<3x128x224xbf16, #tpu.memory_space<vmem>>, vector<1x128x224xbf16>
    %280 = vector.shape_cast %279 : vector<1x128x224xbf16> to vector<128x224xbf16>
    %cst_42 = arith.constant dense<0.000000e+00> : vector<64x224xf32>
    %281 = tpu.matmul %272, %280, %cst_42 {dimension_numbers = #tpu.dot_dimension_numbers<[1], [0], [0], [1], [0, 0, 1, 1], [], []>} : vector<64x128xbf16>, vector<128x224xbf16>, vector<64x224xf32> -> vector<64x224xf32>
    %c1_43 = arith.constant 1 : index
    %c0_44 = arith.constant 0 : index
    %c0_45 = arith.constant 0 : index
    %282 = vector.load %arg5[%c1_43, %c0_44, %c0_45] : memref<3x128x224xbf16, #tpu.memory_space<vmem>>, vector<1x128x224xbf16>
    %283 = vector.shape_cast %282 : vector<1x128x224xbf16> to vector<128x224xbf16>
    %cst_46 = arith.constant dense<0.000000e+00> : vector<64x224xf32>
    %284 = tpu.matmul %274, %283, %cst_46 {dimension_numbers = #tpu.dot_dimension_numbers<[1], [0], [0], [1], [0, 0, 1, 1], [], []>} : vector<64x128xbf16>, vector<128x224xbf16>, vector<64x224xf32> -> vector<64x224xf32>
    %285 = arith.addf %281, %284 : vector<64x224xf32>
    %c2 = arith.constant 2 : index
    %c0_47 = arith.constant 0 : index
    %c0_48 = arith.constant 0 : index
    %286 = vector.load %arg5[%c2, %c0_47, %c0_48] : memref<3x128x224xbf16, #tpu.memory_space<vmem>>, vector<1x128x224xbf16>
    %287 = vector.shape_cast %286 : vector<1x128x224xbf16> to vector<128x224xbf16>
    %cst_49 = arith.constant dense<0.000000e+00> : vector<64x224xf32>
    %288 = tpu.matmul %276, %287, %cst_49 {dimension_numbers = #tpu.dot_dimension_numbers<[1], [0], [0], [1], [0, 0, 1, 1], [], []>} : vector<64x128xbf16>, vector<128x224xbf16>, vector<64x224xf32> -> vector<64x224xf32>
    %289 = arith.addf %285, %288 : vector<64x224xf32>
    %c0_50 = arith.constant 0 : index
    %c0_51 = arith.constant 0 : index
    %c0_52 = arith.constant 0 : index
    %290 = vector.load %arg5[%c0_50, %c0_51, %c0_52] : memref<3x128x224xbf16, #tpu.memory_space<vmem>>, vector<1x128x224xbf16>
    %291 = vector.shape_cast %290 : vector<1x128x224xbf16> to vector<128x224xbf16>
    %cst_53 = arith.constant dense<0.000000e+00> : vector<64x224xf32>
    %292 = tpu.matmul %274, %291, %cst_53 {dimension_numbers = #tpu.dot_dimension_numbers<[1], [0], [0], [1], [0, 0, 1, 1], [], []>} : vector<64x128xbf16>, vector<128x224xbf16>, vector<64x224xf32> -> vector<64x224xf32>
    %c1_54 = arith.constant 1 : index
    %c0_55 = arith.constant 0 : index
    %c0_56 = arith.constant 0 : index
    %293 = vector.load %arg5[%c1_54, %c0_55, %c0_56] : memref<3x128x224xbf16, #tpu.memory_space<vmem>>, vector<1x128x224xbf16>
    %294 = vector.shape_cast %293 : vector<1x128x224xbf16> to vector<128x224xbf16>
    %cst_57 = arith.constant dense<0.000000e+00> : vector<64x224xf32>
    %295 = tpu.matmul %276, %294, %cst_57 {dimension_numbers = #tpu.dot_dimension_numbers<[1], [0], [0], [1], [0, 0, 1, 1], [], []>} : vector<64x128xbf16>, vector<128x224xbf16>, vector<64x224xf32> -> vector<64x224xf32>
    %296 = arith.addf %292, %295 : vector<64x224xf32>
    %c2_58 = arith.constant 2 : index
    %c0_59 = arith.constant 0 : index
    %c0_60 = arith.constant 0 : index
    %297 = vector.load %arg5[%c2_58, %c0_59, %c0_60] : memref<3x128x224xbf16, #tpu.memory_space<vmem>>, vector<1x128x224xbf16>
    %298 = vector.shape_cast %297 : vector<1x128x224xbf16> to vector<128x224xbf16>
    %cst_61 = arith.constant dense<0.000000e+00> : vector<64x224xf32>
    %299 = tpu.matmul %278, %298, %cst_61 {dimension_numbers = #tpu.dot_dimension_numbers<[1], [0], [0], [1], [0, 0, 1, 1], [], []>} : vector<64x128xbf16>, vector<128x224xbf16>, vector<64x224xf32> -> vector<64x224xf32>
    %300 = arith.addf %296, %299 : vector<64x224xf32>
    %301 = arith.maximumf %289, %300 : vector<64x224xf32>
    %302 = vector.extract_strided_slice %301 {offsets = [0, 0], sizes = [64, 208], strides = [1, 1]} : vector<64x224xf32> to vector<64x208xf32>
    %303 = vector.extract_strided_slice %301 {offsets = [0, 16], sizes = [64, 208], strides = [1, 1]} : vector<64x224xf32> to vector<64x208xf32>
    %304 = arith.maximumf %302, %303 : vector<64x208xf32>
    %c0_62 = arith.constant 0 : index
    %c0_63 = arith.constant 0 : index
    %305 = vector.load %arg6[%c0_62, %c0_63] : memref<1x208xf32, #tpu.memory_space<vmem>>, vector<1x208xf32>
    %306 = vector.broadcast %305 : vector<1x208xf32> to vector<64x208xf32>
    %307 = arith.addf %304, %306 : vector<64x208xf32>
    %cst_64 = arith.constant 0.000000e+00 : f32
    %308 = vector.broadcast %cst_64 : f32 to vector<64x208xf32>
    %309 = arith.maximumf %307, %308 : vector<64x208xf32>
    %310 = vector.shape_cast %309 : vector<64x208xf32> to vector<8x8x208xf32>
    %311 = arith.truncf %310 : vector<8x8x208xf32> to vector<8x8x208xbf16>
    %312 = vector.extract_strided_slice %311 {offsets = [0, 0, 0], sizes = [8, 1, 208], strides = [1, 1, 1]} : vector<8x8x208xbf16> to vector<8x1x208xbf16>
    %313 = vector.shape_cast %312 : vector<8x1x208xbf16> to vector<8x208xbf16>
    %c0_65 = arith.constant 0 : index
    %c0_66 = arith.constant 0 : index
    %c0_67 = arith.constant 0 : index
    %314 = vector.load %arg7[%c0_65, %c0_66, %c0_67] : memref<7x208x128xbf16, #tpu.memory_space<vmem>>, vector<1x208x128xbf16>
    %315 = vector.shape_cast %314 : vector<1x208x128xbf16> to vector<208x128xbf16>
    %cst_68 = arith.constant dense<0.000000e+00> : vector<8x128xf32>
    %316 = tpu.matmul %313, %315, %cst_68 {dimension_numbers = #tpu.dot_dimension_numbers<[1], [0], [0], [1], [0, 0, 1, 1], [], []>} : vector<8x208xbf16>, vector<208x128xbf16>, vector<8x128xf32> -> vector<8x128xf32>
    %317 = vector.extract_strided_slice %311 {offsets = [0, 1, 0], sizes = [8, 1, 208], strides = [1, 1, 1]} : vector<8x8x208xbf16> to vector<8x1x208xbf16>
    %318 = vector.shape_cast %317 : vector<8x1x208xbf16> to vector<8x208xbf16>
    %c1_69 = arith.constant 1 : index
    %c0_70 = arith.constant 0 : index
    %c0_71 = arith.constant 0 : index
    %319 = vector.load %arg7[%c1_69, %c0_70, %c0_71] : memref<7x208x128xbf16, #tpu.memory_space<vmem>>, vector<1x208x128xbf16>
    %320 = vector.shape_cast %319 : vector<1x208x128xbf16> to vector<208x128xbf16>
    %cst_72 = arith.constant dense<0.000000e+00> : vector<8x128xf32>
    %321 = tpu.matmul %318, %320, %cst_72 {dimension_numbers = #tpu.dot_dimension_numbers<[1], [0], [0], [1], [0, 0, 1, 1], [], []>} : vector<8x208xbf16>, vector<208x128xbf16>, vector<8x128xf32> -> vector<8x128xf32>
    %322 = arith.addf %316, %321 : vector<8x128xf32>
    %323 = vector.extract_strided_slice %311 {offsets = [0, 2, 0], sizes = [8, 1, 208], strides = [1, 1, 1]} : vector<8x8x208xbf16> to vector<8x1x208xbf16>
    %324 = vector.shape_cast %323 : vector<8x1x208xbf16> to vector<8x208xbf16>
    %c2_73 = arith.constant 2 : index
    %c0_74 = arith.constant 0 : index
    %c0_75 = arith.constant 0 : index
    %325 = vector.load %arg7[%c2_73, %c0_74, %c0_75] : memref<7x208x128xbf16, #tpu.memory_space<vmem>>, vector<1x208x128xbf16>
    %326 = vector.shape_cast %325 : vector<1x208x128xbf16> to vector<208x128xbf16>
    %cst_76 = arith.constant dense<0.000000e+00> : vector<8x128xf32>
    %327 = tpu.matmul %324, %326, %cst_76 {dimension_numbers = #tpu.dot_dimension_numbers<[1], [0], [0], [1], [0, 0, 1, 1], [], []>} : vector<8x208xbf16>, vector<208x128xbf16>, vector<8x128xf32> -> vector<8x128xf32>
    %328 = arith.addf %322, %327 : vector<8x128xf32>
    %329 = vector.extract_strided_slice %311 {offsets = [0, 3, 0], sizes = [8, 1, 208], strides = [1, 1, 1]} : vector<8x8x208xbf16> to vector<8x1x208xbf16>
    %330 = vector.shape_cast %329 : vector<8x1x208xbf16> to vector<8x208xbf16>
    %c3 = arith.constant 3 : index
    %c0_77 = arith.constant 0 : index
    %c0_78 = arith.constant 0 : index
    %331 = vector.load %arg7[%c3, %c0_77, %c0_78] : memref<7x208x128xbf16, #tpu.memory_space<vmem>>, vector<1x208x128xbf16>
    %332 = vector.shape_cast %331 : vector<1x208x128xbf16> to vector<208x128xbf16>
    %cst_79 = arith.constant dense<0.000000e+00> : vector<8x128xf32>
    %333 = tpu.matmul %330, %332, %cst_79 {dimension_numbers = #tpu.dot_dimension_numbers<[1], [0], [0], [1], [0, 0, 1, 1], [], []>} : vector<8x208xbf16>, vector<208x128xbf16>, vector<8x128xf32> -> vector<8x128xf32>
    %334 = arith.addf %328, %333 : vector<8x128xf32>
    %335 = vector.extract_strided_slice %311 {offsets = [0, 4, 0], sizes = [8, 1, 208], strides = [1, 1, 1]} : vector<8x8x208xbf16> to vector<8x1x208xbf16>
    %336 = vector.shape_cast %335 : vector<8x1x208xbf16> to vector<8x208xbf16>
    %c4 = arith.constant 4 : index
    %c0_80 = arith.constant 0 : index
    %c0_81 = arith.constant 0 : index
    %337 = vector.load %arg7[%c4, %c0_80, %c0_81] : memref<7x208x128xbf16, #tpu.memory_space<vmem>>, vector<1x208x128xbf16>
    %338 = vector.shape_cast %337 : vector<1x208x128xbf16> to vector<208x128xbf16>
    %cst_82 = arith.constant dense<0.000000e+00> : vector<8x128xf32>
    %339 = tpu.matmul %336, %338, %cst_82 {dimension_numbers = #tpu.dot_dimension_numbers<[1], [0], [0], [1], [0, 0, 1, 1], [], []>} : vector<8x208xbf16>, vector<208x128xbf16>, vector<8x128xf32> -> vector<8x128xf32>
    %340 = arith.addf %334, %339 : vector<8x128xf32>
    %341 = vector.extract_strided_slice %311 {offsets = [0, 5, 0], sizes = [8, 1, 208], strides = [1, 1, 1]} : vector<8x8x208xbf16> to vector<8x1x208xbf16>
    %342 = vector.shape_cast %341 : vector<8x1x208xbf16> to vector<8x208xbf16>
    %c5 = arith.constant 5 : index
    %c0_83 = arith.constant 0 : index
    %c0_84 = arith.constant 0 : index
    %343 = vector.load %arg7[%c5, %c0_83, %c0_84] : memref<7x208x128xbf16, #tpu.memory_space<vmem>>, vector<1x208x128xbf16>
    %344 = vector.shape_cast %343 : vector<1x208x128xbf16> to vector<208x128xbf16>
    %cst_85 = arith.constant dense<0.000000e+00> : vector<8x128xf32>
    %345 = tpu.matmul %342, %344, %cst_85 {dimension_numbers = #tpu.dot_dimension_numbers<[1], [0], [0], [1], [0, 0, 1, 1], [], []>} : vector<8x208xbf16>, vector<208x128xbf16>, vector<8x128xf32> -> vector<8x128xf32>
    %346 = arith.addf %340, %345 : vector<8x128xf32>
    %347 = vector.extract_strided_slice %311 {offsets = [0, 6, 0], sizes = [8, 1, 208], strides = [1, 1, 1]} : vector<8x8x208xbf16> to vector<8x1x208xbf16>
    %348 = vector.shape_cast %347 : vector<8x1x208xbf16> to vector<8x208xbf16>
    %c6 = arith.constant 6 : index
    %c0_86 = arith.constant 0 : index
    %c0_87 = arith.constant 0 : index
    %349 = vector.load %arg7[%c6, %c0_86, %c0_87] : memref<7x208x128xbf16, #tpu.memory_space<vmem>>, vector<1x208x128xbf16>
    %350 = vector.shape_cast %349 : vector<1x208x128xbf16> to vector<208x128xbf16>
    %cst_88 = arith.constant dense<0.000000e+00> : vector<8x128xf32>
    %351 = tpu.matmul %348, %350, %cst_88 {dimension_numbers = #tpu.dot_dimension_numbers<[1], [0], [0], [1], [0, 0, 1, 1], [], []>} : vector<8x208xbf16>, vector<208x128xbf16>, vector<8x128xf32> -> vector<8x128xf32>
    %352 = arith.addf %346, %351 : vector<8x128xf32>
    %c0_89 = arith.constant 0 : index
    %c0_90 = arith.constant 0 : index
    %353 = vector.load %arg8[%c0_89, %c0_90] : memref<1x128xf32, #tpu.memory_space<vmem>>, vector<1x128xf32>
    %354 = vector.broadcast %353 : vector<1x128xf32> to vector<8x128xf32>
    %355 = arith.addf %352, %354 : vector<8x128xf32>
    %c0_91 = arith.constant 0 : index
    %c0_92 = arith.constant 0 : index
    %356 = vector.load %arg9[%c0_91, %c0_92] : memref<8x128xf32, #tpu.memory_space<vmem>>, vector<8x128xf32>
    tpu.vector_store %arg9[%c0_91, %c0_92], %355 {strides = array<i32>} : memref<8x128xf32, #tpu.memory_space<vmem>>, vector<8x128xf32>,
    return
  }
  func.func @transform_0(%arg0: i32) -> (i32, i32, i32) {
    %c0_i32 = arith.constant 0 : i32
    %c0_i32_0 = arith.constant 0 : i32
    %c0_i32_1 = arith.constant 0 : i32
    return %arg0, %c0_i32, %c0_i32_0 : i32, i32, i32
  }
  func.func @transform_1(%arg0: i32) -> (i32, i32) {
    %c0_i32 = arith.constant 0 : i32
    %c0_i32_0 = arith.constant 0 : i32
    %c0_i32_1 = arith.constant 0 : i32
    return %c0_i32, %c0_i32_0 : i32, i32
  }
  func.func @transform_2(%arg0: i32) -> (i32, i32) {
    %c0_i32 = arith.constant 0 : i32
    %c0_i32_0 = arith.constant 0 : i32
    %c0_i32_1 = arith.constant 0 : i32
    return %c0_i32, %c0_i32_0 : i32, i32
  }
  func.func @transform_3(%arg0: i32) -> (i32, i32) {
    %c0_i32 = arith.constant 0 : i32
    %c0_i32_0 = arith.constant 0 : i32
    %c0_i32_1 = arith.constant 0 : i32
    return %c0_i32, %c0_i32_0 : i32, i32
  }
  func.func @transform_4(%arg0: i32) -> (i32, i32, i32) {
    %c0_i32 = arith.constant 0 : i32
    %c0_i32_0 = arith.constant 0 : i32
    %c0_i32_1 = arith.constant 0 : i32
    %c0_i32_2 = arith.constant 0 : i32
    return %c0_i32, %c0_i32_0, %c0_i32_1 : i32, i32, i32
  }
  func.func @transform_5(%arg0: i32) -> (i32, i32) {
    %c0_i32 = arith.constant 0 : i32
    %c0_i32_0 = arith.constant 0 : i32
    %c0_i32_1 = arith.constant 0 : i32
    return %c0_i32, %c0_i32_0 : i32, i32
  }
  func.func @transform_6(%arg0: i32) -> (i32, i32, i32) {
    %c0_i32 = arith.constant 0 : i32
    %c0_i32_0 = arith.constant 0 : i32
    %c0_i32_1 = arith.constant 0 : i32
    %c0_i32_2 = arith.constant 0 : i32
    return %c0_i32, %c0_i32_0, %c0_i32_1 : i32, i32, i32
  }
  func.func @transform_7(%arg0: i32) -> (i32, i32) {
    %c0_i32 = arith.constant 0 : i32
    %c0_i32_0 = arith.constant 0 : i32
    %c0_i32_1 = arith.constant 0 : i32
    return %c0_i32, %c0_i32_0 : i32, i32
  }
  func.func @transform_8(%arg0: i32) -> (i32, i32) {
    %c0_i32 = arith.constant 0 : i32
    %c0_i32_0 = arith.constant 0 : i32
    return %arg0, %c0_i32 : i32, i32
  }
}

</mosaic_0001>

<llo_original>
// kernel: tile.13
$region0: #{tile.13}
  #allocation0 [shape = 's32[1]{0}', space=sflag, size = 0x4, scoped, tag = 'scoped memory for tile.13']
  %s0 = inlined_call_operand.vmem [shape: f32[8], index: 0, kind: input, shape index: {}]
  %s1 = inlined_call_operand.vmem [shape: f32[14,8], index: 1, kind: output, shape index: {}]
  // Predicated region
  $region2: #{tile.13} parent=0 // pred_check
    _
  $region3: #{tile.13} parent=0 // pred_check_branch
    %3 = sbr.rel (0) target = $region5
  $region4: #{tile.13} parent=0 // pred_region
    _
  $region5: #{tile.13} parent=0 // pred_fallthru
    _
  %v4 = vld [vmem:[%s0] ss:$0 sm:$0xff]
  %5 = vst [vmem:[%s1] sm:$0xff] %v4
  %s6 = scalar_lea.vmem %s1, 8
  %7 = vst [vmem:[%s6] sm:$0xff] %v4

// kernel: tile.14
$region0: #{tile.14}
  %s0 = inlined_call_operand.vmem [shape: f32[14,8], index: 0, kind: input, shape index: {}]
  %s1 = inlined_call_operand.vmem [shape: f32[112], index: 1, kind: output, shape index: {}]
  $region1: #{tile.14} parent=0
    #allocation0 [shape = 'u8[4096]{0}', space=vmem, size = 0x1000, scoped, tag = 'scoped mem for output reshape']
    %v2 = vld [vmem:[%s0] sm:$0x1]
    %vm3 = vcmask 64512
    %4 = vst.msk [vmem:[#allocation0] sm:$0x1] %vm3, %v2
    %s5 = scalar_lea.vmem %s0, 13
    %v6 = vld [vmem:[%s5] sm:$0x1]
    %7 = vrot.lane.b32.xlu0 %v6, 104
    %v8 = vpop.permute.xlu0 %7
    %vm9 = vcmask 917312
    %10 = vst.msk [vmem:[#allocation0] sm:$0x1] %vm9, %v8
    %s11 = scalar_lea.vmem %s0, 12
    %v12 = vld [vmem:[%s11] sm:$0x1]
    %13 = vrot.lane.b32.xlu0 %v12, 96
    %v14 = vpop.permute.xlu0 %13
    %vm15 = vcmask 851712
    %16 = vst.msk [vmem:[#allocation0] sm:$0x1] %vm15, %v14
    %s17 = scalar_lea.vmem %s0, 11
    %v18 = vld [vmem:[%s17] sm:$0x1]
    %19 = vrot.lane.b32.xlu0 %v18, 88
    %v20 = vpop.permute.xlu0 %19
    %vm21 = vcmask 786112
    %22 = vst.msk [vmem:[#allocation0] sm:$0x1] %vm21, %v20
    %s23 = scalar_lea.vmem %s0, 10
    %v24 = vld [vmem:[%s23] sm:$0x1]
    %25 = vrot.lane.b32.xlu0 %v24, 80
    %v26 = vpop.permute.xlu0 %25
    %vm27 = vcmask 720512
    %28 = vst.msk [vmem:[#allocation0] sm:$0x1] %vm27, %v26
    %s29 = scalar_lea.vmem %s0, 9
    %v30 = vld [vmem:[%s29] sm:$0x1]
    %31 = vrot.lane.b32.xlu0 %v30, 72
    %v32 = vpop.permute.xlu0 %31
    %vm33 = vcmask 654912
    %34 = vst.msk [vmem:[#allocation0] sm:$0x1] %vm33, %v32
    %s35 = scalar_lea.vmem %s0, 8
    %v36 = vld [vmem:[%s35] sm:$0x1]
    %37 = vrot.lane.b32.xlu0 %v36, 64
    %v38 = vpop.permute.xlu0 %37
    %vm39 = vcmask 589312
    %40 = vst.msk [vmem:[#allocation0] sm:$0x1] %vm39, %v38
    %s41 = scalar_lea.vmem %s0, 7
    %v42 = vld [vmem:[%s41] sm:$0x1]
    %43 = vrot.lane.b32.xlu0 %v42, 56
    %v44 = vpop.permute.xlu0 %43
    %vm45 = vcmask 523712
    %46 = vst.msk [vmem:[#allocation0] sm:$0x1] %vm45, %v44
    %s47 = scalar_lea.vmem %s0, 6
    %v48 = vld [vmem:[%s47] sm:$0x1]
    %49 = vrot.lane.b32.xlu0 %v48, 48
    %v50 = vpop.permute.xlu0 %49
    %vm51 = vcmask 458112
    %52 = vst.msk [vmem:[#allocation0] sm:$0x1] %vm51, %v50
    %s53 = scalar_lea.vmem %s0, 5
    %v54 = vld [vmem:[%s53] sm:$0x1]
    %55 = vrot.lane.b32.xlu0 %v54, 40
    %v56 = vpop.permute.xlu0 %55
    %vm57 = vcmask 392512
    %58 = vst.msk [vmem:[#allocation0] sm:$0x1] %vm57, %v56
    %s59 = scalar_lea.vmem %s0, 4
    %v60 = vld [vmem:[%s59] sm:$0x1]
    %61 = vrot.lane.b32.xlu0 %v60, 32
    %v62 = vpop.permute.xlu0 %61
    %vm63 = vcmask 326912
    %64 = vst.msk [vmem:[#allocation0] sm:$0x1] %vm63, %v62
    %s65 = scalar_lea.vmem %s0, 3
    %v66 = vld [vmem:[%s65] sm:$0x1]
    %67 = vrot.lane.b32.xlu0 %v66, 24
    %v68 = vpop.permute.xlu0 %67
    %vm69 = vcmask 261312
    %70 = vst.msk [vmem:[#allocation0] sm:$0x1] %vm69, %v68
    %s71 = scalar_lea.vmem %s0, 2
    %v72 = vld [vmem:[%s71] sm:$0x1]
    %73 = vrot.lane.b32.xlu0 %v72, 16
    %v74 = vpop.permute.xlu0 %73
    %vm75 = vcmask 195712
    %76 = vst.msk [vmem:[#allocation0] sm:$0x1] %vm75, %v74
    %s77 = scalar_lea.vmem %s0, 1
    %v78 = vld [vmem:[%s77] sm:$0x1]
    %79 = vrot.lane.b32.xlu0 %v78, 8
    %v80 = vpop.permute.xlu0 %79
    %vm81 = vcmask 130112
    %82 = vst.msk [vmem:[#allocation0] sm:$0x1] %vm81, %v80
    %s84 = sshllo.u32 0, 1
    %v86 = vld [vmem:[#allocation0] sm:%s84]
    %s87 = sshllo.u32 0, 1
    %88 = vst [vmem:[%s1] sm:%s87] %v86

// kernel: tile.18
$region0: #{tile.18}
  #allocation0 [shape = 's32[1]{0}', space=sflag, size = 0x4, scoped, tag = 'scoped memory for tile.18']
  %s0 = inlined_call_operand.vmem [shape: f32[16], index: 0, kind: input, shape index: {}]
  %s1 = inlined_call_operand.vmem [shape: f32[13,16], index: 1, kind: output, shape index: {}]
  // Predicated region
  $region2: #{tile.18} parent=0 // pred_check
    _
  $region3: #{tile.18} parent=0 // pred_check_branch
    %3 = sbr.rel (0) target = $region5
  $region4: #{tile.18} parent=0 // pred_region
    _
  $region5: #{tile.18} parent=0 // pred_fallthru
    _
  %v4 = vld [vmem:[%s0] ss:$0 sm:$0xff]
  %5 = vst [vmem:[%s1] sm:$0xff] %v4
  %s6 = scalar_lea.vmem %s1, 8
  %7 = vst [vmem:[%s6] sm:$0xff] %v4

// kernel: tile.19
$region0: #{tile.19}
  %s0 = inlined_call_operand.vmem [shape: f32[13,16], index: 0, kind: input, shape index: {}]
  %s1 = inlined_call_operand.vmem [shape: f32[1,208], index: 1, kind: output, shape index: {}]
  $region1: #{tile.19} parent=0
    #allocation0 [shape = 'u8[8192]{0}', space=vmem, size = 0x2000, scoped, tag = 'scoped mem for output reshape']
    %s2 = smov 3
    %v3 = vld [vmem:[%s0] ss:$8 sm:%s2]
    %vm4 = vcmask 130048
    %5 = vst.msk [vmem:[#allocation0] ss:$8 sm:$0x3] %vm4, %v3
    %s6 = scalar_lea.vmem %s0, 7
    %v7 = vld [vmem:[%s6] sm:$0x1]
    %8 = vrot.lane.b32.xlu0 %v7, 112
    %v9 = vpop.permute.xlu0 %8
    %vm10 = vcmask 1048448
    %11 = vst.msk [vmem:[#allocation0] sm:$0x1] %vm10, %v9
    %s12 = scalar_lea.vmem %s0, 6
    %v13 = vld [vmem:[%s12] sm:$0x1]
    %14 = vrot.lane.b32.xlu0 %v13, 96
    %v15 = vpop.permute.xlu0 %14
    %vm16 = vcmask 917248
    %17 = vst.msk [vmem:[#allocation0] sm:$0x1] %vm16, %v15
    %s18 = scalar_lea.vmem %s0, 5
    %v19 = vld [vmem:[%s18] sm:$0x1]
    %20 = vrot.lane.b32.xlu0 %v19, 80
    %v21 = vpop.permute.xlu0 %20
    %vm22 = vcmask 786048
    %23 = vst.msk [vmem:[#allocation0] sm:$0x1] %vm22, %v21
    %s24 = scalar_lea.vmem %s0, 4
    %s25 = smov 3
    %v26 = vld [vmem:[%s24] ss:$8 sm:%s25]
    %27 = vrot.lane.b32.xlu0 %v26, 64
    %v28 = vpop.permute.xlu0 %27
    %vm29 = vcmask 654848
    %30 = vst.msk [vmem:[#allocation0] ss:$8 sm:$0x3] %vm29, %v28
    %s31 = scalar_lea.vmem %s0, 3
    %s32 = smov 3
    %v33 = vld [vmem:[%s31] ss:$8 sm:%s32]
    %34 = vrot.lane.b32.xlu0 %v33, 48
    %v35 = vpop.permute.xlu0 %34
    %vm36 = vcmask 523648
    %37 = vst.msk [vmem:[#allocation0] ss:$8 sm:$0x3] %vm36, %v35
    %s38 = scalar_lea.vmem %s0, 2
    %s39 = smov 3
    %v40 = vld [vmem:[%s38] ss:$8 sm:%s39]
    %41 = vrot.lane.b32.xlu0 %v40, 32
    %v42 = vpop.permute.xlu0 %41
    %vm43 = vcmask 392448
    %44 = vst.msk [vmem:[#allocation0] ss:$8 sm:$0x3] %vm43, %v42
    %s45 = scalar_lea.vmem %s0, 1
    %s46 = smov 3
    %v47 = vld [vmem:[%s45] ss:$8 sm:%s46]
    %48 = vrot.lane.b32.xlu0 %v47, 16
    %v49 = vpop.permute.xlu0 %48
    %vm50 = vcmask 261248
    %51 = vst.msk [vmem:[#allocation0] ss:$8 sm:$0x3] %vm50, %v49
    %s53 = sshllo.u32 0, 1
    %v55 = vld [vmem:[#allocation0] sm:%s53]
    %s56 = sshllo.u32 0, 1
    %57 = vst [vmem:[%s1] sm:%s56] %v55
    %s58 = scalar_lea.vmem [#allocation0], 8
    %v59 = vld [vmem:[%s58] sm:%s53]
    %s60 = sshllo.u32 0, 1
    %s61 = scalar_lea.vmem %s1, 1
    %62 = vst [vmem:[%s61] sm:%s60] %v59

// kernel: cnn_forward.1
$region0: #{cnn_forward.1}
  #allocation0 [shape = 'u32[]', space=smem, size = 0x4, offset = 0x4, fixed_abs, tag = 'smem constant byte address 0x4 - core index']
  #allocation1 [shape = 'u32[144,128]{1,0:T(1,128)}', space=vmem, size = 0x12000, scoped, tag = 'internal scratch']
  #allocation2 [shape = 'bf16[8,9,128]{2,1,0:T(8,128)(2,1)}', space=vmem, size = 0x8000, scoped, tag = 'scratch operand']
  #allocation3 [shape = 'bf16[8,9,128]{2,1,0:T(8,128)(2,1)}', space=vmem, size = 0x8000, scoped, tag = 'scratch operand']
  %s0 = inlined_call_operand.vmem [shape: f32[16,9,120], index: 0, kind: input, shape index: {}]
  %s1 = inlined_call_operand.vmem [shape: f32[9,238], index: 1, kind: input, shape index: {}]
  %s2 = inlined_call_operand.vmem [shape: f32[1,128], index: 2, kind: input, shape index: {}]
  %s3 = inlined_call_operand.vmem [shape: bf16[237,128], index: 3, kind: input, shape index: {}]
  %s4 = inlined_call_operand.vmem [shape: bf16[3,128,224], index: 4, kind: input, shape index: {}]
  %s5 = inlined_call_operand.vmem [shape: f32[1,208], index: 5, kind: input, shape index: {}]
  %s6 = inlined_call_operand.vmem [shape: bf16[7,208,128], index: 6, kind: input, shape index: {}]
  %s7 = inlined_call_operand.vmem [shape: f32[1,128], index: 7, kind: input, shape index: {}]
  %s8 = inlined_call_operand.hbm [shape: f32[16,128], index: 8, kind: output, shape index: {}]
  %s9 = sld [smem:[#allocation0]]
  $region65: #{cnn_forward.1} parent=0
    _
  %s11 = ssub.s32 1, %s9
  %s12 = scalar_select 0, %s11, %s9
  $region1: #{cnn_forward.1} parent=0
    #allocation4 [shape = 'u8[8192]{0}', space=vmem, size = 0x2000, scoped, tag = 'output window, operand 0']
    #allocation5 [shape = 's32[2]{0}', space=sflag, size = 0x8, scoped, tag = 'scoped memory for cnn_forward.1']
    %13 = vsyncpa [#allocation5], 0
    %s14 = scalar_lea.sflag [#allocation5], 1
    %15 = vsyncpa %s14, 0
    loop: start=0, step=1, limit=4
    $region2: #{cnn_forward.1} parent=1 // loop_pre_header
      _
    $region3: #{cnn_forward.1} parent=1 // loop_header
      %s17 = sphi 0, %s21
      %p18 = scmp.ge.s32.totalorder %s17, 4
      %s27 = sphi 0, %s29
      %s30 = sphi 0, %s27
      %s31 = sphi 0, %s30
      %s47 = sphi 0, %s31
      %s51 = sphi 0, %s51
      %s53 = sphi 0, %s51
      %s54 = sphi 0, %s53
      %s68 = sphi 0, %s54
      %s72 = sphi 0, %s72
      %s74 = sphi 0, %s72
      %s75 = sphi 0, %s74
      %s89 = sphi 0, %s75
      %s93 = sphi 0, %s93
      %s95 = sphi 0, %s93
      %s96 = sphi 0, %s95
      %s110 = sphi 0, %s96
      %s114 = sphi 0, %s114
      %s116 = sphi 0, %s114
      %s117 = sphi 0, %s116
      %s131 = sphi 0, %s117
      %s135 = sphi 0, %s135
      %s137 = sphi 0, %s135
      %s138 = sphi 0, %s137
      %s152 = sphi 0, %s138
      %s156 = sphi 0, %s156
      %s158 = sphi 0, %s156
      %s159 = sphi 0, %s158
      %s173 = sphi 0, %s159
      %s177 = sphi 0, %s177
      %s179 = sphi 0, %s177
      %s180 = sphi 0, %s179
      %s194 = sphi 0, %s180
      %s200 = sphi 0, %s202
      %s203 = sphi 0, %s200
      %s204 = sphi 0, %s203
      %s220 = sphi 0, %s204
    $region4: #{cnn_forward.1} parent=1 // loop_header_branch
      %20 = sbr.rel (%p18) target = $region8
    $region5: #{cnn_forward.1} parent=1 // loop_body
      %s22 = ssub.s32 %s17, 1
      %s23 = ssub.s32 %s17, 2
      %s24 = sadd.s32 %s17, 1
      %s25 = ssub.s32 %s17, %s24
      %p26 = scmp.eq.s32.totalorder %s25, 0
      %s28 = sadd.s32 %s27, 1
      %s29 = scalar_select %p26, %s27, %s28
      %p32 = pneg %p26
      %p33 = scmp.eq.s32.totalorder %s17, 1
      %p34 = por %p32, %p33
      %p35 = scmp.ne.s32.totalorder %s27, %s30
      %p36 = scmp.eq.s32.totalorder %s17, 0
      %p37 = por %p35, %p36
      %p38 = scmp.ne.s32.totalorder %s27, %s30
      %p39 = scmp.eq.s32.totalorder %s22, 1
      %p40 = por %p38, %p39
      %p41 = scmp.ne.s32.totalorder %s30, %s31
      %p42 = scmp.eq.s32.totalorder %s22, 0
      %p43 = por %p41, %p42
      %p44 = scmp.ne.s32.totalorder %s30, %s31
      %p45 = scmp.eq.s32.totalorder %s23, 1
      %p46 = por %p44, %p45
      %p48 = scmp.ne.s32.totalorder %s31, %s47
      %p49 = scmp.eq.s32.totalorder %s23, 0
      %p50 = por %p48, %p49
      %s52 = sadd.s32 %s51, 1
      %p55 = scmp.eq.s32.totalorder %s17, 1
      %p56 = scmp.ne.s32.totalorder %s51, %s53
      %p57 = scmp.eq.s32.totalorder %s17, 0
      %p58 = por %p56, %p57
      %p59 = scmp.ne.s32.totalorder %s51, %s53
      %p60 = scmp.eq.s32.totalorder %s22, 1
      %p61 = por %p59, %p60
      %p62 = scmp.ne.s32.totalorder %s53, %s54
      %p63 = scmp.eq.s32.totalorder %s22, 0
      %p64 = por %p62, %p63
      %p65 = scmp.ne.s32.totalorder %s53, %s54
      %p66 = scmp.eq.s32.totalorder %s23, 1
      %p67 = por %p65, %p66
      %p69 = scmp.ne.s32.totalorder %s54, %s68
      %p70 = scmp.eq.s32.totalorder %s23, 0
      %p71 = por %p69, %p70
      %s73 = sadd.s32 %s72, 1
      %p76 = scmp.eq.s32.totalorder %s17, 1
      %p77 = scmp.ne.s32.totalorder %s72, %s74
      %p78 = scmp.eq.s32.totalorder %s17, 0
      %p79 = por %p77, %p78
      %p80 = scmp.ne.s32.totalorder %s72, %s74
      %p81 = scmp.eq.s32.totalorder %s22, 1
      %p82 = por %p80, %p81
      %p83 = scmp.ne.s32.totalorder %s74, %s75
      %p84 = scmp.eq.s32.totalorder %s22, 0
      %p85 = por %p83, %p84
      %p86 = scmp.ne.s32.totalorder %s74, %s75
      %p87 = scmp.eq.s32.totalorder %s23, 1
      %p88 = por %p86, %p87
      %p90 = scmp.ne.s32.totalorder %s75, %s89
      %p91 = scmp.eq.s32.totalorder %s23, 0
      %p92 = por %p90, %p91
      %s94 = sadd.s32 %s93, 1
      %p97 = scmp.eq.s32.totalorder %s17, 1
      %p98 = scmp.ne.s32.totalorder %s93, %s95
      %p99 = scmp.eq.s32.totalorder %s17, 0
      %p100 = por %p98, %p99
      %p101 = scmp.ne.s32.totalorder %s93, %s95
      %p102 = scmp.eq.s32.totalorder %s22, 1
      %p103 = por %p101, %p102
      %p104 = scmp.ne.s32.totalorder %s95, %s96
      %p105 = scmp.eq.s32.totalorder %s22, 0
      %p106 = por %p104, %p105
      %p107 = scmp.ne.s32.totalorder %s95, %s96
      %p108 = scmp.eq.s32.totalorder %s23, 1
      %p109 = por %p107, %p108
      %p111 = scmp.ne.s32.totalorder %s96, %s110
      %p112 = scmp.eq.s32.totalorder %s23, 0
      %p113 = por %p111, %p112
      %s115 = sadd.s32 %s114, 1
      %p118 = scmp.eq.s32.totalorder %s17, 1
      %p119 = scmp.ne.s32.totalorder %s114, %s116
      %p120 = scmp.eq.s32.totalorder %s17, 0
      %p121 = por %p119, %p120
      %p122 = scmp.ne.s32.totalorder %s114, %s116
      %p123 = scmp.eq.s32.totalorder %s22, 1
      %p124 = por %p122, %p123
      %p125 = scmp.ne.s32.totalorder %s116, %s117
      %p126 = scmp.eq.s32.totalorder %s22, 0
      %p127 = por %p125, %p126
      %p128 = scmp.ne.s32.totalorder %s116, %s117
      %p129 = scmp.eq.s32.totalorder %s23, 1
      %p130 = por %p128, %p129
      %p132 = scmp.ne.s32.totalorder %s117, %s131
      %p133 = scmp.eq.s32.totalorder %s23, 0
      %p134 = por %p132, %p133
      %s136 = sadd.s32 %s135, 1
      %p139 = scmp.eq.s32.totalorder %s17, 1
      %p140 = scmp.ne.s32.totalorder %s135, %s137
      %p141 = scmp.eq.s32.totalorder %s17, 0
      %p142 = por %p140, %p141
      %p143 = scmp.ne.s32.totalorder %s135, %s137
      %p144 = scmp.eq.s32.totalorder %s22, 1
      %p145 = por %p143, %p144
      %p146 = scmp.ne.s32.totalorder %s137, %s138
      %p147 = scmp.eq.s32.totalorder %s22, 0
      %p148 = por %p146, %p147
      %p149 = scmp.ne.s32.totalorder %s137, %s138
      %p150 = scmp.eq.s32.totalorder %s23, 1
      %p151 = por %p149, %p150
      %p153 = scmp.ne.s32.totalorder %s138, %s152
      %p154 = scmp.eq.s32.totalorder %s23, 0
      %p155 = por %p153, %p154
      %s157 = sadd.s32 %s156, 1
      %p160 = scmp.eq.s32.totalorder %s17, 1
      %p161 = scmp.ne.s32.totalorder %s156, %s158
      %p162 = scmp.eq.s32.totalorder %s17, 0
      %p163 = por %p161, %p162
      %p164 = scmp.ne.s32.totalorder %s156, %s158
      %p165 = scmp.eq.s32.totalorder %s22, 1
      %p166 = por %p164, %p165
      %p167 = scmp.ne.s32.totalorder %s158, %s159
      %p168 = scmp.eq.s32.totalorder %s22, 0
      %p169 = por %p167, %p168
      %p170 = scmp.ne.s32.totalorder %s158, %s159
      %p171 = scmp.eq.s32.totalorder %s23, 1
      %p172 = por %p170, %p171
      %p174 = scmp.ne.s32.totalorder %s159, %s173
      %p175 = scmp.eq.s32.totalorder %s23, 0
      %p176 = por %p174, %p175
      %s178 = sadd.s32 %s177, 1
      %p181 = scmp.eq.s32.totalorder %s17, 1
      %p182 = scmp.ne.s32.totalorder %s177, %s179
      %p183 = scmp.eq.s32.totalorder %s17, 0
      %p184 = por %p182, %p183
      %p185 = scmp.ne.s32.totalorder %s177, %s179
      %p186 = scmp.eq.s32.totalorder %s22, 1
      %p187 = por %p185, %p186
      %p188 = scmp.ne.s32.totalorder %s179, %s180
      %p189 = scmp.eq.s32.totalorder %s22, 0
      %p190 = por %p188, %p189
      %p191 = scmp.ne.s32.totalorder %s179, %s180
      %p192 = scmp.eq.s32.totalorder %s23, 1
      %p193 = por %p191, %p192
      %p195 = scmp.ne.s32.totalorder %s180, %s194
      %p196 = scmp.eq.s32.totalorder %s23, 0
      %p197 = por %p195, %p196
      %s198 = ssub.s32 %s17, %s24
      %p199 = scmp.eq.s32.totalorder %s198, 0
      %s201 = sadd.s32 %s200, 1
      %s202 = scalar_select %p199, %s200, %s201
      %p205 = pneg %p199
      %p206 = scmp.eq.s32.totalorder %s17, 1
      %p207 = por %p205, %p206
      %p208 = scmp.ne.s32.totalorder %s200, %s203
      %p209 = scmp.eq.s32.totalorder %s17, 0
      %p210 = por %p208, %p209
      %p211 = scmp.ne.s32.totalorder %s200, %s203
      %p212 = scmp.eq.s32.totalorder %s22, 1
      %p213 = por %p211, %p212
      %p214 = scmp.ne.s32.totalorder %s203, %s204
      %p215 = scmp.eq.s32.totalorder %s22, 0
      %p216 = por %p214, %p215
      %p217 = scmp.ne.s32.totalorder %s203, %s204
      %p218 = scmp.eq.s32.totalorder %s23, 1
      %p219 = por %p217, %p218
      %p221 = scmp.ne.s32.totalorder %s204, %s220
      %p222 = scmp.eq.s32.totalorder %s23, 0
      %p223 = por %p221, %p222
      %p224 = scmp.le.s32.totalorder 1, %s17
      %p225 = scmp.lt.s32.totalorder %s17, 3
      %p226 = pnand %p224, %p225
      %p227 = pneg %p226
      // Predicated region
      $region9: #{cnn_forward.1} parent=5 // pred_check
        _
      $region10: #{cnn_forward.1} parent=5 // pred_check_branch
        %229 = sbr.rel (%p226) target = $region12
      $region11: #{cnn_forward.1} parent=5 // pred_region
        %s230 = ssub.s32 %s17, 1
        // Predicated region
        $region13: #{cnn_forward.1} parent=11 // pred_check
          %p231 = pneg %p64
        $region14: #{cnn_forward.1} parent=11 // pred_check_branch
          %233 = sbr.rel (%p231) target = $region16
        $region15: #{cnn_forward.1} parent=11 // pred_region
          _
        $region16: #{cnn_forward.1} parent=11 // pred_fallthru
          _
        // Predicated region
        $region17: #{cnn_forward.1} parent=11 // pred_check
          %p234 = pneg %p85
        $region18: #{cnn_forward.1} parent=11 // pred_check_branch
          %236 = sbr.rel (%p234) target = $region20
        $region19: #{cnn_forward.1} parent=11 // pred_region
          _
        $region20: #{cnn_forward.1} parent=11 // pred_fallthru
          _
        // Predicated region
        $region21: #{cnn_forward.1} parent=11 // pred_check
          %p237 = pneg %p106
        $region22: #{cnn_forward.1} parent=11 // pred_check_branch
          %239 = sbr.rel (%p237) target = $region24
        $region23: #{cnn_forward.1} parent=11 // pred_region
          _
        $region24: #{cnn_forward.1} parent=11 // pred_fallthru
          _
        // Predicated region
        $region25: #{cnn_forward.1} parent=11 // pred_check
          %p240 = pneg %p127
        $region26: #{cnn_forward.1} parent=11 // pred_check_branch
          %242 = sbr.rel (%p240) target = $region28
        $region27: #{cnn_forward.1} parent=11 // pred_region
          _
        $region28: #{cnn_forward.1} parent=11 // pred_fallthru
          _
        // Predicated region
        $region29: #{cnn_forward.1} parent=11 // pred_check
          %p243 = pneg %p148
        $region30: #{cnn_forward.1} parent=11 // pred_check_branch
          %245 = sbr.rel (%p243) target = $region32
        $region31: #{cnn_forward.1} parent=11 // pred_region
          _
        $region32: #{cnn_forward.1} parent=11 // pred_fallthru
          _
        // Predicated region
        $region33: #{cnn_forward.1} parent=11 // pred_check
          %p246 = pneg %p169
        $region34: #{cnn_forward.1} parent=11 // pred_check_branch
          %248 = sbr.rel (%p246) target = $region36
        $region35: #{cnn_forward.1} parent=11 // pred_region
          _
        $region36: #{cnn_forward.1} parent=11 // pred_fallthru
          _
        // Predicated region
        $region37: #{cnn_forward.1} parent=11 // pred_check
          %p249 = pneg %p190
        $region38: #{cnn_forward.1} parent=11 // pred_check_branch
          %251 = sbr.rel (%p249) target = $region40
        $region39: #{cnn_forward.1} parent=11 // pred_region
          _
        $region40: #{cnn_forward.1} parent=11 // pred_fallthru
          _
      $region12: #{cnn_forward.1} parent=5 // pred_fallthru
        _
      %p252 = scmp.lt.s32.totalorder %s17, 2
      // Predicated region
      $region41: #{cnn_forward.1} parent=5 // pred_check
        %p253 = pneg %p252
      $region42: #{cnn_forward.1} parent=5 // pred_check_branch
        %255 = sbr.rel (%p253) target = $region44
      $region43: #{cnn_forward.1} parent=5 // pred_region
        // Predicated region
        $region45: #{cnn_forward.1} parent=43 // pred_check
          %p256 = pneg %p37
        $region46: #{cnn_forward.1} parent=43 // pred_check_branch
          %258 = sbr.rel (%p256) target = $region48
        $region47: #{cnn_forward.1} parent=43 // pred_region
          %s259 = smul.u32 8, %s17
          %p260 = scmp.lt.s32.totalorder %s259, 15
          %s261 = scalar_select %p260, %s259, 15
          %s262 = smul.addr %s261, 2
          %s263 = smul.addr %s262, 8
          %s264 = scalar_lea.vmem %s0, %s263
          %s265 = smul.u32 8, %s17
        $region48: #{cnn_forward.1} parent=43 // pred_fallthru
          _
      $region44: #{cnn_forward.1} parent=5 // pred_fallthru
        _
      %p266 = scmp.le.s32.totalorder 1, %s17
      %p267 = scmp.lt.s32.totalorder %s17, 3
      %p268 = pnand %p266, %p267
      %p269 = pneg %p268
      // Predicated region
      $region49: #{cnn_forward.1} parent=5 // pred_check
        _
      $region50: #{cnn_forward.1} parent=5 // pred_check_branch
        %271 = sbr.rel (%p268) target = $region52
      $region51: #{cnn_forward.1} parent=5 // pred_region
        %s272 = ssub.s32 %s17, 1
        %s273 = smul.u32 8, %s22
        %p274 = scmp.lt.s32.totalorder %s273, 15
        %s275 = scalar_select %p274, %s273, 15
        %s276 = smul.addr %s275, 2
        %s277 = smul.addr %s276, 8
        %s278 = scalar_lea.vmem %s0, %s277
        %p279 = pneg %p43
        %p280 = pneg %p40
        %p281 = pneg %p64
        %p282 = pneg %p61
        %p283 = pneg %p85
        %p284 = pneg %p82
        %p285 = pneg %p106
        %p286 = pneg %p103
        %p287 = pneg %p127
        %p288 = pneg %p124
        %p289 = pneg %p148
        %p290 = pneg %p145
        %p291 = pneg %p169
        %p292 = pneg %p166
        %p293 = pneg %p190
        %p294 = pneg %p187
        %p295 = pneg %p216
        %p296 = pneg %p213
        %s297 = sand.u32 %s203, 1
        %s298 = scalar_lea.sflag [#allocation5], %s297
        %s299 = sand.u32 %s203, 1
        %s300 = smul.addr %s299, 8
        %s301 = scalar_lea.vmem [#allocation4], %s300
        %s302 = smul.u32 8, %s22
        %p303 = scmp.lt.s32.totalorder %s302, 15
        %s304 = scalar_select %p303, %s302, 15
        %s305 = smul.addr %s304, 2
        %s306 = smul.addr %s305, 8
        %s307 = scalar_lea.vmem %s0, %s306
        %s308 = smul.u32 8, %s22
        %v310 = vld [vmem:[%s307] sm:$0xff]
        %v311 = vld [vmem:[%s307 + $0x8] sm:$0x1]
        %v312 = vld [vmem:[%s307 + $0x10] sm:$0xff]
        %v313 = vld [vmem:[%s307 + $0x18] sm:$0x1]
        %v314 = vld [vmem:[%s307 + $0x20] sm:$0xff]
        %v315 = vld [vmem:[%s307 + $0x28] sm:$0x1]
        %v316 = vld [vmem:[%s307 + $0x30] sm:$0xff]
        %v317 = vld [vmem:[%s307 + $0x38] sm:$0x1]
        %v318 = vld [vmem:[%s307 + $0x40] sm:$0xff]
        %v319 = vld [vmem:[%s307 + $0x48] sm:$0x1]
        %v320 = vld [vmem:[%s307 + $0x50] sm:$0xff]
        %v321 = vld [vmem:[%s307 + $0x58] sm:$0x1]
        %v322 = vld [vmem:[%s307 + $0x60] sm:$0xff]
        %v323 = vld [vmem:[%s307 + $0x68] sm:$0x1]
        %v324 = vld [vmem:[%s307 + $0x70] sm:$0xff]
        %v325 = vld [vmem:[%s307 + $0x78] sm:$0x1]
        %342 = vrot.lane.b32.xlu0 %v310, 30
        %v343 = vpop.permute.xlu0 %342
        %344 = vrot.lane.b32.xlu0 %v311, 30
        %v345 = vpop.permute.xlu0 %344
        %346 = vrot.lane.b32.xlu0 %v312, 30
        %v347 = vpop.permute.xlu0 %346
        %348 = vrot.lane.b32.xlu0 %v313, 30
        %v349 = vpop.permute.xlu0 %348
        %350 = vrot.lane.b32.xlu0 %v314, 30
        %v351 = vpop.permute.xlu0 %350
        %352 = vrot.lane.b32.xlu0 %v315, 30
        %v353 = vpop.permute.xlu0 %352
        %354 = vrot.lane.b32.xlu0 %v316, 30
        %v355 = vpop.permute.xlu0 %354
        %356 = vrot.lane.b32.xlu0 %v317, 30
        %v357 = vpop.permute.xlu0 %356
        %358 = vrot.lane.b32.xlu0 %v318, 30
        %v359 = vpop.permute.xlu0 %358
        %360 = vrot.lane.b32.xlu0 %v319, 30
        %v361 = vpop.permute.xlu0 %360
        %362 = vrot.lane.b32.xlu0 %v320, 30
        %v363 = vpop.permute.xlu0 %362
        %364 = vrot.lane.b32.xlu0 %v321, 30
        %v365 = vpop.permute.xlu0 %364
        %366 = vrot.lane.b32.xlu0 %v322, 30
        %v367 = vpop.permute.xlu0 %366
        %368 = vrot.lane.b32.xlu0 %v323, 30
        %v369 = vpop.permute.xlu0 %368
        %370 = vrot.lane.b32.xlu0 %v324, 30
        %v371 = vpop.permute.xlu0 %370
        %372 = vrot.lane.b32.xlu0 %v325, 30
        %v373 = vpop.permute.xlu0 %372
        %390 = vrot.lane.b32.xlu0 %v310, 60
        %v391 = vpop.permute.xlu0 %390
        %392 = vrot.lane.b32.xlu0 %v311, 60
        %v393 = vpop.permute.xlu0 %392
        %394 = vrot.lane.b32.xlu0 %v312, 60
        %v395 = vpop.permute.xlu0 %394
        %396 = vrot.lane.b32.xlu0 %v313, 60
        %v397 = vpop.permute.xlu0 %396
        %398 = vrot.lane.b32.xlu0 %v314, 60
        %v399 = vpop.permute.xlu0 %398
        %400 = vrot.lane.b32.xlu0 %v315, 60
        %v401 = vpop.permute.xlu0 %400
        %402 = vrot.lane.b32.xlu0 %v316, 60
        %v403 = vpop.permute.xlu0 %402
        %404 = vrot.lane.b32.xlu0 %v317, 60
        %v405 = vpop.permute.xlu0 %404
        %406 = vrot.lane.b32.xlu0 %v318, 60
        %v407 = vpop.permute.xlu0 %406
        %408 = vrot.lane.b32.xlu0 %v319, 60
        %v409 = vpop.permute.xlu0 %408
        %410 = vrot.lane.b32.xlu0 %v320, 60
        %v411 = vpop.permute.xlu0 %410
        %412 = vrot.lane.b32.xlu0 %v321, 60
        %v413 = vpop.permute.xlu0 %412
        %414 = vrot.lane.b32.xlu0 %v322, 60
        %v415 = vpop.permute.xlu0 %414
        %416 = vrot.lane.b32.xlu0 %v323, 60
        %v417 = vpop.permute.xlu0 %416
        %418 = vrot.lane.b32.xlu0 %v324, 60
        %v419 = vpop.permute.xlu0 %418
        %420 = vrot.lane.b32.xlu0 %v325, 60
        %v421 = vpop.permute.xlu0 %420
        %438 = vrot.lane.b32.xlu0 %v310, 90
        %v439 = vpop.permute.xlu0 %438
        %440 = vrot.lane.b32.xlu0 %v311, 90
        %v441 = vpop.permute.xlu0 %440
        %442 = vrot.lane.b32.xlu0 %v312, 90
        %v443 = vpop.permute.xlu0 %442
        %444 = vrot.lane.b32.xlu0 %v313, 90
        %v445 = vpop.permute.xlu0 %444
        %446 = vrot.lane.b32.xlu0 %v314, 90
        %v447 = vpop.permute.xlu0 %446
        %448 = vrot.lane.b32.xlu0 %v315, 90
        %v449 = vpop.permute.xlu0 %448
        %450 = vrot.lane.b32.xlu0 %v316, 90
        %v451 = vpop.permute.xlu0 %450
        %452 = vrot.lane.b32.xlu0 %v317, 90
        %v453 = vpop.permute.xlu0 %452
        %454 = vrot.lane.b32.xlu0 %v318, 90
        %v455 = vpop.permute.xlu0 %454
        %456 = vrot.lane.b32.xlu0 %v319, 90
        %v457 = vpop.permute.xlu0 %456
        %458 = vrot.lane.b32.xlu0 %v320, 90
        %v459 = vpop.permute.xlu0 %458
        %460 = vrot.lane.b32.xlu0 %v321, 90
        %v461 = vpop.permute.xlu0 %460
        %462 = vrot.lane.b32.xlu0 %v322, 90
        %v463 = vpop.permute.xlu0 %462
        %464 = vrot.lane.b32.xlu0 %v323, 90
        %v465 = vpop.permute.xlu0 %464
        %466 = vrot.lane.b32.xlu0 %v324, 90
        %v467 = vpop.permute.xlu0 %466
        %468 = vrot.lane.b32.xlu0 %v325, 90
        %v469 = vpop.permute.xlu0 %468
        %486 = vrot.lane.b32.xlu0 %v310, 120
        %v487 = vpop.permute.xlu0 %486
        %488 = vrot.lane.b32.xlu0 %v311, 120
        %v489 = vpop.permute.xlu0 %488
        %490 = vrot.lane.b32.xlu0 %v312, 120
        %v491 = vpop.permute.xlu0 %490
        %492 = vrot.lane.b32.xlu0 %v313, 120
        %v493 = vpop.permute.xlu0 %492
        %494 = vrot.lane.b32.xlu0 %v314, 120
        %v495 = vpop.permute.xlu0 %494
        %496 = vrot.lane.b32.xlu0 %v315, 120
        %v497 = vpop.permute.xlu0 %496
        %498 = vrot.lane.b32.xlu0 %v316, 120
        %v499 = vpop.permute.xlu0 %498
        %500 = vrot.lane.b32.xlu0 %v317, 120
        %v501 = vpop.permute.xlu0 %500
        %502 = vrot.lane.b32.xlu0 %v318, 120
        %v503 = vpop.permute.xlu0 %502
        %504 = vrot.lane.b32.xlu0 %v319, 120
        %v505 = vpop.permute.xlu0 %504
        %506 = vrot.lane.b32.xlu0 %v320, 120
        %v507 = vpop.permute.xlu0 %506
        %508 = vrot.lane.b32.xlu0 %v321, 120
        %v509 = vpop.permute.xlu0 %508
        %510 = vrot.lane.b32.xlu0 %v322, 120
        %v511 = vpop.permute.xlu0 %510
        %512 = vrot.lane.b32.xlu0 %v323, 120
        %v513 = vpop.permute.xlu0 %512
        %514 = vrot.lane.b32.xlu0 %v324, 120
        %v515 = vpop.permute.xlu0 %514
        %516 = vrot.lane.b32.xlu0 %v325, 120
        %v517 = vpop.permute.xlu0 %516
        %534 = vrot.lane.b32.xlu0 %v310, 22
        %v535 = vpop.permute.xlu0 %534
        %536 = vrot.lane.b32.xlu0 %v311, 22
        %v537 = vpop.permute.xlu0 %536
        %538 = vrot.lane.b32.xlu0 %v312, 22
        %v539 = vpop.permute.xlu0 %538
        %540 = vrot.lane.b32.xlu0 %v313, 22
        %v541 = vpop.permute.xlu0 %540
        %542 = vrot.lane.b32.xlu0 %v314, 22
        %v543 = vpop.permute.xlu0 %542
        %544 = vrot.lane.b32.xlu0 %v315, 22
        %v545 = vpop.permute.xlu0 %544
        %546 = vrot.lane.b32.xlu0 %v316, 22
        %v547 = vpop.permute.xlu0 %546
        %548 = vrot.lane.b32.xlu0 %v317, 22
        %v549 = vpop.permute.xlu0 %548
        %550 = vrot.lane.b32.xlu0 %v318, 22
        %v551 = vpop.permute.xlu0 %550
        %552 = vrot.lane.b32.xlu0 %v319, 22
        %v553 = vpop.permute.xlu0 %552
        %554 = vrot.lane.b32.xlu0 %v320, 22
        %v555 = vpop.permute.xlu0 %554
        %556 = vrot.lane.b32.xlu0 %v321, 22
        %v557 = vpop.permute.xlu0 %556
        %558 = vrot.lane.b32.xlu0 %v322, 22
        %v559 = vpop.permute.xlu0 %558
        %560 = vrot.lane.b32.xlu0 %v323, 22
        %v561 = vpop.permute.xlu0 %560
        %562 = vrot.lane.b32.xlu0 %v324, 22
        %v563 = vpop.permute.xlu0 %562
        %564 = vrot.lane.b32.xlu0 %v325, 22
        %v565 = vpop.permute.xlu0 %564
        %582 = vrot.lane.b32.xlu0 %v310, 52
        %v583 = vpop.permute.xlu0 %582
        %584 = vrot.lane.b32.xlu0 %v311, 52
        %v585 = vpop.permute.xlu0 %584
        %586 = vrot.lane.b32.xlu0 %v312, 52
        %v587 = vpop.permute.xlu0 %586
        %588 = vrot.lane.b32.xlu0 %v313, 52
        %v589 = vpop.permute.xlu0 %588
        %590 = vrot.lane.b32.xlu0 %v314, 52
        %v591 = vpop.permute.xlu0 %590
        %592 = vrot.lane.b32.xlu0 %v315, 52
        %v593 = vpop.permute.xlu0 %592
        %594 = vrot.lane.b32.xlu0 %v316, 52
        %v595 = vpop.permute.xlu0 %594
        %596 = vrot.lane.b32.xlu0 %v317, 52
        %v597 = vpop.permute.xlu0 %596
        %598 = vrot.lane.b32.xlu0 %v318, 52
        %v599 = vpop.permute.xlu0 %598
        %600 = vrot.lane.b32.xlu0 %v319, 52
        %v601 = vpop.permute.xlu0 %600
        %602 = vrot.lane.b32.xlu0 %v320, 52
        %v603 = vpop.permute.xlu0 %602
        %604 = vrot.lane.b32.xlu0 %v321, 52
        %v605 = vpop.permute.xlu0 %604
        %606 = vrot.lane.b32.xlu0 %v322, 52
        %v607 = vpop.permute.xlu0 %606
        %608 = vrot.lane.b32.xlu0 %v323, 52
        %v609 = vpop.permute.xlu0 %608
        %610 = vrot.lane.b32.xlu0 %v324, 52
        %v611 = vpop.permute.xlu0 %610
        %612 = vrot.lane.b32.xlu0 %v325, 52
        %v613 = vpop.permute.xlu0 %612
        %630 = vrot.lane.b32.xlu0 %v310, 82
        %v631 = vpop.permute.xlu0 %630
        %632 = vrot.lane.b32.xlu0 %v311, 82
        %v633 = vpop.permute.xlu0 %632
        %634 = vrot.lane.b32.xlu0 %v312, 82
        %v635 = vpop.permute.xlu0 %634
        %636 = vrot.lane.b32.xlu0 %v313, 82
        %v637 = vpop.permute.xlu0 %636
        %638 = vrot.lane.b32.xlu0 %v314, 82
        %v639 = vpop.permute.xlu0 %638
        %640 = vrot.lane.b32.xlu0 %v315, 82
        %v641 = vpop.permute.xlu0 %640
        %642 = vrot.lane.b32.xlu0 %v316, 82
        %v643 = vpop.permute.xlu0 %642
        %644 = vrot.lane.b32.xlu0 %v317, 82
        %v645 = vpop.permute.xlu0 %644
        %646 = vrot.lane.b32.xlu0 %v318, 82
        %v647 = vpop.permute.xlu0 %646
        %648 = vrot.lane.b32.xlu0 %v319, 82
        %v649 = vpop.permute.xlu0 %648
        %650 = vrot.lane.b32.xlu0 %v320, 82
        %v651 = vpop.permute.xlu0 %650
        %652 = vrot.lane.b32.xlu0 %v321, 82
        %v653 = vpop.permute.xlu0 %652
        %654 = vrot.lane.b32.xlu0 %v322, 82
        %v655 = vpop.permute.xlu0 %654
        %656 = vrot.lane.b32.xlu0 %v323, 82
        %v657 = vpop.permute.xlu0 %656
        %658 = vrot.lane.b32.xlu0 %v324, 82
        %v659 = vpop.permute.xlu0 %658
        %660 = vrot.lane.b32.xlu0 %v325, 82
        %v661 = vpop.permute.xlu0 %660
        %vm678 = vcmask 244736
        %v679 = vsel %vm678, %v310, %v343
        %v680 = vsel %vm678, %v311, %v345
        %v681 = vsel %vm678, %v312, %v347
        %v682 = vsel %vm678, %v313, %v349
        %v683 = vsel %vm678, %v314, %v351
        %v684 = vsel %vm678, %v315, %v353
        %v685 = vsel %vm678, %v316, %v355
        %v686 = vsel %vm678, %v317, %v357
        %v687 = vsel %vm678, %v318, %v359
        %v688 = vsel %vm678, %v319, %v361
        %v689 = vsel %vm678, %v320, %v363
        %v690 = vsel %vm678, %v321, %v365
        %v691 = vsel %vm678, %v322, %v367
        %v692 = vsel %vm678, %v323, %v369
        %v693 = vsel %vm678, %v324, %v371
        %v694 = vsel %vm678, %v325, %v373
        %vm695 = vcmask 490496
        %v696 = vsel %vm695, %v679, %v391
        %v697 = vsel %vm695, %v680, %v393
        %v698 = vsel %vm695, %v681, %v395
        %v699 = vsel %vm695, %v682, %v397
        %v700 = vsel %vm695, %v683, %v399
        %v701 = vsel %vm695, %v684, %v401
        %v702 = vsel %vm695, %v685, %v403
        %v703 = vsel %vm695, %v686, %v405
        %v704 = vsel %vm695, %v687, %v407
        %v705 = vsel %vm695, %v688, %v409
        %v706 = vsel %vm695, %v689, %v411
        %v707 = vsel %vm695, %v690, %v413
        %v708 = vsel %vm695, %v691, %v415
        %v709 = vsel %vm695, %v692, %v417
        %v710 = vsel %vm695, %v693, %v419
        %v711 = vsel %vm695, %v694, %v421
        %vm712 = vcmask 736256
        %v713 = vsel %vm712, %v696, %v439
        %v714 = vsel %vm712, %v697, %v441
        %v715 = vsel %vm712, %v698, %v443
        %v716 = vsel %vm712, %v699, %v445
        %v717 = vsel %vm712, %v700, %v447
        %v718 = vsel %vm712, %v701, %v449
        %v719 = vsel %vm712, %v702, %v451
        %v720 = vsel %vm712, %v703, %v453
        %v721 = vsel %vm712, %v704, %v455
        %v722 = vsel %vm712, %v705, %v457
        %v723 = vsel %vm712, %v706, %v459
        %v724 = vsel %vm712, %v707, %v461
        %v725 = vsel %vm712, %v708, %v463
        %v726 = vsel %vm712, %v709, %v465
        %v727 = vsel %vm712, %v710, %v467
        %v728 = vsel %vm712, %v711, %v469
        %vm729 = vcmask 982016
        %v730 = vsel %vm729, %v713, %v487
        %v731 = vsel %vm729, %v714, %v489
        %v732 = vsel %vm729, %v715, %v491
        %v733 = vsel %vm729, %v716, %v493
        %v734 = vsel %vm729, %v717, %v495
        %v735 = vsel %vm729, %v718, %v497
        %v736 = vsel %vm729, %v719, %v499
        %v737 = vsel %vm729, %v720, %v501
        %v738 = vsel %vm729, %v721, %v503
        %v739 = vsel %vm729, %v722, %v505
        %v740 = vsel %vm729, %v723, %v507
        %v741 = vsel %vm729, %v724, %v509
        %v742 = vsel %vm729, %v725, %v511
        %v743 = vsel %vm729, %v726, %v513
        %v744 = vsel %vm729, %v727, %v515
        %v745 = vsel %vm729, %v728, %v517
        %vm746 = vcmask 179200
        %v747 = vsel %vm746, %v487, %v535
        %v748 = vsel %vm746, %v489, %v537
        %v749 = vsel %vm746, %v491, %v539
        %v750 = vsel %vm746, %v493, %v541
        %v751 = vsel %vm746, %v495, %v543
        %v752 = vsel %vm746, %v497, %v545
        %v753 = vsel %vm746, %v499, %v547
        %v754 = vsel %vm746, %v501, %v549
        %v755 = vsel %vm746, %v503, %v551
        %v756 = vsel %vm746, %v505, %v553
        %v757 = vsel %vm746, %v507, %v555
        %v758 = vsel %vm746, %v509, %v557
        %v759 = vsel %vm746, %v511, %v559
        %v760 = vsel %vm746, %v513, %v561
        %v761 = vsel %vm746, %v515, %v563
        %v762 = vsel %vm746, %v517, %v565
        %vm763 = vcmask 424960
        %v764 = vsel %vm763, %v747, %v583
        %v765 = vsel %vm763, %v748, %v585
        %v766 = vsel %vm763, %v749, %v587
        %v767 = vsel %vm763, %v750, %v589
        %v768 = vsel %vm763, %v751, %v591
        %v769 = vsel %vm763, %v752, %v593
        %v770 = vsel %vm763, %v753, %v595
        %v771 = vsel %vm763, %v754, %v597
        %v772 = vsel %vm763, %v755, %v599
        %v773 = vsel %vm763, %v756, %v601
        %v774 = vsel %vm763, %v757, %v603
        %v775 = vsel %vm763, %v758, %v605
        %v776 = vsel %vm763, %v759, %v607
        %v777 = vsel %vm763, %v760, %v609
        %v778 = vsel %vm763, %v761, %v611
        %v779 = vsel %vm763, %v762, %v613
        %vm780 = vcmask 670720
        %v781 = vsel %vm780, %v764, %v631
        %v782 = vsel %vm780, %v765, %v633
        %v783 = vsel %vm780, %v766, %v635
        %v784 = vsel %vm780, %v767, %v637
        %v785 = vsel %vm780, %v768, %v639
        %v786 = vsel %vm780, %v769, %v641
        %v787 = vsel %vm780, %v770, %v643
        %v788 = vsel %vm780, %v771, %v645
        %v789 = vsel %vm780, %v772, %v647
        %v790 = vsel %vm780, %v773, %v649
        %v791 = vsel %vm780, %v774, %v651
        %v792 = vsel %vm780, %v775, %v653
        %v793 = vsel %vm780, %v776, %v655
        %v794 = vsel %vm780, %v777, %v657
        %v795 = vsel %vm780, %v778, %v659
        %v796 = vsel %vm780, %v779, %v661
        %797 = vrot.lane.b32.xlu0 %v310, 98
        %v798 = vpop.permute.xlu0 %797
        %799 = vrot.lane.b32.xlu0 %v311, 98
        %v800 = vpop.permute.xlu0 %799
        %801 = vrot.lane.b32.xlu0 %v312, 98
        %v802 = vpop.permute.xlu0 %801
        %803 = vrot.lane.b32.xlu0 %v313, 98
        %v804 = vpop.permute.xlu0 %803
        %805 = vrot.lane.b32.xlu0 %v314, 98
        %v806 = vpop.permute.xlu0 %805
        %807 = vrot.lane.b32.xlu0 %v315, 98
        %v808 = vpop.permute.xlu0 %807
        %809 = vrot.lane.b32.xlu0 %v316, 98
        %v810 = vpop.permute.xlu0 %809
        %811 = vrot.lane.b32.xlu0 %v317, 98
        %v812 = vpop.permute.xlu0 %811
        %813 = vrot.lane.b32.xlu0 %v318, 98
        %v814 = vpop.permute.xlu0 %813
        %815 = vrot.lane.b32.xlu0 %v319, 98
        %v816 = vpop.permute.xlu0 %815
        %817 = vrot.lane.b32.xlu0 %v320, 98
        %v818 = vpop.permute.xlu0 %817
        %819 = vrot.lane.b32.xlu0 %v321, 98
        %v820 = vpop.permute.xlu0 %819
        %821 = vrot.lane.b32.xlu0 %v322, 98
        %v822 = vpop.permute.xlu0 %821
        %823 = vrot.lane.b32.xlu0 %v323, 98
        %v824 = vpop.permute.xlu0 %823
        %825 = vrot.lane.b32.xlu0 %v324, 98
        %v826 = vpop.permute.xlu0 %825
        %827 = vrot.lane.b32.xlu0 %v325, 98
        %v828 = vpop.permute.xlu0 %827
        %v845 = vsel %vm678, %v798, %v310
        %v846 = vsel %vm678, %v800, %v311
        %v847 = vsel %vm678, %v802, %v312
        %v848 = vsel %vm678, %v804, %v313
        %v849 = vsel %vm678, %v806, %v314
        %v850 = vsel %vm678, %v808, %v315
        %v851 = vsel %vm678, %v810, %v316
        %v852 = vsel %vm678, %v812, %v317
        %v853 = vsel %vm678, %v814, %v318
        %v854 = vsel %vm678, %v816, %v319
        %v855 = vsel %vm678, %v818, %v320
        %v856 = vsel %vm678, %v820, %v321
        %v857 = vsel %vm678, %v822, %v322
        %v858 = vsel %vm678, %v824, %v323
        %v859 = vsel %vm678, %v826, %v324
        %v860 = vsel %vm678, %v828, %v325
        %v861 = vsel %vm695, %v845, %v343
        %v862 = vsel %vm695, %v846, %v345
        %v863 = vsel %vm695, %v847, %v347
        %v864 = vsel %vm695, %v848, %v349
        %v865 = vsel %vm695, %v849, %v351
        %v866 = vsel %vm695, %v850, %v353
        %v867 = vsel %vm695, %v851, %v355
        %v868 = vsel %vm695, %v852, %v357
        %v869 = vsel %vm695, %v853, %v359
        %v870 = vsel %vm695, %v854, %v361
        %v871 = vsel %vm695, %v855, %v363
        %v872 = vsel %vm695, %v856, %v365
        %v873 = vsel %vm695, %v857, %v367
        %v874 = vsel %vm695, %v858, %v369
        %v875 = vsel %vm695, %v859, %v371
        %v876 = vsel %vm695, %v860, %v373
        %v877 = vsel %vm712, %v861, %v391
        %v878 = vsel %vm712, %v862, %v393
        %v879 = vsel %vm712, %v863, %v395
        %v880 = vsel %vm712, %v864, %v397
        %v881 = vsel %vm712, %v865, %v399
        %v882 = vsel %vm712, %v866, %v401
        %v883 = vsel %vm712, %v867, %v403
        %v884 = vsel %vm712, %v868, %v405
        %v885 = vsel %vm712, %v869, %v407
        %v886 = vsel %vm712, %v870, %v409
        %v887 = vsel %vm712, %v871, %v411
        %v888 = vsel %vm712, %v872, %v413
        %v889 = vsel %vm712, %v873, %v415
        %v890 = vsel %vm712, %v874, %v417
        %v891 = vsel %vm712, %v875, %v419
        %v892 = vsel %vm712, %v876, %v421
        %v893 = vsel %vm729, %v877, %v439
        %v894 = vsel %vm729, %v878, %v441
        %v895 = vsel %vm729, %v879, %v443
        %v896 = vsel %vm729, %v880, %v445
        %v897 = vsel %vm729, %v881, %v447
        %v898 = vsel %vm729, %v882, %v449
        %v899 = vsel %vm729, %v883, %v451
        %v900 = vsel %vm729, %v884, %v453
        %v901 = vsel %vm729, %v885, %v455
        %v902 = vsel %vm729, %v886, %v457
        %v903 = vsel %vm729, %v887, %v459
        %v904 = vsel %vm729, %v888, %v461
        %v905 = vsel %vm729, %v889, %v463
        %v906 = vsel %vm729, %v890, %v465
        %v907 = vsel %vm729, %v891, %v467
        %v908 = vsel %vm729, %v892, %v469
        %v909 = vsel %vm746, %v439, %v487
        %v910 = vsel %vm746, %v441, %v489
        %v911 = vsel %vm746, %v443, %v491
        %v912 = vsel %vm746, %v445, %v493
        %v913 = vsel %vm746, %v447, %v495
        %v914 = vsel %vm746, %v449, %v497
        %v915 = vsel %vm746, %v451, %v499
        %v916 = vsel %vm746, %v453, %v501
        %v917 = vsel %vm746, %v455, %v503
        %v918 = vsel %vm746, %v457, %v505
        %v919 = vsel %vm746, %v459, %v507
        %v920 = vsel %vm746, %v461, %v509
        %v921 = vsel %vm746, %v463, %v511
        %v922 = vsel %vm746, %v465, %v513
        %v923 = vsel %vm746, %v467, %v515
        %v924 = vsel %vm746, %v469, %v517
        %v925 = vsel %vm763, %v909, %v535
        %v926 = vsel %vm763, %v910, %v537
        %v927 = vsel %vm763, %v911, %v539
        %v928 = vsel %vm763, %v912, %v541
        %v929 = vsel %vm763, %v913, %v543
        %v930 = vsel %vm763, %v914, %v545
        %v931 = vsel %vm763, %v915, %v547
        %v932 = vsel %vm763, %v916, %v549
        %v933 = vsel %vm763, %v917, %v551
        %v934 = vsel %vm763, %v918, %v553
        %v935 = vsel %vm763, %v919, %v555
        %v936 = vsel %vm763, %v920, %v557
        %v937 = vsel %vm763, %v921, %v559
        %v938 = vsel %vm763, %v922, %v561
        %v939 = vsel %vm763, %v923, %v563
        %v940 = vsel %vm763, %v924, %v565
        %v941 = vsel %vm780, %v925, %v583
        %v942 = vsel %vm780, %v926, %v585
        %v943 = vsel %vm780, %v927, %v587
        %v944 = vsel %vm780, %v928, %v589
        %v945 = vsel %vm780, %v929, %v591
        %v946 = vsel %vm780, %v930, %v593
        %v947 = vsel %vm780, %v931, %v595
        %v948 = vsel %vm780, %v932, %v597
        %v949 = vsel %vm780, %v933, %v599
        %v950 = vsel %vm780, %v934, %v601
        %v951 = vsel %vm780, %v935, %v603
        %v952 = vsel %vm780, %v936, %v605
        %v953 = vsel %vm780, %v937, %v607
        %v954 = vsel %vm780, %v938, %v609
        %v955 = vsel %vm780, %v939, %v611
        %v956 = vsel %vm780, %v940, %v613
        %957 = vrot.lane.b32.xlu0 %v310, 68
        %v958 = vpop.permute.xlu0 %957
        %959 = vrot.lane.b32.xlu0 %v312, 68
        %v960 = vpop.permute.xlu0 %959
        %961 = vrot.lane.b32.xlu0 %v314, 68
        %v962 = vpop.permute.xlu0 %961
        %963 = vrot.lane.b32.xlu0 %v316, 68
        %v964 = vpop.permute.xlu0 %963
        %965 = vrot.lane.b32.xlu0 %v318, 68
        %v966 = vpop.permute.xlu0 %965
        %967 = vrot.lane.b32.xlu0 %v320, 68
        %v968 = vpop.permute.xlu0 %967
        %969 = vrot.lane.b32.xlu0 %v322, 68
        %v970 = vpop.permute.xlu0 %969
        %971 = vrot.lane.b32.xlu0 %v324, 68
        %v972 = vpop.permute.xlu0 %971
        %v981 = vsel %vm678, %v958, %v798
        %v982 = vsel %vm678, %v960, %v802
        %v983 = vsel %vm678, %v962, %v806
        %v984 = vsel %vm678, %v964, %v810
        %v985 = vsel %vm678, %v966, %v814
        %v986 = vsel %vm678, %v968, %v818
        %v987 = vsel %vm678, %v970, %v822
        %v988 = vsel %vm678, %v972, %v826
        %v989 = vsel %vm695, %v981, %v310
        %v990 = vsel %vm695, %v982, %v312
        %v991 = vsel %vm695, %v983, %v314
        %v992 = vsel %vm695, %v984, %v316
        %v993 = vsel %vm695, %v985, %v318
        %v994 = vsel %vm695, %v986, %v320
        %v995 = vsel %vm695, %v987, %v322
        %v996 = vsel %vm695, %v988, %v324
        %v997 = vsel %vm712, %v989, %v343
        %v998 = vsel %vm712, %v990, %v347
        %v999 = vsel %vm712, %v991, %v351
        %v1000 = vsel %vm712, %v992, %v355
        %v1001 = vsel %vm712, %v993, %v359
        %v1002 = vsel %vm712, %v994, %v363
        %v1003 = vsel %vm712, %v995, %v367
        %v1004 = vsel %vm712, %v996, %v371
        %v1005 = vsel %vm729, %v997, %v391
        %v1006 = vsel %vm729, %v998, %v395
        %v1007 = vsel %vm729, %v999, %v399
        %v1008 = vsel %vm729, %v1000, %v403
        %v1009 = vsel %vm729, %v1001, %v407
        %v1010 = vsel %vm729, %v1002, %v411
        %v1011 = vsel %vm729, %v1003, %v415
        %v1012 = vsel %vm729, %v1004, %v419
        %v1013 = vsel %vm746, %v391, %v439
        %v1014 = vsel %vm746, %v395, %v443
        %v1015 = vsel %vm746, %v399, %v447
        %v1016 = vsel %vm746, %v403, %v451
        %v1017 = vsel %vm746, %v407, %v455
        %v1018 = vsel %vm746, %v411, %v459
        %v1019 = vsel %vm746, %v415, %v463
        %v1020 = vsel %vm746, %v419, %v467
        %v1021 = vsel %vm763, %v1013, %v487
        %v1022 = vsel %vm763, %v1014, %v491
        %v1023 = vsel %vm763, %v1015, %v495
        %v1024 = vsel %vm763, %v1016, %v499
        %v1025 = vsel %vm763, %v1017, %v503
        %v1026 = vsel %vm763, %v1018, %v507
        %v1027 = vsel %vm763, %v1019, %v511
        %v1028 = vsel %vm763, %v1020, %v515
        %v1029 = vsel %vm780, %v1021, %v535
        %v1030 = vsel %vm780, %v1022, %v539
        %v1031 = vsel %vm780, %v1023, %v543
        %v1032 = vsel %vm780, %v1024, %v547
        %v1033 = vsel %vm780, %v1025, %v551
        %v1034 = vsel %vm780, %v1026, %v555
        %v1035 = vsel %vm780, %v1027, %v559
        %v1036 = vsel %vm780, %v1028, %v563
        %1037 = vrot.lane.b32.xlu0 %v310, 38
        %v1038 = vpop.permute.xlu0 %1037
        %1039 = vrot.lane.b32.xlu0 %v312, 38
        %v1040 = vpop.permute.xlu0 %1039
        %1041 = vrot.lane.b32.xlu0 %v314, 38
        %v1042 = vpop.permute.xlu0 %1041
        %1043 = vrot.lane.b32.xlu0 %v316, 38
        %v1044 = vpop.permute.xlu0 %1043
        %1045 = vrot.lane.b32.xlu0 %v318, 38
        %v1046 = vpop.permute.xlu0 %1045
        %1047 = vrot.lane.b32.xlu0 %v320, 38
        %v1048 = vpop.permute.xlu0 %1047
        %1049 = vrot.lane.b32.xlu0 %v322, 38
        %v1050 = vpop.permute.xlu0 %1049
        %1051 = vrot.lane.b32.xlu0 %v324, 38
        %v1052 = vpop.permute.xlu0 %1051
        %v1061 = vsel %vm678, %v1038, %v958
        %v1062 = vsel %vm678, %v1040, %v960
        %v1063 = vsel %vm678, %v1042, %v962
        %v1064 = vsel %vm678, %v1044, %v964
        %v1065 = vsel %vm678, %v1046, %v966
        %v1066 = vsel %vm678, %v1048, %v968
        %v1067 = vsel %vm678, %v1050, %v970
        %v1068 = vsel %vm678, %v1052, %v972
        %v1069 = vsel %vm695, %v1061, %v798
        %v1070 = vsel %vm695, %v1062, %v802
        %v1071 = vsel %vm695, %v1063, %v806
        %v1072 = vsel %vm695, %v1064, %v810
        %v1073 = vsel %vm695, %v1065, %v814
        %v1074 = vsel %vm695, %v1066, %v818
        %v1075 = vsel %vm695, %v1067, %v822
        %v1076 = vsel %vm695, %v1068, %v826
        %v1077 = vsel %vm712, %v1069, %v310
        %v1078 = vsel %vm712, %v1070, %v312
        %v1079 = vsel %vm712, %v1071, %v314
        %v1080 = vsel %vm712, %v1072, %v316
        %v1081 = vsel %vm712, %v1073, %v318
        %v1082 = vsel %vm712, %v1074, %v320
        %v1083 = vsel %vm712, %v1075, %v322
        %v1084 = vsel %vm712, %v1076, %v324
        %v1085 = vsel %vm729, %v1077, %v343
        %v1086 = vsel %vm729, %v1078, %v347
        %v1087 = vsel %vm729, %v1079, %v351
        %v1088 = vsel %vm729, %v1080, %v355
        %v1089 = vsel %vm729, %v1081, %v359
        %v1090 = vsel %vm729, %v1082, %v363
        %v1091 = vsel %vm729, %v1083, %v367
        %v1092 = vsel %vm729, %v1084, %v371
        %v1093 = vsel %vm746, %v343, %v391
        %v1094 = vsel %vm746, %v347, %v395
        %v1095 = vsel %vm746, %v351, %v399
        %v1096 = vsel %vm746, %v355, %v403
        %v1097 = vsel %vm746, %v359, %v407
        %v1098 = vsel %vm746, %v363, %v411
        %v1099 = vsel %vm746, %v367, %v415
        %v1100 = vsel %vm746, %v371, %v419
        %v1101 = vsel %vm763, %v1093, %v439
        %v1102 = vsel %vm763, %v1094, %v443
        %v1103 = vsel %vm763, %v1095, %v447
        %v1104 = vsel %vm763, %v1096, %v451
        %v1105 = vsel %vm763, %v1097, %v455
        %v1106 = vsel %vm763, %v1098, %v459
        %v1107 = vsel %vm763, %v1099, %v463
        %v1108 = vsel %vm763, %v1100, %v467
        %v1109 = vsel %vm780, %v1101, %v487
        %v1110 = vsel %vm780, %v1102, %v491
        %v1111 = vsel %vm780, %v1103, %v495
        %v1112 = vsel %vm780, %v1104, %v499
        %v1113 = vsel %vm780, %v1105, %v503
        %v1114 = vsel %vm780, %v1106, %v507
        %v1115 = vsel %vm780, %v1107, %v511
        %v1116 = vsel %vm780, %v1108, %v515
        %v1117 = vld [vmem:[%s1] sm:$0xff]
        %v1118 = vld [vmem:[%s1 + $0x8] sm:$0xff]
        %v1119 = vld [vmem:[%s1 + $0x10] sm:$0x1]
        %v1120 = vld [vmem:[%s1 + $0x18] sm:$0x1]
        %v1121 = vld [vmem:[%s2] sm:$0x1]
        %v1122 = vld [vmem:[%s3] sm:$0xf]
        %v1123 = vld [vmem:[%s3 + $0x4] sm:$0xf]
        %v1124 = vld [vmem:[%s3 + $0x8] sm:$0xf]
        %v1125 = vld [vmem:[%s3 + $0xc] sm:$0xf]
        %v1126 = vld [vmem:[%s3 + $0x10] sm:$0xf]
        %v1127 = vld [vmem:[%s3 + $0x14] sm:$0xf]
        %v1128 = vld [vmem:[%s3 + $0x18] sm:$0xf]
        %v1129 = vld [vmem:[%s3 + $0x1c] sm:$0xf]
        %v1130 = vld [vmem:[%s3 + $0x20] sm:$0xf]
        %v1131 = vld [vmem:[%s3 + $0x24] sm:$0xf]
        %v1132 = vld [vmem:[%s3 + $0x28] sm:$0xf]
        %v1133 = vld [vmem:[%s3 + $0x2c] sm:$0xf]
        %v1134 = vld [vmem:[%s3 + $0x30] sm:$0xf]
        %v1135 = vld [vmem:[%s3 + $0x34] sm:$0xf]
        %v1136 = vld [vmem:[%s3 + $0x38] sm:$0xf]
        %v1137 = vld [vmem:[%s3 + $0x3c] sm:$0xf]
        %v1138 = vld [vmem:[%s3 + $0x40] sm:$0xf]
        %v1139 = vld [vmem:[%s3 + $0x44] sm:$0xf]
        %v1140 = vld [vmem:[%s3 + $0x48] sm:$0xf]
        %v1141 = vld [vmem:[%s3 + $0x4c] sm:$0xf]
        %v1142 = vld [vmem:[%s3 + $0x50] sm:$0xf]
        %v1143 = vld [vmem:[%s3 + $0x54] sm:$0xf]
        %v1144 = vld [vmem:[%s3 + $0x58] sm:$0xf]
        %v1145 = vld [vmem:[%s3 + $0x5c] sm:$0xf]
        %v1146 = vld [vmem:[%s3 + $0x60] sm:$0xf]
        %v1147 = vld [vmem:[%s3 + $0x64] sm:$0xf]
        %v1148 = vld [vmem:[%s3 + $0x68] sm:$0xf]
        %v1149 = vld [vmem:[%s3 + $0x6c] sm:$0xf]
        %v1150 = vld [vmem:[%s3 + $0x70] sm:$0xf]
        %v1151 = vld [vmem:[%s3 + $0x74] sm:$0x7]
        %vm1152 = vcmask 1040384
        %vm1153 = vsmask.f32 256
        %vm1154 = vmand %vm1152, %vm1153
        %v1155 = vld [vmem:[#allocation2] sm:$0x1]
        %v1156 = vsel %vm1154, 0, %v1155
        %1157 = vst [vmem:[#allocation2] sm:$0x1] %v1156
        %v1158 = vld [vmem:[#allocation2 + $0x8] sm:$0x1]
        %v1159 = vsel %vm1154, 0, %v1158
        %1160 = vst [vmem:[#allocation2 + $0x8] sm:$0x1] %v1159
        %v1161 = vld [vmem:[#allocation2 + $0x10] sm:$0x1]
        %v1162 = vsel %vm1154, 0, %v1161
        %1163 = vst [vmem:[#allocation2 + $0x10] sm:$0x1] %v1162
        %v1164 = vld [vmem:[#allocation2 + $0x18] sm:$0x1]
        %v1165 = vsel %vm1154, 0, %v1164
        %1166 = vst [vmem:[#allocation2 + $0x18] sm:$0x1] %v1165
        %v1167 = vld [vmem:[#allocation2 + $0x20] sm:$0x1]
        %v1168 = vsel %vm1154, 0, %v1167
        %1169 = vst [vmem:[#allocation2 + $0x20] sm:$0x1] %v1168
        %v1170 = vld [vmem:[#allocation2 + $0x28] sm:$0x1]
        %v1171 = vsel %vm1154, 0, %v1170
        %1172 = vst [vmem:[#allocation2 + $0x28] sm:$0x1] %v1171
        %v1173 = vld [vmem:[#allocation2 + $0x30] sm:$0x1]
        %v1174 = vsel %vm1154, 0, %v1173
        %1175 = vst [vmem:[#allocation2 + $0x30] sm:$0x1] %v1174
        %v1176 = vld [vmem:[#allocation2 + $0x38] sm:$0x1]
        %v1177 = vsel %vm1154, 0, %v1176
        %1178 = vst [vmem:[#allocation2 + $0x38] sm:$0x1] %v1177
        %v1179 = vld [vmem:[#allocation2 + $0x4] sm:$0x1]
        %v1180 = vsel %vm1154, 0, %v1179
        %1181 = vst [vmem:[#allocation2 + $0x4] sm:$0x1] %v1180
        %v1182 = vld [vmem:[#allocation2 + $0xc] sm:$0x1]
        %v1183 = vsel %vm1154, 0, %v1182
        %1184 = vst [vmem:[#allocation2 + $0xc] sm:$0x1] %v1183
        %v1185 = vld [vmem:[#allocation2 + $0x14] sm:$0x1]
        %v1186 = vsel %vm1154, 0, %v1185
        %1187 = vst [vmem:[#allocation2 + $0x14] sm:$0x1] %v1186
        %v1188 = vld [vmem:[#allocation2 + $0x1c] sm:$0x1]
        %v1189 = vsel %vm1154, 0, %v1188
        %1190 = vst [vmem:[#allocation2 + $0x1c] sm:$0x1] %v1189
        %v1191 = vld [vmem:[#allocation2 + $0x24] sm:$0x1]
        %v1192 = vsel %vm1154, 0, %v1191
        %1193 = vst [vmem:[#allocation2 + $0x24] sm:$0x1] %v1192
        %v1194 = vld [vmem:[#allocation2 + $0x2c] sm:$0x1]
        %v1195 = vsel %vm1154, 0, %v1194
        %1196 = vst [vmem:[#allocation2 + $0x2c] sm:$0x1] %v1195
        %v1197 = vld [vmem:[#allocation2 + $0x34] sm:$0x1]
        %v1198 = vsel %vm1154, 0, %v1197
        %1199 = vst [vmem:[#allocation2 + $0x34] sm:$0x1] %v1198
        %v1200 = vld [vmem:[#allocation2 + $0x3c] sm:$0x1]
        %v1201 = vsel %vm1154, 0, %v1200
        %1202 = vst [vmem:[#allocation2 + $0x3c] sm:$0x1] %v1201
        %vm1203 = vcmask 1043459
        %vm1204 = vsmask.f32 7950
        %vm1205 = vmand %vm1203, %vm1204
        %v1206 = vld [vmem:[#allocation3] sm:$0x8]
        %v1207 = vsel %vm1205, 0, %v1206
        %1208 = vst [vmem:[#allocation3] sm:$0x8] %v1207
        %v1209 = vld [vmem:[#allocation3 + $0x8] sm:$0x8]
        %v1210 = vsel %vm1205, 0, %v1209
        %1211 = vst [vmem:[#allocation3 + $0x8] sm:$0x8] %v1210
        %v1212 = vld [vmem:[#allocation3 + $0x10] sm:$0x8]
        %v1213 = vsel %vm1205, 0, %v1212
        %1214 = vst [vmem:[#allocation3 + $0x10] sm:$0x8] %v1213
        %v1215 = vld [vmem:[#allocation3 + $0x18] sm:$0x8]
        %v1216 = vsel %vm1205, 0, %v1215
        %1217 = vst [vmem:[#allocation3 + $0x18] sm:$0x8] %v1216
        %v1218 = vld [vmem:[#allocation3 + $0x20] sm:$0x8]
        %v1219 = vsel %vm1205, 0, %v1218
        %1220 = vst [vmem:[#allocation3 + $0x20] sm:$0x8] %v1219
        %v1221 = vld [vmem:[#allocation3 + $0x28] sm:$0x8]
        %v1222 = vsel %vm1205, 0, %v1221
        %1223 = vst [vmem:[#allocation3 + $0x28] sm:$0x8] %v1222
        %v1224 = vld [vmem:[#allocation3 + $0x30] sm:$0x8]
        %v1225 = vsel %vm1205, 0, %v1224
        %1226 = vst [vmem:[#allocation3 + $0x30] sm:$0x8] %v1225
        %v1227 = vld [vmem:[#allocation3 + $0x38] sm:$0x8]
        %v1228 = vsel %vm1205, 0, %v1227
        %1229 = vst [vmem:[#allocation3 + $0x38] sm:$0x8] %v1228
        %v1230 = vld [vmem:[#allocation3 + $0x4] sm:$0x1]
        %v1231 = vsel %vm1154, 0, %v1230
        %1232 = vst [vmem:[#allocation3 + $0x4] sm:$0x1] %v1231
        %v1233 = vld [vmem:[#allocation3 + $0xc] sm:$0x1]
        %v1234 = vsel %vm1154, 0, %v1233
        %1235 = vst [vmem:[#allocation3 + $0xc] sm:$0x1] %v1234
        %v1236 = vld [vmem:[#allocation3 + $0x14] sm:$0x1]
        %v1237 = vsel %vm1154, 0, %v1236
        %1238 = vst [vmem:[#allocation3 + $0x14] sm:$0x1] %v1237
        %v1239 = vld [vmem:[#allocation3 + $0x1c] sm:$0x1]
        %v1240 = vsel %vm1154, 0, %v1239
        %1241 = vst [vmem:[#allocation3 + $0x1c] sm:$0x1] %v1240
        %v1242 = vld [vmem:[#allocation3 + $0x24] sm:$0x1]
        %v1243 = vsel %vm1154, 0, %v1242
        %1244 = vst [vmem:[#allocation3 + $0x24] sm:$0x1] %v1243
        %v1245 = vld [vmem:[#allocation3 + $0x2c] sm:$0x1]
        %v1246 = vsel %vm1154, 0, %v1245
        %1247 = vst [vmem:[#allocation3 + $0x2c] sm:$0x1] %v1246
        %v1248 = vld [vmem:[#allocation3 + $0x34] sm:$0x1]
        %v1249 = vsel %vm1154, 0, %v1248
        %1250 = vst [vmem:[#allocation3 + $0x34] sm:$0x1] %v1249
        %v1251 = vld [vmem:[#allocation3 + $0x3c] sm:$0x1]
        %v1252 = vsel %vm1154, 0, %v1251
        %1253 = vst [vmem:[#allocation3 + $0x3c] sm:$0x1] %v1252
        %v1254 = vlaneseq
        %v1255 = vshrl.u32 %v1254, 7
        %v1256 = vsub.s32 0, %v1255
        %v1257 = vrot.slane %v1117, %v1256
        %v1258 = vlaneseq
        %v1259 = vshrl.u32 %v1258, 7
        %v1260 = vsub.s32 0, %v1259
        %v1261 = vrot.slane %v1118, %v1260
        %v1262 = vmul.f32 %v730, %v1257
        %v1263 = vmul.f32 %v781, %v1261
        %v1264 = vmul.f32 %v732, %v1257
        %v1265 = vmul.f32 %v783, %v1261
        %v1266 = vmul.f32 %v734, %v1257
        %v1267 = vmul.f32 %v785, %v1261
        %v1268 = vmul.f32 %v736, %v1257
        %v1269 = vmul.f32 %v787, %v1261
        %v1270 = vmul.f32 %v738, %v1257
        %v1271 = vmul.f32 %v789, %v1261
        %v1272 = vmul.f32 %v740, %v1257
        %v1273 = vmul.f32 %v791, %v1261
        %v1274 = vmul.f32 %v742, %v1257
        %v1275 = vmul.f32 %v793, %v1261
        %v1276 = vmul.f32 %v744, %v1257
        %v1277 = vmul.f32 %v795, %v1261
        %v1278 = vlaneseq
        %v1279 = vshrl.u32 %v1278, 7
        %v1280 = vsub.s32 1, %v1279
        %v1281 = vrot.slane %v1117, %v1280
        %v1282 = vlaneseq
        %v1283 = vshrl.u32 %v1282, 7
        %v1284 = vsub.s32 1, %v1283
        %v1285 = vrot.slane %v1118, %v1284
        %1288 = vrot.lane.b32.xlu0 %v1281, 1
        %v1289 = vpop.permute.xlu0 %1288
        %1290 = vrot.lane.b32.xlu0 %v1285, 1
        %v1291 = vpop.permute.xlu0 %1290
        %vm1292 = vcmask 7168
        %v1293 = vsel %vm1292, %v1289, %v1291
        %v1296 = vmul.f32 %v730, %v1289
        %v1297 = vmul.f32 %v781, %v1293
        %v1298 = vmul.f32 %v732, %v1289
        %v1299 = vmul.f32 %v783, %v1293
        %v1300 = vmul.f32 %v734, %v1289
        %v1301 = vmul.f32 %v785, %v1293
        %v1302 = vmul.f32 %v736, %v1289
        %v1303 = vmul.f32 %v787, %v1293
        %v1304 = vmul.f32 %v738, %v1289
        %v1305 = vmul.f32 %v789, %v1293
        %v1306 = vmul.f32 %v740, %v1289
        %v1307 = vmul.f32 %v791, %v1293
        %v1308 = vmul.f32 %v742, %v1289
        %v1309 = vmul.f32 %v793, %v1293
        %v1310 = vmul.f32 %v744, %v1289
        %v1311 = vmul.f32 %v795, %v1293
        %1328 = vrot.lane.b32.xlu0 %v1296, 127
        %v1329 = vpop.permute.xlu0 %1328
        %1330 = vrot.lane.b32.xlu0 %v1297, 127
        %v1331 = vpop.permute.xlu0 %1330
        %1332 = vrot.lane.b32.xlu0 %v1298, 127
        %v1333 = vpop.permute.xlu0 %1332
        %1334 = vrot.lane.b32.xlu0 %v1299, 127
        %v1335 = vpop.permute.xlu0 %1334
        %1336 = vrot.lane.b32.xlu0 %v1300, 127
        %v1337 = vpop.permute.xlu0 %1336
        %1338 = vrot.lane.b32.xlu0 %v1301, 127
        %v1339 = vpop.permute.xlu0 %1338
        %1340 = vrot.lane.b32.xlu0 %v1302, 127
        %v1341 = vpop.permute.xlu0 %1340
        %1342 = vrot.lane.b32.xlu0 %v1303, 127
        %v1343 = vpop.permute.xlu0 %1342
        %1344 = vrot.lane.b32.xlu0 %v1304, 127
        %v1345 = vpop.permute.xlu0 %1344
        %1346 = vrot.lane.b32.xlu0 %v1305, 127
        %v1347 = vpop.permute.xlu0 %1346
        %1348 = vrot.lane.b32.xlu0 %v1306, 127
        %v1349 = vpop.permute.xlu0 %1348
        %1350 = vrot.lane.b32.xlu0 %v1307, 127
        %v1351 = vpop.permute.xlu0 %1350
        %1352 = vrot.lane.b32.xlu0 %v1308, 127
        %v1353 = vpop.permute.xlu0 %1352
        %1354 = vrot.lane.b32.xlu0 %v1309, 127
        %v1355 = vpop.permute.xlu0 %1354
        %1356 = vrot.lane.b32.xlu0 %v1310, 127
        %v1357 = vpop.permute.xlu0 %1356
        %1358 = vrot.lane.b32.xlu0 %v1311, 127
        %v1359 = vpop.permute.xlu0 %1358
        %vm1360 = vcmask 1039360
        %v1361 = vsel %vm1360, %v1329, %v1331
        %v1362 = vsel %vm1360, %v1333, %v1335
        %v1363 = vsel %vm1360, %v1337, %v1339
        %v1364 = vsel %vm1360, %v1341, %v1343
        %v1365 = vsel %vm1360, %v1345, %v1347
        %v1366 = vsel %vm1360, %v1349, %v1351
        %v1367 = vsel %vm1360, %v1353, %v1355
        %v1368 = vsel %vm1360, %v1357, %v1359
        %v1385 = vadd.f32 %v1262, %v1361
        %v1386 = vadd.f32 %v1263, %v1331
        %v1387 = vadd.f32 %v1264, %v1362
        %v1388 = vadd.f32 %v1265, %v1335
        %v1389 = vadd.f32 %v1266, %v1363
        %v1390 = vadd.f32 %v1267, %v1339
        %v1391 = vadd.f32 %v1268, %v1364
        %v1392 = vadd.f32 %v1269, %v1343
        %v1393 = vadd.f32 %v1270, %v1365
        %v1394 = vadd.f32 %v1271, %v1347
        %v1395 = vadd.f32 %v1272, %v1366
        %v1396 = vadd.f32 %v1273, %v1351
        %v1397 = vadd.f32 %v1274, %v1367
        %v1398 = vadd.f32 %v1275, %v1355
        %v1399 = vadd.f32 %v1276, %v1368
        %v1400 = vadd.f32 %v1277, %v1359
        %v1401 = vlaneseq
        %v1402 = vshrl.u32 %v1401, 7
        %v1403 = vsub.s32 2, %v1402
        %v1404 = vrot.slane %v1117, %v1403
        %v1405 = vlaneseq
        %v1406 = vshrl.u32 %v1405, 7
        %v1407 = vsub.s32 2, %v1406
        %v1408 = vrot.slane %v1118, %v1407
        %1411 = vrot.lane.b32.xlu0 %v1404, 2
        %v1412 = vpop.permute.xlu0 %1411
        %1413 = vrot.lane.b32.xlu0 %v1408, 2
        %v1414 = vpop.permute.xlu0 %1413
        %vm1415 = vcmask 15360
        %v1416 = vsel %vm1415, %v1412, %v1414
        %v1419 = vmul.f32 %v730, %v1412
        %v1420 = vmul.f32 %v781, %v1416
        %v1421 = vmul.f32 %v732, %v1412
        %v1422 = vmul.f32 %v783, %v1416
        %v1423 = vmul.f32 %v734, %v1412
        %v1424 = vmul.f32 %v785, %v1416
        %v1425 = vmul.f32 %v736, %v1412
        %v1426 = vmul.f32 %v787, %v1416
        %v1427 = vmul.f32 %v738, %v1412
        %v1428 = vmul.f32 %v789, %v1416
        %v1429 = vmul.f32 %v740, %v1412
        %v1430 = vmul.f32 %v791, %v1416
        %v1431 = vmul.f32 %v742, %v1412
        %v1432 = vmul.f32 %v793, %v1416
        %v1433 = vmul.f32 %v744, %v1412
        %v1434 = vmul.f32 %v795, %v1416
        %1451 = vrot.lane.b32.xlu0 %v1419, 126
        %v1452 = vpop.permute.xlu0 %1451
        %1453 = vrot.lane.b32.xlu0 %v1420, 126
        %v1454 = vpop.permute.xlu0 %1453
        %1455 = vrot.lane.b32.xlu0 %v1421, 126
        %v1456 = vpop.permute.xlu0 %1455
        %1457 = vrot.lane.b32.xlu0 %v1422, 126
        %v1458 = vpop.permute.xlu0 %1457
        %1459 = vrot.lane.b32.xlu0 %v1423, 126
        %v1460 = vpop.permute.xlu0 %1459
        %1461 = vrot.lane.b32.xlu0 %v1424, 126
        %v1462 = vpop.permute.xlu0 %1461
        %1463 = vrot.lane.b32.xlu0 %v1425, 126
        %v1464 = vpop.permute.xlu0 %1463
        %1465 = vrot.lane.b32.xlu0 %v1426, 126
        %v1466 = vpop.permute.xlu0 %1465
        %1467 = vrot.lane.b32.xlu0 %v1427, 126
        %v1468 = vpop.permute.xlu0 %1467
        %1469 = vrot.lane.b32.xlu0 %v1428, 126
        %v1470 = vpop.permute.xlu0 %1469
        %1471 = vrot.lane.b32.xlu0 %v1429, 126
        %v1472 = vpop.permute.xlu0 %1471
        %1473 = vrot.lane.b32.xlu0 %v1430, 126
        %v1474 = vpop.permute.xlu0 %1473
        %1475 = vrot.lane.b32.xlu0 %v1431, 126
        %v1476 = vpop.permute.xlu0 %1475
        %1477 = vrot.lane.b32.xlu0 %v1432, 126
        %v1478 = vpop.permute.xlu0 %1477
        %1479 = vrot.lane.b32.xlu0 %v1433, 126
        %v1480 = vpop.permute.xlu0 %1479
        %1481 = vrot.lane.b32.xlu0 %v1434, 126
        %v1482 = vpop.permute.xlu0 %1481
        %vm1483 = vcmask 1031168
        %v1484 = vsel %vm1483, %v1452, %v1454
        %v1485 = vsel %vm1483, %v1456, %v1458
        %v1486 = vsel %vm1483, %v1460, %v1462
        %v1487 = vsel %vm1483, %v1464, %v1466
        %v1488 = vsel %vm1483, %v1468, %v1470
        %v1489 = vsel %vm1483, %v1472, %v1474
        %v1490 = vsel %vm1483, %v1476, %v1478
        %v1491 = vsel %vm1483, %v1480, %v1482
        %v1508 = vadd.f32 %v1385, %v1484
        %v1509 = vadd.f32 %v1386, %v1454
        %v1510 = vadd.f32 %v1387, %v1485
        %v1511 = vadd.f32 %v1388, %v1458
        %v1512 = vadd.f32 %v1389, %v1486
        %v1513 = vadd.f32 %v1390, %v1462
        %v1514 = vadd.f32 %v1391, %v1487
        %v1515 = vadd.f32 %v1392, %v1466
        %v1516 = vadd.f32 %v1393, %v1488
        %v1517 = vadd.f32 %v1394, %v1470
        %v1518 = vadd.f32 %v1395, %v1489
        %v1519 = vadd.f32 %v1396, %v1474
        %v1520 = vadd.f32 %v1397, %v1490
        %v1521 = vadd.f32 %v1398, %v1478
        %v1522 = vadd.f32 %v1399, %v1491
        %v1523 = vadd.f32 %v1400, %v1482
        %v1524 = vlaneseq
        %v1525 = vshrl.u32 %v1524, 7
        %v1526 = vsub.s32 3, %v1525
        %v1527 = vrot.slane %v1117, %v1526
        %v1528 = vlaneseq
        %v1529 = vshrl.u32 %v1528, 7
        %v1530 = vsub.s32 3, %v1529
        %v1531 = vrot.slane %v1118, %v1530
        %v1532 = vmul.f32 %v893, %v1527
        %v1533 = vmul.f32 %v941, %v1531
        %v1534 = vmul.f32 %v895, %v1527
        %v1535 = vmul.f32 %v943, %v1531
        %v1536 = vmul.f32 %v897, %v1527
        %v1537 = vmul.f32 %v945, %v1531
        %v1538 = vmul.f32 %v899, %v1527
        %v1539 = vmul.f32 %v947, %v1531
        %v1540 = vmul.f32 %v901, %v1527
        %v1541 = vmul.f32 %v949, %v1531
        %v1542 = vmul.f32 %v903, %v1527
        %v1543 = vmul.f32 %v951, %v1531
        %v1544 = vmul.f32 %v905, %v1527
        %v1545 = vmul.f32 %v953, %v1531
        %v1546 = vmul.f32 %v907, %v1527
        %v1547 = vmul.f32 %v955, %v1531
        %v1548 = vadd.f32 %v1508, %v1532
        %v1549 = vadd.f32 %v1509, %v1533
        %v1550 = vadd.f32 %v1510, %v1534
        %v1551 = vadd.f32 %v1511, %v1535
        %v1552 = vadd.f32 %v1512, %v1536
        %v1553 = vadd.f32 %v1513, %v1537
        %v1554 = vadd.f32 %v1514, %v1538
        %v1555 = vadd.f32 %v1515, %v1539
        %v1556 = vadd.f32 %v1516, %v1540
        %v1557 = vadd.f32 %v1517, %v1541
        %v1558 = vadd.f32 %v1518, %v1542
        %v1559 = vadd.f32 %v1519, %v1543
        %v1560 = vadd.f32 %v1520, %v1544
        %v1561 = vadd.f32 %v1521, %v1545
        %v1562 = vadd.f32 %v1522, %v1546
        %v1563 = vadd.f32 %v1523, %v1547
        %v1564 = vlaneseq
        %v1565 = vshrl.u32 %v1564, 7
        %v1566 = vsub.s32 4, %v1565
        %v1567 = vrot.slane %v1117, %v1566
        %v1568 = vlaneseq
        %v1569 = vshrl.u32 %v1568, 7
        %v1570 = vsub.s32 4, %v1569
        %v1571 = vrot.slane %v1118, %v1570
        %1574 = vrot.lane.b32.xlu0 %v1567, 1
        %v1575 = vpop.permute.xlu0 %1574
        %1576 = vrot.lane.b32.xlu0 %v1571, 1
        %v1577 = vpop.permute.xlu0 %1576
        %v1578 = vsel %vm1292, %v1575, %v1577
        %v1581 = vmul.f32 %v893, %v1575
        %v1582 = vmul.f32 %v941, %v1578
        %v1583 = vmul.f32 %v895, %v1575
        %v1584 = vmul.f32 %v943, %v1578
        %v1585 = vmul.f32 %v897, %v1575
        %v1586 = vmul.f32 %v945, %v1578
        %v1587 = vmul.f32 %v899, %v1575
        %v1588 = vmul.f32 %v947, %v1578
        %v1589 = vmul.f32 %v901, %v1575
        %v1590 = vmul.f32 %v949, %v1578
        %v1591 = vmul.f32 %v903, %v1575
        %v1592 = vmul.f32 %v951, %v1578
        %v1593 = vmul.f32 %v905, %v1575
        %v1594 = vmul.f32 %v953, %v1578
        %v1595 = vmul.f32 %v907, %v1575
        %v1596 = vmul.f32 %v955, %v1578
        %1613 = vrot.lane.b32.xlu0 %v1581, 127
        %v1614 = vpop.permute.xlu0 %1613
        %1615 = vrot.lane.b32.xlu0 %v1582, 127
        %v1616 = vpop.permute.xlu0 %1615
        %1617 = vrot.lane.b32.xlu0 %v1583, 127
        %v1618 = vpop.permute.xlu0 %1617
        %1619 = vrot.lane.b32.xlu0 %v1584, 127
        %v1620 = vpop.permute.xlu0 %1619
        %1621 = vrot.lane.b32.xlu0 %v1585, 127
        %v1622 = vpop.permute.xlu0 %1621
        %1623 = vrot.lane.b32.xlu0 %v1586, 127
        %v1624 = vpop.permute.xlu0 %1623
        %1625 = vrot.lane.b32.xlu0 %v1587, 127
        %v1626 = vpop.permute.xlu0 %1625
        %1627 = vrot.lane.b32.xlu0 %v1588, 127
        %v1628 = vpop.permute.xlu0 %1627
        %1629 = vrot.lane.b32.xlu0 %v1589, 127
        %v1630 = vpop.permute.xlu0 %1629
        %1631 = vrot.lane.b32.xlu0 %v1590, 127
        %v1632 = vpop.permute.xlu0 %1631
        %1633 = vrot.lane.b32.xlu0 %v1591, 127
        %v1634 = vpop.permute.xlu0 %1633
        %1635 = vrot.lane.b32.xlu0 %v1592, 127
        %v1636 = vpop.permute.xlu0 %1635
        %1637 = vrot.lane.b32.xlu0 %v1593, 127
        %v1638 = vpop.permute.xlu0 %1637
        %1639 = vrot.lane.b32.xlu0 %v1594, 127
        %v1640 = vpop.permute.xlu0 %1639
        %1641 = vrot.lane.b32.xlu0 %v1595, 127
        %v1642 = vpop.permute.xlu0 %1641
        %1643 = vrot.lane.b32.xlu0 %v1596, 127
        %v1644 = vpop.permute.xlu0 %1643
        %v1645 = vsel %vm1360, %v1614, %v1616
        %v1646 = vsel %vm1360, %v1618, %v1620
        %v1647 = vsel %vm1360, %v1622, %v1624
        %v1648 = vsel %vm1360, %v1626, %v1628
        %v1649 = vsel %vm1360, %v1630, %v1632
        %v1650 = vsel %vm1360, %v1634, %v1636
        %v1651 = vsel %vm1360, %v1638, %v1640
        %v1652 = vsel %vm1360, %v1642, %v1644
        %v1669 = vadd.f32 %v1548, %v1645
        %v1670 = vadd.f32 %v1549, %v1616
        %v1671 = vadd.f32 %v1550, %v1646
        %v1672 = vadd.f32 %v1551, %v1620
        %v1673 = vadd.f32 %v1552, %v1647
        %v1674 = vadd.f32 %v1553, %v1624
        %v1675 = vadd.f32 %v1554, %v1648
        %v1676 = vadd.f32 %v1555, %v1628
        %v1677 = vadd.f32 %v1556, %v1649
        %v1678 = vadd.f32 %v1557, %v1632
        %v1679 = vadd.f32 %v1558, %v1650
        %v1680 = vadd.f32 %v1559, %v1636
        %v1681 = vadd.f32 %v1560, %v1651
        %v1682 = vadd.f32 %v1561, %v1640
        %v1683 = vadd.f32 %v1562, %v1652
        %v1684 = vadd.f32 %v1563, %v1644
        %v1685 = vlaneseq
        %v1686 = vshrl.u32 %v1685, 7
        %v1687 = vsub.s32 5, %v1686
        %v1688 = vrot.slane %v1117, %v1687
        %v1689 = vlaneseq
        %v1690 = vshrl.u32 %v1689, 7
        %v1691 = vsub.s32 5, %v1690
        %v1692 = vrot.slane %v1118, %v1691
        %1695 = vrot.lane.b32.xlu0 %v1688, 2
        %v1696 = vpop.permute.xlu0 %1695
        %1697 = vrot.lane.b32.xlu0 %v1692, 2
        %v1698 = vpop.permute.xlu0 %1697
        %v1699 = vsel %vm1415, %v1696, %v1698
        %v1702 = vmul.f32 %v893, %v1696
        %v1703 = vmul.f32 %v941, %v1699
        %v1704 = vmul.f32 %v895, %v1696
        %v1705 = vmul.f32 %v943, %v1699
        %v1706 = vmul.f32 %v897, %v1696
        %v1707 = vmul.f32 %v945, %v1699
        %v1708 = vmul.f32 %v899, %v1696
        %v1709 = vmul.f32 %v947, %v1699
        %v1710 = vmul.f32 %v901, %v1696
        %v1711 = vmul.f32 %v949, %v1699
        %v1712 = vmul.f32 %v903, %v1696
        %v1713 = vmul.f32 %v951, %v1699
        %v1714 = vmul.f32 %v905, %v1696
        %v1715 = vmul.f32 %v953, %v1699
        %v1716 = vmul.f32 %v907, %v1696
        %v1717 = vmul.f32 %v955, %v1699
        %1734 = vrot.lane.b32.xlu0 %v1702, 126
        %v1735 = vpop.permute.xlu0 %1734
        %1736 = vrot.lane.b32.xlu0 %v1703, 126
        %v1737 = vpop.permute.xlu0 %1736
        %1738 = vrot.lane.b32.xlu0 %v1704, 126
        %v1739 = vpop.permute.xlu0 %1738
        %1740 = vrot.lane.b32.xlu0 %v1705, 126
        %v1741 = vpop.permute.xlu0 %1740
        %1742 = vrot.lane.b32.xlu0 %v1706, 126
        %v1743 = vpop.permute.xlu0 %1742
        %1744 = vrot.lane.b32.xlu0 %v1707, 126
        %v1745 = vpop.permute.xlu0 %1744
        %1746 = vrot.lane.b32.xlu0 %v1708, 126
        %v1747 = vpop.permute.xlu0 %1746
        %1748 = vrot.lane.b32.xlu0 %v1709, 126
        %v1749 = vpop.permute.xlu0 %1748
        %1750 = vrot.lane.b32.xlu0 %v1710, 126
        %v1751 = vpop.permute.xlu0 %1750
        %1752 = vrot.lane.b32.xlu0 %v1711, 126
        %v1753 = vpop.permute.xlu0 %1752
        %1754 = vrot.lane.b32.xlu0 %v1712, 126
        %v1755 = vpop.permute.xlu0 %1754
        %1756 = vrot.lane.b32.xlu0 %v1713, 126
        %v1757 = vpop.permute.xlu0 %1756
        %1758 = vrot.lane.b32.xlu0 %v1714, 126
        %v1759 = vpop.permute.xlu0 %1758
        %1760 = vrot.lane.b32.xlu0 %v1715, 126
        %v1761 = vpop.permute.xlu0 %1760
        %1762 = vrot.lane.b32.xlu0 %v1716, 126
        %v1763 = vpop.permute.xlu0 %1762
        %1764 = vrot.lane.b32.xlu0 %v1717, 126
        %v1765 = vpop.permute.xlu0 %1764
        %v1766 = vsel %vm1483, %v1735, %v1737
        %v1767 = vsel %vm1483, %v1739, %v1741
        %v1768 = vsel %vm1483, %v1743, %v1745
        %v1769 = vsel %vm1483, %v1747, %v1749
        %v1770 = vsel %vm1483, %v1751, %v1753
        %v1771 = vsel %vm1483, %v1755, %v1757
        %v1772 = vsel %vm1483, %v1759, %v1761
        %v1773 = vsel %vm1483, %v1763, %v1765
        %v1790 = vadd.f32 %v1669, %v1766
        %v1791 = vadd.f32 %v1670, %v1737
        %v1792 = vadd.f32 %v1671, %v1767
        %v1793 = vadd.f32 %v1672, %v1741
        %v1794 = vadd.f32 %v1673, %v1768
        %v1795 = vadd.f32 %v1674, %v1745
        %v1796 = vadd.f32 %v1675, %v1769
        %v1797 = vadd.f32 %v1676, %v1749
        %v1798 = vadd.f32 %v1677, %v1770
        %v1799 = vadd.f32 %v1678, %v1753
        %v1800 = vadd.f32 %v1679, %v1771
        %v1801 = vadd.f32 %v1680, %v1757
        %v1802 = vadd.f32 %v1681, %v1772
        %v1803 = vadd.f32 %v1682, %v1761
        %v1804 = vadd.f32 %v1683, %v1773
        %v1805 = vadd.f32 %v1684, %v1765
        %v1806 = vlaneseq
        %v1807 = vshrl.u32 %v1806, 7
        %v1808 = vsub.s32 6, %v1807
        %v1809 = vrot.slane %v1117, %v1808
        %v1810 = vlaneseq
        %v1811 = vshrl.u32 %v1810, 7
        %v1812 = vsub.s32 6, %v1811
        %v1813 = vrot.slane %v1118, %v1812
        %v1814 = vmul.f32 %v1005, %v1809
        %v1815 = vmul.f32 %v1029, %v1813
        %v1816 = vmul.f32 %v1006, %v1809
        %v1817 = vmul.f32 %v1030, %v1813
        %v1818 = vmul.f32 %v1007, %v1809
        %v1819 = vmul.f32 %v1031, %v1813
        %v1820 = vmul.f32 %v1008, %v1809
        %v1821 = vmul.f32 %v1032, %v1813
        %v1822 = vmul.f32 %v1009, %v1809
        %v1823 = vmul.f32 %v1033, %v1813
        %v1824 = vmul.f32 %v1010, %v1809
        %v1825 = vmul.f32 %v1034, %v1813
        %v1826 = vmul.f32 %v1011, %v1809
        %v1827 = vmul.f32 %v1035, %v1813
        %v1828 = vmul.f32 %v1012, %v1809
        %v1829 = vmul.f32 %v1036, %v1813
        %v1830 = vadd.f32 %v1790, %v1814
        %v1831 = vadd.f32 %v1791, %v1815
        %v1832 = vadd.f32 %v1792, %v1816
        %v1833 = vadd.f32 %v1793, %v1817
        %v1834 = vadd.f32 %v1794, %v1818
        %v1835 = vadd.f32 %v1795, %v1819
        %v1836 = vadd.f32 %v1796, %v1820
        %v1837 = vadd.f32 %v1797, %v1821
        %v1838 = vadd.f32 %v1798, %v1822
        %v1839 = vadd.f32 %v1799, %v1823
        %v1840 = vadd.f32 %v1800, %v1824
        %v1841 = vadd.f32 %v1801, %v1825
        %v1842 = vadd.f32 %v1802, %v1826
        %v1843 = vadd.f32 %v1803, %v1827
        %v1844 = vadd.f32 %v1804, %v1828
        %v1845 = vadd.f32 %v1805, %v1829
        %v1846 = vlaneseq
        %v1847 = vshrl.u32 %v1846, 7
        %v1848 = vsub.s32 7, %v1847
        %v1849 = vrot.slane %v1117, %v1848
        %v1850 = vlaneseq
        %v1851 = vshrl.u32 %v1850, 7
        %v1852 = vsub.s32 7, %v1851
        %v1853 = vrot.slane %v1118, %v1852
        %1856 = vrot.lane.b32.xlu0 %v1849, 1
        %v1857 = vpop.permute.xlu0 %1856
        %1858 = vrot.lane.b32.xlu0 %v1853, 1
        %v1859 = vpop.permute.xlu0 %1858
        %v1860 = vsel %vm1292, %v1857, %v1859
        %v1863 = vmul.f32 %v1005, %v1857
        %v1864 = vmul.f32 %v1029, %v1860
        %v1865 = vmul.f32 %v1006, %v1857
        %v1866 = vmul.f32 %v1030, %v1860
        %v1867 = vmul.f32 %v1007, %v1857
        %v1868 = vmul.f32 %v1031, %v1860
        %v1869 = vmul.f32 %v1008, %v1857
        %v1870 = vmul.f32 %v1032, %v1860
        %v1871 = vmul.f32 %v1009, %v1857
        %v1872 = vmul.f32 %v1033, %v1860
        %v1873 = vmul.f32 %v1010, %v1857
        %v1874 = vmul.f32 %v1034, %v1860
        %v1875 = vmul.f32 %v1011, %v1857
        %v1876 = vmul.f32 %v1035, %v1860
        %v1877 = vmul.f32 %v1012, %v1857
        %v1878 = vmul.f32 %v1036, %v1860
        %1895 = vrot.lane.b32.xlu0 %v1863, 127
        %v1896 = vpop.permute.xlu0 %1895
        %1897 = vrot.lane.b32.xlu0 %v1864, 127
        %v1898 = vpop.permute.xlu0 %1897
        %1899 = vrot.lane.b32.xlu0 %v1865, 127
        %v1900 = vpop.permute.xlu0 %1899
        %1901 = vrot.lane.b32.xlu0 %v1866, 127
        %v1902 = vpop.permute.xlu0 %1901
        %1903 = vrot.lane.b32.xlu0 %v1867, 127
        %v1904 = vpop.permute.xlu0 %1903
        %1905 = vrot.lane.b32.xlu0 %v1868, 127
        %v1906 = vpop.permute.xlu0 %1905
        %1907 = vrot.lane.b32.xlu0 %v1869, 127
        %v1908 = vpop.permute.xlu0 %1907
        %1909 = vrot.lane.b32.xlu0 %v1870, 127
        %v1910 = vpop.permute.xlu0 %1909
        %1911 = vrot.lane.b32.xlu0 %v1871, 127
        %v1912 = vpop.permute.xlu0 %1911
        %1913 = vrot.lane.b32.xlu0 %v1872, 127
        %v1914 = vpop.permute.xlu0 %1913
        %1915 = vrot.lane.b32.xlu0 %v1873, 127
        %v1916 = vpop.permute.xlu0 %1915
        %1917 = vrot.lane.b32.xlu0 %v1874, 127
        %v1918 = vpop.permute.xlu0 %1917
        %1919 = vrot.lane.b32.xlu0 %v1875, 127
        %v1920 = vpop.permute.xlu0 %1919
        %1921 = vrot.lane.b32.xlu0 %v1876, 127
        %v1922 = vpop.permute.xlu0 %1921
        %1923 = vrot.lane.b32.xlu0 %v1877, 127
        %v1924 = vpop.permute.xlu0 %1923
        %1925 = vrot.lane.b32.xlu0 %v1878, 127
        %v1926 = vpop.permute.xlu0 %1925
        %v1927 = vsel %vm1360, %v1896, %v1898
        %v1928 = vsel %vm1360, %v1900, %v1902
        %v1929 = vsel %vm1360, %v1904, %v1906
        %v1930 = vsel %vm1360, %v1908, %v1910
        %v1931 = vsel %vm1360, %v1912, %v1914
        %v1932 = vsel %vm1360, %v1916, %v1918
        %v1933 = vsel %vm1360, %v1920, %v1922
        %v1934 = vsel %vm1360, %v1924, %v1926
        %v1951 = vadd.f32 %v1830, %v1927
        %v1952 = vadd.f32 %v1831, %v1898
        %v1953 = vadd.f32 %v1832, %v1928
        %v1954 = vadd.f32 %v1833, %v1902
        %v1955 = vadd.f32 %v1834, %v1929
        %v1956 = vadd.f32 %v1835, %v1906
        %v1957 = vadd.f32 %v1836, %v1930
        %v1958 = vadd.f32 %v1837, %v1910
        %v1959 = vadd.f32 %v1838, %v1931
        %v1960 = vadd.f32 %v1839, %v1914
        %v1961 = vadd.f32 %v1840, %v1932
        %v1962 = vadd.f32 %v1841, %v1918
        %v1963 = vadd.f32 %v1842, %v1933
        %v1964 = vadd.f32 %v1843, %v1922
        %v1965 = vadd.f32 %v1844, %v1934
        %v1966 = vadd.f32 %v1845, %v1926
        %v1967 = vlaneseq
        %v1968 = vshrl.u32 %v1967, 7
        %v1969 = vsub.s32 0, %v1968
        %v1970 = vrot.slane %v1119, %v1969
        %v1971 = vlaneseq
        %v1972 = vshrl.u32 %v1971, 7
        %v1973 = vsub.s32 0, %v1972
        %v1974 = vrot.slane %v1120, %v1973
        %1977 = vrot.lane.b32.xlu0 %v1970, 2
        %v1978 = vpop.permute.xlu0 %1977
        %1979 = vrot.lane.b32.xlu0 %v1974, 2
        %v1980 = vpop.permute.xlu0 %1979
        %v1981 = vsel %vm1415, %v1978, %v1980
        %v1984 = vmul.f32 %v1005, %v1978
        %v1985 = vmul.f32 %v1029, %v1981
        %v1986 = vmul.f32 %v1006, %v1978
        %v1987 = vmul.f32 %v1030, %v1981
        %v1988 = vmul.f32 %v1007, %v1978
        %v1989 = vmul.f32 %v1031, %v1981
        %v1990 = vmul.f32 %v1008, %v1978
        %v1991 = vmul.f32 %v1032, %v1981
        %v1992 = vmul.f32 %v1009, %v1978
        %v1993 = vmul.f32 %v1033, %v1981
        %v1994 = vmul.f32 %v1010, %v1978
        %v1995 = vmul.f32 %v1034, %v1981
        %v1996 = vmul.f32 %v1011, %v1978
        %v1997 = vmul.f32 %v1035, %v1981
        %v1998 = vmul.f32 %v1012, %v1978
        %v1999 = vmul.f32 %v1036, %v1981
        %2016 = vrot.lane.b32.xlu0 %v1984, 126
        %v2017 = vpop.permute.xlu0 %2016
        %2018 = vrot.lane.b32.xlu0 %v1985, 126
        %v2019 = vpop.permute.xlu0 %2018
        %2020 = vrot.lane.b32.xlu0 %v1986, 126
        %v2021 = vpop.permute.xlu0 %2020
        %2022 = vrot.lane.b32.xlu0 %v1987, 126
        %v2023 = vpop.permute.xlu0 %2022
        %2024 = vrot.lane.b32.xlu0 %v1988, 126
        %v2025 = vpop.permute.xlu0 %2024
        %2026 = vrot.lane.b32.xlu0 %v1989, 126
        %v2027 = vpop.permute.xlu0 %2026
        %2028 = vrot.lane.b32.xlu0 %v1990, 126
        %v2029 = vpop.permute.xlu0 %2028
        %2030 = vrot.lane.b32.xlu0 %v1991, 126
        %v2031 = vpop.permute.xlu0 %2030
        %2032 = vrot.lane.b32.xlu0 %v1992, 126
        %v2033 = vpop.permute.xlu0 %2032
        %2034 = vrot.lane.b32.xlu0 %v1993, 126
        %v2035 = vpop.permute.xlu0 %2034
        %2036 = vrot.lane.b32.xlu0 %v1994, 126
        %v2037 = vpop.permute.xlu0 %2036
        %2038 = vrot.lane.b32.xlu0 %v1995, 126
        %v2039 = vpop.permute.xlu0 %2038
        %2040 = vrot.lane.b32.xlu0 %v1996, 126
        %v2041 = vpop.permute.xlu0 %2040
        %2042 = vrot.lane.b32.xlu0 %v1997, 126
        %v2043 = vpop.permute.xlu0 %2042
        %2044 = vrot.lane.b32.xlu0 %v1998, 126
        %v2045 = vpop.permute.xlu0 %2044
        %2046 = vrot.lane.b32.xlu0 %v1999, 126
        %v2047 = vpop.permute.xlu0 %2046
        %v2048 = vsel %vm1483, %v2017, %v2019
        %v2049 = vsel %vm1483, %v2021, %v2023
        %v2050 = vsel %vm1483, %v2025, %v2027
        %v2051 = vsel %vm1483, %v2029, %v2031
        %v2052 = vsel %vm1483, %v2033, %v2035
        %v2053 = vsel %vm1483, %v2037, %v2039
        %v2054 = vsel %vm1483, %v2041, %v2043
        %v2055 = vsel %vm1483, %v2045, %v2047
        %v2072 = vadd.f32 %v1951, %v2048
        %v2073 = vadd.f32 %v1952, %v2019
        %v2074 = vadd.f32 %v1953, %v2049
        %v2075 = vadd.f32 %v1954, %v2023
        %v2076 = vadd.f32 %v1955, %v2050
        %v2077 = vadd.f32 %v1956, %v2027
        %v2078 = vadd.f32 %v1957, %v2051
        %v2079 = vadd.f32 %v1958, %v2031
        %v2080 = vadd.f32 %v1959, %v2052
        %v2081 = vadd.f32 %v1960, %v2035
        %v2082 = vadd.f32 %v1961, %v2053
        %v2083 = vadd.f32 %v1962, %v2039
        %v2084 = vadd.f32 %v1963, %v2054
        %v2085 = vadd.f32 %v1964, %v2043
        %v2086 = vadd.f32 %v1965, %v2055
        %v2087 = vadd.f32 %v1966, %v2047
        %v2088 = vmul.f32 %v893, %v1257
        %v2089 = vmul.f32 %v941, %v1261
        %v2090 = vmul.f32 %v895, %v1257
        %v2091 = vmul.f32 %v943, %v1261
        %v2092 = vmul.f32 %v897, %v1257
        %v2093 = vmul.f32 %v945, %v1261
        %v2094 = vmul.f32 %v899, %v1257
        %v2095 = vmul.f32 %v947, %v1261
        %v2096 = vmul.f32 %v901, %v1257
        %v2097 = vmul.f32 %v949, %v1261
        %v2098 = vmul.f32 %v903, %v1257
        %v2099 = vmul.f32 %v951, %v1261
        %v2100 = vmul.f32 %v905, %v1257
        %v2101 = vmul.f32 %v953, %v1261
        %v2102 = vmul.f32 %v907, %v1257
        %v2103 = vmul.f32 %v955, %v1261
        %v2104 = vmul.f32 %v893, %v1289
        %v2105 = vmul.f32 %v941, %v1293
        %v2106 = vmul.f32 %v895, %v1289
        %v2107 = vmul.f32 %v943, %v1293
        %v2108 = vmul.f32 %v897, %v1289
        %v2109 = vmul.f32 %v945, %v1293
        %v2110 = vmul.f32 %v899, %v1289
        %v2111 = vmul.f32 %v947, %v1293
        %v2112 = vmul.f32 %v901, %v1289
        %v2113 = vmul.f32 %v949, %v1293
        %v2114 = vmul.f32 %v903, %v1289
        %v2115 = vmul.f32 %v951, %v1293
        %v2116 = vmul.f32 %v905, %v1289
        %v2117 = vmul.f32 %v953, %v1293
        %v2118 = vmul.f32 %v907, %v1289
        %v2119 = vmul.f32 %v955, %v1293
        %2136 = vrot.lane.b32.xlu0 %v2104, 127
        %v2137 = vpop.permute.xlu0 %2136
        %2138 = vrot.lane.b32.xlu0 %v2105, 127
        %v2139 = vpop.permute.xlu0 %2138
        %2140 = vrot.lane.b32.xlu0 %v2106, 127
        %v2141 = vpop.permute.xlu0 %2140
        %2142 = vrot.lane.b32.xlu0 %v2107, 127
        %v2143 = vpop.permute.xlu0 %2142
        %2144 = vrot.lane.b32.xlu0 %v2108, 127
        %v2145 = vpop.permute.xlu0 %2144
        %2146 = vrot.lane.b32.xlu0 %v2109, 127
        %v2147 = vpop.permute.xlu0 %2146
        %2148 = vrot.lane.b32.xlu0 %v2110, 127
        %v2149 = vpop.permute.xlu0 %2148
        %2150 = vrot.lane.b32.xlu0 %v2111, 127
        %v2151 = vpop.permute.xlu0 %2150
        %2152 = vrot.lane.b32.xlu0 %v2112, 127
        %v2153 = vpop.permute.xlu0 %2152
        %2154 = vrot.lane.b32.xlu0 %v2113, 127
        %v2155 = vpop.permute.xlu0 %2154
        %2156 = vrot.lane.b32.xlu0 %v2114, 127
        %v2157 = vpop.permute.xlu0 %2156
        %2158 = vrot.lane.b32.xlu0 %v2115, 127
        %v2159 = vpop.permute.xlu0 %2158
        %2160 = vrot.lane.b32.xlu0 %v2116, 127
        %v2161 = vpop.permute.xlu0 %2160
        %2162 = vrot.lane.b32.xlu0 %v2117, 127
        %v2163 = vpop.permute.xlu0 %2162
        %2164 = vrot.lane.b32.xlu0 %v2118, 127
        %v2165 = vpop.permute.xlu0 %2164
        %2166 = vrot.lane.b32.xlu0 %v2119, 127
        %v2167 = vpop.permute.xlu0 %2166
        %v2168 = vsel %vm1360, %v2137, %v2139
        %v2169 = vsel %vm1360, %v2141, %v2143
        %v2170 = vsel %vm1360, %v2145, %v2147
        %v2171 = vsel %vm1360, %v2149, %v2151
        %v2172 = vsel %vm1360, %v2153, %v2155
        %v2173 = vsel %vm1360, %v2157, %v2159
        %v2174 = vsel %vm1360, %v2161, %v2163
        %v2175 = vsel %vm1360, %v2165, %v2167
        %v2192 = vadd.f32 %v2088, %v2168
        %v2193 = vadd.f32 %v2089, %v2139
        %v2194 = vadd.f32 %v2090, %v2169
        %v2195 = vadd.f32 %v2091, %v2143
        %v2196 = vadd.f32 %v2092, %v2170
        %v2197 = vadd.f32 %v2093, %v2147
        %v2198 = vadd.f32 %v2094, %v2171
        %v2199 = vadd.f32 %v2095, %v2151
        %v2200 = vadd.f32 %v2096, %v2172
        %v2201 = vadd.f32 %v2097, %v2155
        %v2202 = vadd.f32 %v2098, %v2173
        %v2203 = vadd.f32 %v2099, %v2159
        %v2204 = vadd.f32 %v2100, %v2174
        %v2205 = vadd.f32 %v2101, %v2163
        %v2206 = vadd.f32 %v2102, %v2175
        %v2207 = vadd.f32 %v2103, %v2167
        %v2208 = vmul.f32 %v893, %v1412
        %v2209 = vmul.f32 %v941, %v1416
        %v2210 = vmul.f32 %v895, %v1412
        %v2211 = vmul.f32 %v943, %v1416
        %v2212 = vmul.f32 %v897, %v1412
        %v2213 = vmul.f32 %v945, %v1416
        %v2214 = vmul.f32 %v899, %v1412
        %v2215 = vmul.f32 %v947, %v1416
        %v2216 = vmul.f32 %v901, %v1412
        %v2217 = vmul.f32 %v949, %v1416
        %v2218 = vmul.f32 %v903, %v1412
        %v2219 = vmul.f32 %v951, %v1416
        %v2220 = vmul.f32 %v905, %v1412
        %v2221 = vmul.f32 %v953, %v1416
        %v2222 = vmul.f32 %v907, %v1412
        %v2223 = vmul.f32 %v955, %v1416
        %2240 = vrot.lane.b32.xlu0 %v2208, 126
        %v2241 = vpop.permute.xlu0 %2240
        %2242 = vrot.lane.b32.xlu0 %v2209, 126
        %v2243 = vpop.permute.xlu0 %2242
        %2244 = vrot.lane.b32.xlu0 %v2210, 126
        %v2245 = vpop.permute.xlu0 %2244
        %2246 = vrot.lane.b32.xlu0 %v2211, 126
        %v2247 = vpop.permute.xlu0 %2246
        %2248 = vrot.lane.b32.xlu0 %v2212, 126
        %v2249 = vpop.permute.xlu0 %2248
        %2250 = vrot.lane.b32.xlu0 %v2213, 126
        %v2251 = vpop.permute.xlu0 %2250
        %2252 = vrot.lane.b32.xlu0 %v2214, 126
        %v2253 = vpop.permute.xlu0 %2252
        %2254 = vrot.lane.b32.xlu0 %v2215, 126
        %v2255 = vpop.permute.xlu0 %2254
        %2256 = vrot.lane.b32.xlu0 %v2216, 126
        %v2257 = vpop.permute.xlu0 %2256
        %2258 = vrot.lane.b32.xlu0 %v2217, 126
        %v2259 = vpop.permute.xlu0 %2258
        %2260 = vrot.lane.b32.xlu0 %v2218, 126
        %v2261 = vpop.permute.xlu0 %2260
        %2262 = vrot.lane.b32.xlu0 %v2219, 126
        %v2263 = vpop.permute.xlu0 %2262
        %2264 = vrot.lane.b32.xlu0 %v2220, 126
        %v2265 = vpop.permute.xlu0 %2264
        %2266 = vrot.lane.b32.xlu0 %v2221, 126
        %v2267 = vpop.permute.xlu0 %2266
        %2268 = vrot.lane.b32.xlu0 %v2222, 126
        %v2269 = vpop.permute.xlu0 %2268
        %2270 = vrot.lane.b32.xlu0 %v2223, 126
        %v2271 = vpop.permute.xlu0 %2270
        %v2272 = vsel %vm1483, %v2241, %v2243
        %v2273 = vsel %vm1483, %v2245, %v2247
        %v2274 = vsel %vm1483, %v2249, %v2251
        %v2275 = vsel %vm1483, %v2253, %v2255
        %v2276 = vsel %vm1483, %v2257, %v2259
        %v2277 = vsel %vm1483, %v2261, %v2263
        %v2278 = vsel %vm1483, %v2265, %v2267
        %v2279 = vsel %vm1483, %v2269, %v2271
        %v2296 = vadd.f32 %v2192, %v2272
        %v2297 = vadd.f32 %v2193, %v2243
        %v2298 = vadd.f32 %v2194, %v2273
        %v2299 = vadd.f32 %v2195, %v2247
        %v2300 = vadd.f32 %v2196, %v2274
        %v2301 = vadd.f32 %v2197, %v2251
        %v2302 = vadd.f32 %v2198, %v2275
        %v2303 = vadd.f32 %v2199, %v2255
        %v2304 = vadd.f32 %v2200, %v2276
        %v2305 = vadd.f32 %v2201, %v2259
        %v2306 = vadd.f32 %v2202, %v2277
        %v2307 = vadd.f32 %v2203, %v2263
        %v2308 = vadd.f32 %v2204, %v2278
        %v2309 = vadd.f32 %v2205, %v2267
        %v2310 = vadd.f32 %v2206, %v2279
        %v2311 = vadd.f32 %v2207, %v2271
        %v2312 = vmul.f32 %v1005, %v1527
        %v2313 = vmul.f32 %v1029, %v1531
        %v2314 = vmul.f32 %v1006, %v1527
        %v2315 = vmul.f32 %v1030, %v1531
        %v2316 = vmul.f32 %v1007, %v1527
        %v2317 = vmul.f32 %v1031, %v1531
        %v2318 = vmul.f32 %v1008, %v1527
        %v2319 = vmul.f32 %v1032, %v1531
        %v2320 = vmul.f32 %v1009, %v1527
        %v2321 = vmul.f32 %v1033, %v1531
        %v2322 = vmul.f32 %v1010, %v1527
        %v2323 = vmul.f32 %v1034, %v1531
        %v2324 = vmul.f32 %v1011, %v1527
        %v2325 = vmul.f32 %v1035, %v1531
        %v2326 = vmul.f32 %v1012, %v1527
        %v2327 = vmul.f32 %v1036, %v1531
        %v2328 = vadd.f32 %v2296, %v2312
        %v2329 = vadd.f32 %v2297, %v2313
        %v2330 = vadd.f32 %v2298, %v2314
        %v2331 = vadd.f32 %v2299, %v2315
        %v2332 = vadd.f32 %v2300, %v2316
        %v2333 = vadd.f32 %v2301, %v2317
        %v2334 = vadd.f32 %v2302, %v2318
        %v2335 = vadd.f32 %v2303, %v2319
        %v2336 = vadd.f32 %v2304, %v2320
        %v2337 = vadd.f32 %v2305, %v2321
        %v2338 = vadd.f32 %v2306, %v2322
        %v2339 = vadd.f32 %v2307, %v2323
        %v2340 = vadd.f32 %v2308, %v2324
        %v2341 = vadd.f32 %v2309, %v2325
        %v2342 = vadd.f32 %v2310, %v2326
        %v2343 = vadd.f32 %v2311, %v2327
        %v2344 = vmul.f32 %v1005, %v1575
        %v2345 = vmul.f32 %v1029, %v1578
        %v2346 = vmul.f32 %v1006, %v1575
        %v2347 = vmul.f32 %v1030, %v1578
        %v2348 = vmul.f32 %v1007, %v1575
        %v2349 = vmul.f32 %v1031, %v1578
        %v2350 = vmul.f32 %v1008, %v1575
        %v2351 = vmul.f32 %v1032, %v1578
        %v2352 = vmul.f32 %v1009, %v1575
        %v2353 = vmul.f32 %v1033, %v1578
        %v2354 = vmul.f32 %v1010, %v1575
        %v2355 = vmul.f32 %v1034, %v1578
        %v2356 = vmul.f32 %v1011, %v1575
        %v2357 = vmul.f32 %v1035, %v1578
        %v2358 = vmul.f32 %v1012, %v1575
        %v2359 = vmul.f32 %v1036, %v1578
        %2376 = vrot.lane.b32.xlu0 %v2344, 127
        %v2377 = vpop.permute.xlu0 %2376
        %2378 = vrot.lane.b32.xlu0 %v2345, 127
        %v2379 = vpop.permute.xlu0 %2378
        %2380 = vrot.lane.b32.xlu0 %v2346, 127
        %v2381 = vpop.permute.xlu0 %2380
        %2382 = vrot.lane.b32.xlu0 %v2347, 127
        %v2383 = vpop.permute.xlu0 %2382
        %2384 = vrot.lane.b32.xlu0 %v2348, 127
        %v2385 = vpop.permute.xlu0 %2384
        %2386 = vrot.lane.b32.xlu0 %v2349, 127
        %v2387 = vpop.permute.xlu0 %2386
        %2388 = vrot.lane.b32.xlu0 %v2350, 127
        %v2389 = vpop.permute.xlu0 %2388
        %2390 = vrot.lane.b32.xlu0 %v2351, 127
        %v2391 = vpop.permute.xlu0 %2390
        %2392 = vrot.lane.b32.xlu0 %v2352, 127
        %v2393 = vpop.permute.xlu0 %2392
        %2394 = vrot.lane.b32.xlu0 %v2353, 127
        %v2395 = vpop.permute.xlu0 %2394
        %2396 = vrot.lane.b32.xlu0 %v2354, 127
        %v2397 = vpop.permute.xlu0 %2396
        %2398 = vrot.lane.b32.xlu0 %v2355, 127
        %v2399 = vpop.permute.xlu0 %2398
        %2400 = vrot.lane.b32.xlu0 %v2356, 127
        %v2401 = vpop.permute.xlu0 %2400
        %2402 = vrot.lane.b32.xlu0 %v2357, 127
        %v2403 = vpop.permute.xlu0 %2402
        %2404 = vrot.lane.b32.xlu0 %v2358, 127
        %v2405 = vpop.permute.xlu0 %2404
        %2406 = vrot.lane.b32.xlu0 %v2359, 127
        %v2407 = vpop.permute.xlu0 %2406
        %v2408 = vsel %vm1360, %v2377, %v2379
        %v2409 = vsel %vm1360, %v2381, %v2383
        %v2410 = vsel %vm1360, %v2385, %v2387
        %v2411 = vsel %vm1360, %v2389, %v2391
        %v2412 = vsel %vm1360, %v2393, %v2395
        %v2413 = vsel %vm1360, %v2397, %v2399
        %v2414 = vsel %vm1360, %v2401, %v2403
        %v2415 = vsel %vm1360, %v2405, %v2407
        %v2432 = vadd.f32 %v2328, %v2408
        %v2433 = vadd.f32 %v2329, %v2379
        %v2434 = vadd.f32 %v2330, %v2409
        %v2435 = vadd.f32 %v2331, %v2383
        %v2436 = vadd.f32 %v2332, %v2410
        %v2437 = vadd.f32 %v2333, %v2387
        %v2438 = vadd.f32 %v2334, %v2411
        %v2439 = vadd.f32 %v2335, %v2391
        %v2440 = vadd.f32 %v2336, %v2412
        %v2441 = vadd.f32 %v2337, %v2395
        %v2442 = vadd.f32 %v2338, %v2413
        %v2443 = vadd.f32 %v2339, %v2399
        %v2444 = vadd.f32 %v2340, %v2414
        %v2445 = vadd.f32 %v2341, %v2403
        %v2446 = vadd.f32 %v2342, %v2415
        %v2447 = vadd.f32 %v2343, %v2407
        %v2448 = vmul.f32 %v1005, %v1696
        %v2449 = vmul.f32 %v1029, %v1699
        %v2450 = vmul.f32 %v1006, %v1696
        %v2451 = vmul.f32 %v1030, %v1699
        %v2452 = vmul.f32 %v1007, %v1696
        %v2453 = vmul.f32 %v1031, %v1699
        %v2454 = vmul.f32 %v1008, %v1696
        %v2455 = vmul.f32 %v1032, %v1699
        %v2456 = vmul.f32 %v1009, %v1696
        %v2457 = vmul.f32 %v1033, %v1699
        %v2458 = vmul.f32 %v1010, %v1696
        %v2459 = vmul.f32 %v1034, %v1699
        %v2460 = vmul.f32 %v1011, %v1696
        %v2461 = vmul.f32 %v1035, %v1699
        %v2462 = vmul.f32 %v1012, %v1696
        %v2463 = vmul.f32 %v1036, %v1699
        %2480 = vrot.lane.b32.xlu0 %v2448, 126
        %v2481 = vpop.permute.xlu0 %2480
        %2482 = vrot.lane.b32.xlu0 %v2449, 126
        %v2483 = vpop.permute.xlu0 %2482
        %2484 = vrot.lane.b32.xlu0 %v2450, 126
        %v2485 = vpop.permute.xlu0 %2484
        %2486 = vrot.lane.b32.xlu0 %v2451, 126
        %v2487 = vpop.permute.xlu0 %2486
        %2488 = vrot.lane.b32.xlu0 %v2452, 126
        %v2489 = vpop.permute.xlu0 %2488
        %2490 = vrot.lane.b32.xlu0 %v2453, 126
        %v2491 = vpop.permute.xlu0 %2490
        %2492 = vrot.lane.b32.xlu0 %v2454, 126
        %v2493 = vpop.permute.xlu0 %2492
        %2494 = vrot.lane.b32.xlu0 %v2455, 126
        %v2495 = vpop.permute.xlu0 %2494
        %2496 = vrot.lane.b32.xlu0 %v2456, 126
        %v2497 = vpop.permute.xlu0 %2496
        %2498 = vrot.lane.b32.xlu0 %v2457, 126
        %v2499 = vpop.permute.xlu0 %2498
        %2500 = vrot.lane.b32.xlu0 %v2458, 126
        %v2501 = vpop.permute.xlu0 %2500
        %2502 = vrot.lane.b32.xlu0 %v2459, 126
        %v2503 = vpop.permute.xlu0 %2502
        %2504 = vrot.lane.b32.xlu0 %v2460, 126
        %v2505 = vpop.permute.xlu0 %2504
        %2506 = vrot.lane.b32.xlu0 %v2461, 126
        %v2507 = vpop.permute.xlu0 %2506
        %2508 = vrot.lane.b32.xlu0 %v2462, 126
        %v2509 = vpop.permute.xlu0 %2508
        %2510 = vrot.lane.b32.xlu0 %v2463, 126
        %v2511 = vpop.permute.xlu0 %2510
        %v2512 = vsel %vm1483, %v2481, %v2483
        %v2513 = vsel %vm1483, %v2485, %v2487
        %v2514 = vsel %vm1483, %v2489, %v2491
        %v2515 = vsel %vm1483, %v2493, %v2495
        %v2516 = vsel %vm1483, %v2497, %v2499
        %v2517 = vsel %vm1483, %v2501, %v2503
        %v2518 = vsel %vm1483, %v2505, %v2507
        %v2519 = vsel %vm1483, %v2509, %v2511
        %v2536 = vadd.f32 %v2432, %v2512
        %v2537 = vadd.f32 %v2433, %v2483
        %v2538 = vadd.f32 %v2434, %v2513
        %v2539 = vadd.f32 %v2435, %v2487
        %v2540 = vadd.f32 %v2436, %v2514
        %v2541 = vadd.f32 %v2437, %v2491
        %v2542 = vadd.f32 %v2438, %v2515
        %v2543 = vadd.f32 %v2439, %v2495
        %v2544 = vadd.f32 %v2440, %v2516
        %v2545 = vadd.f32 %v2441, %v2499
        %v2546 = vadd.f32 %v2442, %v2517
        %v2547 = vadd.f32 %v2443, %v2503
        %v2548 = vadd.f32 %v2444, %v2518
        %v2549 = vadd.f32 %v2445, %v2507
        %v2550 = vadd.f32 %v2446, %v2519
        %v2551 = vadd.f32 %v2447, %v2511
        %v2552 = vmul.f32 %v1085, %v1809
        %v2553 = vmul.f32 %v1109, %v1813
        %v2554 = vmul.f32 %v1086, %v1809
        %v2555 = vmul.f32 %v1110, %v1813
        %v2556 = vmul.f32 %v1087, %v1809
        %v2557 = vmul.f32 %v1111, %v1813
        %v2558 = vmul.f32 %v1088, %v1809
        %v2559 = vmul.f32 %v1112, %v1813
        %v2560 = vmul.f32 %v1089, %v1809
        %v2561 = vmul.f32 %v1113, %v1813
        %v2562 = vmul.f32 %v1090, %v1809
        %v2563 = vmul.f32 %v1114, %v1813
        %v2564 = vmul.f32 %v1091, %v1809
        %v2565 = vmul.f32 %v1115, %v1813
        %v2566 = vmul.f32 %v1092, %v1809
        %v2567 = vmul.f32 %v1116, %v1813
        %v2568 = vadd.f32 %v2536, %v2552
        %v2569 = vadd.f32 %v2537, %v2553
        %v2570 = vadd.f32 %v2538, %v2554
        %v2571 = vadd.f32 %v2539, %v2555
        %v2572 = vadd.f32 %v2540, %v2556
        %v2573 = vadd.f32 %v2541, %v2557
        %v2574 = vadd.f32 %v2542, %v2558
        %v2575 = vadd.f32 %v2543, %v2559
        %v2576 = vadd.f32 %v2544, %v2560
        %v2577 = vadd.f32 %v2545, %v2561
        %v2578 = vadd.f32 %v2546, %v2562
        %v2579 = vadd.f32 %v2547, %v2563
        %v2580 = vadd.f32 %v2548, %v2564
        %v2581 = vadd.f32 %v2549, %v2565
        %v2582 = vadd.f32 %v2550, %v2566
        %v2583 = vadd.f32 %v2551, %v2567
        %v2584 = vmul.f32 %v1085, %v1857
        %v2585 = vmul.f32 %v1109, %v1860
        %v2586 = vmul.f32 %v1086, %v1857
        %v2587 = vmul.f32 %v1110, %v1860
        %v2588 = vmul.f32 %v1087, %v1857
        %v2589 = vmul.f32 %v1111, %v1860
        %v2590 = vmul.f32 %v1088, %v1857
        %v2591 = vmul.f32 %v1112, %v1860
        %v2592 = vmul.f32 %v1089, %v1857
        %v2593 = vmul.f32 %v1113, %v1860
        %v2594 = vmul.f32 %v1090, %v1857
        %v2595 = vmul.f32 %v1114, %v1860
        %v2596 = vmul.f32 %v1091, %v1857
        %v2597 = vmul.f32 %v1115, %v1860
        %v2598 = vmul.f32 %v1092, %v1857
        %v2599 = vmul.f32 %v1116, %v1860
        %2616 = vrot.lane.b32.xlu0 %v2584, 127
        %v2617 = vpop.permute.xlu0 %2616
        %2618 = vrot.lane.b32.xlu0 %v2585, 127
        %v2619 = vpop.permute.xlu0 %2618
        %2620 = vrot.lane.b32.xlu0 %v2586, 127
        %v2621 = vpop.permute.xlu0 %2620
        %2622 = vrot.lane.b32.xlu0 %v2587, 127
        %v2623 = vpop.permute.xlu0 %2622
        %2624 = vrot.lane.b32.xlu0 %v2588, 127
        %v2625 = vpop.permute.xlu0 %2624
        %2626 = vrot.lane.b32.xlu0 %v2589, 127
        %v2627 = vpop.permute.xlu0 %2626
        %2628 = vrot.lane.b32.xlu0 %v2590, 127
        %v2629 = vpop.permute.xlu0 %2628
        %2630 = vrot.lane.b32.xlu0 %v2591, 127
        %v2631 = vpop.permute.xlu0 %2630
        %2632 = vrot.lane.b32.xlu0 %v2592, 127
        %v2633 = vpop.permute.xlu0 %2632
        %2634 = vrot.lane.b32.xlu0 %v2593, 127
        %v2635 = vpop.permute.xlu0 %2634
        %2636 = vrot.lane.b32.xlu0 %v2594, 127
        %v2637 = vpop.permute.xlu0 %2636
        %2638 = vrot.lane.b32.xlu0 %v2595, 127
        %v2639 = vpop.permute.xlu0 %2638
        %2640 = vrot.lane.b32.xlu0 %v2596, 127
        %v2641 = vpop.permute.xlu0 %2640
        %2642 = vrot.lane.b32.xlu0 %v2597, 127
        %v2643 = vpop.permute.xlu0 %2642
        %2644 = vrot.lane.b32.xlu0 %v2598, 127
        %v2645 = vpop.permute.xlu0 %2644
        %2646 = vrot.lane.b32.xlu0 %v2599, 127
        %v2647 = vpop.permute.xlu0 %2646
        %v2648 = vsel %vm1360, %v2617, %v2619
        %v2649 = vsel %vm1360, %v2621, %v2623
        %v2650 = vsel %vm1360, %v2625, %v2627
        %v2651 = vsel %vm1360, %v2629, %v2631
        %v2652 = vsel %vm1360, %v2633, %v2635
        %v2653 = vsel %vm1360, %v2637, %v2639
        %v2654 = vsel %vm1360, %v2641, %v2643
        %v2655 = vsel %vm1360, %v2645, %v2647
        %v2672 = vadd.f32 %v2568, %v2648
        %v2673 = vadd.f32 %v2569, %v2619
        %v2674 = vadd.f32 %v2570, %v2649
        %v2675 = vadd.f32 %v2571, %v2623
        %v2676 = vadd.f32 %v2572, %v2650
        %v2677 = vadd.f32 %v2573, %v2627
        %v2678 = vadd.f32 %v2574, %v2651
        %v2679 = vadd.f32 %v2575, %v2631
        %v2680 = vadd.f32 %v2576, %v2652
        %v2681 = vadd.f32 %v2577, %v2635
        %v2682 = vadd.f32 %v2578, %v2653
        %v2683 = vadd.f32 %v2579, %v2639
        %v2684 = vadd.f32 %v2580, %v2654
        %v2685 = vadd.f32 %v2581, %v2643
        %v2686 = vadd.f32 %v2582, %v2655
        %v2687 = vadd.f32 %v2583, %v2647
        %v2688 = vmul.f32 %v1085, %v1978
        %v2689 = vmul.f32 %v1109, %v1981
        %v2690 = vmul.f32 %v1086, %v1978
        %v2691 = vmul.f32 %v1110, %v1981
        %v2692 = vmul.f32 %v1087, %v1978
        %v2693 = vmul.f32 %v1111, %v1981
        %v2694 = vmul.f32 %v1088, %v1978
        %v2695 = vmul.f32 %v1112, %v1981
        %v2696 = vmul.f32 %v1089, %v1978
        %v2697 = vmul.f32 %v1113, %v1981
        %v2698 = vmul.f32 %v1090, %v1978
        %v2699 = vmul.f32 %v1114, %v1981
        %v2700 = vmul.f32 %v1091, %v1978
        %v2701 = vmul.f32 %v1115, %v1981
        %v2702 = vmul.f32 %v1092, %v1978
        %v2703 = vmul.f32 %v1116, %v1981
        %2720 = vrot.lane.b32.xlu0 %v2688, 126
        %v2721 = vpop.permute.xlu0 %2720
        %2722 = vrot.lane.b32.xlu0 %v2689, 126
        %v2723 = vpop.permute.xlu0 %2722
        %2724 = vrot.lane.b32.xlu0 %v2690, 126
        %v2725 = vpop.permute.xlu0 %2724
        %2726 = vrot.lane.b32.xlu0 %v2691, 126
        %v2727 = vpop.permute.xlu0 %2726
        %2728 = vrot.lane.b32.xlu0 %v2692, 126
        %v2729 = vpop.permute.xlu0 %2728
        %2730 = vrot.lane.b32.xlu0 %v2693, 126
        %v2731 = vpop.permute.xlu0 %2730
        %2732 = vrot.lane.b32.xlu0 %v2694, 126
        %v2733 = vpop.permute.xlu0 %2732
        %2734 = vrot.lane.b32.xlu0 %v2695, 126
        %v2735 = vpop.permute.xlu0 %2734
        %2736 = vrot.lane.b32.xlu0 %v2696, 126
        %v2737 = vpop.permute.xlu0 %2736
        %2738 = vrot.lane.b32.xlu0 %v2697, 126
        %v2739 = vpop.permute.xlu0 %2738
        %2740 = vrot.lane.b32.xlu0 %v2698, 126
        %v2741 = vpop.permute.xlu0 %2740
        %2742 = vrot.lane.b32.xlu0 %v2699, 126
        %v2743 = vpop.permute.xlu0 %2742
        %2744 = vrot.lane.b32.xlu0 %v2700, 126
        %v2745 = vpop.permute.xlu0 %2744
        %2746 = vrot.lane.b32.xlu0 %v2701, 126
        %v2747 = vpop.permute.xlu0 %2746
        %2748 = vrot.lane.b32.xlu0 %v2702, 126
        %v2749 = vpop.permute.xlu0 %2748
        %2750 = vrot.lane.b32.xlu0 %v2703, 126
        %v2751 = vpop.permute.xlu0 %2750
        %v2752 = vsel %vm1483, %v2721, %v2723
        %v2753 = vsel %vm1483, %v2725, %v2727
        %v2754 = vsel %vm1483, %v2729, %v2731
        %v2755 = vsel %vm1483, %v2733, %v2735
        %v2756 = vsel %vm1483, %v2737, %v2739
        %v2757 = vsel %vm1483, %v2741, %v2743
        %v2758 = vsel %vm1483, %v2745, %v2747
        %v2759 = vsel %vm1483, %v2749, %v2751
        %v2776 = vadd.f32 %v2672, %v2752
        %v2777 = vadd.f32 %v2673, %v2723
        %v2778 = vadd.f32 %v2674, %v2753
        %v2779 = vadd.f32 %v2675, %v2727
        %v2780 = vadd.f32 %v2676, %v2754
        %v2781 = vadd.f32 %v2677, %v2731
        %v2782 = vadd.f32 %v2678, %v2755
        %v2783 = vadd.f32 %v2679, %v2735
        %v2784 = vadd.f32 %v2680, %v2756
        %v2785 = vadd.f32 %v2681, %v2739
        %v2786 = vadd.f32 %v2682, %v2757
        %v2787 = vadd.f32 %v2683, %v2743
        %v2788 = vadd.f32 %v2684, %v2758
        %v2789 = vadd.f32 %v2685, %v2747
        %v2790 = vadd.f32 %v2686, %v2759
        %v2791 = vadd.f32 %v2687, %v2751
        %v2792 = vmax.f32 %v2072, %v2776
        %v2793 = vmax.f32 %v2073, %v2777
        %v2794 = vmax.f32 %v2074, %v2778
        %v2795 = vmax.f32 %v2075, %v2779
        %v2796 = vmax.f32 %v2076, %v2780
        %v2797 = vmax.f32 %v2077, %v2781
        %v2798 = vmax.f32 %v2078, %v2782
        %v2799 = vmax.f32 %v2079, %v2783
        %v2800 = vmax.f32 %v2080, %v2784
        %v2801 = vmax.f32 %v2081, %v2785
        %v2802 = vmax.f32 %v2082, %v2786
        %v2803 = vmax.f32 %v2083, %v2787
        %v2804 = vmax.f32 %v2084, %v2788
        %v2805 = vmax.f32 %v2085, %v2789
        %v2806 = vmax.f32 %v2086, %v2790
        %v2807 = vmax.f32 %v2087, %v2791
        %2824 = vrot.lane.b32.xlu0 %v2792, 127
        %v2825 = vpop.permute.xlu0 %2824
        %2826 = vrot.lane.b32.xlu0 %v2793, 127
        %v2827 = vpop.permute.xlu0 %2826
        %2828 = vrot.lane.b32.xlu0 %v2794, 127
        %v2829 = vpop.permute.xlu0 %2828
        %2830 = vrot.lane.b32.xlu0 %v2795, 127
        %v2831 = vpop.permute.xlu0 %2830
        %2832 = vrot.lane.b32.xlu0 %v2796, 127
        %v2833 = vpop.permute.xlu0 %2832
        %2834 = vrot.lane.b32.xlu0 %v2797, 127
        %v2835 = vpop.permute.xlu0 %2834
        %2836 = vrot.lane.b32.xlu0 %v2798, 127
        %v2837 = vpop.permute.xlu0 %2836
        %2838 = vrot.lane.b32.xlu0 %v2799, 127
        %v2839 = vpop.permute.xlu0 %2838
        %2840 = vrot.lane.b32.xlu0 %v2800, 127
        %v2841 = vpop.permute.xlu0 %2840
        %2842 = vrot.lane.b32.xlu0 %v2801, 127
        %v2843 = vpop.permute.xlu0 %2842
        %2844 = vrot.lane.b32.xlu0 %v2802, 127
        %v2845 = vpop.permute.xlu0 %2844
        %2846 = vrot.lane.b32.xlu0 %v2803, 127
        %v2847 = vpop.permute.xlu0 %2846
        %2848 = vrot.lane.b32.xlu0 %v2804, 127
        %v2849 = vpop.permute.xlu0 %2848
        %2850 = vrot.lane.b32.xlu0 %v2805, 127
        %v2851 = vpop.permute.xlu0 %2850
        %2852 = vrot.lane.b32.xlu0 %v2806, 127
        %v2853 = vpop.permute.xlu0 %2852
        %2854 = vrot.lane.b32.xlu0 %v2807, 127
        %v2855 = vpop.permute.xlu0 %2854
        %v2856 = vsel %vm1360, %v2825, %v2827
        %v2857 = vsel %vm1360, %v2829, %v2831
        %v2858 = vsel %vm1360, %v2833, %v2835
        %v2859 = vsel %vm1360, %v2837, %v2839
        %v2860 = vsel %vm1360, %v2841, %v2843
        %v2861 = vsel %vm1360, %v2845, %v2847
        %v2862 = vsel %vm1360, %v2849, %v2851
        %v2863 = vsel %vm1360, %v2853, %v2855
        %v2880 = vmax.f32 %v2792, %v2856
        %v2881 = vmax.f32 %v2793, %v2827
        %v2882 = vmax.f32 %v2794, %v2857
        %v2883 = vmax.f32 %v2795, %v2831
        %v2884 = vmax.f32 %v2796, %v2858
        %v2885 = vmax.f32 %v2797, %v2835
        %v2886 = vmax.f32 %v2798, %v2859
        %v2887 = vmax.f32 %v2799, %v2839
        %v2888 = vmax.f32 %v2800, %v2860
        %v2889 = vmax.f32 %v2801, %v2843
        %v2890 = vmax.f32 %v2802, %v2861
        %v2891 = vmax.f32 %v2803, %v2847
        %v2892 = vmax.f32 %v2804, %v2862
        %v2893 = vmax.f32 %v2805, %v2851
        %v2894 = vmax.f32 %v2806, %v2863
        %v2895 = vmax.f32 %v2807, %v2855
        %v2896 = vpack.c.bf16 %v2882, %v2880
        %v2897 = vpack.c.bf16 %v2883, %v2881
        %v2898 = vpack.c.bf16 %v2886, %v2884
        %v2899 = vpack.c.bf16 %v2887, %v2885
        %v2900 = vpack.c.bf16 %v2890, %v2888
        %v2901 = vpack.c.bf16 %v2891, %v2889
        %v2902 = vpack.c.bf16 %v2894, %v2892
        %v2903 = vpack.c.bf16 %v2895, %v2893
        %v2905 = vlaneseq
        %v2906 = vshrl.u32 %v2905, 7
        %v2907 = vsub.s32 0, %v2906
        %v2908 = vrot.slane %v1121, %v2907
        %v2940 = vunpack.c.l.b16 %v1122
        %v2941 = vunpack.c.l.b16 %v1123
        %v2942 = vunpack.c.l.b16 %v1124
        %v2943 = vunpack.c.l.b16 %v1125
        %v2944 = vunpack.c.l.b16 %v1126
        %v2945 = vunpack.c.l.b16 %v1127
        %v2946 = vunpack.c.l.b16 %v1128
        %v2947 = vunpack.c.l.b16 %v1129
        %v2948 = vunpack.c.l.b16 %v1130
        %v2949 = vunpack.c.l.b16 %v1131
        %v2950 = vunpack.c.l.b16 %v1132
        %v2951 = vunpack.c.l.b16 %v1133
        %v2952 = vunpack.c.l.b16 %v1134
        %v2953 = vunpack.c.l.b16 %v1135
        %v2954 = vunpack.c.l.b16 %v1136
        %v2955 = vunpack.c.l.b16 %v1137
        %v2956 = vunpack.c.l.b16 %v1138
        %v2957 = vunpack.c.l.b16 %v1139
        %v2958 = vunpack.c.l.b16 %v1140
        %v2959 = vunpack.c.l.b16 %v1141
        %v2960 = vunpack.c.l.b16 %v1142
        %v2961 = vunpack.c.l.b16 %v1143
        %v2962 = vunpack.c.l.b16 %v1144
        %v2963 = vunpack.c.l.b16 %v1145
        %v2964 = vunpack.c.l.b16 %v1146
        %v2965 = vunpack.c.l.b16 %v1147
        %v2966 = vunpack.c.l.b16 %v1148
        %v2967 = vunpack.c.l.b16 %v1149
        %v2968 = vunpack.c.l.b16 %v1150
        %v2969 = vunpack.c.l.b16 %v1151
        %v2970 = vpack.c.b16 %v2941, %v2940
        %v2971 = vpack.c.b16 %v2943, %v2942
        %v2972 = vpack.c.b16 %v2945, %v2944
        %v2973 = vpack.c.b16 %v2947, %v2946
        %v2974 = vpack.c.b16 %v2949, %v2948
        %v2975 = vpack.c.b16 %v2951, %v2950
        %v2976 = vpack.c.b16 %v2953, %v2952
        %v2977 = vpack.c.b16 %v2955, %v2954
        %v2978 = vpack.c.b16 %v2957, %v2956
        %v2979 = vpack.c.b16 %v2959, %v2958
        %v2980 = vpack.c.b16 %v2961, %v2960
        %v2981 = vpack.c.b16 %v2963, %v2962
        %v2982 = vpack.c.b16 %v2965, %v2964
        %v2983 = vpack.c.b16 %v2967, %v2966
        %v2984 = vpack.c.b16 %v2969, %v2968
        %vm2999 = vcmask 891904
        %v3001 = vsel %vm2999, %v2897, 0
        %v3004 = vsel %vm2999, %v2899, 0
        %v3007 = vsel %vm2999, %v2901, 0
        %v3010 = vsel %vm2999, %v2903, 0
        %vm3012 = vcmask 1045504
        %vm3013 = vcmask 1046528
        %v3014 = vsel %vm3012, 4294967295, 65535
        %v3015 = vsel %vm3013, %v3014, 0
        %v3017 = vand.u32 %v2984, %v3015
        %3019 = vmatprep.subr.bf16.mxu0 0
        %3020 = vmatpush1.bf16.msra.mxu0 %v2970
        %3021 = vmatprep.subr.bf16.mxu0 0
        %3022 = vmatpush1.bf16.msra.mxu0 %v2971
        %3023 = vmatprep.subr.bf16.mxu0 0
        %3024 = vmatpush1.bf16.msra.mxu0 %v2972
        %3025 = vmatprep.subr.bf16.mxu0 0
        %3026 = vmatpush1.bf16.msra.mxu0 %v2973
        %3027 = vmatprep.subr.bf16.mxu0 0
        %3028 = vmatpush1.bf16.msra.mxu0 %v2974
        %3029 = vmatprep.subr.bf16.mxu0 0
        %3030 = vmatpush1.bf16.msra.mxu0 %v2975
        %3031 = vmatprep.subr.bf16.mxu0 0
        %3032 = vmatpush1.bf16.msra.mxu0 %v2976
        %3033 = vmatprep.subr.bf16.mxu0 0
        %3034 = vmatpush1.bf16.msra.mxu0 %v2977
        %3035 = vmatprep.subr.bf16.mxu0 0
        %3036 = vmatpush1.bf16.msra.mxu0 %v2978
        %3037 = vmatprep.subr.bf16.mxu0 0
        %3038 = vmatpush1.bf16.msra.mxu0 %v2979
        %3039 = vmatprep.subr.bf16.mxu0 0
        %3040 = vmatpush1.bf16.msra.mxu0 %v2980
        %3041 = vmatprep.subr.bf16.mxu0 0
        %3042 = vmatpush1.bf16.msra.mxu0 %v2981
        %3043 = vmatprep.subr.bf16.mxu0 0
        %3044 = vmatpush1.bf16.msra.mxu0 %v2982
        %3045 = vmatprep.subr.bf16.mxu0 0
        %3046 = vmatpush1.bf16.msra.mxu0 %v2983
        %3047 = vmatprep.subr.bf16.mxu0 0
        %3048 = vmatpush1.bf16.msra.mxu0 %v3017
        %3049 = vmatprep.subr.bf16.mxu0 0
        %3050 = vmatpush1.bf16.msra.mxu0 0
        %3051 = vmatprep.mubr.bf16.mxu0 %v3001
        %3052 = vmatmul.mubr.bf16.gmra.mrb[0].mxu0 %v2896
        %v3053 = vpop.f32.mrb[0].mxu0
        %v3054 = vadd.f32 %v2908, %v3053
        %v3055 = vpop.f32.mrb[0].mxu0
        %v3056 = vpop.f32.mrb[0].mxu0
        %v3057 = vadd.f32 %v2908, %v3056
        %v3058 = vpop.f32.mrb[0].mxu0
        %3059 = vmatprep.mubr.bf16.mxu0 %v3004
        %3060 = vmatmul.mubr.bf16.gmra.mrb[0].mxu0 %v2898
        %v3061 = vpop.f32.mrb[0].mxu0
        %v3062 = vadd.f32 %v2908, %v3061
        %v3063 = vpop.f32.mrb[0].mxu0
        %v3064 = vpop.f32.mrb[0].mxu0
        %v3065 = vadd.f32 %v2908, %v3064
        %v3066 = vpop.f32.mrb[0].mxu0
        %3067 = vmatprep.mubr.bf16.mxu0 %v3007
        %3068 = vmatmul.mubr.bf16.gmra.mrb[0].mxu0 %v2900
        %v3069 = vpop.f32.mrb[0].mxu0
        %v3070 = vadd.f32 %v2908, %v3069
        %v3071 = vpop.f32.mrb[0].mxu0
        %v3072 = vpop.f32.mrb[0].mxu0
        %v3073 = vadd.f32 %v2908, %v3072
        %v3074 = vpop.f32.mrb[0].mxu0
        %3075 = vmatprep.mubr.bf16.mxu0 %v3010
        %3076 = vmatmul.mubr.bf16.gmra.mrb[0].mxu0 %v2902
        %v3077 = vpop.f32.mrb[0].mxu0
        %v3078 = vadd.f32 %v2908, %v3077
        %v3079 = vpop.f32.mrb[0].mxu0
        %v3080 = vpop.f32.mrb[0].mxu0
        %v3081 = vadd.f32 %v2908, %v3080
        %v3082 = vpop.f32.mrb[0].mxu0
        %3083 = vdwg.mxu0
        %v3084 = vmax.f32 %v3054, 0.0
        %v3085 = vmax.f32 %v3057, 0.0
        %v3086 = vmax.f32 %v3062, 0.0
        %v3087 = vmax.f32 %v3065, 0.0
        %v3088 = vmax.f32 %v3070, 0.0
        %v3089 = vmax.f32 %v3073, 0.0
        %v3090 = vmax.f32 %v3078, 0.0
        %v3091 = vmax.f32 %v3081, 0.0
        %v3092 = vpack.c.bf16 %v3084, %v3084
        %v3093 = vpack.c.bf16 %v3085, %v3085
        %v3094 = vpack.c.bf16 %v3086, %v3086
        %v3095 = vpack.c.bf16 %v3087, %v3087
        %v3096 = vpack.c.bf16 %v3088, %v3088
        %v3097 = vpack.c.bf16 %v3089, %v3089
        %v3098 = vpack.c.bf16 %v3090, %v3090
        %v3099 = vpack.c.bf16 %v3091, %v3091
        %vm3100 = vcmask 1043456
        %vm3101 = vsmask.f32 3328
        %vm3102 = vmand %vm3100, %vm3101
        %v3103 = vld [vmem:[#allocation3] sm:$0xf]
        %v3104 = vsel %vm3102, %v3092, %v3103
        %3105 = vst [vmem:[#allocation3] sm:$0xf] %v3104
        %v3106 = vld [vmem:[#allocation3 + $0x8] sm:$0xf]
        %v3107 = vsel %vm3102, %v3093, %v3106
        %3108 = vst [vmem:[#allocation3 + $0x8] sm:$0xf] %v3107
        %v3109 = vld [vmem:[#allocation3 + $0x10] sm:$0xf]
        %v3110 = vsel %vm3102, %v3094, %v3109
        %3111 = vst [vmem:[#allocation3 + $0x10] sm:$0xf] %v3110
        %v3112 = vld [vmem:[#allocation3 + $0x18] sm:$0xf]
        %v3113 = vsel %vm3102, %v3095, %v3112
        %3114 = vst [vmem:[#allocation3 + $0x18] sm:$0xf] %v3113
        %v3115 = vld [vmem:[#allocation3 + $0x20] sm:$0xf]
        %v3116 = vsel %vm3102, %v3096, %v3115
        %3117 = vst [vmem:[#allocation3 + $0x20] sm:$0xf] %v3116
        %v3118 = vld [vmem:[#allocation3 + $0x28] sm:$0xf]
        %v3119 = vsel %vm3102, %v3097, %v3118
        %3120 = vst [vmem:[#allocation3 + $0x28] sm:$0xf] %v3119
        %v3121 = vld [vmem:[#allocation3 + $0x30] sm:$0xf]
        %v3122 = vsel %vm3102, %v3098, %v3121
        %3123 = vst [vmem:[#allocation3 + $0x30] sm:$0xf] %v3122
        %v3124 = vld [vmem:[#allocation3 + $0x38] sm:$0xf]
        %v3125 = vsel %vm3102, %v3099, %v3124
        %3126 = vst [vmem:[#allocation3 + $0x38] sm:$0xf] %v3125
        %v3127 = vmul.f32 %v1005, %v1257
        %v3128 = vmul.f32 %v1029, %v1261
        %v3129 = vmul.f32 %v1006, %v1257
        %v3130 = vmul.f32 %v1030, %v1261
        %v3131 = vmul.f32 %v1007, %v1257
        %v3132 = vmul.f32 %v1031, %v1261
        %v3133 = vmul.f32 %v1008, %v1257
        %v3134 = vmul.f32 %v1032, %v1261
        %v3135 = vmul.f32 %v1009, %v1257
        %v3136 = vmul.f32 %v1033, %v1261
        %v3137 = vmul.f32 %v1010, %v1257
        %v3138 = vmul.f32 %v1034, %v1261
        %v3139 = vmul.f32 %v1011, %v1257
        %v3140 = vmul.f32 %v1035, %v1261
        %v3141 = vmul.f32 %v1012, %v1257
        %v3142 = vmul.f32 %v1036, %v1261
        %v3143 = vmul.f32 %v1005, %v1289
        %v3144 = vmul.f32 %v1029, %v1293
        %v3145 = vmul.f32 %v1006, %v1289
        %v3146 = vmul.f32 %v1030, %v1293
        %v3147 = vmul.f32 %v1007, %v1289
        %v3148 = vmul.f32 %v1031, %v1293
        %v3149 = vmul.f32 %v1008, %v1289
        %v3150 = vmul.f32 %v1032, %v1293
        %v3151 = vmul.f32 %v1009, %v1289
        %v3152 = vmul.f32 %v1033, %v1293
        %v3153 = vmul.f32 %v1010, %v1289
        %v3154 = vmul.f32 %v1034, %v1293
        %v3155 = vmul.f32 %v1011, %v1289
        %v3156 = vmul.f32 %v1035, %v1293
        %v3157 = vmul.f32 %v1012, %v1289
        %v3158 = vmul.f32 %v1036, %v1293
        %3175 = vrot.lane.b32.xlu0 %v3143, 127
        %v3176 = vpop.permute.xlu0 %3175
        %3177 = vrot.lane.b32.xlu0 %v3144, 127
        %v3178 = vpop.permute.xlu0 %3177
        %3179 = vrot.lane.b32.xlu0 %v3145, 127
        %v3180 = vpop.permute.xlu0 %3179
        %3181 = vrot.lane.b32.xlu0 %v3146, 127
        %v3182 = vpop.permute.xlu0 %3181
        %3183 = vrot.lane.b32.xlu0 %v3147, 127
        %v3184 = vpop.permute.xlu0 %3183
        %3185 = vrot.lane.b32.xlu0 %v3148, 127
        %v3186 = vpop.permute.xlu0 %3185
        %3187 = vrot.lane.b32.xlu0 %v3149, 127
        %v3188 = vpop.permute.xlu0 %3187
        %3189 = vrot.lane.b32.xlu0 %v3150, 127
        %v3190 = vpop.permute.xlu0 %3189
        %3191 = vrot.lane.b32.xlu0 %v3151, 127
        %v3192 = vpop.permute.xlu0 %3191
        %3193 = vrot.lane.b32.xlu0 %v3152, 127
        %v3194 = vpop.permute.xlu0 %3193
        %3195 = vrot.lane.b32.xlu0 %v3153, 127
        %v3196 = vpop.permute.xlu0 %3195
        %3197 = vrot.lane.b32.xlu0 %v3154, 127
        %v3198 = vpop.permute.xlu0 %3197
        %3199 = vrot.lane.b32.xlu0 %v3155, 127
        %v3200 = vpop.permute.xlu0 %3199
        %3201 = vrot.lane.b32.xlu0 %v3156, 127
        %v3202 = vpop.permute.xlu0 %3201
        %3203 = vrot.lane.b32.xlu0 %v3157, 127
        %v3204 = vpop.permute.xlu0 %3203
        %3205 = vrot.lane.b32.xlu0 %v3158, 127
        %v3206 = vpop.permute.xlu0 %3205
        %v3207 = vsel %vm1360, %v3176, %v3178
        %v3208 = vsel %vm1360, %v3180, %v3182
        %v3209 = vsel %vm1360, %v3184, %v3186
        %v3210 = vsel %vm1360, %v3188, %v3190
        %v3211 = vsel %vm1360, %v3192, %v3194
        %v3212 = vsel %vm1360, %v3196, %v3198
        %v3213 = vsel %vm1360, %v3200, %v3202
        %v3214 = vsel %vm1360, %v3204, %v3206
        %v3231 = vadd.f32 %v3127, %v3207
        %v3232 = vadd.f32 %v3128, %v3178
        %v3233 = vadd.f32 %v3129, %v3208
        %v3234 = vadd.f32 %v3130, %v3182
        %v3235 = vadd.f32 %v3131, %v3209
        %v3236 = vadd.f32 %v3132, %v3186
        %v3237 = vadd.f32 %v3133, %v3210
        %v3238 = vadd.f32 %v3134, %v3190
        %v3239 = vadd.f32 %v3135, %v3211
        %v3240 = vadd.f32 %v3136, %v3194
        %v3241 = vadd.f32 %v3137, %v3212
        %v3242 = vadd.f32 %v3138, %v3198
        %v3243 = vadd.f32 %v3139, %v3213
        %v3244 = vadd.f32 %v3140, %v3202
        %v3245 = vadd.f32 %v3141, %v3214
        %v3246 = vadd.f32 %v3142, %v3206
        %v3247 = vmul.f32 %v1005, %v1412
        %v3248 = vmul.f32 %v1029, %v1416
        %v3249 = vmul.f32 %v1006, %v1412
        %v3250 = vmul.f32 %v1030, %v1416
        %v3251 = vmul.f32 %v1007, %v1412
        %v3252 = vmul.f32 %v1031, %v1416
        %v3253 = vmul.f32 %v1008, %v1412
        %v3254 = vmul.f32 %v1032, %v1416
        %v3255 = vmul.f32 %v1009, %v1412
        %v3256 = vmul.f32 %v1033, %v1416
        %v3257 = vmul.f32 %v1010, %v1412
        %v3258 = vmul.f32 %v1034, %v1416
        %v3259 = vmul.f32 %v1011, %v1412
        %v3260 = vmul.f32 %v1035, %v1416
        %v3261 = vmul.f32 %v1012, %v1412
        %v3262 = vmul.f32 %v1036, %v1416
        %3279 = vrot.lane.b32.xlu0 %v3247, 126
        %v3280 = vpop.permute.xlu0 %3279
        %3281 = vrot.lane.b32.xlu0 %v3248, 126
        %v3282 = vpop.permute.xlu0 %3281
        %3283 = vrot.lane.b32.xlu0 %v3249, 126
        %v3284 = vpop.permute.xlu0 %3283
        %3285 = vrot.lane.b32.xlu0 %v3250, 126
        %v3286 = vpop.permute.xlu0 %3285
        %3287 = vrot.lane.b32.xlu0 %v3251, 126
        %v3288 = vpop.permute.xlu0 %3287
        %3289 = vrot.lane.b32.xlu0 %v3252, 126
        %v3290 = vpop.permute.xlu0 %3289
        %3291 = vrot.lane.b32.xlu0 %v3253, 126
        %v3292 = vpop.permute.xlu0 %3291
        %3293 = vrot.lane.b32.xlu0 %v3254, 126
        %v3294 = vpop.permute.xlu0 %3293
        %3295 = vrot.lane.b32.xlu0 %v3255, 126
        %v3296 = vpop.permute.xlu0 %3295
        %3297 = vrot.lane.b32.xlu0 %v3256, 126
        %v3298 = vpop.permute.xlu0 %3297
        %3299 = vrot.lane.b32.xlu0 %v3257, 126
        %v3300 = vpop.permute.xlu0 %3299
        %3301 = vrot.lane.b32.xlu0 %v3258, 126
        %v3302 = vpop.permute.xlu0 %3301
        %3303 = vrot.lane.b32.xlu0 %v3259, 126
        %v3304 = vpop.permute.xlu0 %3303
        %3305 = vrot.lane.b32.xlu0 %v3260, 126
        %v3306 = vpop.permute.xlu0 %3305
        %3307 = vrot.lane.b32.xlu0 %v3261, 126
        %v3308 = vpop.permute.xlu0 %3307
        %3309 = vrot.lane.b32.xlu0 %v3262, 126
        %v3310 = vpop.permute.xlu0 %3309
        %v3311 = vsel %vm1483, %v3280, %v3282
        %v3312 = vsel %vm1483, %v3284, %v3286
        %v3313 = vsel %vm1483, %v3288, %v3290
        %v3314 = vsel %vm1483, %v3292, %v3294
        %v3315 = vsel %vm1483, %v3296, %v3298
        %v3316 = vsel %vm1483, %v3300, %v3302
        %v3317 = vsel %vm1483, %v3304, %v3306
        %v3318 = vsel %vm1483, %v3308, %v3310
        %v3335 = vadd.f32 %v3231, %v3311
        %v3336 = vadd.f32 %v3232, %v3282
        %v3337 = vadd.f32 %v3233, %v3312
        %v3338 = vadd.f32 %v3234, %v3286
        %v3339 = vadd.f32 %v3235, %v3313
        %v3340 = vadd.f32 %v3236, %v3290
        %v3341 = vadd.f32 %v3237, %v3314
        %v3342 = vadd.f32 %v3238, %v3294
        %v3343 = vadd.f32 %v3239, %v3315
        %v3344 = vadd.f32 %v3240, %v3298
        %v3345 = vadd.f32 %v3241, %v3316
        %v3346 = vadd.f32 %v3242, %v3302
        %v3347 = vadd.f32 %v3243, %v3317
        %v3348 = vadd.f32 %v3244, %v3306
        %v3349 = vadd.f32 %v3245, %v3318
        %v3350 = vadd.f32 %v3246, %v3310
        %v3351 = vmul.f32 %v1085, %v1527
        %v3352 = vmul.f32 %v1109, %v1531
        %v3353 = vmul.f32 %v1086, %v1527
        %v3354 = vmul.f32 %v1110, %v1531
        %v3355 = vmul.f32 %v1087, %v1527
        %v3356 = vmul.f32 %v1111, %v1531
        %v3357 = vmul.f32 %v1088, %v1527
        %v3358 = vmul.f32 %v1112, %v1531
        %v3359 = vmul.f32 %v1089, %v1527
        %v3360 = vmul.f32 %v1113, %v1531
        %v3361 = vmul.f32 %v1090, %v1527
        %v3362 = vmul.f32 %v1114, %v1531
        %v3363 = vmul.f32 %v1091, %v1527
        %v3364 = vmul.f32 %v1115, %v1531
        %v3365 = vmul.f32 %v1092, %v1527
        %v3366 = vmul.f32 %v1116, %v1531
        %v3367 = vadd.f32 %v3335, %v3351
        %v3368 = vadd.f32 %v3336, %v3352
        %v3369 = vadd.f32 %v3337, %v3353
        %v3370 = vadd.f32 %v3338, %v3354
        %v3371 = vadd.f32 %v3339, %v3355
        %v3372 = vadd.f32 %v3340, %v3356
        %v3373 = vadd.f32 %v3341, %v3357
        %v3374 = vadd.f32 %v3342, %v3358
        %v3375 = vadd.f32 %v3343, %v3359
        %v3376 = vadd.f32 %v3344, %v3360
        %v3377 = vadd.f32 %v3345, %v3361
        %v3378 = vadd.f32 %v3346, %v3362
        %v3379 = vadd.f32 %v3347, %v3363
        %v3380 = vadd.f32 %v3348, %v3364
        %v3381 = vadd.f32 %v3349, %v3365
        %v3382 = vadd.f32 %v3350, %v3366
        %v3383 = vmul.f32 %v1085, %v1575
        %v3384 = vmul.f32 %v1109, %v1578
        %v3385 = vmul.f32 %v1086, %v1575
        %v3386 = vmul.f32 %v1110, %v1578
        %v3387 = vmul.f32 %v1087, %v1575
        %v3388 = vmul.f32 %v1111, %v1578
        %v3389 = vmul.f32 %v1088, %v1575
        %v3390 = vmul.f32 %v1112, %v1578
        %v3391 = vmul.f32 %v1089, %v1575
        %v3392 = vmul.f32 %v1113, %v1578
        %v3393 = vmul.f32 %v1090, %v1575
        %v3394 = vmul.f32 %v1114, %v1578
        %v3395 = vmul.f32 %v1091, %v1575
        %v3396 = vmul.f32 %v1115, %v1578
        %v3397 = vmul.f32 %v1092, %v1575
        %v3398 = vmul.f32 %v1116, %v1578
        %3415 = vrot.lane.b32.xlu0 %v3383, 127
        %v3416 = vpop.permute.xlu0 %3415
        %3417 = vrot.lane.b32.xlu0 %v3384, 127
        %v3418 = vpop.permute.xlu0 %3417
        %3419 = vrot.lane.b32.xlu0 %v3385, 127
        %v3420 = vpop.permute.xlu0 %3419
        %3421 = vrot.lane.b32.xlu0 %v3386, 127
        %v3422 = vpop.permute.xlu0 %3421
        %3423 = vrot.lane.b32.xlu0 %v3387, 127
        %v3424 = vpop.permute.xlu0 %3423
        %3425 = vrot.lane.b32.xlu0 %v3388, 127
        %v3426 = vpop.permute.xlu0 %3425
        %3427 = vrot.lane.b32.xlu0 %v3389, 127
        %v3428 = vpop.permute.xlu0 %3427
        %3429 = vrot.lane.b32.xlu0 %v3390, 127
        %v3430 = vpop.permute.xlu0 %3429
        %3431 = vrot.lane.b32.xlu0 %v3391, 127
        %v3432 = vpop.permute.xlu0 %3431
        %3433 = vrot.lane.b32.xlu0 %v3392, 127
        %v3434 = vpop.permute.xlu0 %3433
        %3435 = vrot.lane.b32.xlu0 %v3393, 127
        %v3436 = vpop.permute.xlu0 %3435
        %3437 = vrot.lane.b32.xlu0 %v3394, 127
        %v3438 = vpop.permute.xlu0 %3437
        %3439 = vrot.lane.b32.xlu0 %v3395, 127
        %v3440 = vpop.permute.xlu0 %3439
        %3441 = vrot.lane.b32.xlu0 %v3396, 127
        %v3442 = vpop.permute.xlu0 %3441
        %3443 = vrot.lane.b32.xlu0 %v3397, 127
        %v3444 = vpop.permute.xlu0 %3443
        %3445 = vrot.lane.b32.xlu0 %v3398, 127
        %v3446 = vpop.permute.xlu0 %3445
        %v3447 = vsel %vm1360, %v3416, %v3418
        %v3448 = vsel %vm1360, %v3420, %v3422
        %v3449 = vsel %vm1360, %v3424, %v3426
        %v3450 = vsel %vm1360, %v3428, %v3430
        %v3451 = vsel %vm1360, %v3432, %v3434
        %v3452 = vsel %vm1360, %v3436, %v3438
        %v3453 = vsel %vm1360, %v3440, %v3442
        %v3454 = vsel %vm1360, %v3444, %v3446
        %v3471 = vadd.f32 %v3367, %v3447
        %v3472 = vadd.f32 %v3368, %v3418
        %v3473 = vadd.f32 %v3369, %v3448
        %v3474 = vadd.f32 %v3370, %v3422
        %v3475 = vadd.f32 %v3371, %v3449
        %v3476 = vadd.f32 %v3372, %v3426
        %v3477 = vadd.f32 %v3373, %v3450
        %v3478 = vadd.f32 %v3374, %v3430
        %v3479 = vadd.f32 %v3375, %v3451
        %v3480 = vadd.f32 %v3376, %v3434
        %v3481 = vadd.f32 %v3377, %v3452
        %v3482 = vadd.f32 %v3378, %v3438
        %v3483 = vadd.f32 %v3379, %v3453
        %v3484 = vadd.f32 %v3380, %v3442
        %v3485 = vadd.f32 %v3381, %v3454
        %v3486 = vadd.f32 %v3382, %v3446
        %v3487 = vmul.f32 %v1085, %v1696
        %v3488 = vmul.f32 %v1109, %v1699
        %v3489 = vmul.f32 %v1086, %v1696
        %v3490 = vmul.f32 %v1110, %v1699
        %v3491 = vmul.f32 %v1087, %v1696
        %v3492 = vmul.f32 %v1111, %v1699
        %v3493 = vmul.f32 %v1088, %v1696
        %v3494 = vmul.f32 %v1112, %v1699
        %v3495 = vmul.f32 %v1089, %v1696
        %v3496 = vmul.f32 %v1113, %v1699
        %v3497 = vmul.f32 %v1090, %v1696
        %v3498 = vmul.f32 %v1114, %v1699
        %v3499 = vmul.f32 %v1091, %v1696
        %v3500 = vmul.f32 %v1115, %v1699
        %v3501 = vmul.f32 %v1092, %v1696
        %v3502 = vmul.f32 %v1116, %v1699
        %3519 = vrot.lane.b32.xlu0 %v3487, 126
        %v3520 = vpop.permute.xlu0 %3519
        %3521 = vrot.lane.b32.xlu0 %v3488, 126
        %v3522 = vpop.permute.xlu0 %3521
        %3523 = vrot.lane.b32.xlu0 %v3489, 126
        %v3524 = vpop.permute.xlu0 %3523
        %3525 = vrot.lane.b32.xlu0 %v3490, 126
        %v3526 = vpop.permute.xlu0 %3525
        %3527 = vrot.lane.b32.xlu0 %v3491, 126
        %v3528 = vpop.permute.xlu0 %3527
        %3529 = vrot.lane.b32.xlu0 %v3492, 126
        %v3530 = vpop.permute.xlu0 %3529
        %3531 = vrot.lane.b32.xlu0 %v3493, 126
        %v3532 = vpop.permute.xlu0 %3531
        %3533 = vrot.lane.b32.xlu0 %v3494, 126
        %v3534 = vpop.permute.xlu0 %3533
        %3535 = vrot.lane.b32.xlu0 %v3495, 126
        %v3536 = vpop.permute.xlu0 %3535
        %3537 = vrot.lane.b32.xlu0 %v3496, 126
        %v3538 = vpop.permute.xlu0 %3537
        %3539 = vrot.lane.b32.xlu0 %v3497, 126
        %v3540 = vpop.permute.xlu0 %3539
        %3541 = vrot.lane.b32.xlu0 %v3498, 126
        %v3542 = vpop.permute.xlu0 %3541
        %3543 = vrot.lane.b32.xlu0 %v3499, 126
        %v3544 = vpop.permute.xlu0 %3543
        %3545 = vrot.lane.b32.xlu0 %v3500, 126
        %v3546 = vpop.permute.xlu0 %3545
        %3547 = vrot.lane.b32.xlu0 %v3501, 126
        %v3548 = vpop.permute.xlu0 %3547
        %3549 = vrot.lane.b32.xlu0 %v3502, 126
        %v3550 = vpop.permute.xlu0 %3549
        %v3551 = vsel %vm1483, %v3520, %v3522
        %v3552 = vsel %vm1483, %v3524, %v3526
        %v3553 = vsel %vm1483, %v3528, %v3530
        %v3554 = vsel %vm1483, %v3532, %v3534
        %v3555 = vsel %vm1483, %v3536, %v3538
        %v3556 = vsel %vm1483, %v3540, %v3542
        %v3557 = vsel %vm1483, %v3544, %v3546
        %v3558 = vsel %vm1483, %v3548, %v3550
        %v3575 = vadd.f32 %v3471, %v3551
        %v3576 = vadd.f32 %v3472, %v3522
        %v3577 = vadd.f32 %v3473, %v3552
        %v3578 = vadd.f32 %v3474, %v3526
        %v3579 = vadd.f32 %v3475, %v3553
        %v3580 = vadd.f32 %v3476, %v3530
        %v3581 = vadd.f32 %v3477, %v3554
        %v3582 = vadd.f32 %v3478, %v3534
        %v3583 = vadd.f32 %v3479, %v3555
        %v3584 = vadd.f32 %v3480, %v3538
        %v3585 = vadd.f32 %v3481, %v3556
        %v3586 = vadd.f32 %v3482, %v3542
        %v3587 = vadd.f32 %v3483, %v3557
        %v3588 = vadd.f32 %v3484, %v3546
        %v3589 = vadd.f32 %v3485, %v3558
        %v3590 = vadd.f32 %v3486, %v3550
        %v3591 = vmul.f32 %v730, %v1809
        %v3592 = vmul.f32 %v781, %v1813
        %v3593 = vmul.f32 %v731, %v1809
        %v3594 = vmul.f32 %v782, %v1813
        %v3595 = vmul.f32 %v732, %v1809
        %v3596 = vmul.f32 %v783, %v1813
        %v3597 = vmul.f32 %v733, %v1809
        %v3598 = vmul.f32 %v784, %v1813
        %v3599 = vmul.f32 %v734, %v1809
        %v3600 = vmul.f32 %v785, %v1813
        %v3601 = vmul.f32 %v735, %v1809
        %v3602 = vmul.f32 %v786, %v1813
        %v3603 = vmul.f32 %v736, %v1809
        %v3604 = vmul.f32 %v787, %v1813
        %v3605 = vmul.f32 %v737, %v1809
        %v3606 = vmul.f32 %v788, %v1813
        %v3607 = vmul.f32 %v738, %v1809
        %v3608 = vmul.f32 %v789, %v1813
        %v3609 = vmul.f32 %v739, %v1809
        %v3610 = vmul.f32 %v790, %v1813
        %v3611 = vmul.f32 %v740, %v1809
        %v3612 = vmul.f32 %v791, %v1813
        %v3613 = vmul.f32 %v741, %v1809
        %v3614 = vmul.f32 %v792, %v1813
        %v3615 = vmul.f32 %v742, %v1809
        %v3616 = vmul.f32 %v793, %v1813
        %v3617 = vmul.f32 %v743, %v1809
        %v3618 = vmul.f32 %v794, %v1813
        %v3619 = vmul.f32 %v744, %v1809
        %v3620 = vmul.f32 %v795, %v1813
        %v3621 = vmul.f32 %v745, %v1809
        %v3622 = vmul.f32 %v796, %v1813
        %v3655 = vrot.slane %v3591, 1
        %v3656 = vrot.slane %v3593, 1
        %v3657 = vsel %vm3013, %v3655, %v3656
        %v3658 = vrot.slane %v3592, 1
        %v3659 = vrot.slane %v3594, 1
        %v3660 = vsel %vm3013, %v3658, %v3659
        %v3661 = vrot.slane %v3595, 1
        %v3662 = vrot.slane %v3597, 1
        %v3663 = vsel %vm3013, %v3661, %v3662
        %v3664 = vrot.slane %v3596, 1
        %v3665 = vrot.slane %v3598, 1
        %v3666 = vsel %vm3013, %v3664, %v3665
        %v3667 = vrot.slane %v3599, 1
        %v3668 = vrot.slane %v3601, 1
        %v3669 = vsel %vm3013, %v3667, %v3668
        %v3670 = vrot.slane %v3600, 1
        %v3671 = vrot.slane %v3602, 1
        %v3672 = vsel %vm3013, %v3670, %v3671
        %v3673 = vrot.slane %v3603, 1
        %v3674 = vrot.slane %v3605, 1
        %v3675 = vsel %vm3013, %v3673, %v3674
        %v3676 = vrot.slane %v3604, 1
        %v3677 = vrot.slane %v3606, 1
        %v3678 = vsel %vm3013, %v3676, %v3677
        %v3679 = vrot.slane %v3607, 1
        %v3680 = vrot.slane %v3609, 1
        %v3681 = vsel %vm3013, %v3679, %v3680
        %v3682 = vrot.slane %v3608, 1
        %v3683 = vrot.slane %v3610, 1
        %v3684 = vsel %vm3013, %v3682, %v3683
        %v3685 = vrot.slane %v3611, 1
        %v3686 = vrot.slane %v3613, 1
        %v3687 = vsel %vm3013, %v3685, %v3686
        %v3688 = vrot.slane %v3612, 1
        %v3689 = vrot.slane %v3614, 1
        %v3690 = vsel %vm3013, %v3688, %v3689
        %v3691 = vrot.slane %v3615, 1
        %v3692 = vrot.slane %v3617, 1
        %v3693 = vsel %vm3013, %v3691, %v3692
        %v3694 = vrot.slane %v3616, 1
        %v3695 = vrot.slane %v3618, 1
        %v3696 = vsel %vm3013, %v3694, %v3695
        %v3697 = vrot.slane %v3619, 1
        %v3698 = vrot.slane %v3621, 1
        %v3699 = vsel %vm3013, %v3697, %v3698
        %v3700 = vrot.slane %v3620, 1
        %v3701 = vrot.slane %v3622, 1
        %v3702 = vsel %vm3013, %v3700, %v3701
        %v3719 = vadd.f32 %v3575, %v3657
        %v3720 = vadd.f32 %v3576, %v3660
        %v3721 = vadd.f32 %v3577, %v3663
        %v3722 = vadd.f32 %v3578, %v3666
        %v3723 = vadd.f32 %v3579, %v3669
        %v3724 = vadd.f32 %v3580, %v3672
        %v3725 = vadd.f32 %v3581, %v3675
        %v3726 = vadd.f32 %v3582, %v3678
        %v3727 = vadd.f32 %v3583, %v3681
        %v3728 = vadd.f32 %v3584, %v3684
        %v3729 = vadd.f32 %v3585, %v3687
        %v3730 = vadd.f32 %v3586, %v3690
        %v3731 = vadd.f32 %v3587, %v3693
        %v3732 = vadd.f32 %v3588, %v3696
        %v3733 = vadd.f32 %v3589, %v3699
        %v3734 = vadd.f32 %v3590, %v3702
        %v3735 = vmul.f32 %v730, %v1857
        %v3736 = vmul.f32 %v781, %v1860
        %v3737 = vmul.f32 %v731, %v1857
        %v3738 = vmul.f32 %v782, %v1860
        %v3739 = vmul.f32 %v732, %v1857
        %v3740 = vmul.f32 %v783, %v1860
        %v3741 = vmul.f32 %v733, %v1857
        %v3742 = vmul.f32 %v784, %v1860
        %v3743 = vmul.f32 %v734, %v1857
        %v3744 = vmul.f32 %v785, %v1860
        %v3745 = vmul.f32 %v735, %v1857
        %v3746 = vmul.f32 %v786, %v1860
        %v3747 = vmul.f32 %v736, %v1857
        %v3748 = vmul.f32 %v787, %v1860
        %v3749 = vmul.f32 %v737, %v1857
        %v3750 = vmul.f32 %v788, %v1860
        %v3751 = vmul.f32 %v738, %v1857
        %v3752 = vmul.f32 %v789, %v1860
        %v3753 = vmul.f32 %v739, %v1857
        %v3754 = vmul.f32 %v790, %v1860
        %v3755 = vmul.f32 %v740, %v1857
        %v3756 = vmul.f32 %v791, %v1860
        %v3757 = vmul.f32 %v741, %v1857
        %v3758 = vmul.f32 %v792, %v1860
        %v3759 = vmul.f32 %v742, %v1857
        %v3760 = vmul.f32 %v793, %v1860
        %v3761 = vmul.f32 %v743, %v1857
        %v3762 = vmul.f32 %v794, %v1860
        %v3763 = vmul.f32 %v744, %v1857
        %v3764 = vmul.f32 %v795, %v1860
        %v3765 = vmul.f32 %v745, %v1857
        %v3766 = vmul.f32 %v796, %v1860
        %v3799 = vrot.slane %v3735, 1
        %v3800 = vrot.slane %v3737, 1
        %v3801 = vsel %vm3013, %v3799, %v3800
        %v3802 = vrot.slane %v3736, 1
        %v3803 = vrot.slane %v3738, 1
        %v3804 = vsel %vm3013, %v3802, %v3803
        %v3805 = vrot.slane %v3739, 1
        %v3806 = vrot.slane %v3741, 1
        %v3807 = vsel %vm3013, %v3805, %v3806
        %v3808 = vrot.slane %v3740, 1
        %v3809 = vrot.slane %v3742, 1
        %v3810 = vsel %vm3013, %v3808, %v3809
        %v3811 = vrot.slane %v3743, 1
        %v3812 = vrot.slane %v3745, 1
        %v3813 = vsel %vm3013, %v3811, %v3812
        %v3814 = vrot.slane %v3744, 1
        %v3815 = vrot.slane %v3746, 1
        %v3816 = vsel %vm3013, %v3814, %v3815
        %v3817 = vrot.slane %v3747, 1
        %v3818 = vrot.slane %v3749, 1
        %v3819 = vsel %vm3013, %v3817, %v3818
        %v3820 = vrot.slane %v3748, 1
        %v3821 = vrot.slane %v3750, 1
        %v3822 = vsel %vm3013, %v3820, %v3821
        %v3823 = vrot.slane %v3751, 1
        %v3824 = vrot.slane %v3753, 1
        %v3825 = vsel %vm3013, %v3823, %v3824
        %v3826 = vrot.slane %v3752, 1
        %v3827 = vrot.slane %v3754, 1
        %v3828 = vsel %vm3013, %v3826, %v3827
        %v3829 = vrot.slane %v3755, 1
        %v3830 = vrot.slane %v3757, 1
        %v3831 = vsel %vm3013, %v3829, %v3830
        %v3832 = vrot.slane %v3756, 1
        %v3833 = vrot.slane %v3758, 1
        %v3834 = vsel %vm3013, %v3832, %v3833
        %v3835 = vrot.slane %v3759, 1
        %v3836 = vrot.slane %v3761, 1
        %v3837 = vsel %vm3013, %v3835, %v3836
        %v3838 = vrot.slane %v3760, 1
        %v3839 = vrot.slane %v3762, 1
        %v3840 = vsel %vm3013, %v3838, %v3839
        %v3841 = vrot.slane %v3763, 1
        %v3842 = vrot.slane %v3765, 1
        %v3843 = vsel %vm3013, %v3841, %v3842
        %v3844 = vrot.slane %v3764, 1
        %v3845 = vrot.slane %v3766, 1
        %v3846 = vsel %vm3013, %v3844, %v3845
        %3847 = vrot.lane.b32.xlu0 %v3801, 127
        %v3848 = vpop.permute.xlu0 %3847
        %3849 = vrot.lane.b32.xlu0 %v3804, 127
        %v3850 = vpop.permute.xlu0 %3849
        %3851 = vrot.lane.b32.xlu0 %v3807, 127
        %v3852 = vpop.permute.xlu0 %3851
        %3853 = vrot.lane.b32.xlu0 %v3810, 127
        %v3854 = vpop.permute.xlu0 %3853
        %3855 = vrot.lane.b32.xlu0 %v3813, 127
        %v3856 = vpop.permute.xlu0 %3855
        %3857 = vrot.lane.b32.xlu0 %v3816, 127
        %v3858 = vpop.permute.xlu0 %3857
        %3859 = vrot.lane.b32.xlu0 %v3819, 127
        %v3860 = vpop.permute.xlu0 %3859
        %3861 = vrot.lane.b32.xlu0 %v3822, 127
        %v3862 = vpop.permute.xlu0 %3861
        %3863 = vrot.lane.b32.xlu0 %v3825, 127
        %v3864 = vpop.permute.xlu0 %3863
        %3865 = vrot.lane.b32.xlu0 %v3828, 127
        %v3866 = vpop.permute.xlu0 %3865
        %3867 = vrot.lane.b32.xlu0 %v3831, 127
        %v3868 = vpop.permute.xlu0 %3867
        %3869 = vrot.lane.b32.xlu0 %v3834, 127
        %v3870 = vpop.permute.xlu0 %3869
        %3871 = vrot.lane.b32.xlu0 %v3837, 127
        %v3872 = vpop.permute.xlu0 %3871
        %3873 = vrot.lane.b32.xlu0 %v3840, 127
        %v3874 = vpop.permute.xlu0 %3873
        %3875 = vrot.lane.b32.xlu0 %v3843, 127
        %v3876 = vpop.permute.xlu0 %3875
        %3877 = vrot.lane.b32.xlu0 %v3846, 127
        %v3878 = vpop.permute.xlu0 %3877
        %v3879 = vsel %vm1360, %v3848, %v3850
        %v3880 = vsel %vm1360, %v3852, %v3854
        %v3881 = vsel %vm1360, %v3856, %v3858
        %v3882 = vsel %vm1360, %v3860, %v3862
        %v3883 = vsel %vm1360, %v3864, %v3866
        %v3884 = vsel %vm1360, %v3868, %v3870
        %v3885 = vsel %vm1360, %v3872, %v3874
        %v3886 = vsel %vm1360, %v3876, %v3878
        %v3903 = vadd.f32 %v3719, %v3879
        %v3904 = vadd.f32 %v3720, %v3850
        %v3905 = vadd.f32 %v3721, %v3880
        %v3906 = vadd.f32 %v3722, %v3854
        %v3907 = vadd.f32 %v3723, %v3881
        %v3908 = vadd.f32 %v3724, %v3858
        %v3909 = vadd.f32 %v3725, %v3882
        %v3910 = vadd.f32 %v3726, %v3862
        %v3911 = vadd.f32 %v3727, %v3883
        %v3912 = vadd.f32 %v3728, %v3866
        %v3913 = vadd.f32 %v3729, %v3884
        %v3914 = vadd.f32 %v3730, %v3870
        %v3915 = vadd.f32 %v3731, %v3885
        %v3916 = vadd.f32 %v3732, %v3874
        %v3917 = vadd.f32 %v3733, %v3886
        %v3918 = vadd.f32 %v3734, %v3878
        %v3919 = vmul.f32 %v730, %v1978
        %v3920 = vmul.f32 %v781, %v1981
        %v3921 = vmul.f32 %v731, %v1978
        %v3922 = vmul.f32 %v782, %v1981
        %v3923 = vmul.f32 %v732, %v1978
        %v3924 = vmul.f32 %v783, %v1981
        %v3925 = vmul.f32 %v733, %v1978
        %v3926 = vmul.f32 %v784, %v1981
        %v3927 = vmul.f32 %v734, %v1978
        %v3928 = vmul.f32 %v785, %v1981
        %v3929 = vmul.f32 %v735, %v1978
        %v3930 = vmul.f32 %v786, %v1981
        %v3931 = vmul.f32 %v736, %v1978
        %v3932 = vmul.f32 %v787, %v1981
        %v3933 = vmul.f32 %v737, %v1978
        %v3934 = vmul.f32 %v788, %v1981
        %v3935 = vmul.f32 %v738, %v1978
        %v3936 = vmul.f32 %v789, %v1981
        %v3937 = vmul.f32 %v739, %v1978
        %v3938 = vmul.f32 %v790, %v1981
        %v3939 = vmul.f32 %v740, %v1978
        %v3940 = vmul.f32 %v791, %v1981
        %v3941 = vmul.f32 %v741, %v1978
        %v3942 = vmul.f32 %v792, %v1981
        %v3943 = vmul.f32 %v742, %v1978
        %v3944 = vmul.f32 %v793, %v1981
        %v3945 = vmul.f32 %v743, %v1978
        %v3946 = vmul.f32 %v794, %v1981
        %v3947 = vmul.f32 %v744, %v1978
        %v3948 = vmul.f32 %v795, %v1981
        %v3949 = vmul.f32 %v745, %v1978
        %v3950 = vmul.f32 %v796, %v1981
        %v3983 = vrot.slane %v3919, 1
        %v3984 = vrot.slane %v3921, 1
        %v3985 = vsel %vm3013, %v3983, %v3984
        %v3986 = vrot.slane %v3920, 1
        %v3987 = vrot.slane %v3922, 1
        %v3988 = vsel %vm3013, %v3986, %v3987
        %v3989 = vrot.slane %v3923, 1
        %v3990 = vrot.slane %v3925, 1
        %v3991 = vsel %vm3013, %v3989, %v3990
        %v3992 = vrot.slane %v3924, 1
        %v3993 = vrot.slane %v3926, 1
        %v3994 = vsel %vm3013, %v3992, %v3993
        %v3995 = vrot.slane %v3927, 1
        %v3996 = vrot.slane %v3929, 1
        %v3997 = vsel %vm3013, %v3995, %v3996
        %v3998 = vrot.slane %v3928, 1
        %v3999 = vrot.slane %v3930, 1
        %v4000 = vsel %vm3013, %v3998, %v3999
        %v4001 = vrot.slane %v3931, 1
        %v4002 = vrot.slane %v3933, 1
        %v4003 = vsel %vm3013, %v4001, %v4002
        %v4004 = vrot.slane %v3932, 1
        %v4005 = vrot.slane %v3934, 1
        %v4006 = vsel %vm3013, %v4004, %v4005
        %v4007 = vrot.slane %v3935, 1
        %v4008 = vrot.slane %v3937, 1
        %v4009 = vsel %vm3013, %v4007, %v4008
        %v4010 = vrot.slane %v3936, 1
        %v4011 = vrot.slane %v3938, 1
        %v4012 = vsel %vm3013, %v4010, %v4011
        %v4013 = vrot.slane %v3939, 1
        %v4014 = vrot.slane %v3941, 1
        %v4015 = vsel %vm3013, %v4013, %v4014
        %v4016 = vrot.slane %v3940, 1
        %v4017 = vrot.slane %v3942, 1
        %v4018 = vsel %vm3013, %v4016, %v4017
        %v4019 = vrot.slane %v3943, 1
        %v4020 = vrot.slane %v3945, 1
        %v4021 = vsel %vm3013, %v4019, %v4020
        %v4022 = vrot.slane %v3944, 1
        %v4023 = vrot.slane %v3946, 1
        %v4024 = vsel %vm3013, %v4022, %v4023
        %v4025 = vrot.slane %v3947, 1
        %v4026 = vrot.slane %v3949, 1
        %v4027 = vsel %vm3013, %v4025, %v4026
        %v4028 = vrot.slane %v3948, 1
        %v4029 = vrot.slane %v3950, 1
        %v4030 = vsel %vm3013, %v4028, %v4029
        %4031 = vrot.lane.b32.xlu0 %v3985, 126
        %v4032 = vpop.permute.xlu0 %4031
        %4033 = vrot.lane.b32.xlu0 %v3988, 126
        %v4034 = vpop.permute.xlu0 %4033
        %4035 = vrot.lane.b32.xlu0 %v3991, 126
        %v4036 = vpop.permute.xlu0 %4035
        %4037 = vrot.lane.b32.xlu0 %v3994, 126
        %v4038 = vpop.permute.xlu0 %4037
        %4039 = vrot.lane.b32.xlu0 %v3997, 126
        %v4040 = vpop.permute.xlu0 %4039
        %4041 = vrot.lane.b32.xlu0 %v4000, 126
        %v4042 = vpop.permute.xlu0 %4041
        %4043 = vrot.lane.b32.xlu0 %v4003, 126
        %v4044 = vpop.permute.xlu0 %4043
        %4045 = vrot.lane.b32.xlu0 %v4006, 126
        %v4046 = vpop.permute.xlu0 %4045
        %4047 = vrot.lane.b32.xlu0 %v4009, 126
        %v4048 = vpop.permute.xlu0 %4047
        %4049 = vrot.lane.b32.xlu0 %v4012, 126
        %v4050 = vpop.permute.xlu0 %4049
        %4051 = vrot.lane.b32.xlu0 %v4015, 126
        %v4052 = vpop.permute.xlu0 %4051
        %4053 = vrot.lane.b32.xlu0 %v4018, 126
        %v4054 = vpop.permute.xlu0 %4053
        %4055 = vrot.lane.b32.xlu0 %v4021, 126
        %v4056 = vpop.permute.xlu0 %4055
        %4057 = vrot.lane.b32.xlu0 %v4024, 126
        %v4058 = vpop.permute.xlu0 %4057
        %4059 = vrot.lane.b32.xlu0 %v4027, 126
        %v4060 = vpop.permute.xlu0 %4059
        %4061 = vrot.lane.b32.xlu0 %v4030, 126
        %v4062 = vpop.permute.xlu0 %4061
        %v4063 = vsel %vm1483, %v4032, %v4034
        %v4064 = vsel %vm1483, %v4036, %v4038
        %v4065 = vsel %vm1483, %v4040, %v4042
        %v4066 = vsel %vm1483, %v4044, %v4046
        %v4067 = vsel %vm1483, %v4048, %v4050
        %v4068 = vsel %vm1483, %v4052, %v4054
        %v4069 = vsel %vm1483, %v4056, %v4058
        %v4070 = vsel %vm1483, %v4060, %v4062
        %v4087 = vadd.f32 %v3903, %v4063
        %v4088 = vadd.f32 %v3904, %v4034
        %v4089 = vadd.f32 %v3905, %v4064
        %v4090 = vadd.f32 %v3906, %v4038
        %v4091 = vadd.f32 %v3907, %v4065
        %v4092 = vadd.f32 %v3908, %v4042
        %v4093 = vadd.f32 %v3909, %v4066
        %v4094 = vadd.f32 %v3910, %v4046
        %v4095 = vadd.f32 %v3911, %v4067
        %v4096 = vadd.f32 %v3912, %v4050
        %v4097 = vadd.f32 %v3913, %v4068
        %v4098 = vadd.f32 %v3914, %v4054
        %v4099 = vadd.f32 %v3915, %v4069
        %v4100 = vadd.f32 %v3916, %v4058
        %v4101 = vadd.f32 %v3917, %v4070
        %v4102 = vadd.f32 %v3918, %v4062
        %v4103 = vmul.f32 %v1085, %v1257
        %v4104 = vmul.f32 %v1109, %v1261
        %v4105 = vmul.f32 %v1086, %v1257
        %v4106 = vmul.f32 %v1110, %v1261
        %v4107 = vmul.f32 %v1087, %v1257
        %v4108 = vmul.f32 %v1111, %v1261
        %v4109 = vmul.f32 %v1088, %v1257
        %v4110 = vmul.f32 %v1112, %v1261
        %v4111 = vmul.f32 %v1089, %v1257
        %v4112 = vmul.f32 %v1113, %v1261
        %v4113 = vmul.f32 %v1090, %v1257
        %v4114 = vmul.f32 %v1114, %v1261
        %v4115 = vmul.f32 %v1091, %v1257
        %v4116 = vmul.f32 %v1115, %v1261
        %v4117 = vmul.f32 %v1092, %v1257
        %v4118 = vmul.f32 %v1116, %v1261
        %v4119 = vmul.f32 %v1085, %v1289
        %v4120 = vmul.f32 %v1109, %v1293
        %v4121 = vmul.f32 %v1086, %v1289
        %v4122 = vmul.f32 %v1110, %v1293
        %v4123 = vmul.f32 %v1087, %v1289
        %v4124 = vmul.f32 %v1111, %v1293
        %v4125 = vmul.f32 %v1088, %v1289
        %v4126 = vmul.f32 %v1112, %v1293
        %v4127 = vmul.f32 %v1089, %v1289
        %v4128 = vmul.f32 %v1113, %v1293
        %v4129 = vmul.f32 %v1090, %v1289
        %v4130 = vmul.f32 %v1114, %v1293
        %v4131 = vmul.f32 %v1091, %v1289
        %v4132 = vmul.f32 %v1115, %v1293
        %v4133 = vmul.f32 %v1092, %v1289
        %v4134 = vmul.f32 %v1116, %v1293
        %4151 = vrot.lane.b32.xlu0 %v4119, 127
        %v4152 = vpop.permute.xlu0 %4151
        %4153 = vrot.lane.b32.xlu0 %v4120, 127
        %v4154 = vpop.permute.xlu0 %4153
        %4155 = vrot.lane.b32.xlu0 %v4121, 127
        %v4156 = vpop.permute.xlu0 %4155
        %4157 = vrot.lane.b32.xlu0 %v4122, 127
        %v4158 = vpop.permute.xlu0 %4157
        %4159 = vrot.lane.b32.xlu0 %v4123, 127
        %v4160 = vpop.permute.xlu0 %4159
        %4161 = vrot.lane.b32.xlu0 %v4124, 127
        %v4162 = vpop.permute.xlu0 %4161
        %4163 = vrot.lane.b32.xlu0 %v4125, 127
        %v4164 = vpop.permute.xlu0 %4163
        %4165 = vrot.lane.b32.xlu0 %v4126, 127
        %v4166 = vpop.permute.xlu0 %4165
        %4167 = vrot.lane.b32.xlu0 %v4127, 127
        %v4168 = vpop.permute.xlu0 %4167
        %4169 = vrot.lane.b32.xlu0 %v4128, 127
        %v4170 = vpop.permute.xlu0 %4169
        %4171 = vrot.lane.b32.xlu0 %v4129, 127
        %v4172 = vpop.permute.xlu0 %4171
        %4173 = vrot.lane.b32.xlu0 %v4130, 127
        %v4174 = vpop.permute.xlu0 %4173
        %4175 = vrot.lane.b32.xlu0 %v4131, 127
        %v4176 = vpop.permute.xlu0 %4175
        %4177 = vrot.lane.b32.xlu0 %v4132, 127
        %v4178 = vpop.permute.xlu0 %4177
        %4179 = vrot.lane.b32.xlu0 %v4133, 127
        %v4180 = vpop.permute.xlu0 %4179
        %4181 = vrot.lane.b32.xlu0 %v4134, 127
        %v4182 = vpop.permute.xlu0 %4181
        %v4183 = vsel %vm1360, %v4152, %v4154
        %v4184 = vsel %vm1360, %v4156, %v4158
        %v4185 = vsel %vm1360, %v4160, %v4162
        %v4186 = vsel %vm1360, %v4164, %v4166
        %v4187 = vsel %vm1360, %v4168, %v4170
        %v4188 = vsel %vm1360, %v4172, %v4174
        %v4189 = vsel %vm1360, %v4176, %v4178
        %v4190 = vsel %vm1360, %v4180, %v4182
        %v4207 = vadd.f32 %v4103, %v4183
        %v4208 = vadd.f32 %v4104, %v4154
        %v4209 = vadd.f32 %v4105, %v4184
        %v4210 = vadd.f32 %v4106, %v4158
        %v4211 = vadd.f32 %v4107, %v4185
        %v4212 = vadd.f32 %v4108, %v4162
        %v4213 = vadd.f32 %v4109, %v4186
        %v4214 = vadd.f32 %v4110, %v4166
        %v4215 = vadd.f32 %v4111, %v4187
        %v4216 = vadd.f32 %v4112, %v4170
        %v4217 = vadd.f32 %v4113, %v4188
        %v4218 = vadd.f32 %v4114, %v4174
        %v4219 = vadd.f32 %v4115, %v4189
        %v4220 = vadd.f32 %v4116, %v4178
        %v4221 = vadd.f32 %v4117, %v4190
        %v4222 = vadd.f32 %v4118, %v4182
        %v4223 = vmul.f32 %v1085, %v1412
        %v4224 = vmul.f32 %v1109, %v1416
        %v4225 = vmul.f32 %v1086, %v1412
        %v4226 = vmul.f32 %v1110, %v1416
        %v4227 = vmul.f32 %v1087, %v1412
        %v4228 = vmul.f32 %v1111, %v1416
        %v4229 = vmul.f32 %v1088, %v1412
        %v4230 = vmul.f32 %v1112, %v1416
        %v4231 = vmul.f32 %v1089, %v1412
        %v4232 = vmul.f32 %v1113, %v1416
        %v4233 = vmul.f32 %v1090, %v1412
        %v4234 = vmul.f32 %v1114, %v1416
        %v4235 = vmul.f32 %v1091, %v1412
        %v4236 = vmul.f32 %v1115, %v1416
        %v4237 = vmul.f32 %v1092, %v1412
        %v4238 = vmul.f32 %v1116, %v1416
        %4255 = vrot.lane.b32.xlu0 %v4223, 126
        %v4256 = vpop.permute.xlu0 %4255
        %4257 = vrot.lane.b32.xlu0 %v4224, 126
        %v4258 = vpop.permute.xlu0 %4257
        %4259 = vrot.lane.b32.xlu0 %v4225, 126
        %v4260 = vpop.permute.xlu0 %4259
        %4261 = vrot.lane.b32.xlu0 %v4226, 126
        %v4262 = vpop.permute.xlu0 %4261
        %4263 = vrot.lane.b32.xlu0 %v4227, 126
        %v4264 = vpop.permute.xlu0 %4263
        %4265 = vrot.lane.b32.xlu0 %v4228, 126
        %v4266 = vpop.permute.xlu0 %4265
        %4267 = vrot.lane.b32.xlu0 %v4229, 126
        %v4268 = vpop.permute.xlu0 %4267
        %4269 = vrot.lane.b32.xlu0 %v4230, 126
        %v4270 = vpop.permute.xlu0 %4269
        %4271 = vrot.lane.b32.xlu0 %v4231, 126
        %v4272 = vpop.permute.xlu0 %4271
        %4273 = vrot.lane.b32.xlu0 %v4232, 126
        %v4274 = vpop.permute.xlu0 %4273
        %4275 = vrot.lane.b32.xlu0 %v4233, 126
        %v4276 = vpop.permute.xlu0 %4275
        %4277 = vrot.lane.b32.xlu0 %v4234, 126
        %v4278 = vpop.permute.xlu0 %4277
        %4279 = vrot.lane.b32.xlu0 %v4235, 126
        %v4280 = vpop.permute.xlu0 %4279
        %4281 = vrot.lane.b32.xlu0 %v4236, 126
        %v4282 = vpop.permute.xlu0 %4281
        %4283 = vrot.lane.b32.xlu0 %v4237, 126
        %v4284 = vpop.permute.xlu0 %4283
        %4285 = vrot.lane.b32.xlu0 %v4238, 126
        %v4286 = vpop.permute.xlu0 %4285
        %v4287 = vsel %vm1483, %v4256, %v4258
        %v4288 = vsel %vm1483, %v4260, %v4262
        %v4289 = vsel %vm1483, %v4264, %v4266
        %v4290 = vsel %vm1483, %v4268, %v4270
        %v4291 = vsel %vm1483, %v4272, %v4274
        %v4292 = vsel %vm1483, %v4276, %v4278
        %v4293 = vsel %vm1483, %v4280, %v4282
        %v4294 = vsel %vm1483, %v4284, %v4286
        %v4311 = vadd.f32 %v4207, %v4287
        %v4312 = vadd.f32 %v4208, %v4258
        %v4313 = vadd.f32 %v4209, %v4288
        %v4314 = vadd.f32 %v4210, %v4262
        %v4315 = vadd.f32 %v4211, %v4289
        %v4316 = vadd.f32 %v4212, %v4266
        %v4317 = vadd.f32 %v4213, %v4290
        %v4318 = vadd.f32 %v4214, %v4270
        %v4319 = vadd.f32 %v4215, %v4291
        %v4320 = vadd.f32 %v4216, %v4274
        %v4321 = vadd.f32 %v4217, %v4292
        %v4322 = vadd.f32 %v4218, %v4278
        %v4323 = vadd.f32 %v4219, %v4293
        %v4324 = vadd.f32 %v4220, %v4282
        %v4325 = vadd.f32 %v4221, %v4294
        %v4326 = vadd.f32 %v4222, %v4286
        %v4327 = vmul.f32 %v730, %v1527
        %v4328 = vmul.f32 %v781, %v1531
        %v4329 = vmul.f32 %v731, %v1527
        %v4330 = vmul.f32 %v782, %v1531
        %v4331 = vmul.f32 %v732, %v1527
        %v4332 = vmul.f32 %v783, %v1531
        %v4333 = vmul.f32 %v733, %v1527
        %v4334 = vmul.f32 %v784, %v1531
        %v4335 = vmul.f32 %v734, %v1527
        %v4336 = vmul.f32 %v785, %v1531
        %v4337 = vmul.f32 %v735, %v1527
        %v4338 = vmul.f32 %v786, %v1531
        %v4339 = vmul.f32 %v736, %v1527
        %v4340 = vmul.f32 %v787, %v1531
        %v4341 = vmul.f32 %v737, %v1527
        %v4342 = vmul.f32 %v788, %v1531
        %v4343 = vmul.f32 %v738, %v1527
        %v4344 = vmul.f32 %v789, %v1531
        %v4345 = vmul.f32 %v739, %v1527
        %v4346 = vmul.f32 %v790, %v1531
        %v4347 = vmul.f32 %v740, %v1527
        %v4348 = vmul.f32 %v791, %v1531
        %v4349 = vmul.f32 %v741, %v1527
        %v4350 = vmul.f32 %v792, %v1531
        %v4351 = vmul.f32 %v742, %v1527
        %v4352 = vmul.f32 %v793, %v1531
        %v4353 = vmul.f32 %v743, %v1527
        %v4354 = vmul.f32 %v794, %v1531
        %v4355 = vmul.f32 %v744, %v1527
        %v4356 = vmul.f32 %v795, %v1531
        %v4357 = vmul.f32 %v745, %v1527
        %v4358 = vmul.f32 %v796, %v1531
        %v4391 = vrot.slane %v4327, 1
        %v4392 = vrot.slane %v4329, 1
        %v4393 = vsel %vm3013, %v4391, %v4392
        %v4394 = vrot.slane %v4328, 1
        %v4395 = vrot.slane %v4330, 1
        %v4396 = vsel %vm3013, %v4394, %v4395
        %v4397 = vrot.slane %v4331, 1
        %v4398 = vrot.slane %v4333, 1
        %v4399 = vsel %vm3013, %v4397, %v4398
        %v4400 = vrot.slane %v4332, 1
        %v4401 = vrot.slane %v4334, 1
        %v4402 = vsel %vm3013, %v4400, %v4401
        %v4403 = vrot.slane %v4335, 1
        %v4404 = vrot.slane %v4337, 1
        %v4405 = vsel %vm3013, %v4403, %v4404
        %v4406 = vrot.slane %v4336, 1
        %v4407 = vrot.slane %v4338, 1
        %v4408 = vsel %vm3013, %v4406, %v4407
        %v4409 = vrot.slane %v4339, 1
        %v4410 = vrot.slane %v4341, 1
        %v4411 = vsel %vm3013, %v4409, %v4410
        %v4412 = vrot.slane %v4340, 1
        %v4413 = vrot.slane %v4342, 1
        %v4414 = vsel %vm3013, %v4412, %v4413
        %v4415 = vrot.slane %v4343, 1
        %v4416 = vrot.slane %v4345, 1
        %v4417 = vsel %vm3013, %v4415, %v4416
        %v4418 = vrot.slane %v4344, 1
        %v4419 = vrot.slane %v4346, 1
        %v4420 = vsel %vm3013, %v4418, %v4419
        %v4421 = vrot.slane %v4347, 1
        %v4422 = vrot.slane %v4349, 1
        %v4423 = vsel %vm3013, %v4421, %v4422
        %v4424 = vrot.slane %v4348, 1
        %v4425 = vrot.slane %v4350, 1
        %v4426 = vsel %vm3013, %v4424, %v4425
        %v4427 = vrot.slane %v4351, 1
        %v4428 = vrot.slane %v4353, 1
        %v4429 = vsel %vm3013, %v4427, %v4428
        %v4430 = vrot.slane %v4352, 1
        %v4431 = vrot.slane %v4354, 1
        %v4432 = vsel %vm3013, %v4430, %v4431
        %v4433 = vrot.slane %v4355, 1
        %v4434 = vrot.slane %v4357, 1
        %v4435 = vsel %vm3013, %v4433, %v4434
        %v4436 = vrot.slane %v4356, 1
        %v4437 = vrot.slane %v4358, 1
        %v4438 = vsel %vm3013, %v4436, %v4437
        %v4455 = vadd.f32 %v4311, %v4393
        %v4456 = vadd.f32 %v4312, %v4396
        %v4457 = vadd.f32 %v4313, %v4399
        %v4458 = vadd.f32 %v4314, %v4402
        %v4459 = vadd.f32 %v4315, %v4405
        %v4460 = vadd.f32 %v4316, %v4408
        %v4461 = vadd.f32 %v4317, %v4411
        %v4462 = vadd.f32 %v4318, %v4414
        %v4463 = vadd.f32 %v4319, %v4417
        %v4464 = vadd.f32 %v4320, %v4420
        %v4465 = vadd.f32 %v4321, %v4423
        %v4466 = vadd.f32 %v4322, %v4426
        %v4467 = vadd.f32 %v4323, %v4429
        %v4468 = vadd.f32 %v4324, %v4432
        %v4469 = vadd.f32 %v4325, %v4435
        %v4470 = vadd.f32 %v4326, %v4438
        %v4471 = vmul.f32 %v730, %v1575
        %v4472 = vmul.f32 %v781, %v1578
        %v4473 = vmul.f32 %v731, %v1575
        %v4474 = vmul.f32 %v782, %v1578
        %v4475 = vmul.f32 %v732, %v1575
        %v4476 = vmul.f32 %v783, %v1578
        %v4477 = vmul.f32 %v733, %v1575
        %v4478 = vmul.f32 %v784, %v1578
        %v4479 = vmul.f32 %v734, %v1575
        %v4480 = vmul.f32 %v785, %v1578
        %v4481 = vmul.f32 %v735, %v1575
        %v4482 = vmul.f32 %v786, %v1578
        %v4483 = vmul.f32 %v736, %v1575
        %v4484 = vmul.f32 %v787, %v1578
        %v4485 = vmul.f32 %v737, %v1575
        %v4486 = vmul.f32 %v788, %v1578
        %v4487 = vmul.f32 %v738, %v1575
        %v4488 = vmul.f32 %v789, %v1578
        %v4489 = vmul.f32 %v739, %v1575
        %v4490 = vmul.f32 %v790, %v1578
        %v4491 = vmul.f32 %v740, %v1575
        %v4492 = vmul.f32 %v791, %v1578
        %v4493 = vmul.f32 %v741, %v1575
        %v4494 = vmul.f32 %v792, %v1578
        %v4495 = vmul.f32 %v742, %v1575
        %v4496 = vmul.f32 %v793, %v1578
        %v4497 = vmul.f32 %v743, %v1575
        %v4498 = vmul.f32 %v794, %v1578
        %v4499 = vmul.f32 %v744, %v1575
        %v4500 = vmul.f32 %v795, %v1578
        %v4501 = vmul.f32 %v745, %v1575
        %v4502 = vmul.f32 %v796, %v1578
        %v4535 = vrot.slane %v4471, 1
        %v4536 = vrot.slane %v4473, 1
        %v4537 = vsel %vm3013, %v4535, %v4536
        %v4538 = vrot.slane %v4472, 1
        %v4539 = vrot.slane %v4474, 1
        %v4540 = vsel %vm3013, %v4538, %v4539
        %v4541 = vrot.slane %v4475, 1
        %v4542 = vrot.slane %v4477, 1
        %v4543 = vsel %vm3013, %v4541, %v4542
        %v4544 = vrot.slane %v4476, 1
        %v4545 = vrot.slane %v4478, 1
        %v4546 = vsel %vm3013, %v4544, %v4545
        %v4547 = vrot.slane %v4479, 1
        %v4548 = vrot.slane %v4481, 1
        %v4549 = vsel %vm3013, %v4547, %v4548
        %v4550 = vrot.slane %v4480, 1
        %v4551 = vrot.slane %v4482, 1
        %v4552 = vsel %vm3013, %v4550, %v4551
        %v4553 = vrot.slane %v4483, 1
        %v4554 = vrot.slane %v4485, 1
        %v4555 = vsel %vm3013, %v4553, %v4554
        %v4556 = vrot.slane %v4484, 1
        %v4557 = vrot.slane %v4486, 1
        %v4558 = vsel %vm3013, %v4556, %v4557
        %v4559 = vrot.slane %v4487, 1
        %v4560 = vrot.slane %v4489, 1
        %v4561 = vsel %vm3013, %v4559, %v4560
        %v4562 = vrot.slane %v4488, 1
        %v4563 = vrot.slane %v4490, 1
        %v4564 = vsel %vm3013, %v4562, %v4563
        %v4565 = vrot.slane %v4491, 1
        %v4566 = vrot.slane %v4493, 1
        %v4567 = vsel %vm3013, %v4565, %v4566
        %v4568 = vrot.slane %v4492, 1
        %v4569 = vrot.slane %v4494, 1
        %v4570 = vsel %vm3013, %v4568, %v4569
        %v4571 = vrot.slane %v4495, 1
        %v4572 = vrot.slane %v4497, 1
        %v4573 = vsel %vm3013, %v4571, %v4572
        %v4574 = vrot.slane %v4496, 1
        %v4575 = vrot.slane %v4498, 1
        %v4576 = vsel %vm3013, %v4574, %v4575
        %v4577 = vrot.slane %v4499, 1
        %v4578 = vrot.slane %v4501, 1
        %v4579 = vsel %vm3013, %v4577, %v4578
        %v4580 = vrot.slane %v4500, 1
        %v4581 = vrot.slane %v4502, 1
        %v4582 = vsel %vm3013, %v4580, %v4581
        %4583 = vrot.lane.b32.xlu0 %v4537, 127
        %v4584 = vpop.permute.xlu0 %4583
        %4585 = vrot.lane.b32.xlu0 %v4540, 127
        %v4586 = vpop.permute.xlu0 %4585
        %4587 = vrot.lane.b32.xlu0 %v4543, 127
        %v4588 = vpop.permute.xlu0 %4587
        %4589 = vrot.lane.b32.xlu0 %v4546, 127
        %v4590 = vpop.permute.xlu0 %4589
        %4591 = vrot.lane.b32.xlu0 %v4549, 127
        %v4592 = vpop.permute.xlu0 %4591
        %4593 = vrot.lane.b32.xlu0 %v4552, 127
        %v4594 = vpop.permute.xlu0 %4593
        %4595 = vrot.lane.b32.xlu0 %v4555, 127
        %v4596 = vpop.permute.xlu0 %4595
        %4597 = vrot.lane.b32.xlu0 %v4558, 127
        %v4598 = vpop.permute.xlu0 %4597
        %4599 = vrot.lane.b32.xlu0 %v4561, 127
        %v4600 = vpop.permute.xlu0 %4599
        %4601 = vrot.lane.b32.xlu0 %v4564, 127
        %v4602 = vpop.permute.xlu0 %4601
        %4603 = vrot.lane.b32.xlu0 %v4567, 127
        %v4604 = vpop.permute.xlu0 %4603
        %4605 = vrot.lane.b32.xlu0 %v4570, 127
        %v4606 = vpop.permute.xlu0 %4605
        %4607 = vrot.lane.b32.xlu0 %v4573, 127
        %v4608 = vpop.permute.xlu0 %4607
        %4609 = vrot.lane.b32.xlu0 %v4576, 127
        %v4610 = vpop.permute.xlu0 %4609
        %4611 = vrot.lane.b32.xlu0 %v4579, 127
        %v4612 = vpop.permute.xlu0 %4611
        %4613 = vrot.lane.b32.xlu0 %v4582, 127
        %v4614 = vpop.permute.xlu0 %4613
        %v4615 = vsel %vm1360, %v4584, %v4586
        %v4616 = vsel %vm1360, %v4588, %v4590
        %v4617 = vsel %vm1360, %v4592, %v4594
        %v4618 = vsel %vm1360, %v4596, %v4598
        %v4619 = vsel %vm1360, %v4600, %v4602
        %v4620 = vsel %vm1360, %v4604, %v4606
        %v4621 = vsel %vm1360, %v4608, %v4610
        %v4622 = vsel %vm1360, %v4612, %v4614
        %v4639 = vadd.f32 %v4455, %v4615
        %v4640 = vadd.f32 %v4456, %v4586
        %v4641 = vadd.f32 %v4457, %v4616
        %v4642 = vadd.f32 %v4458, %v4590
        %v4643 = vadd.f32 %v4459, %v4617
        %v4644 = vadd.f32 %v4460, %v4594
        %v4645 = vadd.f32 %v4461, %v4618
        %v4646 = vadd.f32 %v4462, %v4598
        %v4647 = vadd.f32 %v4463, %v4619
        %v4648 = vadd.f32 %v4464, %v4602
        %v4649 = vadd.f32 %v4465, %v4620
        %v4650 = vadd.f32 %v4466, %v4606
        %v4651 = vadd.f32 %v4467, %v4621
        %v4652 = vadd.f32 %v4468, %v4610
        %v4653 = vadd.f32 %v4469, %v4622
        %v4654 = vadd.f32 %v4470, %v4614
        %v4655 = vmul.f32 %v730, %v1696
        %v4656 = vmul.f32 %v781, %v1699
        %v4657 = vmul.f32 %v731, %v1696
        %v4658 = vmul.f32 %v782, %v1699
        %v4659 = vmul.f32 %v732, %v1696
        %v4660 = vmul.f32 %v783, %v1699
        %v4661 = vmul.f32 %v733, %v1696
        %v4662 = vmul.f32 %v784, %v1699
        %v4663 = vmul.f32 %v734, %v1696
        %v4664 = vmul.f32 %v785, %v1699
        %v4665 = vmul.f32 %v735, %v1696
        %v4666 = vmul.f32 %v786, %v1699
        %v4667 = vmul.f32 %v736, %v1696
        %v4668 = vmul.f32 %v787, %v1699
        %v4669 = vmul.f32 %v737, %v1696
        %v4670 = vmul.f32 %v788, %v1699
        %v4671 = vmul.f32 %v738, %v1696
        %v4672 = vmul.f32 %v789, %v1699
        %v4673 = vmul.f32 %v739, %v1696
        %v4674 = vmul.f32 %v790, %v1699
        %v4675 = vmul.f32 %v740, %v1696
        %v4676 = vmul.f32 %v791, %v1699
        %v4677 = vmul.f32 %v741, %v1696
        %v4678 = vmul.f32 %v792, %v1699
        %v4679 = vmul.f32 %v742, %v1696
        %v4680 = vmul.f32 %v793, %v1699
        %v4681 = vmul.f32 %v743, %v1696
        %v4682 = vmul.f32 %v794, %v1699
        %v4683 = vmul.f32 %v744, %v1696
        %v4684 = vmul.f32 %v795, %v1699
        %v4685 = vmul.f32 %v745, %v1696
        %v4686 = vmul.f32 %v796, %v1699
        %v4719 = vrot.slane %v4655, 1
        %v4720 = vrot.slane %v4657, 1
        %v4721 = vsel %vm3013, %v4719, %v4720
        %v4722 = vrot.slane %v4656, 1
        %v4723 = vrot.slane %v4658, 1
        %v4724 = vsel %vm3013, %v4722, %v4723
        %v4725 = vrot.slane %v4659, 1
        %v4726 = vrot.slane %v4661, 1
        %v4727 = vsel %vm3013, %v4725, %v4726
        %v4728 = vrot.slane %v4660, 1
        %v4729 = vrot.slane %v4662, 1
        %v4730 = vsel %vm3013, %v4728, %v4729
        %v4731 = vrot.slane %v4663, 1
        %v4732 = vrot.slane %v4665, 1
        %v4733 = vsel %vm3013, %v4731, %v4732
        %v4734 = vrot.slane %v4664, 1
        %v4735 = vrot.slane %v4666, 1
        %v4736 = vsel %vm3013, %v4734, %v4735
        %v4737 = vrot.slane %v4667, 1
        %v4738 = vrot.slane %v4669, 1
        %v4739 = vsel %vm3013, %v4737, %v4738
        %v4740 = vrot.slane %v4668, 1
        %v4741 = vrot.slane %v4670, 1
        %v4742 = vsel %vm3013, %v4740, %v4741
        %v4743 = vrot.slane %v4671, 1
        %v4744 = vrot.slane %v4673, 1
        %v4745 = vsel %vm3013, %v4743, %v4744
        %v4746 = vrot.slane %v4672, 1
        %v4747 = vrot.slane %v4674, 1
        %v4748 = vsel %vm3013, %v4746, %v4747
        %v4749 = vrot.slane %v4675, 1
        %v4750 = vrot.slane %v4677, 1
        %v4751 = vsel %vm3013, %v4749, %v4750
        %v4752 = vrot.slane %v4676, 1
        %v4753 = vrot.slane %v4678, 1
        %v4754 = vsel %vm3013, %v4752, %v4753
        %v4755 = vrot.slane %v4679, 1
        %v4756 = vrot.slane %v4681, 1
        %v4757 = vsel %vm3013, %v4755, %v4756
        %v4758 = vrot.slane %v4680, 1
        %v4759 = vrot.slane %v4682, 1
        %v4760 = vsel %vm3013, %v4758, %v4759
        %v4761 = vrot.slane %v4683, 1
        %v4762 = vrot.slane %v4685, 1
        %v4763 = vsel %vm3013, %v4761, %v4762
        %v4764 = vrot.slane %v4684, 1
        %v4765 = vrot.slane %v4686, 1
        %v4766 = vsel %vm3013, %v4764, %v4765
        %4767 = vrot.lane.b32.xlu0 %v4721, 126
        %v4768 = vpop.permute.xlu0 %4767
        %4769 = vrot.lane.b32.xlu0 %v4724, 126
        %v4770 = vpop.permute.xlu0 %4769
        %4771 = vrot.lane.b32.xlu0 %v4727, 126
        %v4772 = vpop.permute.xlu0 %4771
        %4773 = vrot.lane.b32.xlu0 %v4730, 126
        %v4774 = vpop.permute.xlu0 %4773
        %4775 = vrot.lane.b32.xlu0 %v4733, 126
        %v4776 = vpop.permute.xlu0 %4775
        %4777 = vrot.lane.b32.xlu0 %v4736, 126
        %v4778 = vpop.permute.xlu0 %4777
        %4779 = vrot.lane.b32.xlu0 %v4739, 126
        %v4780 = vpop.permute.xlu0 %4779
        %4781 = vrot.lane.b32.xlu0 %v4742, 126
        %v4782 = vpop.permute.xlu0 %4781
        %4783 = vrot.lane.b32.xlu0 %v4745, 126
        %v4784 = vpop.permute.xlu0 %4783
        %4785 = vrot.lane.b32.xlu0 %v4748, 126
        %v4786 = vpop.permute.xlu0 %4785
        %4787 = vrot.lane.b32.xlu0 %v4751, 126
        %v4788 = vpop.permute.xlu0 %4787
        %4789 = vrot.lane.b32.xlu0 %v4754, 126
        %v4790 = vpop.permute.xlu0 %4789
        %4791 = vrot.lane.b32.xlu0 %v4757, 126
        %v4792 = vpop.permute.xlu0 %4791
        %4793 = vrot.lane.b32.xlu0 %v4760, 126
        %v4794 = vpop.permute.xlu0 %4793
        %4795 = vrot.lane.b32.xlu0 %v4763, 126
        %v4796 = vpop.permute.xlu0 %4795
        %4797 = vrot.lane.b32.xlu0 %v4766, 126
        %v4798 = vpop.permute.xlu0 %4797
        %v4799 = vsel %vm1483, %v4768, %v4770
        %v4800 = vsel %vm1483, %v4772, %v4774
        %v4801 = vsel %vm1483, %v4776, %v4778
        %v4802 = vsel %vm1483, %v4780, %v4782
        %v4803 = vsel %vm1483, %v4784, %v4786
        %v4804 = vsel %vm1483, %v4788, %v4790
        %v4805 = vsel %vm1483, %v4792, %v4794
        %v4806 = vsel %vm1483, %v4796, %v4798
        %v4823 = vadd.f32 %v4639, %v4799
        %v4824 = vadd.f32 %v4640, %v4770
        %v4825 = vadd.f32 %v4641, %v4800
        %v4826 = vadd.f32 %v4642, %v4774
        %v4827 = vadd.f32 %v4643, %v4801
        %v4828 = vadd.f32 %v4644, %v4778
        %v4829 = vadd.f32 %v4645, %v4802
        %v4830 = vadd.f32 %v4646, %v4782
        %v4831 = vadd.f32 %v4647, %v4803
        %v4832 = vadd.f32 %v4648, %v4786
        %v4833 = vadd.f32 %v4649, %v4804
        %v4834 = vadd.f32 %v4650, %v4790
        %v4835 = vadd.f32 %v4651, %v4805
        %v4836 = vadd.f32 %v4652, %v4794
        %v4837 = vadd.f32 %v4653, %v4806
        %v4838 = vadd.f32 %v4654, %v4798
        %v4839 = vmul.f32 %v893, %v1809
        %v4840 = vmul.f32 %v941, %v1813
        %v4841 = vmul.f32 %v894, %v1809
        %v4842 = vmul.f32 %v942, %v1813
        %v4843 = vmul.f32 %v895, %v1809
        %v4844 = vmul.f32 %v943, %v1813
        %v4845 = vmul.f32 %v896, %v1809
        %v4846 = vmul.f32 %v944, %v1813
        %v4847 = vmul.f32 %v897, %v1809
        %v4848 = vmul.f32 %v945, %v1813
        %v4849 = vmul.f32 %v898, %v1809
        %v4850 = vmul.f32 %v946, %v1813
        %v4851 = vmul.f32 %v899, %v1809
        %v4852 = vmul.f32 %v947, %v1813
        %v4853 = vmul.f32 %v900, %v1809
        %v4854 = vmul.f32 %v948, %v1813
        %v4855 = vmul.f32 %v901, %v1809
        %v4856 = vmul.f32 %v949, %v1813
        %v4857 = vmul.f32 %v902, %v1809
        %v4858 = vmul.f32 %v950, %v1813
        %v4859 = vmul.f32 %v903, %v1809
        %v4860 = vmul.f32 %v951, %v1813
        %v4861 = vmul.f32 %v904, %v1809
        %v4862 = vmul.f32 %v952, %v1813
        %v4863 = vmul.f32 %v905, %v1809
        %v4864 = vmul.f32 %v953, %v1813
        %v4865 = vmul.f32 %v906, %v1809
        %v4866 = vmul.f32 %v954, %v1813
        %v4867 = vmul.f32 %v907, %v1809
        %v4868 = vmul.f32 %v955, %v1813
        %v4869 = vmul.f32 %v908, %v1809
        %v4870 = vmul.f32 %v956, %v1813
        %v4903 = vrot.slane %v4839, 1
        %v4904 = vrot.slane %v4841, 1
        %v4905 = vsel %vm3013, %v4903, %v4904
        %v4906 = vrot.slane %v4840, 1
        %v4907 = vrot.slane %v4842, 1
        %v4908 = vsel %vm3013, %v4906, %v4907
        %v4909 = vrot.slane %v4843, 1
        %v4910 = vrot.slane %v4845, 1
        %v4911 = vsel %vm3013, %v4909, %v4910
        %v4912 = vrot.slane %v4844, 1
        %v4913 = vrot.slane %v4846, 1
        %v4914 = vsel %vm3013, %v4912, %v4913
        %v4915 = vrot.slane %v4847, 1
        %v4916 = vrot.slane %v4849, 1
        %v4917 = vsel %vm3013, %v4915, %v4916
        %v4918 = vrot.slane %v4848, 1
        %v4919 = vrot.slane %v4850, 1
        %v4920 = vsel %vm3013, %v4918, %v4919
        %v4921 = vrot.slane %v4851, 1
        %v4922 = vrot.slane %v4853, 1
        %v4923 = vsel %vm3013, %v4921, %v4922
        %v4924 = vrot.slane %v4852, 1
        %v4925 = vrot.slane %v4854, 1
        %v4926 = vsel %vm3013, %v4924, %v4925
        %v4927 = vrot.slane %v4855, 1
        %v4928 = vrot.slane %v4857, 1
        %v4929 = vsel %vm3013, %v4927, %v4928
        %v4930 = vrot.slane %v4856, 1
        %v4931 = vrot.slane %v4858, 1
        %v4932 = vsel %vm3013, %v4930, %v4931
        %v4933 = vrot.slane %v4859, 1
        %v4934 = vrot.slane %v4861, 1
        %v4935 = vsel %vm3013, %v4933, %v4934
        %v4936 = vrot.slane %v4860, 1
        %v4937 = vrot.slane %v4862, 1
        %v4938 = vsel %vm3013, %v4936, %v4937
        %v4939 = vrot.slane %v4863, 1
        %v4940 = vrot.slane %v4865, 1
        %v4941 = vsel %vm3013, %v4939, %v4940
        %v4942 = vrot.slane %v4864, 1
        %v4943 = vrot.slane %v4866, 1
        %v4944 = vsel %vm3013, %v4942, %v4943
        %v4945 = vrot.slane %v4867, 1
        %v4946 = vrot.slane %v4869, 1
        %v4947 = vsel %vm3013, %v4945, %v4946
        %v4948 = vrot.slane %v4868, 1
        %v4949 = vrot.slane %v4870, 1
        %v4950 = vsel %vm3013, %v4948, %v4949
        %v4967 = vadd.f32 %v4823, %v4905
        %v4968 = vadd.f32 %v4824, %v4908
        %v4969 = vadd.f32 %v4825, %v4911
        %v4970 = vadd.f32 %v4826, %v4914
        %v4971 = vadd.f32 %v4827, %v4917
        %v4972 = vadd.f32 %v4828, %v4920
        %v4973 = vadd.f32 %v4829, %v4923
        %v4974 = vadd.f32 %v4830, %v4926
        %v4975 = vadd.f32 %v4831, %v4929
        %v4976 = vadd.f32 %v4832, %v4932
        %v4977 = vadd.f32 %v4833, %v4935
        %v4978 = vadd.f32 %v4834, %v4938
        %v4979 = vadd.f32 %v4835, %v4941
        %v4980 = vadd.f32 %v4836, %v4944
        %v4981 = vadd.f32 %v4837, %v4947
        %v4982 = vadd.f32 %v4838, %v4950
        %v4983 = vmul.f32 %v893, %v1857
        %v4984 = vmul.f32 %v941, %v1860
        %v4985 = vmul.f32 %v894, %v1857
        %v4986 = vmul.f32 %v942, %v1860
        %v4987 = vmul.f32 %v895, %v1857
        %v4988 = vmul.f32 %v943, %v1860
        %v4989 = vmul.f32 %v896, %v1857
        %v4990 = vmul.f32 %v944, %v1860
        %v4991 = vmul.f32 %v897, %v1857
        %v4992 = vmul.f32 %v945, %v1860
        %v4993 = vmul.f32 %v898, %v1857
        %v4994 = vmul.f32 %v946, %v1860
        %v4995 = vmul.f32 %v899, %v1857
        %v4996 = vmul.f32 %v947, %v1860
        %v4997 = vmul.f32 %v900, %v1857
        %v4998 = vmul.f32 %v948, %v1860
        %v4999 = vmul.f32 %v901, %v1857
        %v5000 = vmul.f32 %v949, %v1860
        %v5001 = vmul.f32 %v902, %v1857
        %v5002 = vmul.f32 %v950, %v1860
        %v5003 = vmul.f32 %v903, %v1857
        %v5004 = vmul.f32 %v951, %v1860
        %v5005 = vmul.f32 %v904, %v1857
        %v5006 = vmul.f32 %v952, %v1860
        %v5007 = vmul.f32 %v905, %v1857
        %v5008 = vmul.f32 %v953, %v1860
        %v5009 = vmul.f32 %v906, %v1857
        %v5010 = vmul.f32 %v954, %v1860
        %v5011 = vmul.f32 %v907, %v1857
        %v5012 = vmul.f32 %v955, %v1860
        %v5013 = vmul.f32 %v908, %v1857
        %v5014 = vmul.f32 %v956, %v1860
        %v5047 = vrot.slane %v4983, 1
        %v5048 = vrot.slane %v4985, 1
        %v5049 = vsel %vm3013, %v5047, %v5048
        %v5050 = vrot.slane %v4984, 1
        %v5051 = vrot.slane %v4986, 1
        %v5052 = vsel %vm3013, %v5050, %v5051
        %v5053 = vrot.slane %v4987, 1
        %v5054 = vrot.slane %v4989, 1
        %v5055 = vsel %vm3013, %v5053, %v5054
        %v5056 = vrot.slane %v4988, 1
        %v5057 = vrot.slane %v4990, 1
        %v5058 = vsel %vm3013, %v5056, %v5057
        %v5059 = vrot.slane %v4991, 1
        %v5060 = vrot.slane %v4993, 1
        %v5061 = vsel %vm3013, %v5059, %v5060
        %v5062 = vrot.slane %v4992, 1
        %v5063 = vrot.slane %v4994, 1
        %v5064 = vsel %vm3013, %v5062, %v5063
        %v5065 = vrot.slane %v4995, 1
        %v5066 = vrot.slane %v4997, 1
        %v5067 = vsel %vm3013, %v5065, %v5066
        %v5068 = vrot.slane %v4996, 1
        %v5069 = vrot.slane %v4998, 1
        %v5070 = vsel %vm3013, %v5068, %v5069
        %v5071 = vrot.slane %v4999, 1
        %v5072 = vrot.slane %v5001, 1
        %v5073 = vsel %vm3013, %v5071, %v5072
        %v5074 = vrot.slane %v5000, 1
        %v5075 = vrot.slane %v5002, 1
        %v5076 = vsel %vm3013, %v5074, %v5075
        %v5077 = vrot.slane %v5003, 1
        %v5078 = vrot.slane %v5005, 1
        %v5079 = vsel %vm3013, %v5077, %v5078
        %v5080 = vrot.slane %v5004, 1
        %v5081 = vrot.slane %v5006, 1
        %v5082 = vsel %vm3013, %v5080, %v5081
        %v5083 = vrot.slane %v5007, 1
        %v5084 = vrot.slane %v5009, 1
        %v5085 = vsel %vm3013, %v5083, %v5084
        %v5086 = vrot.slane %v5008, 1
        %v5087 = vrot.slane %v5010, 1
        %v5088 = vsel %vm3013, %v5086, %v5087
        %v5089 = vrot.slane %v5011, 1
        %v5090 = vrot.slane %v5013, 1
        %v5091 = vsel %vm3013, %v5089, %v5090
        %v5092 = vrot.slane %v5012, 1
        %v5093 = vrot.slane %v5014, 1
        %v5094 = vsel %vm3013, %v5092, %v5093
        %5095 = vrot.lane.b32.xlu0 %v5049, 127
        %v5096 = vpop.permute.xlu0 %5095
        %5097 = vrot.lane.b32.xlu0 %v5052, 127
        %v5098 = vpop.permute.xlu0 %5097
        %5099 = vrot.lane.b32.xlu0 %v5055, 127
        %v5100 = vpop.permute.xlu0 %5099
        %5101 = vrot.lane.b32.xlu0 %v5058, 127
        %v5102 = vpop.permute.xlu0 %5101
        %5103 = vrot.lane.b32.xlu0 %v5061, 127
        %v5104 = vpop.permute.xlu0 %5103
        %5105 = vrot.lane.b32.xlu0 %v5064, 127
        %v5106 = vpop.permute.xlu0 %5105
        %5107 = vrot.lane.b32.xlu0 %v5067, 127
        %v5108 = vpop.permute.xlu0 %5107
        %5109 = vrot.lane.b32.xlu0 %v5070, 127
        %v5110 = vpop.permute.xlu0 %5109
        %5111 = vrot.lane.b32.xlu0 %v5073, 127
        %v5112 = vpop.permute.xlu0 %5111
        %5113 = vrot.lane.b32.xlu0 %v5076, 127
        %v5114 = vpop.permute.xlu0 %5113
        %5115 = vrot.lane.b32.xlu0 %v5079, 127
        %v5116 = vpop.permute.xlu0 %5115
        %5117 = vrot.lane.b32.xlu0 %v5082, 127
        %v5118 = vpop.permute.xlu0 %5117
        %5119 = vrot.lane.b32.xlu0 %v5085, 127
        %v5120 = vpop.permute.xlu0 %5119
        %5121 = vrot.lane.b32.xlu0 %v5088, 127
        %v5122 = vpop.permute.xlu0 %5121
        %5123 = vrot.lane.b32.xlu0 %v5091, 127
        %v5124 = vpop.permute.xlu0 %5123
        %5125 = vrot.lane.b32.xlu0 %v5094, 127
        %v5126 = vpop.permute.xlu0 %5125
        %v5127 = vsel %vm1360, %v5096, %v5098
        %v5128 = vsel %vm1360, %v5100, %v5102
        %v5129 = vsel %vm1360, %v5104, %v5106
        %v5130 = vsel %vm1360, %v5108, %v5110
        %v5131 = vsel %vm1360, %v5112, %v5114
        %v5132 = vsel %vm1360, %v5116, %v5118
        %v5133 = vsel %vm1360, %v5120, %v5122
        %v5134 = vsel %vm1360, %v5124, %v5126
        %v5151 = vadd.f32 %v4967, %v5127
        %v5152 = vadd.f32 %v4968, %v5098
        %v5153 = vadd.f32 %v4969, %v5128
        %v5154 = vadd.f32 %v4970, %v5102
        %v5155 = vadd.f32 %v4971, %v5129
        %v5156 = vadd.f32 %v4972, %v5106
        %v5157 = vadd.f32 %v4973, %v5130
        %v5158 = vadd.f32 %v4974, %v5110
        %v5159 = vadd.f32 %v4975, %v5131
        %v5160 = vadd.f32 %v4976, %v5114
        %v5161 = vadd.f32 %v4977, %v5132
        %v5162 = vadd.f32 %v4978, %v5118
        %v5163 = vadd.f32 %v4979, %v5133
        %v5164 = vadd.f32 %v4980, %v5122
        %v5165 = vadd.f32 %v4981, %v5134
        %v5166 = vadd.f32 %v4982, %v5126
        %v5167 = vmul.f32 %v893, %v1978
        %v5168 = vmul.f32 %v941, %v1981
        %v5169 = vmul.f32 %v894, %v1978
        %v5170 = vmul.f32 %v942, %v1981
        %v5171 = vmul.f32 %v895, %v1978
        %v5172 = vmul.f32 %v943, %v1981
        %v5173 = vmul.f32 %v896, %v1978
        %v5174 = vmul.f32 %v944, %v1981
        %v5175 = vmul.f32 %v897, %v1978
        %v5176 = vmul.f32 %v945, %v1981
        %v5177 = vmul.f32 %v898, %v1978
        %v5178 = vmul.f32 %v946, %v1981
        %v5179 = vmul.f32 %v899, %v1978
        %v5180 = vmul.f32 %v947, %v1981
        %v5181 = vmul.f32 %v900, %v1978
        %v5182 = vmul.f32 %v948, %v1981
        %v5183 = vmul.f32 %v901, %v1978
        %v5184 = vmul.f32 %v949, %v1981
        %v5185 = vmul.f32 %v902, %v1978
        %v5186 = vmul.f32 %v950, %v1981
        %v5187 = vmul.f32 %v903, %v1978
        %v5188 = vmul.f32 %v951, %v1981
        %v5189 = vmul.f32 %v904, %v1978
        %v5190 = vmul.f32 %v952, %v1981
        %v5191 = vmul.f32 %v905, %v1978
        %v5192 = vmul.f32 %v953, %v1981
        %v5193 = vmul.f32 %v906, %v1978
        %v5194 = vmul.f32 %v954, %v1981
        %v5195 = vmul.f32 %v907, %v1978
        %v5196 = vmul.f32 %v955, %v1981
        %v5197 = vmul.f32 %v908, %v1978
        %v5198 = vmul.f32 %v956, %v1981
        %v5231 = vrot.slane %v5167, 1
        %v5232 = vrot.slane %v5169, 1
        %v5233 = vsel %vm3013, %v5231, %v5232
        %v5234 = vrot.slane %v5168, 1
        %v5235 = vrot.slane %v5170, 1
        %v5236 = vsel %vm3013, %v5234, %v5235
        %v5237 = vrot.slane %v5171, 1
        %v5238 = vrot.slane %v5173, 1
        %v5239 = vsel %vm3013, %v5237, %v5238
        %v5240 = vrot.slane %v5172, 1
        %v5241 = vrot.slane %v5174, 1
        %v5242 = vsel %vm3013, %v5240, %v5241
        %v5243 = vrot.slane %v5175, 1
        %v5244 = vrot.slane %v5177, 1
        %v5245 = vsel %vm3013, %v5243, %v5244
        %v5246 = vrot.slane %v5176, 1
        %v5247 = vrot.slane %v5178, 1
        %v5248 = vsel %vm3013, %v5246, %v5247
        %v5249 = vrot.slane %v5179, 1
        %v5250 = vrot.slane %v5181, 1
        %v5251 = vsel %vm3013, %v5249, %v5250
        %v5252 = vrot.slane %v5180, 1
        %v5253 = vrot.slane %v5182, 1
        %v5254 = vsel %vm3013, %v5252, %v5253
        %v5255 = vrot.slane %v5183, 1
        %v5256 = vrot.slane %v5185, 1
        %v5257 = vsel %vm3013, %v5255, %v5256
        %v5258 = vrot.slane %v5184, 1
        %v5259 = vrot.slane %v5186, 1
        %v5260 = vsel %vm3013, %v5258, %v5259
        %v5261 = vrot.slane %v5187, 1
        %v5262 = vrot.slane %v5189, 1
        %v5263 = vsel %vm3013, %v5261, %v5262
        %v5264 = vrot.slane %v5188, 1
        %v5265 = vrot.slane %v5190, 1
        %v5266 = vsel %vm3013, %v5264, %v5265
        %v5267 = vrot.slane %v5191, 1
        %v5268 = vrot.slane %v5193, 1
        %v5269 = vsel %vm3013, %v5267, %v5268
        %v5270 = vrot.slane %v5192, 1
        %v5271 = vrot.slane %v5194, 1
        %v5272 = vsel %vm3013, %v5270, %v5271
        %v5273 = vrot.slane %v5195, 1
        %v5274 = vrot.slane %v5197, 1
        %v5275 = vsel %vm3013, %v5273, %v5274
        %v5276 = vrot.slane %v5196, 1
        %v5277 = vrot.slane %v5198, 1
        %v5278 = vsel %vm3013, %v5276, %v5277
        %5279 = vrot.lane.b32.xlu0 %v5233, 126
        %v5280 = vpop.permute.xlu0 %5279
        %5281 = vrot.lane.b32.xlu0 %v5236, 126
        %v5282 = vpop.permute.xlu0 %5281
        %5283 = vrot.lane.b32.xlu0 %v5239, 126
        %v5284 = vpop.permute.xlu0 %5283
        %5285 = vrot.lane.b32.xlu0 %v5242, 126
        %v5286 = vpop.permute.xlu0 %5285
        %5287 = vrot.lane.b32.xlu0 %v5245, 126
        %v5288 = vpop.permute.xlu0 %5287
        %5289 = vrot.lane.b32.xlu0 %v5248, 126
        %v5290 = vpop.permute.xlu0 %5289
        %5291 = vrot.lane.b32.xlu0 %v5251, 126
        %v5292 = vpop.permute.xlu0 %5291
        %5293 = vrot.lane.b32.xlu0 %v5254, 126
        %v5294 = vpop.permute.xlu0 %5293
        %5295 = vrot.lane.b32.xlu0 %v5257, 126
        %v5296 = vpop.permute.xlu0 %5295
        %5297 = vrot.lane.b32.xlu0 %v5260, 126
        %v5298 = vpop.permute.xlu0 %5297
        %5299 = vrot.lane.b32.xlu0 %v5263, 126
        %v5300 = vpop.permute.xlu0 %5299
        %5301 = vrot.lane.b32.xlu0 %v5266, 126
        %v5302 = vpop.permute.xlu0 %5301
        %5303 = vrot.lane.b32.xlu0 %v5269, 126
        %v5304 = vpop.permute.xlu0 %5303
        %5305 = vrot.lane.b32.xlu0 %v5272, 126
        %v5306 = vpop.permute.xlu0 %5305
        %5307 = vrot.lane.b32.xlu0 %v5275, 126
        %v5308 = vpop.permute.xlu0 %5307
        %5309 = vrot.lane.b32.xlu0 %v5278, 126
        %v5310 = vpop.permute.xlu0 %5309
        %v5311 = vsel %vm1483, %v5280, %v5282
        %v5312 = vsel %vm1483, %v5284, %v5286
        %v5313 = vsel %vm1483, %v5288, %v5290
        %v5314 = vsel %vm1483, %v5292, %v5294
        %v5315 = vsel %vm1483, %v5296, %v5298
        %v5316 = vsel %vm1483, %v5300, %v5302
        %v5317 = vsel %vm1483, %v5304, %v5306
        %v5318 = vsel %vm1483, %v5308, %v5310
        %v5335 = vadd.f32 %v5151, %v5311
        %v5336 = vadd.f32 %v5152, %v5282
        %v5337 = vadd.f32 %v5153, %v5312
        %v5338 = vadd.f32 %v5154, %v5286
        %v5339 = vadd.f32 %v5155, %v5313
        %v5340 = vadd.f32 %v5156, %v5290
        %v5341 = vadd.f32 %v5157, %v5314
        %v5342 = vadd.f32 %v5158, %v5294
        %v5343 = vadd.f32 %v5159, %v5315
        %v5344 = vadd.f32 %v5160, %v5298
        %v5345 = vadd.f32 %v5161, %v5316
        %v5346 = vadd.f32 %v5162, %v5302
        %v5347 = vadd.f32 %v5163, %v5317
        %v5348 = vadd.f32 %v5164, %v5306
        %v5349 = vadd.f32 %v5165, %v5318
        %v5350 = vadd.f32 %v5166, %v5310
        %v5351 = vmax.f32 %v4087, %v5335
        %v5352 = vmax.f32 %v4088, %v5336
        %v5353 = vmax.f32 %v4089, %v5337
        %v5354 = vmax.f32 %v4090, %v5338
        %v5355 = vmax.f32 %v4091, %v5339
        %v5356 = vmax.f32 %v4092, %v5340
        %v5357 = vmax.f32 %v4093, %v5341
        %v5358 = vmax.f32 %v4094, %v5342
        %v5359 = vmax.f32 %v4095, %v5343
        %v5360 = vmax.f32 %v4096, %v5344
        %v5361 = vmax.f32 %v4097, %v5345
        %v5362 = vmax.f32 %v4098, %v5346
        %v5363 = vmax.f32 %v4099, %v5347
        %v5364 = vmax.f32 %v4100, %v5348
        %v5365 = vmax.f32 %v4101, %v5349
        %v5366 = vmax.f32 %v4102, %v5350
        %5383 = vrot.lane.b32.xlu0 %v5351, 127
        %v5384 = vpop.permute.xlu0 %5383
        %5385 = vrot.lane.b32.xlu0 %v5352, 127
        %v5386 = vpop.permute.xlu0 %5385
        %5387 = vrot.lane.b32.xlu0 %v5353, 127
        %v5388 = vpop.permute.xlu0 %5387
        %5389 = vrot.lane.b32.xlu0 %v5354, 127
        %v5390 = vpop.permute.xlu0 %5389
        %5391 = vrot.lane.b32.xlu0 %v5355, 127
        %v5392 = vpop.permute.xlu0 %5391
        %5393 = vrot.lane.b32.xlu0 %v5356, 127
        %v5394 = vpop.permute.xlu0 %5393
        %5395 = vrot.lane.b32.xlu0 %v5357, 127
        %v5396 = vpop.permute.xlu0 %5395
        %5397 = vrot.lane.b32.xlu0 %v5358, 127
        %v5398 = vpop.permute.xlu0 %5397
        %5399 = vrot.lane.b32.xlu0 %v5359, 127
        %v5400 = vpop.permute.xlu0 %5399
        %5401 = vrot.lane.b32.xlu0 %v5360, 127
        %v5402 = vpop.permute.xlu0 %5401
        %5403 = vrot.lane.b32.xlu0 %v5361, 127
        %v5404 = vpop.permute.xlu0 %5403
        %5405 = vrot.lane.b32.xlu0 %v5362, 127
        %v5406 = vpop.permute.xlu0 %5405
        %5407 = vrot.lane.b32.xlu0 %v5363, 127
        %v5408 = vpop.permute.xlu0 %5407
        %5409 = vrot.lane.b32.xlu0 %v5364, 127
        %v5410 = vpop.permute.xlu0 %5409
        %5411 = vrot.lane.b32.xlu0 %v5365, 127
        %v5412 = vpop.permute.xlu0 %5411
        %5413 = vrot.lane.b32.xlu0 %v5366, 127
        %v5414 = vpop.permute.xlu0 %5413
        %v5415 = vsel %vm1360, %v5384, %v5386
        %v5416 = vsel %vm1360, %v5388, %v5390
        %v5417 = vsel %vm1360, %v5392, %v5394
        %v5418 = vsel %vm1360, %v5396, %v5398
        %v5419 = vsel %vm1360, %v5400, %v5402
        %v5420 = vsel %vm1360, %v5404, %v5406
        %v5421 = vsel %vm1360, %v5408, %v5410
        %v5422 = vsel %vm1360, %v5412, %v5414
        %v5439 = vmax.f32 %v5351, %v5415
        %v5440 = vmax.f32 %v5352, %v5386
        %v5441 = vmax.f32 %v5353, %v5416
        %v5442 = vmax.f32 %v5354, %v5390
        %v5443 = vmax.f32 %v5355, %v5417
        %v5444 = vmax.f32 %v5356, %v5394
        %v5445 = vmax.f32 %v5357, %v5418
        %v5446 = vmax.f32 %v5358, %v5398
        %v5447 = vmax.f32 %v5359, %v5419
        %v5448 = vmax.f32 %v5360, %v5402
        %v5449 = vmax.f32 %v5361, %v5420
        %v5450 = vmax.f32 %v5362, %v5406
        %v5451 = vmax.f32 %v5363, %v5421
        %v5452 = vmax.f32 %v5364, %v5410
        %v5453 = vmax.f32 %v5365, %v5422
        %v5454 = vmax.f32 %v5366, %v5414
        %v5455 = vpack.c.bf16 %v5441, %v5439
        %v5456 = vpack.c.bf16 %v5442, %v5440
        %v5457 = vpack.c.bf16 %v5445, %v5443
        %v5458 = vpack.c.bf16 %v5446, %v5444
        %v5459 = vpack.c.bf16 %v5449, %v5447
        %v5460 = vpack.c.bf16 %v5450, %v5448
        %v5461 = vpack.c.bf16 %v5453, %v5451
        %v5462 = vpack.c.bf16 %v5454, %v5452
        %v5464 = vsel %vm2999, %v5456, 0
        %v5467 = vsel %vm2999, %v5458, 0
        %v5470 = vsel %vm2999, %v5460, 0
        %v5473 = vsel %vm2999, %v5462, 0
        %5475 = vmatprep.subr.bf16.mxu0 0
        %5476 = vmatpush1.bf16.msra.mxu0 %v2970
        %5477 = vmatprep.subr.bf16.mxu0 0
        %5478 = vmatpush1.bf16.msra.mxu0 %v2971
        %5479 = vmatprep.subr.bf16.mxu0 0
        %5480 = vmatpush1.bf16.msra.mxu0 %v2972
        %5481 = vmatprep.subr.bf16.mxu0 0
        %5482 = vmatpush1.bf16.msra.mxu0 %v2973
        %5483 = vmatprep.subr.bf16.mxu0 0
        %5484 = vmatpush1.bf16.msra.mxu0 %v2974
        %5485 = vmatprep.subr.bf16.mxu0 0
        %5486 = vmatpush1.bf16.msra.mxu0 %v2975
        %5487 = vmatprep.subr.bf16.mxu0 0
        %5488 = vmatpush1.bf16.msra.mxu0 %v2976
        %5489 = vmatprep.subr.bf16.mxu0 0
        %5490 = vmatpush1.bf16.msra.mxu0 %v2977
        %5491 = vmatprep.subr.bf16.mxu0 0
        %5492 = vmatpush1.bf16.msra.mxu0 %v2978
        %5493 = vmatprep.subr.bf16.mxu0 0
        %5494 = vmatpush1.bf16.msra.mxu0 %v2979
        %5495 = vmatprep.subr.bf16.mxu0 0
        %5496 = vmatpush1.bf16.msra.mxu0 %v2980
        %5497 = vmatprep.subr.bf16.mxu0 0
        %5498 = vmatpush1.bf16.msra.mxu0 %v2981
        %5499 = vmatprep.subr.bf16.mxu0 0
        %5500 = vmatpush1.bf16.msra.mxu0 %v2982
        %5501 = vmatprep.subr.bf16.mxu0 0
        %5502 = vmatpush1.bf16.msra.mxu0 %v2983
        %5503 = vmatprep.subr.bf16.mxu0 0
        %5504 = vmatpush1.bf16.msra.mxu0 %v3017
        %5505 = vmatprep.subr.bf16.mxu0 0
        %5506 = vmatpush1.bf16.msra.mxu0 0
        %5507 = vmatprep.mubr.bf16.mxu0 %v5464
        %5508 = vmatmul.mubr.bf16.gmra.mrb[0].mxu0 %v5455
        %v5509 = vpop.f32.mrb[0].mxu0
        %v5510 = vadd.f32 %v2908, %v5509
        %v5511 = vpop.f32.mrb[0].mxu0
        %v5512 = vpop.f32.mrb[0].mxu0
        %v5513 = vadd.f32 %v2908, %v5512
        %v5514 = vpop.f32.mrb[0].mxu0
        %5515 = vmatprep.mubr.bf16.mxu0 %v5467
        %5516 = vmatmul.mubr.bf16.gmra.mrb[0].mxu0 %v5457
        %v5517 = vpop.f32.mrb[0].mxu0
        %v5518 = vadd.f32 %v2908, %v5517
        %v5519 = vpop.f32.mrb[0].mxu0
        %v5520 = vpop.f32.mrb[0].mxu0
        %v5521 = vadd.f32 %v2908, %v5520
        %v5522 = vpop.f32.mrb[0].mxu0
        %5523 = vmatprep.mubr.bf16.mxu0 %v5470
        %5524 = vmatmul.mubr.bf16.gmra.mrb[0].mxu0 %v5459
        %v5525 = vpop.f32.mrb[0].mxu0
        %v5526 = vadd.f32 %v2908, %v5525
        %v5527 = vpop.f32.mrb[0].mxu0
        %v5528 = vpop.f32.mrb[0].mxu0
        %v5529 = vadd.f32 %v2908, %v5528
        %v5530 = vpop.f32.mrb[0].mxu0
        %5531 = vmatprep.mubr.bf16.mxu0 %v5473
        %5532 = vmatmul.mubr.bf16.gmra.mrb[0].mxu0 %v5461
        %v5533 = vpop.f32.mrb[0].mxu0
        %v5534 = vadd.f32 %v2908, %v5533
        %v5535 = vpop.f32.mrb[0].mxu0
        %v5536 = vpop.f32.mrb[0].mxu0
        %v5537 = vadd.f32 %v2908, %v5536
        %v5538 = vpop.f32.mrb[0].mxu0
        %5539 = vdwg.mxu0
        %v5540 = vmax.f32 %v5510, 0.0
        %v5541 = vmax.f32 %v5513, 0.0
        %v5542 = vmax.f32 %v5518, 0.0
        %v5543 = vmax.f32 %v5521, 0.0
        %v5544 = vmax.f32 %v5526, 0.0
        %v5545 = vmax.f32 %v5529, 0.0
        %v5546 = vmax.f32 %v5534, 0.0
        %v5547 = vmax.f32 %v5537, 0.0
        %v5548 = vpack.c.bf16 %v5540, %v5540
        %v5549 = vpack.c.bf16 %v5541, %v5541
        %v5550 = vpack.c.bf16 %v5542, %v5542
        %v5551 = vpack.c.bf16 %v5543, %v5543
        %v5552 = vpack.c.bf16 %v5544, %v5544
        %v5553 = vpack.c.bf16 %v5545, %v5545
        %v5554 = vpack.c.bf16 %v5546, %v5546
        %v5555 = vpack.c.bf16 %v5547, %v5547
        %v5564 = vunpack.c.l.b16 %v5548
        %v5565 = vunpack.c.l.b16 %v5549
        %v5566 = vunpack.c.l.b16 %v5550
        %v5567 = vunpack.c.l.b16 %v5551
        %v5568 = vunpack.c.l.b16 %v5552
        %v5569 = vunpack.c.l.b16 %v5553
        %v5570 = vunpack.c.l.b16 %v5554
        %v5571 = vunpack.c.l.b16 %v5555
        %v5572 = vpack.c.b16 %v5564, %v5564
        %v5573 = vpack.c.b16 %v5565, %v5565
        %v5574 = vpack.c.b16 %v5566, %v5566
        %v5575 = vpack.c.b16 %v5567, %v5567
        %v5576 = vpack.c.b16 %v5568, %v5568
        %v5577 = vpack.c.b16 %v5569, %v5569
        %v5578 = vpack.c.b16 %v5570, %v5570
        %v5579 = vpack.c.b16 %v5571, %v5571
        %v5581 = vshrl.u32 %v5572, 16
        %v5583 = vrot.slane %v5581, 7
        %v5584 = vshll.u32 %v5572, 16
        %v5586 = vor.u32 %v5583, %v5584
        %v5588 = vshrl.u32 %v5573, 16
        %v5590 = vrot.slane %v5588, 7
        %v5591 = vshll.u32 %v5573, 16
        %v5593 = vor.u32 %v5590, %v5591
        %v5595 = vshrl.u32 %v5574, 16
        %v5597 = vrot.slane %v5595, 7
        %v5598 = vshll.u32 %v5574, 16
        %v5600 = vor.u32 %v5597, %v5598
        %v5602 = vshrl.u32 %v5575, 16
        %v5604 = vrot.slane %v5602, 7
        %v5605 = vshll.u32 %v5575, 16
        %v5607 = vor.u32 %v5604, %v5605
        %v5609 = vshrl.u32 %v5576, 16
        %v5611 = vrot.slane %v5609, 7
        %v5612 = vshll.u32 %v5576, 16
        %v5614 = vor.u32 %v5611, %v5612
        %v5616 = vshrl.u32 %v5577, 16
        %v5618 = vrot.slane %v5616, 7
        %v5619 = vshll.u32 %v5577, 16
        %v5621 = vor.u32 %v5618, %v5619
        %v5623 = vshrl.u32 %v5578, 16
        %v5625 = vrot.slane %v5623, 7
        %v5626 = vshll.u32 %v5578, 16
        %v5628 = vor.u32 %v5625, %v5626
        %v5630 = vshrl.u32 %v5579, 16
        %v5632 = vrot.slane %v5630, 7
        %v5633 = vshll.u32 %v5579, 16
        %v5635 = vor.u32 %v5632, %v5633
        %vm5644 = vsmask.f32 7938
        %vm5645 = vmand %vm3100, %vm5644
        %v5646 = vld [vmem:[#allocation2] sm:$0xf]
        %v5647 = vsel %vm5645, %v5586, %v5646
        %5648 = vst [vmem:[#allocation2] sm:$0xf] %v5647
        %v5649 = vld [vmem:[#allocation2 + $0x8] sm:$0xf]
        %v5650 = vsel %vm5645, %v5593, %v5649
        %5651 = vst [vmem:[#allocation2 + $0x8] sm:$0xf] %v5650
        %v5652 = vld [vmem:[#allocation2 + $0x10] sm:$0xf]
        %v5653 = vsel %vm5645, %v5600, %v5652
        %5654 = vst [vmem:[#allocation2 + $0x10] sm:$0xf] %v5653
        %v5655 = vld [vmem:[#allocation2 + $0x18] sm:$0xf]
        %v5656 = vsel %vm5645, %v5607, %v5655
        %5657 = vst [vmem:[#allocation2 + $0x18] sm:$0xf] %v5656
        %v5658 = vld [vmem:[#allocation2 + $0x20] sm:$0xf]
        %v5659 = vsel %vm5645, %v5614, %v5658
        %5660 = vst [vmem:[#allocation2 + $0x20] sm:$0xf] %v5659
        %v5661 = vld [vmem:[#allocation2 + $0x28] sm:$0xf]
        %v5662 = vsel %vm5645, %v5621, %v5661
        %5663 = vst [vmem:[#allocation2 + $0x28] sm:$0xf] %v5662
        %v5664 = vld [vmem:[#allocation2 + $0x30] sm:$0xf]
        %v5665 = vsel %vm5645, %v5628, %v5664
        %5666 = vst [vmem:[#allocation2 + $0x30] sm:$0xf] %v5665
        %v5667 = vld [vmem:[#allocation2 + $0x38] sm:$0xf]
        %v5668 = vsel %vm5645, %v5635, %v5667
        %5669 = vst [vmem:[#allocation2 + $0x38] sm:$0xf] %v5668
        %v5670 = vld [vmem:[#allocation2] sm:$0xf]
        %v5671 = vld [vmem:[#allocation2 + $0x8] sm:$0xf]
        %v5672 = vld [vmem:[#allocation2 + $0x10] sm:$0xf]
        %v5673 = vld [vmem:[#allocation2 + $0x18] sm:$0xf]
        %v5674 = vld [vmem:[#allocation2 + $0x20] sm:$0xf]
        %v5675 = vld [vmem:[#allocation2 + $0x28] sm:$0xf]
        %v5676 = vld [vmem:[#allocation2 + $0x30] sm:$0xf]
        %v5677 = vld [vmem:[#allocation2 + $0x38] sm:$0xf]
        %v5678 = vld [vmem:[#allocation3] sm:$0xf]
        %v5679 = vld [vmem:[#allocation3 + $0x8] sm:$0xf]
        %v5680 = vld [vmem:[#allocation3 + $0x10] sm:$0xf]
        %v5681 = vld [vmem:[#allocation3 + $0x18] sm:$0xf]
        %v5682 = vld [vmem:[#allocation3 + $0x20] sm:$0xf]
        %v5683 = vld [vmem:[#allocation3 + $0x28] sm:$0xf]
        %v5684 = vld [vmem:[#allocation3 + $0x30] sm:$0xf]
        %v5685 = vld [vmem:[#allocation3 + $0x38] sm:$0xf]
        %v5686 = vld [vmem:[#allocation2 + $0x4] sm:$0x1]
        %v5687 = vld [vmem:[#allocation2 + $0xc] sm:$0x1]
        %v5688 = vld [vmem:[#allocation2 + $0x14] sm:$0x1]
        %v5689 = vld [vmem:[#allocation2 + $0x1c] sm:$0x1]
        %v5690 = vld [vmem:[#allocation2 + $0x24] sm:$0x1]
        %v5691 = vld [vmem:[#allocation2 + $0x2c] sm:$0x1]
        %v5692 = vld [vmem:[#allocation2 + $0x34] sm:$0x1]
        %v5693 = vld [vmem:[#allocation2 + $0x3c] sm:$0x1]
        %vm5694 = vsmask.f32 7440
        %vm5695 = vmor %vm3101, %vm5694
        %v5697 = vshrl.u32 %v5670, 16
        %v5699 = vrot.slane %v5697, 4
        %v5700 = vshll.u32 %v5670, 16
        %v5702 = vrot.slane %v5700, 5
        %v5703 = vor.u32 %v5699, %v5702
        %v5704 = vrot.slane %v5703, 4
        %v5706 = vshll.u32 %v5686, 16
        %v5708 = vrot.slane %v5706, 5
        %v5709 = vsel %vm5695, %v5704, %v5708
        %v5711 = vshrl.u32 %v5671, 16
        %v5713 = vrot.slane %v5711, 4
        %v5714 = vshll.u32 %v5671, 16
        %v5716 = vrot.slane %v5714, 5
        %v5717 = vor.u32 %v5713, %v5716
        %v5718 = vrot.slane %v5717, 4
        %v5720 = vshll.u32 %v5687, 16
        %v5722 = vrot.slane %v5720, 5
        %v5723 = vsel %vm5695, %v5718, %v5722
        %v5725 = vshrl.u32 %v5672, 16
        %v5727 = vrot.slane %v5725, 4
        %v5728 = vshll.u32 %v5672, 16
        %v5730 = vrot.slane %v5728, 5
        %v5731 = vor.u32 %v5727, %v5730
        %v5732 = vrot.slane %v5731, 4
        %v5734 = vshll.u32 %v5688, 16
        %v5736 = vrot.slane %v5734, 5
        %v5737 = vsel %vm5695, %v5732, %v5736
        %v5739 = vshrl.u32 %v5673, 16
        %v5741 = vrot.slane %v5739, 4
        %v5742 = vshll.u32 %v5673, 16
        %v5744 = vrot.slane %v5742, 5
        %v5745 = vor.u32 %v5741, %v5744
        %v5746 = vrot.slane %v5745, 4
        %v5748 = vshll.u32 %v5689, 16
        %v5750 = vrot.slane %v5748, 5
        %v5751 = vsel %vm5695, %v5746, %v5750
        %v5753 = vshrl.u32 %v5674, 16
        %v5755 = vrot.slane %v5753, 4
        %v5756 = vshll.u32 %v5674, 16
        %v5758 = vrot.slane %v5756, 5
        %v5759 = vor.u32 %v5755, %v5758
        %v5760 = vrot.slane %v5759, 4
        %v5762 = vshll.u32 %v5690, 16
        %v5764 = vrot.slane %v5762, 5
        %v5765 = vsel %vm5695, %v5760, %v5764
        %v5767 = vshrl.u32 %v5675, 16
        %v5769 = vrot.slane %v5767, 4
        %v5770 = vshll.u32 %v5675, 16
        %v5772 = vrot.slane %v5770, 5
        %v5773 = vor.u32 %v5769, %v5772
        %v5774 = vrot.slane %v5773, 4
        %v5776 = vshll.u32 %v5691, 16
        %v5778 = vrot.slane %v5776, 5
        %v5779 = vsel %vm5695, %v5774, %v5778
        %v5781 = vshrl.u32 %v5676, 16
        %v5783 = vrot.slane %v5781, 4
        %v5784 = vshll.u32 %v5676, 16
        %v5786 = vrot.slane %v5784, 5
        %v5787 = vor.u32 %v5783, %v5786
        %v5788 = vrot.slane %v5787, 4
        %v5790 = vshll.u32 %v5692, 16
        %v5792 = vrot.slane %v5790, 5
        %v5793 = vsel %vm5695, %v5788, %v5792
        %v5795 = vshrl.u32 %v5677, 16
        %v5797 = vrot.slane %v5795, 4
        %v5798 = vshll.u32 %v5677, 16
        %v5800 = vrot.slane %v5798, 5
        %v5801 = vor.u32 %v5797, %v5800
        %v5802 = vrot.slane %v5801, 4
        %v5804 = vshll.u32 %v5693, 16
        %v5806 = vrot.slane %v5804, 5
        %v5807 = vsel %vm5695, %v5802, %v5806
        %v5808 = vld [vmem:[#allocation3 + $0x4] sm:$0x1]
        %v5809 = vld [vmem:[#allocation3 + $0xc] sm:$0x1]
        %v5810 = vld [vmem:[#allocation3 + $0x14] sm:$0x1]
        %v5811 = vld [vmem:[#allocation3 + $0x1c] sm:$0x1]
        %v5812 = vld [vmem:[#allocation3 + $0x24] sm:$0x1]
        %v5813 = vld [vmem:[#allocation3 + $0x2c] sm:$0x1]
        %v5814 = vld [vmem:[#allocation3 + $0x34] sm:$0x1]
        %v5815 = vld [vmem:[#allocation3 + $0x3c] sm:$0x1]
        %v5817 = vshrl.u32 %v5678, 16
        %v5819 = vrot.slane %v5817, 4
        %v5820 = vshll.u32 %v5678, 16
        %v5822 = vrot.slane %v5820, 5
        %v5823 = vor.u32 %v5819, %v5822
        %v5824 = vrot.slane %v5823, 4
        %v5826 = vshll.u32 %v5808, 16
        %v5828 = vrot.slane %v5826, 5
        %v5829 = vsel %vm5695, %v5824, %v5828
        %v5831 = vshrl.u32 %v5679, 16
        %v5833 = vrot.slane %v5831, 4
        %v5834 = vshll.u32 %v5679, 16
        %v5836 = vrot.slane %v5834, 5
        %v5837 = vor.u32 %v5833, %v5836
        %v5838 = vrot.slane %v5837, 4
        %v5840 = vshll.u32 %v5809, 16
        %v5842 = vrot.slane %v5840, 5
        %v5843 = vsel %vm5695, %v5838, %v5842
        %v5845 = vshrl.u32 %v5680, 16
        %v5847 = vrot.slane %v5845, 4
        %v5848 = vshll.u32 %v5680, 16
        %v5850 = vrot.slane %v5848, 5
        %v5851 = vor.u32 %v5847, %v5850
        %v5852 = vrot.slane %v5851, 4
        %v5854 = vshll.u32 %v5810, 16
        %v5856 = vrot.slane %v5854, 5
        %v5857 = vsel %vm5695, %v5852, %v5856
        %v5859 = vshrl.u32 %v5681, 16
        %v5861 = vrot.slane %v5859, 4
        %v5862 = vshll.u32 %v5681, 16
        %v5864 = vrot.slane %v5862, 5
        %v5865 = vor.u32 %v5861, %v5864
        %v5866 = vrot.slane %v5865, 4
        %v5868 = vshll.u32 %v5811, 16
        %v5870 = vrot.slane %v5868, 5
        %v5871 = vsel %vm5695, %v5866, %v5870
        %v5873 = vshrl.u32 %v5682, 16
        %v5875 = vrot.slane %v5873, 4
        %v5876 = vshll.u32 %v5682, 16
        %v5878 = vrot.slane %v5876, 5
        %v5879 = vor.u32 %v5875, %v5878
        %v5880 = vrot.slane %v5879, 4
        %v5882 = vshll.u32 %v5812, 16
        %v5884 = vrot.slane %v5882, 5
        %v5885 = vsel %vm5695, %v5880, %v5884
        %v5887 = vshrl.u32 %v5683, 16
        %v5889 = vrot.slane %v5887, 4
        %v5890 = vshll.u32 %v5683, 16
        %v5892 = vrot.slane %v5890, 5
        %v5893 = vor.u32 %v5889, %v5892
        %v5894 = vrot.slane %v5893, 4
        %v5896 = vshll.u32 %v5813, 16
        %v5898 = vrot.slane %v5896, 5
        %v5899 = vsel %vm5695, %v5894, %v5898
        %v5901 = vshrl.u32 %v5684, 16
        %v5903 = vrot.slane %v5901, 4
        %v5904 = vshll.u32 %v5684, 16
        %v5906 = vrot.slane %v5904, 5
        %v5907 = vor.u32 %v5903, %v5906
        %v5908 = vrot.slane %v5907, 4
        %v5910 = vshll.u32 %v5814, 16
        %v5912 = vrot.slane %v5910, 5
        %v5913 = vsel %vm5695, %v5908, %v5912
        %v5915 = vshrl.u32 %v5685, 16
        %v5917 = vrot.slane %v5915, 4
        %v5918 = vshll.u32 %v5685, 16
        %v5920 = vrot.slane %v5918, 5
        %v5921 = vor.u32 %v5917, %v5920
        %v5922 = vrot.slane %v5921, 4
        %v5924 = vshll.u32 %v5815, 16
        %v5926 = vrot.slane %v5924, 5
        %v5927 = vsel %vm5695, %v5922, %v5926
        %v5928 = vld [vmem:[%s4] sm:$0xff]
        %v5929 = vld [vmem:[%s4 + $0x8] sm:$0xff]
        %v5930 = vld [vmem:[%s4 + $0x10] sm:$0xff]
        %v5931 = vld [vmem:[%s4 + $0x18] sm:$0xff]
        %v5932 = vld [vmem:[%s4 + $0x20] sm:$0xff]
        %v5933 = vld [vmem:[%s4 + $0x28] sm:$0xff]
        %v5934 = vld [vmem:[%s4 + $0x30] sm:$0xff]
        %v5935 = vld [vmem:[%s4 + $0x38] sm:$0xff]
        %v5936 = vld [vmem:[%s4 + $0x40] sm:$0xff]
        %v5937 = vld [vmem:[%s4 + $0x48] sm:$0xff]
        %v5938 = vld [vmem:[%s4 + $0x50] sm:$0xff]
        %v5939 = vld [vmem:[%s4 + $0x58] sm:$0xff]
        %v5940 = vld [vmem:[%s4 + $0x60] sm:$0xff]
        %v5941 = vld [vmem:[%s4 + $0x68] sm:$0xff]
        %v5942 = vld [vmem:[%s4 + $0x70] sm:$0xff]
        %v5943 = vld [vmem:[%s4 + $0x78] sm:$0xff]
        %s5944 = scalar_lea.vmem %s4, 128
        %v5945 = vld [vmem:[%s5944] sm:$0xff]
        %v5946 = vld [vmem:[%s5944 + $0x8] sm:$0xff]
        %v5947 = vld [vmem:[%s5944 + $0x10] sm:$0xff]
        %v5948 = vld [vmem:[%s5944 + $0x18] sm:$0xff]
        %v5949 = vld [vmem:[%s5944 + $0x20] sm:$0xff]
        %v5950 = vld [vmem:[%s5944 + $0x28] sm:$0xff]
        %v5951 = vld [vmem:[%s5944 + $0x30] sm:$0xff]
        %v5952 = vld [vmem:[%s5944 + $0x38] sm:$0xff]
        %v5953 = vld [vmem:[%s5944 + $0x40] sm:$0xff]
        %v5954 = vld [vmem:[%s5944 + $0x48] sm:$0xff]
        %v5955 = vld [vmem:[%s5944 + $0x50] sm:$0xff]
        %v5956 = vld [vmem:[%s5944 + $0x58] sm:$0xff]
        %v5957 = vld [vmem:[%s5944 + $0x60] sm:$0xff]
        %v5958 = vld [vmem:[%s5944 + $0x68] sm:$0xff]
        %v5959 = vld [vmem:[%s5944 + $0x70] sm:$0xff]
        %v5960 = vld [vmem:[%s5944 + $0x78] sm:$0xff]
        %v5969 = vunpack.c.l.b16 %v5678
        %v5970 = vunpack.c.l.b16 %v5679
        %v5971 = vunpack.c.l.b16 %v5680
        %v5972 = vunpack.c.l.b16 %v5681
        %v5973 = vunpack.c.l.b16 %v5682
        %v5974 = vunpack.c.l.b16 %v5683
        %v5975 = vunpack.c.l.b16 %v5684
        %v5976 = vunpack.c.l.b16 %v5685
        %v5977 = vpack.c.b16 %v5970, %v5969
        %v5978 = vpack.c.b16 %v5972, %v5971
        %v5979 = vpack.c.b16 %v5974, %v5973
        %v5980 = vpack.c.b16 %v5976, %v5975
        %v6001 = vunpack.c.l.b16 %v5945
        %v6002 = vunpack.c.h.b16 %v5945
        %v6003 = vunpack.c.l.b16 %v5946
        %v6004 = vunpack.c.h.b16 %v5946
        %v6005 = vunpack.c.l.b16 %v5947
        %v6006 = vunpack.c.h.b16 %v5947
        %v6007 = vunpack.c.l.b16 %v5948
        %v6008 = vunpack.c.h.b16 %v5948
        %v6009 = vunpack.c.l.b16 %v5949
        %v6010 = vunpack.c.h.b16 %v5949
        %v6011 = vunpack.c.l.b16 %v5950
        %v6012 = vunpack.c.h.b16 %v5950
        %v6013 = vunpack.c.l.b16 %v5951
        %v6014 = vunpack.c.h.b16 %v5951
        %v6015 = vunpack.c.l.b16 %v5952
        %v6016 = vunpack.c.h.b16 %v5952
        %v6017 = vunpack.c.l.b16 %v5953
        %v6018 = vunpack.c.h.b16 %v5953
        %v6019 = vunpack.c.l.b16 %v5954
        %v6020 = vunpack.c.h.b16 %v5954
        %v6021 = vunpack.c.l.b16 %v5955
        %v6022 = vunpack.c.h.b16 %v5955
        %v6023 = vunpack.c.l.b16 %v5956
        %v6024 = vunpack.c.h.b16 %v5956
        %v6025 = vunpack.c.l.b16 %v5957
        %v6026 = vunpack.c.h.b16 %v5957
        %v6027 = vunpack.c.l.b16 %v5958
        %v6028 = vunpack.c.h.b16 %v5958
        %v6029 = vunpack.c.l.b16 %v5959
        %v6030 = vunpack.c.h.b16 %v5959
        %v6031 = vunpack.c.l.b16 %v5960
        %v6032 = vunpack.c.h.b16 %v5960
        %v6033 = vpack.c.b16 %v6003, %v6001
        %v6034 = vpack.c.b16 %v6004, %v6002
        %v6035 = vpack.c.b16 %v6007, %v6005
        %v6036 = vpack.c.b16 %v6008, %v6006
        %v6037 = vpack.c.b16 %v6011, %v6009
        %v6038 = vpack.c.b16 %v6012, %v6010
        %v6039 = vpack.c.b16 %v6015, %v6013
        %v6040 = vpack.c.b16 %v6016, %v6014
        %v6041 = vpack.c.b16 %v6019, %v6017
        %v6042 = vpack.c.b16 %v6020, %v6018
        %v6043 = vpack.c.b16 %v6023, %v6021
        %v6044 = vpack.c.b16 %v6024, %v6022
        %v6045 = vpack.c.b16 %v6027, %v6025
        %v6046 = vpack.c.b16 %v6028, %v6026
        %v6047 = vpack.c.b16 %v6031, %v6029
        %v6048 = vpack.c.b16 %v6032, %v6030
        %6065 = vmatprep.subr.bf16.mxu0 %v6034
        %6066 = vmatpush1.bf16.msra.mxu0 %v6033
        %6067 = vmatprep.subr.bf16.mxu0 %v6036
        %6068 = vmatpush1.bf16.msra.mxu0 %v6035
        %6069 = vmatprep.subr.bf16.mxu0 %v6038
        %6070 = vmatpush1.bf16.msra.mxu0 %v6037
        %6071 = vmatprep.subr.bf16.mxu0 %v6040
        %6072 = vmatpush1.bf16.msra.mxu0 %v6039
        %6073 = vmatprep.subr.bf16.mxu0 %v6042
        %6074 = vmatpush1.bf16.msra.mxu0 %v6041
        %6075 = vmatprep.subr.bf16.mxu0 %v6044
        %6076 = vmatpush1.bf16.msra.mxu0 %v6043
        %6077 = vmatprep.subr.bf16.mxu0 %v6046
        %6078 = vmatpush1.bf16.msra.mxu0 %v6045
        %6079 = vmatprep.subr.bf16.mxu0 %v6048
        %6080 = vmatpush1.bf16.msra.mxu0 %v6047
        %6081 = vmatprep.subr.bf16.mxu0 0
        %6082 = vmatpush1.bf16.msra.mxu0 0
        %6083 = vmatprep.subr.bf16.mxu0 0
        %6084 = vmatpush1.bf16.msra.mxu0 0
        %6085 = vmatprep.subr.bf16.mxu0 0
        %6086 = vmatpush1.bf16.msra.mxu0 0
        %6087 = vmatprep.subr.bf16.mxu0 0
        %6088 = vmatpush1.bf16.msra.mxu0 0
        %6089 = vmatprep.subr.bf16.mxu0 0
        %6090 = vmatpush1.bf16.msra.mxu0 0
        %6091 = vmatprep.subr.bf16.mxu0 0
        %6092 = vmatpush1.bf16.msra.mxu0 0
        %6093 = vmatprep.subr.bf16.mxu0 0
        %6094 = vmatpush1.bf16.msra.mxu0 0
        %6095 = vmatprep.subr.bf16.mxu0 0
        %6096 = vmatpush1.bf16.msra.mxu0 0
        %6097 = vmatprep.mubr.bf16.mxu0 0
        %6098 = vmatmul.mubr.bf16.gmra.mrb[0].mxu0 %v5977
        %v6099 = vpop.f32.mrb[0].mxu0
        %v6100 = vadd.f32 0.0, %v6099
        %v6101 = vpop.f32.mrb[0].mxu0
        %v6102 = vadd.f32 0.0, %v6101
        %v6103 = vpop.f32.mrb[0].mxu0
        %v6104 = vadd.f32 0.0, %v6103
        %v6105 = vpop.f32.mrb[0].mxu0
        %v6106 = vadd.f32 0.0, %v6105
        %6107 = vmatprep.mubr.bf16.mxu0 0
        %6108 = vmatmul.mubr.bf16.gmra.mrb[0].mxu0 %v5978
        %v6109 = vpop.f32.mrb[0].mxu0
        %v6110 = vadd.f32 0.0, %v6109
        %v6111 = vpop.f32.mrb[0].mxu0
        %v6112 = vadd.f32 0.0, %v6111
        %v6113 = vpop.f32.mrb[0].mxu0
        %v6114 = vadd.f32 0.0, %v6113
        %v6115 = vpop.f32.mrb[0].mxu0
        %v6116 = vadd.f32 0.0, %v6115
        %6117 = vmatprep.mubr.bf16.mxu0 0
        %6118 = vmatmul.mubr.bf16.gmra.mrb[0].mxu0 %v5979
        %v6119 = vpop.f32.mrb[0].mxu0
        %v6120 = vadd.f32 0.0, %v6119
        %v6121 = vpop.f32.mrb[0].mxu0
        %v6122 = vadd.f32 0.0, %v6121
        %v6123 = vpop.f32.mrb[0].mxu0
        %v6124 = vadd.f32 0.0, %v6123
        %v6125 = vpop.f32.mrb[0].mxu0
        %v6126 = vadd.f32 0.0, %v6125
        %6127 = vmatprep.mubr.bf16.mxu0 0
        %6128 = vmatmul.mubr.bf16.gmra.mrb[0].mxu0 %v5980
        %v6129 = vpop.f32.mrb[0].mxu0
        %v6130 = vadd.f32 0.0, %v6129
        %v6131 = vpop.f32.mrb[0].mxu0
        %v6132 = vadd.f32 0.0, %v6131
        %v6133 = vpop.f32.mrb[0].mxu0
        %v6134 = vadd.f32 0.0, %v6133
        %v6135 = vpop.f32.mrb[0].mxu0
        %v6136 = vadd.f32 0.0, %v6135
        %6137 = vdwg.mxu0
        %v6146 = vunpack.c.l.b16 %v5670
        %v6147 = vunpack.c.l.b16 %v5671
        %v6148 = vunpack.c.l.b16 %v5672
        %v6149 = vunpack.c.l.b16 %v5673
        %v6150 = vunpack.c.l.b16 %v5674
        %v6151 = vunpack.c.l.b16 %v5675
        %v6152 = vunpack.c.l.b16 %v5676
        %v6153 = vunpack.c.l.b16 %v5677
        %v6154 = vpack.c.b16 %v6147, %v6146
        %v6155 = vpack.c.b16 %v6149, %v6148
        %v6156 = vpack.c.b16 %v6151, %v6150
        %v6157 = vpack.c.b16 %v6153, %v6152
        %v6178 = vunpack.c.l.b16 %v5928
        %v6179 = vunpack.c.h.b16 %v5928
        %v6180 = vunpack.c.l.b16 %v5929
        %v6181 = vunpack.c.h.b16 %v5929
        %v6182 = vunpack.c.l.b16 %v5930
        %v6183 = vunpack.c.h.b16 %v5930
        %v6184 = vunpack.c.l.b16 %v5931
        %v6185 = vunpack.c.h.b16 %v5931
        %v6186 = vunpack.c.l.b16 %v5932
        %v6187 = vunpack.c.h.b16 %v5932
        %v6188 = vunpack.c.l.b16 %v5933
        %v6189 = vunpack.c.h.b16 %v5933
        %v6190 = vunpack.c.l.b16 %v5934
        %v6191 = vunpack.c.h.b16 %v5934
        %v6192 = vunpack.c.l.b16 %v5935
        %v6193 = vunpack.c.h.b16 %v5935
        %v6194 = vunpack.c.l.b16 %v5936
        %v6195 = vunpack.c.h.b16 %v5936
        %v6196 = vunpack.c.l.b16 %v5937
        %v6197 = vunpack.c.h.b16 %v5937
        %v6198 = vunpack.c.l.b16 %v5938
        %v6199 = vunpack.c.h.b16 %v5938
        %v6200 = vunpack.c.l.b16 %v5939
        %v6201 = vunpack.c.h.b16 %v5939
        %v6202 = vunpack.c.l.b16 %v5940
        %v6203 = vunpack.c.h.b16 %v5940
        %v6204 = vunpack.c.l.b16 %v5941
        %v6205 = vunpack.c.h.b16 %v5941
        %v6206 = vunpack.c.l.b16 %v5942
        %v6207 = vunpack.c.h.b16 %v5942
        %v6208 = vunpack.c.l.b16 %v5943
        %v6209 = vunpack.c.h.b16 %v5943
        %v6210 = vpack.c.b16 %v6180, %v6178
        %v6211 = vpack.c.b16 %v6181, %v6179
        %v6212 = vpack.c.b16 %v6184, %v6182
        %v6213 = vpack.c.b16 %v6185, %v6183
        %v6214 = vpack.c.b16 %v6188, %v6186
        %v6215 = vpack.c.b16 %v6189, %v6187
        %v6216 = vpack.c.b16 %v6192, %v6190
        %v6217 = vpack.c.b16 %v6193, %v6191
        %v6218 = vpack.c.b16 %v6196, %v6194
        %v6219 = vpack.c.b16 %v6197, %v6195
        %v6220 = vpack.c.b16 %v6200, %v6198
        %v6221 = vpack.c.b16 %v6201, %v6199
        %v6222 = vpack.c.b16 %v6204, %v6202
        %v6223 = vpack.c.b16 %v6205, %v6203
        %v6224 = vpack.c.b16 %v6208, %v6206
        %v6225 = vpack.c.b16 %v6209, %v6207
        %6242 = vmatprep.subr.bf16.mxu0 %v6211
        %6243 = vmatpush1.bf16.msra.mxu0 %v6210
        %6244 = vmatprep.subr.bf16.mxu0 %v6213
        %6245 = vmatpush1.bf16.msra.mxu0 %v6212
        %6246 = vmatprep.subr.bf16.mxu0 %v6215
        %6247 = vmatpush1.bf16.msra.mxu0 %v6214
        %6248 = vmatprep.subr.bf16.mxu0 %v6217
        %6249 = vmatpush1.bf16.msra.mxu0 %v6216
        %6250 = vmatprep.subr.bf16.mxu0 %v6219
        %6251 = vmatpush1.bf16.msra.mxu0 %v6218
        %6252 = vmatprep.subr.bf16.mxu0 %v6221
        %6253 = vmatpush1.bf16.msra.mxu0 %v6220
        %6254 = vmatprep.subr.bf16.mxu0 %v6223
        %6255 = vmatpush1.bf16.msra.mxu0 %v6222
        %6256 = vmatprep.subr.bf16.mxu0 %v6225
        %6257 = vmatpush1.bf16.msra.mxu0 %v6224
        %6258 = vmatprep.subr.bf16.mxu0 0
        %6259 = vmatpush1.bf16.msra.mxu0 0
        %6260 = vmatprep.subr.bf16.mxu0 0
        %6261 = vmatpush1.bf16.msra.mxu0 0
        %6262 = vmatprep.subr.bf16.mxu0 0
        %6263 = vmatpush1.bf16.msra.mxu0 0
        %6264 = vmatprep.subr.bf16.mxu0 0
        %6265 = vmatpush1.bf16.msra.mxu0 0
        %6266 = vmatprep.subr.bf16.mxu0 0
        %6267 = vmatpush1.bf16.msra.mxu0 0
        %6268 = vmatprep.subr.bf16.mxu0 0
        %6269 = vmatpush1.bf16.msra.mxu0 0
        %6270 = vmatprep.subr.bf16.mxu0 0
        %6271 = vmatpush1.bf16.msra.mxu0 0
        %6272 = vmatprep.subr.bf16.mxu0 0
        %6273 = vmatpush1.bf16.msra.mxu0 0
        %6274 = vmatprep.mubr.bf16.mxu0 0
        %6275 = vmatmul.mubr.bf16.gmra.mrb[0].mxu0 %v6154
        %v6276 = vpop.f32.mrb[0].mxu0
        %v6277 = vadd.f32 %v6100, %v6276
        %v6278 = vpop.f32.mrb[0].mxu0
        %v6279 = vadd.f32 %v6102, %v6278
        %v6280 = vpop.f32.mrb[0].mxu0
        %v6281 = vadd.f32 %v6104, %v6280
        %v6282 = vpop.f32.mrb[0].mxu0
        %v6283 = vadd.f32 %v6106, %v6282
        %6284 = vmatprep.mubr.bf16.mxu0 0
        %6285 = vmatmul.mubr.bf16.gmra.mrb[0].mxu0 %v6155
        %v6286 = vpop.f32.mrb[0].mxu0
        %v6287 = vadd.f32 %v6110, %v6286
        %v6288 = vpop.f32.mrb[0].mxu0
        %v6289 = vadd.f32 %v6112, %v6288
        %v6290 = vpop.f32.mrb[0].mxu0
        %v6291 = vadd.f32 %v6114, %v6290
        %v6292 = vpop.f32.mrb[0].mxu0
        %v6293 = vadd.f32 %v6116, %v6292
        %6294 = vmatprep.mubr.bf16.mxu0 0
        %6295 = vmatmul.mubr.bf16.gmra.mrb[0].mxu0 %v6156
        %v6296 = vpop.f32.mrb[0].mxu0
        %v6297 = vadd.f32 %v6120, %v6296
        %v6298 = vpop.f32.mrb[0].mxu0
        %v6299 = vadd.f32 %v6122, %v6298
        %v6300 = vpop.f32.mrb[0].mxu0
        %v6301 = vadd.f32 %v6124, %v6300
        %v6302 = vpop.f32.mrb[0].mxu0
        %v6303 = vadd.f32 %v6126, %v6302
        %6304 = vmatprep.mubr.bf16.mxu0 0
        %6305 = vmatmul.mubr.bf16.gmra.mrb[0].mxu0 %v6157
        %v6306 = vpop.f32.mrb[0].mxu0
        %v6307 = vadd.f32 %v6130, %v6306
        %v6308 = vpop.f32.mrb[0].mxu0
        %v6309 = vadd.f32 %v6132, %v6308
        %v6310 = vpop.f32.mrb[0].mxu0
        %v6311 = vadd.f32 %v6134, %v6310
        %v6312 = vpop.f32.mrb[0].mxu0
        %v6313 = vadd.f32 %v6136, %v6312
        %6314 = vdwg.mxu0
        %s6315 = scalar_lea.vmem %s4, 256
        %v6316 = vld [vmem:[%s6315] sm:$0xff]
        %v6317 = vld [vmem:[%s6315 + $0x8] sm:$0xff]
        %v6318 = vld [vmem:[%s6315 + $0x10] sm:$0xff]
        %v6319 = vld [vmem:[%s6315 + $0x18] sm:$0xff]
        %v6320 = vld [vmem:[%s6315 + $0x20] sm:$0xff]
        %v6321 = vld [vmem:[%s6315 + $0x28] sm:$0xff]
        %v6322 = vld [vmem:[%s6315 + $0x30] sm:$0xff]
        %v6323 = vld [vmem:[%s6315 + $0x38] sm:$0xff]
        %v6324 = vld [vmem:[%s6315 + $0x40] sm:$0xff]
        %v6325 = vld [vmem:[%s6315 + $0x48] sm:$0xff]
        %v6326 = vld [vmem:[%s6315 + $0x50] sm:$0xff]
        %v6327 = vld [vmem:[%s6315 + $0x58] sm:$0xff]
        %v6328 = vld [vmem:[%s6315 + $0x60] sm:$0xff]
        %v6329 = vld [vmem:[%s6315 + $0x68] sm:$0xff]
        %v6330 = vld [vmem:[%s6315 + $0x70] sm:$0xff]
        %v6331 = vld [vmem:[%s6315 + $0x78] sm:$0xff]
        %v6332 = vunpack.c.l.b16 %v5709
        %v6333 = vunpack.c.l.b16 %v5723
        %v6334 = vunpack.c.l.b16 %v5737
        %v6335 = vunpack.c.l.b16 %v5751
        %v6336 = vunpack.c.l.b16 %v5765
        %v6337 = vunpack.c.l.b16 %v5779
        %v6338 = vunpack.c.l.b16 %v5793
        %v6339 = vunpack.c.l.b16 %v5807
        %v6340 = vpack.c.b16 %v6333, %v6332
        %v6341 = vpack.c.b16 %v6335, %v6334
        %v6342 = vpack.c.b16 %v6337, %v6336
        %v6343 = vpack.c.b16 %v6339, %v6338
        %v6364 = vunpack.c.l.b16 %v6316
        %v6365 = vunpack.c.h.b16 %v6316
        %v6366 = vunpack.c.l.b16 %v6317
        %v6367 = vunpack.c.h.b16 %v6317
        %v6368 = vunpack.c.l.b16 %v6318
        %v6369 = vunpack.c.h.b16 %v6318
        %v6370 = vunpack.c.l.b16 %v6319
        %v6371 = vunpack.c.h.b16 %v6319
        %v6372 = vunpack.c.l.b16 %v6320
        %v6373 = vunpack.c.h.b16 %v6320
        %v6374 = vunpack.c.l.b16 %v6321
        %v6375 = vunpack.c.h.b16 %v6321
        %v6376 = vunpack.c.l.b16 %v6322
        %v6377 = vunpack.c.h.b16 %v6322
        %v6378 = vunpack.c.l.b16 %v6323
        %v6379 = vunpack.c.h.b16 %v6323
        %v6380 = vunpack.c.l.b16 %v6324
        %v6381 = vunpack.c.h.b16 %v6324
        %v6382 = vunpack.c.l.b16 %v6325
        %v6383 = vunpack.c.h.b16 %v6325
        %v6384 = vunpack.c.l.b16 %v6326
        %v6385 = vunpack.c.h.b16 %v6326
        %v6386 = vunpack.c.l.b16 %v6327
        %v6387 = vunpack.c.h.b16 %v6327
        %v6388 = vunpack.c.l.b16 %v6328
        %v6389 = vunpack.c.h.b16 %v6328
        %v6390 = vunpack.c.l.b16 %v6329
        %v6391 = vunpack.c.h.b16 %v6329
        %v6392 = vunpack.c.l.b16 %v6330
        %v6393 = vunpack.c.h.b16 %v6330
        %v6394 = vunpack.c.l.b16 %v6331
        %v6395 = vunpack.c.h.b16 %v6331
        %v6396 = vpack.c.b16 %v6366, %v6364
        %v6397 = vpack.c.b16 %v6367, %v6365
        %v6398 = vpack.c.b16 %v6370, %v6368
        %v6399 = vpack.c.b16 %v6371, %v6369
        %v6400 = vpack.c.b16 %v6374, %v6372
        %v6401 = vpack.c.b16 %v6375, %v6373
        %v6402 = vpack.c.b16 %v6378, %v6376
        %v6403 = vpack.c.b16 %v6379, %v6377
        %v6404 = vpack.c.b16 %v6382, %v6380
        %v6405 = vpack.c.b16 %v6383, %v6381
        %v6406 = vpack.c.b16 %v6386, %v6384
        %v6407 = vpack.c.b16 %v6387, %v6385
        %v6408 = vpack.c.b16 %v6390, %v6388
        %v6409 = vpack.c.b16 %v6391, %v6389
        %v6410 = vpack.c.b16 %v6394, %v6392
        %v6411 = vpack.c.b16 %v6395, %v6393
        %6428 = vmatprep.subr.bf16.mxu0 %v6397
        %6429 = vmatpush1.bf16.msra.mxu0 %v6396
        %6430 = vmatprep.subr.bf16.mxu0 %v6399
        %6431 = vmatpush1.bf16.msra.mxu0 %v6398
        %6432 = vmatprep.subr.bf16.mxu0 %v6401
        %6433 = vmatpush1.bf16.msra.mxu0 %v6400
        %6434 = vmatprep.subr.bf16.mxu0 %v6403
        %6435 = vmatpush1.bf16.msra.mxu0 %v6402
        %6436 = vmatprep.subr.bf16.mxu0 %v6405
        %6437 = vmatpush1.bf16.msra.mxu0 %v6404
        %6438 = vmatprep.subr.bf16.mxu0 %v6407
        %6439 = vmatpush1.bf16.msra.mxu0 %v6406
        %6440 = vmatprep.subr.bf16.mxu0 %v6409
        %6441 = vmatpush1.bf16.msra.mxu0 %v6408
        %6442 = vmatprep.subr.bf16.mxu0 %v6411
        %6443 = vmatpush1.bf16.msra.mxu0 %v6410
        %6444 = vmatprep.subr.bf16.mxu0 0
        %6445 = vmatpush1.bf16.msra.mxu0 0
        %6446 = vmatprep.subr.bf16.mxu0 0
        %6447 = vmatpush1.bf16.msra.mxu0 0
        %6448 = vmatprep.subr.bf16.mxu0 0
        %6449 = vmatpush1.bf16.msra.mxu0 0
        %6450 = vmatprep.subr.bf16.mxu0 0
        %6451 = vmatpush1.bf16.msra.mxu0 0
        %6452 = vmatprep.subr.bf16.mxu0 0
        %6453 = vmatpush1.bf16.msra.mxu0 0
        %6454 = vmatprep.subr.bf16.mxu0 0
        %6455 = vmatpush1.bf16.msra.mxu0 0
        %6456 = vmatprep.subr.bf16.mxu0 0
        %6457 = vmatpush1.bf16.msra.mxu0 0
        %6458 = vmatprep.subr.bf16.mxu0 0
        %6459 = vmatpush1.bf16.msra.mxu0 0
        %6460 = vmatprep.mubr.bf16.mxu0 0
        %6461 = vmatmul.mubr.bf16.gmra.mrb[0].mxu0 %v6340
        %v6462 = vpop.f32.mrb[0].mxu0
        %v6463 = vadd.f32 0.0, %v6462
        %v6464 = vpop.f32.mrb[0].mxu0
        %v6465 = vadd.f32 0.0, %v6464
        %v6466 = vpop.f32.mrb[0].mxu0
        %v6467 = vadd.f32 0.0, %v6466
        %v6468 = vpop.f32.mrb[0].mxu0
        %v6469 = vadd.f32 0.0, %v6468
        %6470 = vmatprep.mubr.bf16.mxu0 0
        %6471 = vmatmul.mubr.bf16.gmra.mrb[0].mxu0 %v6341
        %v6472 = vpop.f32.mrb[0].mxu0
        %v6473 = vadd.f32 0.0, %v6472
        %v6474 = vpop.f32.mrb[0].mxu0
        %v6475 = vadd.f32 0.0, %v6474
        %v6476 = vpop.f32.mrb[0].mxu0
        %v6477 = vadd.f32 0.0, %v6476
        %v6478 = vpop.f32.mrb[0].mxu0
        %v6479 = vadd.f32 0.0, %v6478
        %6480 = vmatprep.mubr.bf16.mxu0 0
        %6481 = vmatmul.mubr.bf16.gmra.mrb[0].mxu0 %v6342
        %v6482 = vpop.f32.mrb[0].mxu0
        %v6483 = vadd.f32 0.0, %v6482
        %v6484 = vpop.f32.mrb[0].mxu0
        %v6485 = vadd.f32 0.0, %v6484
        %v6486 = vpop.f32.mrb[0].mxu0
        %v6487 = vadd.f32 0.0, %v6486
        %v6488 = vpop.f32.mrb[0].mxu0
        %v6489 = vadd.f32 0.0, %v6488
        %6490 = vmatprep.mubr.bf16.mxu0 0
        %6491 = vmatmul.mubr.bf16.gmra.mrb[0].mxu0 %v6343
        %v6492 = vpop.f32.mrb[0].mxu0
        %v6493 = vadd.f32 0.0, %v6492
        %v6494 = vpop.f32.mrb[0].mxu0
        %v6495 = vadd.f32 0.0, %v6494
        %v6496 = vpop.f32.mrb[0].mxu0
        %v6497 = vadd.f32 0.0, %v6496
        %v6498 = vpop.f32.mrb[0].mxu0
        %v6499 = vadd.f32 0.0, %v6498
        %6500 = vdwg.mxu0
        %v6501 = vadd.f32 %v6277, %v6463
        %v6502 = vadd.f32 %v6279, %v6465
        %v6503 = vadd.f32 %v6281, %v6467
        %v6504 = vadd.f32 %v6283, %v6469
        %v6505 = vadd.f32 %v6287, %v6473
        %v6506 = vadd.f32 %v6289, %v6475
        %v6507 = vadd.f32 %v6291, %v6477
        %v6508 = vadd.f32 %v6293, %v6479
        %v6509 = vadd.f32 %v6297, %v6483
        %v6510 = vadd.f32 %v6299, %v6485
        %v6511 = vadd.f32 %v6301, %v6487
        %v6512 = vadd.f32 %v6303, %v6489
        %v6513 = vadd.f32 %v6307, %v6493
        %v6514 = vadd.f32 %v6309, %v6495
        %v6515 = vadd.f32 %v6311, %v6497
        %v6516 = vadd.f32 %v6313, %v6499
        %6517 = vmatprep.subr.bf16.mxu0 %v6034
        %6518 = vmatpush1.bf16.msra.mxu0 %v6033
        %6519 = vmatprep.subr.bf16.mxu0 %v6036
        %6520 = vmatpush1.bf16.msra.mxu0 %v6035
        %6521 = vmatprep.subr.bf16.mxu0 %v6038
        %6522 = vmatpush1.bf16.msra.mxu0 %v6037
        %6523 = vmatprep.subr.bf16.mxu0 %v6040
        %6524 = vmatpush1.bf16.msra.mxu0 %v6039
        %6525 = vmatprep.subr.bf16.mxu0 %v6042
        %6526 = vmatpush1.bf16.msra.mxu0 %v6041
        %6527 = vmatprep.subr.bf16.mxu0 %v6044
        %6528 = vmatpush1.bf16.msra.mxu0 %v6043
        %6529 = vmatprep.subr.bf16.mxu0 %v6046
        %6530 = vmatpush1.bf16.msra.mxu0 %v6045
        %6531 = vmatprep.subr.bf16.mxu0 %v6048
        %6532 = vmatpush1.bf16.msra.mxu0 %v6047
        %6533 = vmatprep.subr.bf16.mxu0 0
        %6534 = vmatpush1.bf16.msra.mxu0 0
        %6535 = vmatprep.subr.bf16.mxu0 0
        %6536 = vmatpush1.bf16.msra.mxu0 0
        %6537 = vmatprep.subr.bf16.mxu0 0
        %6538 = vmatpush1.bf16.msra.mxu0 0
        %6539 = vmatprep.subr.bf16.mxu0 0
        %6540 = vmatpush1.bf16.msra.mxu0 0
        %6541 = vmatprep.subr.bf16.mxu0 0
        %6542 = vmatpush1.bf16.msra.mxu0 0
        %6543 = vmatprep.subr.bf16.mxu0 0
        %6544 = vmatpush1.bf16.msra.mxu0 0
        %6545 = vmatprep.subr.bf16.mxu0 0
        %6546 = vmatpush1.bf16.msra.mxu0 0
        %6547 = vmatprep.subr.bf16.mxu0 0
        %6548 = vmatpush1.bf16.msra.mxu0 0
        %6549 = vmatprep.mubr.bf16.mxu0 0
        %6550 = vmatmul.mubr.bf16.gmra.mrb[0].mxu0 %v6340
        %v6551 = vpop.f32.mrb[0].mxu0
        %v6552 = vadd.f32 0.0, %v6551
        %v6553 = vpop.f32.mrb[0].mxu0
        %v6554 = vadd.f32 0.0, %v6553
        %v6555 = vpop.f32.mrb[0].mxu0
        %v6556 = vadd.f32 0.0, %v6555
        %v6557 = vpop.f32.mrb[0].mxu0
        %v6558 = vadd.f32 0.0, %v6557
        %6559 = vmatprep.mubr.bf16.mxu0 0
        %6560 = vmatmul.mubr.bf16.gmra.mrb[0].mxu0 %v6341
        %v6561 = vpop.f32.mrb[0].mxu0
        %v6562 = vadd.f32 0.0, %v6561
        %v6563 = vpop.f32.mrb[0].mxu0
        %v6564 = vadd.f32 0.0, %v6563
        %v6565 = vpop.f32.mrb[0].mxu0
        %v6566 = vadd.f32 0.0, %v6565
        %v6567 = vpop.f32.mrb[0].mxu0
        %v6568 = vadd.f32 0.0, %v6567
        %6569 = vmatprep.mubr.bf16.mxu0 0
        %6570 = vmatmul.mubr.bf16.gmra.mrb[0].mxu0 %v6342
        %v6571 = vpop.f32.mrb[0].mxu0
        %v6572 = vadd.f32 0.0, %v6571
        %v6573 = vpop.f32.mrb[0].mxu0
        %v6574 = vadd.f32 0.0, %v6573
        %v6575 = vpop.f32.mrb[0].mxu0
        %v6576 = vadd.f32 0.0, %v6575
        %v6577 = vpop.f32.mrb[0].mxu0
        %v6578 = vadd.f32 0.0, %v6577
        %6579 = vmatprep.mubr.bf16.mxu0 0
        %6580 = vmatmul.mubr.bf16.gmra.mrb[0].mxu0 %v6343
        %v6581 = vpop.f32.mrb[0].mxu0
        %v6582 = vadd.f32 0.0, %v6581
        %v6583 = vpop.f32.mrb[0].mxu0
        %v6584 = vadd.f32 0.0, %v6583
        %v6585 = vpop.f32.mrb[0].mxu0
        %v6586 = vadd.f32 0.0, %v6585
        %v6587 = vpop.f32.mrb[0].mxu0
        %v6588 = vadd.f32 0.0, %v6587
        %6589 = vdwg.mxu0
        %6590 = vmatprep.subr.bf16.mxu0 %v6211
        %6591 = vmatpush1.bf16.msra.mxu0 %v6210
        %6592 = vmatprep.subr.bf16.mxu0 %v6213
        %6593 = vmatpush1.bf16.msra.mxu0 %v6212
        %6594 = vmatprep.subr.bf16.mxu0 %v6215
        %6595 = vmatpush1.bf16.msra.mxu0 %v6214
        %6596 = vmatprep.subr.bf16.mxu0 %v6217
        %6597 = vmatpush1.bf16.msra.mxu0 %v6216
        %6598 = vmatprep.subr.bf16.mxu0 %v6219
        %6599 = vmatpush1.bf16.msra.mxu0 %v6218
        %6600 = vmatprep.subr.bf16.mxu0 %v6221
        %6601 = vmatpush1.bf16.msra.mxu0 %v6220
        %6602 = vmatprep.subr.bf16.mxu0 %v6223
        %6603 = vmatpush1.bf16.msra.mxu0 %v6222
        %6604 = vmatprep.subr.bf16.mxu0 %v6225
        %6605 = vmatpush1.bf16.msra.mxu0 %v6224
        %6606 = vmatprep.subr.bf16.mxu0 0
        %6607 = vmatpush1.bf16.msra.mxu0 0
        %6608 = vmatprep.subr.bf16.mxu0 0
        %6609 = vmatpush1.bf16.msra.mxu0 0
        %6610 = vmatprep.subr.bf16.mxu0 0
        %6611 = vmatpush1.bf16.msra.mxu0 0
        %6612 = vmatprep.subr.bf16.mxu0 0
        %6613 = vmatpush1.bf16.msra.mxu0 0
        %6614 = vmatprep.subr.bf16.mxu0 0
        %6615 = vmatpush1.bf16.msra.mxu0 0
        %6616 = vmatprep.subr.bf16.mxu0 0
        %6617 = vmatpush1.bf16.msra.mxu0 0
        %6618 = vmatprep.subr.bf16.mxu0 0
        %6619 = vmatpush1.bf16.msra.mxu0 0
        %6620 = vmatprep.subr.bf16.mxu0 0
        %6621 = vmatpush1.bf16.msra.mxu0 0
        %6622 = vmatprep.mubr.bf16.mxu0 0
        %6623 = vmatmul.mubr.bf16.gmra.mrb[0].mxu0 %v5977
        %v6624 = vpop.f32.mrb[0].mxu0
        %v6625 = vadd.f32 %v6552, %v6624
        %v6626 = vpop.f32.mrb[0].mxu0
        %v6627 = vadd.f32 %v6554, %v6626
        %v6628 = vpop.f32.mrb[0].mxu0
        %v6629 = vadd.f32 %v6556, %v6628
        %v6630 = vpop.f32.mrb[0].mxu0
        %v6631 = vadd.f32 %v6558, %v6630
        %6632 = vmatprep.mubr.bf16.mxu0 0
        %6633 = vmatmul.mubr.bf16.gmra.mrb[0].mxu0 %v5978
        %v6634 = vpop.f32.mrb[0].mxu0
        %v6635 = vadd.f32 %v6562, %v6634
        %v6636 = vpop.f32.mrb[0].mxu0
        %v6637 = vadd.f32 %v6564, %v6636
        %v6638 = vpop.f32.mrb[0].mxu0
        %v6639 = vadd.f32 %v6566, %v6638
        %v6640 = vpop.f32.mrb[0].mxu0
        %v6641 = vadd.f32 %v6568, %v6640
        %6642 = vmatprep.mubr.bf16.mxu0 0
        %6643 = vmatmul.mubr.bf16.gmra.mrb[0].mxu0 %v5979
        %v6644 = vpop.f32.mrb[0].mxu0
        %v6645 = vadd.f32 %v6572, %v6644
        %v6646 = vpop.f32.mrb[0].mxu0
        %v6647 = vadd.f32 %v6574, %v6646
        %v6648 = vpop.f32.mrb[0].mxu0
        %v6649 = vadd.f32 %v6576, %v6648
        %v6650 = vpop.f32.mrb[0].mxu0
        %v6651 = vadd.f32 %v6578, %v6650
        %6652 = vmatprep.mubr.bf16.mxu0 0
        %6653 = vmatmul.mubr.bf16.gmra.mrb[0].mxu0 %v5980
        %v6654 = vpop.f32.mrb[0].mxu0
        %v6655 = vadd.f32 %v6582, %v6654
        %v6656 = vpop.f32.mrb[0].mxu0
        %v6657 = vadd.f32 %v6584, %v6656
        %v6658 = vpop.f32.mrb[0].mxu0
        %v6659 = vadd.f32 %v6586, %v6658
        %v6660 = vpop.f32.mrb[0].mxu0
        %v6661 = vadd.f32 %v6588, %v6660
        %6662 = vdwg.mxu0
        %v6663 = vunpack.c.l.b16 %v5829
        %v6664 = vunpack.c.l.b16 %v5843
        %v6665 = vunpack.c.l.b16 %v5857
        %v6666 = vunpack.c.l.b16 %v5871
        %v6667 = vunpack.c.l.b16 %v5885
        %v6668 = vunpack.c.l.b16 %v5899
        %v6669 = vunpack.c.l.b16 %v5913
        %v6670 = vunpack.c.l.b16 %v5927
        %v6671 = vpack.c.b16 %v6664, %v6663
        %v6672 = vpack.c.b16 %v6666, %v6665
        %v6673 = vpack.c.b16 %v6668, %v6667
        %v6674 = vpack.c.b16 %v6670, %v6669
        %6679 = vmatprep.subr.bf16.mxu0 %v6397
        %6680 = vmatpush1.bf16.msra.mxu0 %v6396
        %6681 = vmatprep.subr.bf16.mxu0 %v6399
        %6682 = vmatpush1.bf16.msra.mxu0 %v6398
        %6683 = vmatprep.subr.bf16.mxu0 %v6401
        %6684 = vmatpush1.bf16.msra.mxu0 %v6400
        %6685 = vmatprep.subr.bf16.mxu0 %v6403
        %6686 = vmatpush1.bf16.msra.mxu0 %v6402
        %6687 = vmatprep.subr.bf16.mxu0 %v6405
        %6688 = vmatpush1.bf16.msra.mxu0 %v6404
        %6689 = vmatprep.subr.bf16.mxu0 %v6407
        %6690 = vmatpush1.bf16.msra.mxu0 %v6406
        %6691 = vmatprep.subr.bf16.mxu0 %v6409
        %6692 = vmatpush1.bf16.msra.mxu0 %v6408
        %6693 = vmatprep.subr.bf16.mxu0 %v6411
        %6694 = vmatpush1.bf16.msra.mxu0 %v6410
        %6695 = vmatprep.subr.bf16.mxu0 0
        %6696 = vmatpush1.bf16.msra.mxu0 0
        %6697 = vmatprep.subr.bf16.mxu0 0
        %6698 = vmatpush1.bf16.msra.mxu0 0
        %6699 = vmatprep.subr.bf16.mxu0 0
        %6700 = vmatpush1.bf16.msra.mxu0 0
        %6701 = vmatprep.subr.bf16.mxu0 0
        %6702 = vmatpush1.bf16.msra.mxu0 0
        %6703 = vmatprep.subr.bf16.mxu0 0
        %6704 = vmatpush1.bf16.msra.mxu0 0
        %6705 = vmatprep.subr.bf16.mxu0 0
        %6706 = vmatpush1.bf16.msra.mxu0 0
        %6707 = vmatprep.subr.bf16.mxu0 0
        %6708 = vmatpush1.bf16.msra.mxu0 0
        %6709 = vmatprep.subr.bf16.mxu0 0
        %6710 = vmatpush1.bf16.msra.mxu0 0
        %6711 = vmatprep.mubr.bf16.mxu0 0
        %6712 = vmatmul.mubr.bf16.gmra.mrb[0].mxu0 %v6671
        %v6713 = vpop.f32.mrb[0].mxu0
        %v6714 = vadd.f32 0.0, %v6713
        %v6715 = vpop.f32.mrb[0].mxu0
        %v6716 = vadd.f32 0.0, %v6715
        %v6717 = vpop.f32.mrb[0].mxu0
        %v6718 = vadd.f32 0.0, %v6717
        %v6719 = vpop.f32.mrb[0].mxu0
        %v6720 = vadd.f32 0.0, %v6719
        %6721 = vmatprep.mubr.bf16.mxu0 0
        %6722 = vmatmul.mubr.bf16.gmra.mrb[0].mxu0 %v6672
        %v6723 = vpop.f32.mrb[0].mxu0
        %v6724 = vadd.f32 0.0, %v6723
        %v6725 = vpop.f32.mrb[0].mxu0
        %v6726 = vadd.f32 0.0, %v6725
        %v6727 = vpop.f32.mrb[0].mxu0
        %v6728 = vadd.f32 0.0, %v6727
        %v6729 = vpop.f32.mrb[0].mxu0
        %v6730 = vadd.f32 0.0, %v6729
        %6731 = vmatprep.mubr.bf16.mxu0 0
        %6732 = vmatmul.mubr.bf16.gmra.mrb[0].mxu0 %v6673
        %v6733 = vpop.f32.mrb[0].mxu0
        %v6734 = vadd.f32 0.0, %v6733
        %v6735 = vpop.f32.mrb[0].mxu0
        %v6736 = vadd.f32 0.0, %v6735
        %v6737 = vpop.f32.mrb[0].mxu0
        %v6738 = vadd.f32 0.0, %v6737
        %v6739 = vpop.f32.mrb[0].mxu0
        %v6740 = vadd.f32 0.0, %v6739
        %6741 = vmatprep.mubr.bf16.mxu0 0
        %6742 = vmatmul.mubr.bf16.gmra.mrb[0].mxu0 %v6674
        %v6743 = vpop.f32.mrb[0].mxu0
        %v6744 = vadd.f32 0.0, %v6743
        %v6745 = vpop.f32.mrb[0].mxu0
        %v6746 = vadd.f32 0.0, %v6745
        %v6747 = vpop.f32.mrb[0].mxu0
        %v6748 = vadd.f32 0.0, %v6747
        %v6749 = vpop.f32.mrb[0].mxu0
        %v6750 = vadd.f32 0.0, %v6749
        %6751 = vdwg.mxu0
        %v6752 = vadd.f32 %v6625, %v6714
        %v6753 = vadd.f32 %v6627, %v6716
        %v6754 = vadd.f32 %v6629, %v6718
        %v6755 = vadd.f32 %v6631, %v6720
        %v6756 = vadd.f32 %v6635, %v6724
        %v6757 = vadd.f32 %v6637, %v6726
        %v6758 = vadd.f32 %v6639, %v6728
        %v6759 = vadd.f32 %v6641, %v6730
        %v6760 = vadd.f32 %v6645, %v6734
        %v6761 = vadd.f32 %v6647, %v6736
        %v6762 = vadd.f32 %v6649, %v6738
        %v6763 = vadd.f32 %v6651, %v6740
        %v6764 = vadd.f32 %v6655, %v6744
        %v6765 = vadd.f32 %v6657, %v6746
        %v6766 = vadd.f32 %v6659, %v6748
        %v6767 = vadd.f32 %v6661, %v6750
        %v6768 = vmax.f32 %v6501, %v6752
        %v6769 = vmax.f32 %v6502, %v6753
        %v6770 = vmax.f32 %v6503, %v6754
        %v6771 = vmax.f32 %v6504, %v6755
        %v6772 = vmax.f32 %v6505, %v6756
        %v6773 = vmax.f32 %v6506, %v6757
        %v6774 = vmax.f32 %v6507, %v6758
        %v6775 = vmax.f32 %v6508, %v6759
        %v6776 = vmax.f32 %v6509, %v6760
        %v6777 = vmax.f32 %v6510, %v6761
        %v6778 = vmax.f32 %v6511, %v6762
        %v6779 = vmax.f32 %v6512, %v6763
        %v6780 = vmax.f32 %v6513, %v6764
        %v6781 = vmax.f32 %v6514, %v6765
        %v6782 = vmax.f32 %v6515, %v6766
        %v6783 = vmax.f32 %v6516, %v6767
        %6800 = vrot.lane.b32.xlu0 %v6768, 112
        %v6801 = vpop.permute.xlu0 %6800
        %6802 = vrot.lane.b32.xlu0 %v6769, 112
        %v6803 = vpop.permute.xlu0 %6802
        %6804 = vrot.lane.b32.xlu0 %v6770, 112
        %v6805 = vpop.permute.xlu0 %6804
        %6806 = vrot.lane.b32.xlu0 %v6771, 112
        %v6807 = vpop.permute.xlu0 %6806
        %6808 = vrot.lane.b32.xlu0 %v6772, 112
        %v6809 = vpop.permute.xlu0 %6808
        %6810 = vrot.lane.b32.xlu0 %v6773, 112
        %v6811 = vpop.permute.xlu0 %6810
        %6812 = vrot.lane.b32.xlu0 %v6774, 112
        %v6813 = vpop.permute.xlu0 %6812
        %6814 = vrot.lane.b32.xlu0 %v6775, 112
        %v6815 = vpop.permute.xlu0 %6814
        %6816 = vrot.lane.b32.xlu0 %v6776, 112
        %v6817 = vpop.permute.xlu0 %6816
        %6818 = vrot.lane.b32.xlu0 %v6777, 112
        %v6819 = vpop.permute.xlu0 %6818
        %6820 = vrot.lane.b32.xlu0 %v6778, 112
        %v6821 = vpop.permute.xlu0 %6820
        %6822 = vrot.lane.b32.xlu0 %v6779, 112
        %v6823 = vpop.permute.xlu0 %6822
        %6824 = vrot.lane.b32.xlu0 %v6780, 112
        %v6825 = vpop.permute.xlu0 %6824
        %6826 = vrot.lane.b32.xlu0 %v6781, 112
        %v6827 = vpop.permute.xlu0 %6826
        %6828 = vrot.lane.b32.xlu0 %v6782, 112
        %v6829 = vpop.permute.xlu0 %6828
        %6830 = vrot.lane.b32.xlu0 %v6783, 112
        %v6831 = vpop.permute.xlu0 %6830
        %vm6832 = vcmask 916480
        %v6833 = vsel %vm6832, %v6801, %v6803
        %v6834 = vsel %vm6832, %v6805, %v6807
        %v6835 = vsel %vm6832, %v6809, %v6811
        %v6836 = vsel %vm6832, %v6813, %v6815
        %v6837 = vsel %vm6832, %v6817, %v6819
        %v6838 = vsel %vm6832, %v6821, %v6823
        %v6839 = vsel %vm6832, %v6825, %v6827
        %v6840 = vsel %vm6832, %v6829, %v6831
        %v6857 = vmax.f32 %v6768, %v6833
        %v6858 = vmax.f32 %v6769, %v6803
        %v6859 = vmax.f32 %v6770, %v6834
        %v6860 = vmax.f32 %v6771, %v6807
        %v6861 = vmax.f32 %v6772, %v6835
        %v6862 = vmax.f32 %v6773, %v6811
        %v6863 = vmax.f32 %v6774, %v6836
        %v6864 = vmax.f32 %v6775, %v6815
        %v6865 = vmax.f32 %v6776, %v6837
        %v6866 = vmax.f32 %v6777, %v6819
        %v6867 = vmax.f32 %v6778, %v6838
        %v6868 = vmax.f32 %v6779, %v6823
        %v6869 = vmax.f32 %v6780, %v6839
        %v6870 = vmax.f32 %v6781, %v6827
        %v6871 = vmax.f32 %v6782, %v6840
        %v6872 = vmax.f32 %v6783, %v6831
        %v6873 = vld [vmem:[%s5] sm:$0x3]
        %v6875 = vlaneseq
        %v6876 = vshrl.u32 %v6875, 7
        %v6877 = vsub.s32 0, %v6876
        %v6878 = vrot.slane %v6873, %v6877
        %v6879 = vlaneseq
        %v6880 = vshrl.u32 %v6879, 7
        %v6881 = vsub.s32 1, %v6880
        %v6882 = vrot.slane %v6873, %v6881
        %v6885 = vadd.f32 %v6857, %v6878
        %v6886 = vadd.f32 %v6858, %v6882
        %v6887 = vadd.f32 %v6859, %v6878
        %v6888 = vadd.f32 %v6860, %v6882
        %v6889 = vadd.f32 %v6861, %v6878
        %v6890 = vadd.f32 %v6862, %v6882
        %v6891 = vadd.f32 %v6863, %v6878
        %v6892 = vadd.f32 %v6864, %v6882
        %v6893 = vadd.f32 %v6865, %v6878
        %v6894 = vadd.f32 %v6866, %v6882
        %v6895 = vadd.f32 %v6867, %v6878
        %v6896 = vadd.f32 %v6868, %v6882
        %v6897 = vadd.f32 %v6869, %v6878
        %v6898 = vadd.f32 %v6870, %v6882
        %v6899 = vadd.f32 %v6871, %v6878
        %v6900 = vadd.f32 %v6872, %v6882
        %v6901 = vmax.f32 %v6885, 0.0
        %v6902 = vmax.f32 %v6886, 0.0
        %v6903 = vmax.f32 %v6887, 0.0
        %v6904 = vmax.f32 %v6888, 0.0
        %v6905 = vmax.f32 %v6889, 0.0
        %v6906 = vmax.f32 %v6890, 0.0
        %v6907 = vmax.f32 %v6891, 0.0
        %v6908 = vmax.f32 %v6892, 0.0
        %v6909 = vmax.f32 %v6893, 0.0
        %v6910 = vmax.f32 %v6894, 0.0
        %v6911 = vmax.f32 %v6895, 0.0
        %v6912 = vmax.f32 %v6896, 0.0
        %v6913 = vmax.f32 %v6897, 0.0
        %v6914 = vmax.f32 %v6898, 0.0
        %v6915 = vmax.f32 %v6899, 0.0
        %v6916 = vmax.f32 %v6900, 0.0
        %v6917 = vpack.c.bf16 %v6901, %v6901
        %v6918 = vpack.c.bf16 %v6902, %v6902
        %v6919 = vpack.c.bf16 %v6903, %v6903
        %v6920 = vpack.c.bf16 %v6904, %v6904
        %v6921 = vpack.c.bf16 %v6905, %v6905
        %v6922 = vpack.c.bf16 %v6906, %v6906
        %v6923 = vpack.c.bf16 %v6907, %v6907
        %v6924 = vpack.c.bf16 %v6908, %v6908
        %v6925 = vpack.c.bf16 %v6909, %v6909
        %v6926 = vpack.c.bf16 %v6910, %v6910
        %v6927 = vpack.c.bf16 %v6911, %v6911
        %v6928 = vpack.c.bf16 %v6912, %v6912
        %v6929 = vpack.c.bf16 %v6913, %v6913
        %v6930 = vpack.c.bf16 %v6914, %v6914
        %v6931 = vpack.c.bf16 %v6915, %v6915
        %v6932 = vpack.c.bf16 %v6916, %v6916
        %v6933 = vld [vmem:[%s6] sm:$0xf]
        %v6934 = vld [vmem:[%s6 + $0x4] sm:$0xf]
        %v6935 = vld [vmem:[%s6 + $0x8] sm:$0xf]
        %v6936 = vld [vmem:[%s6 + $0xc] sm:$0xf]
        %v6937 = vld [vmem:[%s6 + $0x10] sm:$0xf]
        %v6938 = vld [vmem:[%s6 + $0x14] sm:$0xf]
        %v6939 = vld [vmem:[%s6 + $0x18] sm:$0xf]
        %v6940 = vld [vmem:[%s6 + $0x1c] sm:$0xf]
        %v6941 = vld [vmem:[%s6 + $0x20] sm:$0xf]
        %v6942 = vld [vmem:[%s6 + $0x24] sm:$0xf]
        %v6943 = vld [vmem:[%s6 + $0x28] sm:$0xf]
        %v6944 = vld [vmem:[%s6 + $0x2c] sm:$0xf]
        %v6945 = vld [vmem:[%s6 + $0x30] sm:$0xf]
        %v6946 = vld [vmem:[%s6 + $0x34] sm:$0xf]
        %v6947 = vld [vmem:[%s6 + $0x38] sm:$0xf]
        %v6948 = vld [vmem:[%s6 + $0x3c] sm:$0xf]
        %v6949 = vld [vmem:[%s6 + $0x40] sm:$0xf]
        %v6950 = vld [vmem:[%s6 + $0x44] sm:$0xf]
        %v6951 = vld [vmem:[%s6 + $0x48] sm:$0xf]
        %v6952 = vld [vmem:[%s6 + $0x4c] sm:$0xf]
        %v6953 = vld [vmem:[%s6 + $0x50] sm:$0xf]
        %v6954 = vld [vmem:[%s6 + $0x54] sm:$0xf]
        %v6955 = vld [vmem:[%s6 + $0x58] sm:$0xf]
        %v6956 = vld [vmem:[%s6 + $0x5c] sm:$0xf]
        %v6957 = vld [vmem:[%s6 + $0x60] sm:$0xf]
        %v6958 = vld [vmem:[%s6 + $0x64] sm:$0xf]
        %s6959 = scalar_lea.vmem %s6, 104
        %v6960 = vld [vmem:[%s6959] sm:$0xf]
        %v6961 = vld [vmem:[%s6959 + $0x4] sm:$0xf]
        %v6962 = vld [vmem:[%s6959 + $0x8] sm:$0xf]
        %v6963 = vld [vmem:[%s6959 + $0xc] sm:$0xf]
        %v6964 = vld [vmem:[%s6959 + $0x10] sm:$0xf]
        %v6965 = vld [vmem:[%s6959 + $0x14] sm:$0xf]
        %v6966 = vld [vmem:[%s6959 + $0x18] sm:$0xf]
        %v6967 = vld [vmem:[%s6959 + $0x1c] sm:$0xf]
        %v6968 = vld [vmem:[%s6959 + $0x20] sm:$0xf]
        %v6969 = vld [vmem:[%s6959 + $0x24] sm:$0xf]
        %v6970 = vld [vmem:[%s6959 + $0x28] sm:$0xf]
        %v6971 = vld [vmem:[%s6959 + $0x2c] sm:$0xf]
        %v6972 = vld [vmem:[%s6959 + $0x30] sm:$0xf]
        %v6973 = vld [vmem:[%s6959 + $0x34] sm:$0xf]
        %v6974 = vld [vmem:[%s6959 + $0x38] sm:$0xf]
        %v6975 = vld [vmem:[%s6959 + $0x3c] sm:$0xf]
        %v6976 = vld [vmem:[%s6959 + $0x40] sm:$0xf]
        %v6977 = vld [vmem:[%s6959 + $0x44] sm:$0xf]
        %v6978 = vld [vmem:[%s6959 + $0x48] sm:$0xf]
        %v6979 = vld [vmem:[%s6959 + $0x4c] sm:$0xf]
        %v6980 = vld [vmem:[%s6959 + $0x50] sm:$0xf]
        %v6981 = vld [vmem:[%s6959 + $0x54] sm:$0xf]
        %v6982 = vld [vmem:[%s6959 + $0x58] sm:$0xf]
        %v6983 = vld [vmem:[%s6959 + $0x5c] sm:$0xf]
        %v6984 = vld [vmem:[%s6959 + $0x60] sm:$0xf]
        %v6985 = vld [vmem:[%s6959 + $0x64] sm:$0xf]
        %v7002 = vunpack.c.l.b16 %v6917
        %v7003 = vunpack.c.l.b16 %v6918
        %v7004 = vunpack.c.l.b16 %v6919
        %v7005 = vunpack.c.l.b16 %v6920
        %v7006 = vunpack.c.l.b16 %v6921
        %v7007 = vunpack.c.l.b16 %v6922
        %v7008 = vunpack.c.l.b16 %v6923
        %v7009 = vunpack.c.l.b16 %v6924
        %v7010 = vunpack.c.l.b16 %v6925
        %v7011 = vunpack.c.l.b16 %v6926
        %v7012 = vunpack.c.l.b16 %v6927
        %v7013 = vunpack.c.l.b16 %v6928
        %v7014 = vunpack.c.l.b16 %v6929
        %v7015 = vunpack.c.l.b16 %v6930
        %v7016 = vunpack.c.l.b16 %v6931
        %v7017 = vunpack.c.l.b16 %v6932
        %v7018 = vrot.slane %v7002, 1
        %vm7019 = vcmask 1041409
        %v7020 = vsel %vm7019, %v7004, %v7018
        %v7021 = vrot.slane %v7006, 7
        %vm7022 = vcmask 1042434
        %v7023 = vsel %vm7022, %v7021, %v7020
        %v7024 = vrot.slane %v7008, 6
        %vm7025 = vcmask 1043459
        %v7026 = vsel %vm7025, %v7024, %v7023
        %v7027 = vrot.slane %v7010, 5
        %vm7028 = vcmask 1044484
        %v7029 = vsel %vm7028, %v7027, %v7026
        %v7030 = vrot.slane %v7012, 4
        %vm7031 = vcmask 1045509
        %v7032 = vsel %vm7031, %v7030, %v7029
        %v7033 = vrot.slane %v7014, 3
        %vm7034 = vcmask 1046534
        %v7035 = vsel %vm7034, %v7033, %v7032
        %v7036 = vrot.slane %v7016, 2
        %vm7037 = vcmask 1047559
        %v7038 = vsel %vm7037, %v7036, %v7035
        %v7039 = vrot.slane %v7003, 1
        %v7040 = vsel %vm7019, %v7005, %v7039
        %v7041 = vrot.slane %v7007, 7
        %v7042 = vsel %vm7022, %v7041, %v7040
        %v7043 = vrot.slane %v7009, 6
        %v7044 = vsel %vm7025, %v7043, %v7042
        %v7045 = vrot.slane %v7011, 5
        %v7046 = vsel %vm7028, %v7045, %v7044
        %v7047 = vrot.slane %v7013, 4
        %v7048 = vsel %vm7031, %v7047, %v7046
        %v7049 = vrot.slane %v7015, 3
        %v7050 = vsel %vm7034, %v7049, %v7048
        %v7051 = vrot.slane %v7017, 2
        %v7052 = vsel %vm7037, %v7051, %v7050
        %v7053 = vpack.c.b16 %v7038, %v7038
        %v7054 = vpack.c.b16 %v7052, %v7052
        %v7082 = vunpack.c.l.b16 %v6960
        %v7083 = vunpack.c.l.b16 %v6961
        %v7084 = vunpack.c.l.b16 %v6962
        %v7085 = vunpack.c.l.b16 %v6963
        %v7086 = vunpack.c.l.b16 %v6964
        %v7087 = vunpack.c.l.b16 %v6965
        %v7088 = vunpack.c.l.b16 %v6966
        %v7089 = vunpack.c.l.b16 %v6967
        %v7090 = vunpack.c.l.b16 %v6968
        %v7091 = vunpack.c.l.b16 %v6969
        %v7092 = vunpack.c.l.b16 %v6970
        %v7093 = vunpack.c.l.b16 %v6971
        %v7094 = vunpack.c.l.b16 %v6972
        %v7095 = vunpack.c.l.b16 %v6973
        %v7096 = vunpack.c.l.b16 %v6974
        %v7097 = vunpack.c.l.b16 %v6975
        %v7098 = vunpack.c.l.b16 %v6976
        %v7099 = vunpack.c.l.b16 %v6977
        %v7100 = vunpack.c.l.b16 %v6978
        %v7101 = vunpack.c.l.b16 %v6979
        %v7102 = vunpack.c.l.b16 %v6980
        %v7103 = vunpack.c.l.b16 %v6981
        %v7104 = vunpack.c.l.b16 %v6982
        %v7105 = vunpack.c.l.b16 %v6983
        %v7106 = vunpack.c.l.b16 %v6984
        %v7107 = vunpack.c.l.b16 %v6985
        %v7108 = vpack.c.b16 %v7083, %v7082
        %v7109 = vpack.c.b16 %v7085, %v7084
        %v7110 = vpack.c.b16 %v7087, %v7086
        %v7111 = vpack.c.b16 %v7089, %v7088
        %v7112 = vpack.c.b16 %v7091, %v7090
        %v7113 = vpack.c.b16 %v7093, %v7092
        %v7114 = vpack.c.b16 %v7095, %v7094
        %v7115 = vpack.c.b16 %v7097, %v7096
        %v7116 = vpack.c.b16 %v7099, %v7098
        %v7117 = vpack.c.b16 %v7101, %v7100
        %v7118 = vpack.c.b16 %v7103, %v7102
        %v7119 = vpack.c.b16 %v7105, %v7104
        %v7120 = vpack.c.b16 %v7107, %v7106
        %vm7134 = vcmask 654336
        %v7136 = vsel %vm7134, %v7054, 0
        %7138 = vmatprep.subr.bf16.mxu0 0
        %7139 = vmatpush1.bf16.msra.mxu0 %v7108
        %7140 = vmatprep.subr.bf16.mxu0 0
        %7141 = vmatpush1.bf16.msra.mxu0 %v7109
        %7142 = vmatprep.subr.bf16.mxu0 0
        %7143 = vmatpush1.bf16.msra.mxu0 %v7110
        %7144 = vmatprep.subr.bf16.mxu0 0
        %7145 = vmatpush1.bf16.msra.mxu0 %v7111
        %7146 = vmatprep.subr.bf16.mxu0 0
        %7147 = vmatpush1.bf16.msra.mxu0 %v7112
        %7148 = vmatprep.subr.bf16.mxu0 0
        %7149 = vmatpush1.bf16.msra.mxu0 %v7113
        %7150 = vmatprep.subr.bf16.mxu0 0
        %7151 = vmatpush1.bf16.msra.mxu0 %v7114
        %7152 = vmatprep.subr.bf16.mxu0 0
        %7153 = vmatpush1.bf16.msra.mxu0 %v7115
        %7154 = vmatprep.subr.bf16.mxu0 0
        %7155 = vmatpush1.bf16.msra.mxu0 %v7116
        %7156 = vmatprep.subr.bf16.mxu0 0
        %7157 = vmatpush1.bf16.msra.mxu0 %v7117
        %7158 = vmatprep.subr.bf16.mxu0 0
        %7159 = vmatpush1.bf16.msra.mxu0 %v7118
        %7160 = vmatprep.subr.bf16.mxu0 0
        %7161 = vmatpush1.bf16.msra.mxu0 %v7119
        %7162 = vmatprep.subr.bf16.mxu0 0
        %7163 = vmatpush1.bf16.msra.mxu0 %v7120
        %7164 = vmatprep.subr.bf16.mxu0 0
        %7165 = vmatpush1.bf16.msra.mxu0 0
        %7166 = vmatprep.subr.bf16.mxu0 0
        %7167 = vmatpush1.bf16.msra.mxu0 0
        %7168 = vmatprep.subr.bf16.mxu0 0
        %7169 = vmatpush1.bf16.msra.mxu0 0
        %7170 = vmatprep.mubr.bf16.mxu0 %v7136
        %7171 = vmatmul.mubr.bf16.gmra.mrb[0].mxu0 %v7053
        %v7172 = vpop.f32.mrb[0].mxu0
        %v7173 = vadd.f32 0.0, %v7172
        %v7174 = vpop.f32.mrb[0].mxu0
        %v7175 = vpop.f32.mrb[0].mxu0
        %v7176 = vpop.f32.mrb[0].mxu0
        %7177 = vdwg.mxu0
        %v7178 = vrot.slane %v7004, 7
        %v7179 = vsel %vm7019, %v7178, %v7002
        %v7180 = vrot.slane %v7006, 6
        %v7181 = vsel %vm7022, %v7180, %v7179
        %v7182 = vrot.slane %v7008, 5
        %v7183 = vsel %vm7025, %v7182, %v7181
        %v7184 = vrot.slane %v7010, 4
        %v7185 = vsel %vm7028, %v7184, %v7183
        %v7186 = vrot.slane %v7012, 3
        %v7187 = vsel %vm7031, %v7186, %v7185
        %v7188 = vrot.slane %v7014, 2
        %v7189 = vsel %vm7034, %v7188, %v7187
        %v7190 = vrot.slane %v7016, 1
        %v7191 = vsel %vm7037, %v7190, %v7189
        %v7192 = vrot.slane %v7005, 7
        %v7193 = vsel %vm7019, %v7192, %v7003
        %v7194 = vrot.slane %v7007, 6
        %v7195 = vsel %vm7022, %v7194, %v7193
        %v7196 = vrot.slane %v7009, 5
        %v7197 = vsel %vm7025, %v7196, %v7195
        %v7198 = vrot.slane %v7011, 4
        %v7199 = vsel %vm7028, %v7198, %v7197
        %v7200 = vrot.slane %v7013, 3
        %v7201 = vsel %vm7031, %v7200, %v7199
        %v7202 = vrot.slane %v7015, 2
        %v7203 = vsel %vm7034, %v7202, %v7201
        %v7204 = vrot.slane %v7017, 1
        %v7205 = vsel %vm7037, %v7204, %v7203
        %v7206 = vpack.c.b16 %v7191, %v7191
        %v7207 = vpack.c.b16 %v7205, %v7205
        %v7235 = vunpack.c.l.b16 %v6933
        %v7236 = vunpack.c.l.b16 %v6934
        %v7237 = vunpack.c.l.b16 %v6935
        %v7238 = vunpack.c.l.b16 %v6936
        %v7239 = vunpack.c.l.b16 %v6937
        %v7240 = vunpack.c.l.b16 %v6938
        %v7241 = vunpack.c.l.b16 %v6939
        %v7242 = vunpack.c.l.b16 %v6940
        %v7243 = vunpack.c.l.b16 %v6941
        %v7244 = vunpack.c.l.b16 %v6942
        %v7245 = vunpack.c.l.b16 %v6943
        %v7246 = vunpack.c.l.b16 %v6944
        %v7247 = vunpack.c.l.b16 %v6945
        %v7248 = vunpack.c.l.b16 %v6946
        %v7249 = vunpack.c.l.b16 %v6947
        %v7250 = vunpack.c.l.b16 %v6948
        %v7251 = vunpack.c.l.b16 %v6949
        %v7252 = vunpack.c.l.b16 %v6950
        %v7253 = vunpack.c.l.b16 %v6951
        %v7254 = vunpack.c.l.b16 %v6952
        %v7255 = vunpack.c.l.b16 %v6953
        %v7256 = vunpack.c.l.b16 %v6954
        %v7257 = vunpack.c.l.b16 %v6955
        %v7258 = vunpack.c.l.b16 %v6956
        %v7259 = vunpack.c.l.b16 %v6957
        %v7260 = vunpack.c.l.b16 %v6958
        %v7261 = vpack.c.b16 %v7236, %v7235
        %v7262 = vpack.c.b16 %v7238, %v7237
        %v7263 = vpack.c.b16 %v7240, %v7239
        %v7264 = vpack.c.b16 %v7242, %v7241
        %v7265 = vpack.c.b16 %v7244, %v7243
        %v7266 = vpack.c.b16 %v7246, %v7245
        %v7267 = vpack.c.b16 %v7248, %v7247
        %v7268 = vpack.c.b16 %v7250, %v7249
        %v7269 = vpack.c.b16 %v7252, %v7251
        %v7270 = vpack.c.b16 %v7254, %v7253
        %v7271 = vpack.c.b16 %v7256, %v7255
        %v7272 = vpack.c.b16 %v7258, %v7257
        %v7273 = vpack.c.b16 %v7260, %v7259
        %v7288 = vsel %vm7134, %v7207, 0
        %7290 = vmatprep.subr.bf16.mxu0 0
        %7291 = vmatpush1.bf16.msra.mxu0 %v7261
        %7292 = vmatprep.subr.bf16.mxu0 0
        %7293 = vmatpush1.bf16.msra.mxu0 %v7262
        %7294 = vmatprep.subr.bf16.mxu0 0
        %7295 = vmatpush1.bf16.msra.mxu0 %v7263
        %7296 = vmatprep.subr.bf16.mxu0 0
        %7297 = vmatpush1.bf16.msra.mxu0 %v7264
        %7298 = vmatprep.subr.bf16.mxu0 0
        %7299 = vmatpush1.bf16.msra.mxu0 %v7265
        %7300 = vmatprep.subr.bf16.mxu0 0
        %7301 = vmatpush1.bf16.msra.mxu0 %v7266
        %7302 = vmatprep.subr.bf16.mxu0 0
        %7303 = vmatpush1.bf16.msra.mxu0 %v7267
        %7304 = vmatprep.subr.bf16.mxu0 0
        %7305 = vmatpush1.bf16.msra.mxu0 %v7268
        %7306 = vmatprep.subr.bf16.mxu0 0
        %7307 = vmatpush1.bf16.msra.mxu0 %v7269
        %7308 = vmatprep.subr.bf16.mxu0 0
        %7309 = vmatpush1.bf16.msra.mxu0 %v7270
        %7310 = vmatprep.subr.bf16.mxu0 0
        %7311 = vmatpush1.bf16.msra.mxu0 %v7271
        %7312 = vmatprep.subr.bf16.mxu0 0
        %7313 = vmatpush1.bf16.msra.mxu0 %v7272
        %7314 = vmatprep.subr.bf16.mxu0 0
        %7315 = vmatpush1.bf16.msra.mxu0 %v7273
        %7316 = vmatprep.subr.bf16.mxu0 0
        %7317 = vmatpush1.bf16.msra.mxu0 0
        %7318 = vmatprep.subr.bf16.mxu0 0
        %7319 = vmatpush1.bf16.msra.mxu0 0
        %7320 = vmatprep.subr.bf16.mxu0 0
        %7321 = vmatpush1.bf16.msra.mxu0 0
        %7322 = vmatprep.mubr.bf16.mxu0 %v7288
        %7323 = vmatmul.mubr.bf16.gmra.mrb[0].mxu0 %v7206
        %v7324 = vpop.f32.mrb[0].mxu0
        %v7325 = vadd.f32 %v7173, %v7324
        %v7326 = vpop.f32.mrb[0].mxu0
        %v7327 = vpop.f32.mrb[0].mxu0
        %v7328 = vpop.f32.mrb[0].mxu0
        %7329 = vdwg.mxu0
        %s7330 = scalar_lea.vmem %s6, 208
        %v7331 = vld [vmem:[%s7330] sm:$0xf]
        %v7332 = vld [vmem:[%s7330 + $0x4] sm:$0xf]
        %v7333 = vld [vmem:[%s7330 + $0x8] sm:$0xf]
        %v7334 = vld [vmem:[%s7330 + $0xc] sm:$0xf]
        %v7335 = vld [vmem:[%s7330 + $0x10] sm:$0xf]
        %v7336 = vld [vmem:[%s7330 + $0x14] sm:$0xf]
        %v7337 = vld [vmem:[%s7330 + $0x18] sm:$0xf]
        %v7338 = vld [vmem:[%s7330 + $0x1c] sm:$0xf]
        %v7339 = vld [vmem:[%s7330 + $0x20] sm:$0xf]
        %v7340 = vld [vmem:[%s7330 + $0x24] sm:$0xf]
        %v7341 = vld [vmem:[%s7330 + $0x28] sm:$0xf]
        %v7342 = vld [vmem:[%s7330 + $0x2c] sm:$0xf]
        %v7343 = vld [vmem:[%s7330 + $0x30] sm:$0xf]
        %v7344 = vld [vmem:[%s7330 + $0x34] sm:$0xf]
        %v7345 = vld [vmem:[%s7330 + $0x38] sm:$0xf]
        %v7346 = vld [vmem:[%s7330 + $0x3c] sm:$0xf]
        %v7347 = vld [vmem:[%s7330 + $0x40] sm:$0xf]
        %v7348 = vld [vmem:[%s7330 + $0x44] sm:$0xf]
        %v7349 = vld [vmem:[%s7330 + $0x48] sm:$0xf]
        %v7350 = vld [vmem:[%s7330 + $0x4c] sm:$0xf]
        %v7351 = vld [vmem:[%s7330 + $0x50] sm:$0xf]
        %v7352 = vld [vmem:[%s7330 + $0x54] sm:$0xf]
        %v7353 = vld [vmem:[%s7330 + $0x58] sm:$0xf]
        %v7354 = vld [vmem:[%s7330 + $0x5c] sm:$0xf]
        %v7355 = vld [vmem:[%s7330 + $0x60] sm:$0xf]
        %v7356 = vld [vmem:[%s7330 + $0x64] sm:$0xf]
        %v7357 = vrot.slane %v7002, 2
        %v7358 = vrot.slane %v7004, 1
        %v7359 = vsel %vm7019, %v7358, %v7357
        %v7360 = vsel %vm7022, %v7006, %v7359
        %v7361 = vrot.slane %v7008, 7
        %v7362 = vsel %vm7025, %v7361, %v7360
        %v7363 = vrot.slane %v7010, 6
        %v7364 = vsel %vm7028, %v7363, %v7362
        %v7365 = vrot.slane %v7012, 5
        %v7366 = vsel %vm7031, %v7365, %v7364
        %v7367 = vrot.slane %v7014, 4
        %v7368 = vsel %vm7034, %v7367, %v7366
        %v7369 = vrot.slane %v7016, 3
        %v7370 = vsel %vm7037, %v7369, %v7368
        %v7371 = vrot.slane %v7003, 2
        %v7372 = vrot.slane %v7005, 1
        %v7373 = vsel %vm7019, %v7372, %v7371
        %v7374 = vsel %vm7022, %v7007, %v7373
        %v7375 = vrot.slane %v7009, 7
        %v7376 = vsel %vm7025, %v7375, %v7374
        %v7377 = vrot.slane %v7011, 6
        %v7378 = vsel %vm7028, %v7377, %v7376
        %v7379 = vrot.slane %v7013, 5
        %v7380 = vsel %vm7031, %v7379, %v7378
        %v7381 = vrot.slane %v7015, 4
        %v7382 = vsel %vm7034, %v7381, %v7380
        %v7383 = vrot.slane %v7017, 3
        %v7384 = vsel %vm7037, %v7383, %v7382
        %v7385 = vpack.c.b16 %v7370, %v7370
        %v7386 = vpack.c.b16 %v7384, %v7384
        %v7414 = vunpack.c.l.b16 %v7331
        %v7415 = vunpack.c.l.b16 %v7332
        %v7416 = vunpack.c.l.b16 %v7333
        %v7417 = vunpack.c.l.b16 %v7334
        %v7418 = vunpack.c.l.b16 %v7335
        %v7419 = vunpack.c.l.b16 %v7336
        %v7420 = vunpack.c.l.b16 %v7337
        %v7421 = vunpack.c.l.b16 %v7338
        %v7422 = vunpack.c.l.b16 %v7339
        %v7423 = vunpack.c.l.b16 %v7340
        %v7424 = vunpack.c.l.b16 %v7341
        %v7425 = vunpack.c.l.b16 %v7342
        %v7426 = vunpack.c.l.b16 %v7343
        %v7427 = vunpack.c.l.b16 %v7344
        %v7428 = vunpack.c.l.b16 %v7345
        %v7429 = vunpack.c.l.b16 %v7346
        %v7430 = vunpack.c.l.b16 %v7347
        %v7431 = vunpack.c.l.b16 %v7348
        %v7432 = vunpack.c.l.b16 %v7349
        %v7433 = vunpack.c.l.b16 %v7350
        %v7434 = vunpack.c.l.b16 %v7351
        %v7435 = vunpack.c.l.b16 %v7352
        %v7436 = vunpack.c.l.b16 %v7353
        %v7437 = vunpack.c.l.b16 %v7354
        %v7438 = vunpack.c.l.b16 %v7355
        %v7439 = vunpack.c.l.b16 %v7356
        %v7440 = vpack.c.b16 %v7415, %v7414
        %v7441 = vpack.c.b16 %v7417, %v7416
        %v7442 = vpack.c.b16 %v7419, %v7418
        %v7443 = vpack.c.b16 %v7421, %v7420
        %v7444 = vpack.c.b16 %v7423, %v7422
        %v7445 = vpack.c.b16 %v7425, %v7424
        %v7446 = vpack.c.b16 %v7427, %v7426
        %v7447 = vpack.c.b16 %v7429, %v7428
        %v7448 = vpack.c.b16 %v7431, %v7430
        %v7449 = vpack.c.b16 %v7433, %v7432
        %v7450 = vpack.c.b16 %v7435, %v7434
        %v7451 = vpack.c.b16 %v7437, %v7436
        %v7452 = vpack.c.b16 %v7439, %v7438
        %v7467 = vsel %vm7134, %v7386, 0
        %7469 = vmatprep.subr.bf16.mxu0 0
        %7470 = vmatpush1.bf16.msra.mxu0 %v7440
        %7471 = vmatprep.subr.bf16.mxu0 0
        %7472 = vmatpush1.bf16.msra.mxu0 %v7441
        %7473 = vmatprep.subr.bf16.mxu0 0
        %7474 = vmatpush1.bf16.msra.mxu0 %v7442
        %7475 = vmatprep.subr.bf16.mxu0 0
        %7476 = vmatpush1.bf16.msra.mxu0 %v7443
        %7477 = vmatprep.subr.bf16.mxu0 0
        %7478 = vmatpush1.bf16.msra.mxu0 %v7444
        %7479 = vmatprep.subr.bf16.mxu0 0
        %7480 = vmatpush1.bf16.msra.mxu0 %v7445
        %7481 = vmatprep.subr.bf16.mxu0 0
        %7482 = vmatpush1.bf16.msra.mxu0 %v7446
        %7483 = vmatprep.subr.bf16.mxu0 0
        %7484 = vmatpush1.bf16.msra.mxu0 %v7447
        %7485 = vmatprep.subr.bf16.mxu0 0
        %7486 = vmatpush1.bf16.msra.mxu0 %v7448
        %7487 = vmatprep.subr.bf16.mxu0 0
        %7488 = vmatpush1.bf16.msra.mxu0 %v7449
        %7489 = vmatprep.subr.bf16.mxu0 0
        %7490 = vmatpush1.bf16.msra.mxu0 %v7450
        %7491 = vmatprep.subr.bf16.mxu0 0
        %7492 = vmatpush1.bf16.msra.mxu0 %v7451
        %7493 = vmatprep.subr.bf16.mxu0 0
        %7494 = vmatpush1.bf16.msra.mxu0 %v7452
        %7495 = vmatprep.subr.bf16.mxu0 0
        %7496 = vmatpush1.bf16.msra.mxu0 0
        %7497 = vmatprep.subr.bf16.mxu0 0
        %7498 = vmatpush1.bf16.msra.mxu0 0
        %7499 = vmatprep.subr.bf16.mxu0 0
        %7500 = vmatpush1.bf16.msra.mxu0 0
        %7501 = vmatprep.mubr.bf16.mxu0 %v7467
        %7502 = vmatmul.mubr.bf16.gmra.mrb[0].mxu0 %v7385
        %v7503 = vpop.f32.mrb[0].mxu0
        %v7504 = vadd.f32 0.0, %v7503
        %v7505 = vpop.f32.mrb[0].mxu0
        %v7506 = vpop.f32.mrb[0].mxu0
        %v7507 = vpop.f32.mrb[0].mxu0
        %7508 = vdwg.mxu0
        %v7509 = vadd.f32 %v7325, %v7504
        %s7510 = scalar_lea.vmem %s6, 312
        %v7511 = vld [vmem:[%s7510] sm:$0xf]
        %v7512 = vld [vmem:[%s7510 + $0x4] sm:$0xf]
        %v7513 = vld [vmem:[%s7510 + $0x8] sm:$0xf]
        %v7514 = vld [vmem:[%s7510 + $0xc] sm:$0xf]
        %v7515 = vld [vmem:[%s7510 + $0x10] sm:$0xf]
        %v7516 = vld [vmem:[%s7510 + $0x14] sm:$0xf]
        %v7517 = vld [vmem:[%s7510 + $0x18] sm:$0xf]
        %v7518 = vld [vmem:[%s7510 + $0x1c] sm:$0xf]
        %v7519 = vld [vmem:[%s7510 + $0x20] sm:$0xf]
        %v7520 = vld [vmem:[%s7510 + $0x24] sm:$0xf]
        %v7521 = vld [vmem:[%s7510 + $0x28] sm:$0xf]
        %v7522 = vld [vmem:[%s7510 + $0x2c] sm:$0xf]
        %v7523 = vld [vmem:[%s7510 + $0x30] sm:$0xf]
        %v7524 = vld [vmem:[%s7510 + $0x34] sm:$0xf]
        %v7525 = vld [vmem:[%s7510 + $0x38] sm:$0xf]
        %v7526 = vld [vmem:[%s7510 + $0x3c] sm:$0xf]
        %v7527 = vld [vmem:[%s7510 + $0x40] sm:$0xf]
        %v7528 = vld [vmem:[%s7510 + $0x44] sm:$0xf]
        %v7529 = vld [vmem:[%s7510 + $0x48] sm:$0xf]
        %v7530 = vld [vmem:[%s7510 + $0x4c] sm:$0xf]
        %v7531 = vld [vmem:[%s7510 + $0x50] sm:$0xf]
        %v7532 = vld [vmem:[%s7510 + $0x54] sm:$0xf]
        %v7533 = vld [vmem:[%s7510 + $0x58] sm:$0xf]
        %v7534 = vld [vmem:[%s7510 + $0x5c] sm:$0xf]
        %v7535 = vld [vmem:[%s7510 + $0x60] sm:$0xf]
        %v7536 = vld [vmem:[%s7510 + $0x64] sm:$0xf]
        %v7537 = vrot.slane %v7002, 3
        %v7538 = vrot.slane %v7004, 2
        %v7539 = vsel %vm7019, %v7538, %v7537
        %v7540 = vrot.slane %v7006, 1
        %v7541 = vsel %vm7022, %v7540, %v7539
        %v7542 = vsel %vm7025, %v7008, %v7541
        %v7543 = vrot.slane %v7010, 7
        %v7544 = vsel %vm7028, %v7543, %v7542
        %v7545 = vrot.slane %v7012, 6
        %v7546 = vsel %vm7031, %v7545, %v7544
        %v7547 = vrot.slane %v7014, 5
        %v7548 = vsel %vm7034, %v7547, %v7546
        %v7549 = vrot.slane %v7016, 4
        %v7550 = vsel %vm7037, %v7549, %v7548
        %v7551 = vrot.slane %v7003, 3
        %v7552 = vrot.slane %v7005, 2
        %v7553 = vsel %vm7019, %v7552, %v7551
        %v7554 = vrot.slane %v7007, 1
        %v7555 = vsel %vm7022, %v7554, %v7553
        %v7556 = vsel %vm7025, %v7009, %v7555
        %v7557 = vrot.slane %v7011, 7
        %v7558 = vsel %vm7028, %v7557, %v7556
        %v7559 = vrot.slane %v7013, 6
        %v7560 = vsel %vm7031, %v7559, %v7558
        %v7561 = vrot.slane %v7015, 5
        %v7562 = vsel %vm7034, %v7561, %v7560
        %v7563 = vrot.slane %v7017, 4
        %v7564 = vsel %vm7037, %v7563, %v7562
        %v7565 = vpack.c.b16 %v7550, %v7550
        %v7566 = vpack.c.b16 %v7564, %v7564
        %v7594 = vunpack.c.l.b16 %v7511
        %v7595 = vunpack.c.l.b16 %v7512
        %v7596 = vunpack.c.l.b16 %v7513
        %v7597 = vunpack.c.l.b16 %v7514
        %v7598 = vunpack.c.l.b16 %v7515
        %v7599 = vunpack.c.l.b16 %v7516
        %v7600 = vunpack.c.l.b16 %v7517
        %v7601 = vunpack.c.l.b16 %v7518
        %v7602 = vunpack.c.l.b16 %v7519
        %v7603 = vunpack.c.l.b16 %v7520
        %v7604 = vunpack.c.l.b16 %v7521
        %v7605 = vunpack.c.l.b16 %v7522
        %v7606 = vunpack.c.l.b16 %v7523
        %v7607 = vunpack.c.l.b16 %v7524
        %v7608 = vunpack.c.l.b16 %v7525
        %v7609 = vunpack.c.l.b16 %v7526
        %v7610 = vunpack.c.l.b16 %v7527
        %v7611 = vunpack.c.l.b16 %v7528
        %v7612 = vunpack.c.l.b16 %v7529
        %v7613 = vunpack.c.l.b16 %v7530
        %v7614 = vunpack.c.l.b16 %v7531
        %v7615 = vunpack.c.l.b16 %v7532
        %v7616 = vunpack.c.l.b16 %v7533
        %v7617 = vunpack.c.l.b16 %v7534
        %v7618 = vunpack.c.l.b16 %v7535
        %v7619 = vunpack.c.l.b16 %v7536
        %v7620 = vpack.c.b16 %v7595, %v7594
        %v7621 = vpack.c.b16 %v7597, %v7596
        %v7622 = vpack.c.b16 %v7599, %v7598
        %v7623 = vpack.c.b16 %v7601, %v7600
        %v7624 = vpack.c.b16 %v7603, %v7602
        %v7625 = vpack.c.b16 %v7605, %v7604
        %v7626 = vpack.c.b16 %v7607, %v7606
        %v7627 = vpack.c.b16 %v7609, %v7608
        %v7628 = vpack.c.b16 %v7611, %v7610
        %v7629 = vpack.c.b16 %v7613, %v7612
        %v7630 = vpack.c.b16 %v7615, %v7614
        %v7631 = vpack.c.b16 %v7617, %v7616
        %v7632 = vpack.c.b16 %v7619, %v7618
        %v7647 = vsel %vm7134, %v7566, 0
        %7649 = vmatprep.subr.bf16.mxu0 0
        %7650 = vmatpush1.bf16.msra.mxu0 %v7620
        %7651 = vmatprep.subr.bf16.mxu0 0
        %7652 = vmatpush1.bf16.msra.mxu0 %v7621
        %7653 = vmatprep.subr.bf16.mxu0 0
        %7654 = vmatpush1.bf16.msra.mxu0 %v7622
        %7655 = vmatprep.subr.bf16.mxu0 0
        %7656 = vmatpush1.bf16.msra.mxu0 %v7623
        %7657 = vmatprep.subr.bf16.mxu0 0
        %7658 = vmatpush1.bf16.msra.mxu0 %v7624
        %7659 = vmatprep.subr.bf16.mxu0 0
        %7660 = vmatpush1.bf16.msra.mxu0 %v7625
        %7661 = vmatprep.subr.bf16.mxu0 0
        %7662 = vmatpush1.bf16.msra.mxu0 %v7626
        %7663 = vmatprep.subr.bf16.mxu0 0
        %7664 = vmatpush1.bf16.msra.mxu0 %v7627
        %7665 = vmatprep.subr.bf16.mxu0 0
        %7666 = vmatpush1.bf16.msra.mxu0 %v7628
        %7667 = vmatprep.subr.bf16.mxu0 0
        %7668 = vmatpush1.bf16.msra.mxu0 %v7629
        %7669 = vmatprep.subr.bf16.mxu0 0
        %7670 = vmatpush1.bf16.msra.mxu0 %v7630
        %7671 = vmatprep.subr.bf16.mxu0 0
        %7672 = vmatpush1.bf16.msra.mxu0 %v7631
        %7673 = vmatprep.subr.bf16.mxu0 0
        %7674 = vmatpush1.bf16.msra.mxu0 %v7632
        %7675 = vmatprep.subr.bf16.mxu0 0
        %7676 = vmatpush1.bf16.msra.mxu0 0
        %7677 = vmatprep.subr.bf16.mxu0 0
        %7678 = vmatpush1.bf16.msra.mxu0 0
        %7679 = vmatprep.subr.bf16.mxu0 0
        %7680 = vmatpush1.bf16.msra.mxu0 0
        %7681 = vmatprep.mubr.bf16.mxu0 %v7647
        %7682 = vmatmul.mubr.bf16.gmra.mrb[0].mxu0 %v7565
        %v7683 = vpop.f32.mrb[0].mxu0
        %v7684 = vadd.f32 0.0, %v7683
        %v7685 = vpop.f32.mrb[0].mxu0
        %v7686 = vpop.f32.mrb[0].mxu0
        %v7687 = vpop.f32.mrb[0].mxu0
        %7688 = vdwg.mxu0
        %v7689 = vadd.f32 %v7509, %v7684
        %s7690 = scalar_lea.vmem %s6, 416
        %v7691 = vld [vmem:[%s7690] sm:$0xf]
        %v7692 = vld [vmem:[%s7690 + $0x4] sm:$0xf]
        %v7693 = vld [vmem:[%s7690 + $0x8] sm:$0xf]
        %v7694 = vld [vmem:[%s7690 + $0xc] sm:$0xf]
        %v7695 = vld [vmem:[%s7690 + $0x10] sm:$0xf]
        %v7696 = vld [vmem:[%s7690 + $0x14] sm:$0xf]
        %v7697 = vld [vmem:[%s7690 + $0x18] sm:$0xf]
        %v7698 = vld [vmem:[%s7690 + $0x1c] sm:$0xf]
        %v7699 = vld [vmem:[%s7690 + $0x20] sm:$0xf]
        %v7700 = vld [vmem:[%s7690 + $0x24] sm:$0xf]
        %v7701 = vld [vmem:[%s7690 + $0x28] sm:$0xf]
        %v7702 = vld [vmem:[%s7690 + $0x2c] sm:$0xf]
        %v7703 = vld [vmem:[%s7690 + $0x30] sm:$0xf]
        %v7704 = vld [vmem:[%s7690 + $0x34] sm:$0xf]
        %v7705 = vld [vmem:[%s7690 + $0x38] sm:$0xf]
        %v7706 = vld [vmem:[%s7690 + $0x3c] sm:$0xf]
        %v7707 = vld [vmem:[%s7690 + $0x40] sm:$0xf]
        %v7708 = vld [vmem:[%s7690 + $0x44] sm:$0xf]
        %v7709 = vld [vmem:[%s7690 + $0x48] sm:$0xf]
        %v7710 = vld [vmem:[%s7690 + $0x4c] sm:$0xf]
        %v7711 = vld [vmem:[%s7690 + $0x50] sm:$0xf]
        %v7712 = vld [vmem:[%s7690 + $0x54] sm:$0xf]
        %v7713 = vld [vmem:[%s7690 + $0x58] sm:$0xf]
        %v7714 = vld [vmem:[%s7690 + $0x5c] sm:$0xf]
        %v7715 = vld [vmem:[%s7690 + $0x60] sm:$0xf]
        %v7716 = vld [vmem:[%s7690 + $0x64] sm:$0xf]
        %v7717 = vrot.slane %v7002, 4
        %v7718 = vrot.slane %v7004, 3
        %v7719 = vsel %vm7019, %v7718, %v7717
        %v7720 = vrot.slane %v7006, 2
        %v7721 = vsel %vm7022, %v7720, %v7719
        %v7722 = vrot.slane %v7008, 1
        %v7723 = vsel %vm7025, %v7722, %v7721
        %v7724 = vsel %vm7028, %v7010, %v7723
        %v7725 = vrot.slane %v7012, 7
        %v7726 = vsel %vm7031, %v7725, %v7724
        %v7727 = vrot.slane %v7014, 6
        %v7728 = vsel %vm7034, %v7727, %v7726
        %v7729 = vrot.slane %v7016, 5
        %v7730 = vsel %vm7037, %v7729, %v7728
        %v7731 = vrot.slane %v7003, 4
        %v7732 = vrot.slane %v7005, 3
        %v7733 = vsel %vm7019, %v7732, %v7731
        %v7734 = vrot.slane %v7007, 2
        %v7735 = vsel %vm7022, %v7734, %v7733
        %v7736 = vrot.slane %v7009, 1
        %v7737 = vsel %vm7025, %v7736, %v7735
        %v7738 = vsel %vm7028, %v7011, %v7737
        %v7739 = vrot.slane %v7013, 7
        %v7740 = vsel %vm7031, %v7739, %v7738
        %v7741 = vrot.slane %v7015, 6
        %v7742 = vsel %vm7034, %v7741, %v7740
        %v7743 = vrot.slane %v7017, 5
        %v7744 = vsel %vm7037, %v7743, %v7742
        %v7745 = vpack.c.b16 %v7730, %v7730
        %v7746 = vpack.c.b16 %v7744, %v7744
        %v7774 = vunpack.c.l.b16 %v7691
        %v7775 = vunpack.c.l.b16 %v7692
        %v7776 = vunpack.c.l.b16 %v7693
        %v7777 = vunpack.c.l.b16 %v7694
        %v7778 = vunpack.c.l.b16 %v7695
        %v7779 = vunpack.c.l.b16 %v7696
        %v7780 = vunpack.c.l.b16 %v7697
        %v7781 = vunpack.c.l.b16 %v7698
        %v7782 = vunpack.c.l.b16 %v7699
        %v7783 = vunpack.c.l.b16 %v7700
        %v7784 = vunpack.c.l.b16 %v7701
        %v7785 = vunpack.c.l.b16 %v7702
        %v7786 = vunpack.c.l.b16 %v7703
        %v7787 = vunpack.c.l.b16 %v7704
        %v7788 = vunpack.c.l.b16 %v7705
        %v7789 = vunpack.c.l.b16 %v7706
        %v7790 = vunpack.c.l.b16 %v7707
        %v7791 = vunpack.c.l.b16 %v7708
        %v7792 = vunpack.c.l.b16 %v7709
        %v7793 = vunpack.c.l.b16 %v7710
        %v7794 = vunpack.c.l.b16 %v7711
        %v7795 = vunpack.c.l.b16 %v7712
        %v7796 = vunpack.c.l.b16 %v7713
        %v7797 = vunpack.c.l.b16 %v7714
        %v7798 = vunpack.c.l.b16 %v7715
        %v7799 = vunpack.c.l.b16 %v7716
        %v7800 = vpack.c.b16 %v7775, %v7774
        %v7801 = vpack.c.b16 %v7777, %v7776
        %v7802 = vpack.c.b16 %v7779, %v7778
        %v7803 = vpack.c.b16 %v7781, %v7780
        %v7804 = vpack.c.b16 %v7783, %v7782
        %v7805 = vpack.c.b16 %v7785, %v7784
        %v7806 = vpack.c.b16 %v7787, %v7786
        %v7807 = vpack.c.b16 %v7789, %v7788
        %v7808 = vpack.c.b16 %v7791, %v7790
        %v7809 = vpack.c.b16 %v7793, %v7792
        %v7810 = vpack.c.b16 %v7795, %v7794
        %v7811 = vpack.c.b16 %v7797, %v7796
        %v7812 = vpack.c.b16 %v7799, %v7798
        %v7827 = vsel %vm7134, %v7746, 0
        %7829 = vmatprep.subr.bf16.mxu0 0
        %7830 = vmatpush1.bf16.msra.mxu0 %v7800
        %7831 = vmatprep.subr.bf16.mxu0 0
        %7832 = vmatpush1.bf16.msra.mxu0 %v7801
        %7833 = vmatprep.subr.bf16.mxu0 0
        %7834 = vmatpush1.bf16.msra.mxu0 %v7802
        %7835 = vmatprep.subr.bf16.mxu0 0
        %7836 = vmatpush1.bf16.msra.mxu0 %v7803
        %7837 = vmatprep.subr.bf16.mxu0 0
        %7838 = vmatpush1.bf16.msra.mxu0 %v7804
        %7839 = vmatprep.subr.bf16.mxu0 0
        %7840 = vmatpush1.bf16.msra.mxu0 %v7805
        %7841 = vmatprep.subr.bf16.mxu0 0
        %7842 = vmatpush1.bf16.msra.mxu0 %v7806
        %7843 = vmatprep.subr.bf16.mxu0 0
        %7844 = vmatpush1.bf16.msra.mxu0 %v7807
        %7845 = vmatprep.subr.bf16.mxu0 0
        %7846 = vmatpush1.bf16.msra.mxu0 %v7808
        %7847 = vmatprep.subr.bf16.mxu0 0
        %7848 = vmatpush1.bf16.msra.mxu0 %v7809
        %7849 = vmatprep.subr.bf16.mxu0 0
        %7850 = vmatpush1.bf16.msra.mxu0 %v7810
        %7851 = vmatprep.subr.bf16.mxu0 0
        %7852 = vmatpush1.bf16.msra.mxu0 %v7811
        %7853 = vmatprep.subr.bf16.mxu0 0
        %7854 = vmatpush1.bf16.msra.mxu0 %v7812
        %7855 = vmatprep.subr.bf16.mxu0 0
        %7856 = vmatpush1.bf16.msra.mxu0 0
        %7857 = vmatprep.subr.bf16.mxu0 0
        %7858 = vmatpush1.bf16.msra.mxu0 0
        %7859 = vmatprep.subr.bf16.mxu0 0
        %7860 = vmatpush1.bf16.msra.mxu0 0
        %7861 = vmatprep.mubr.bf16.mxu0 %v7827
        %7862 = vmatmul.mubr.bf16.gmra.mrb[0].mxu0 %v7745
        %v7863 = vpop.f32.mrb[0].mxu0
        %v7864 = vadd.f32 0.0, %v7863
        %v7865 = vpop.f32.mrb[0].mxu0
        %v7866 = vpop.f32.mrb[0].mxu0
        %v7867 = vpop.f32.mrb[0].mxu0
        %7868 = vdwg.mxu0
        %v7869 = vadd.f32 %v7689, %v7864
        %s7870 = scalar_lea.vmem %s6, 520
        %v7871 = vld [vmem:[%s7870] sm:$0xf]
        %v7872 = vld [vmem:[%s7870 + $0x4] sm:$0xf]
        %v7873 = vld [vmem:[%s7870 + $0x8] sm:$0xf]
        %v7874 = vld [vmem:[%s7870 + $0xc] sm:$0xf]
        %v7875 = vld [vmem:[%s7870 + $0x10] sm:$0xf]
        %v7876 = vld [vmem:[%s7870 + $0x14] sm:$0xf]
        %v7877 = vld [vmem:[%s7870 + $0x18] sm:$0xf]
        %v7878 = vld [vmem:[%s7870 + $0x1c] sm:$0xf]
        %v7879 = vld [vmem:[%s7870 + $0x20] sm:$0xf]
        %v7880 = vld [vmem:[%s7870 + $0x24] sm:$0xf]
        %v7881 = vld [vmem:[%s7870 + $0x28] sm:$0xf]
        %v7882 = vld [vmem:[%s7870 + $0x2c] sm:$0xf]
        %v7883 = vld [vmem:[%s7870 + $0x30] sm:$0xf]
        %v7884 = vld [vmem:[%s7870 + $0x34] sm:$0xf]
        %v7885 = vld [vmem:[%s7870 + $0x38] sm:$0xf]
        %v7886 = vld [vmem:[%s7870 + $0x3c] sm:$0xf]
        %v7887 = vld [vmem:[%s7870 + $0x40] sm:$0xf]
        %v7888 = vld [vmem:[%s7870 + $0x44] sm:$0xf]
        %v7889 = vld [vmem:[%s7870 + $0x48] sm:$0xf]
        %v7890 = vld [vmem:[%s7870 + $0x4c] sm:$0xf]
        %v7891 = vld [vmem:[%s7870 + $0x50] sm:$0xf]
        %v7892 = vld [vmem:[%s7870 + $0x54] sm:$0xf]
        %v7893 = vld [vmem:[%s7870 + $0x58] sm:$0xf]
        %v7894 = vld [vmem:[%s7870 + $0x5c] sm:$0xf]
        %v7895 = vld [vmem:[%s7870 + $0x60] sm:$0xf]
        %v7896 = vld [vmem:[%s7870 + $0x64] sm:$0xf]
        %v7897 = vrot.slane %v7002, 5
        %v7898 = vrot.slane %v7004, 4
        %v7899 = vsel %vm7019, %v7898, %v7897
        %v7900 = vrot.slane %v7006, 3
        %v7901 = vsel %vm7022, %v7900, %v7899
        %v7902 = vrot.slane %v7008, 2
        %v7903 = vsel %vm7025, %v7902, %v7901
        %v7904 = vrot.slane %v7010, 1
        %v7905 = vsel %vm7028, %v7904, %v7903
        %v7906 = vsel %vm7031, %v7012, %v7905
        %v7907 = vrot.slane %v7014, 7
        %v7908 = vsel %vm7034, %v7907, %v7906
        %v7909 = vrot.slane %v7016, 6
        %v7910 = vsel %vm7037, %v7909, %v7908
        %v7911 = vrot.slane %v7003, 5
        %v7912 = vrot.slane %v7005, 4
        %v7913 = vsel %vm7019, %v7912, %v7911
        %v7914 = vrot.slane %v7007, 3
        %v7915 = vsel %vm7022, %v7914, %v7913
        %v7916 = vrot.slane %v7009, 2
        %v7917 = vsel %vm7025, %v7916, %v7915
        %v7918 = vrot.slane %v7011, 1
        %v7919 = vsel %vm7028, %v7918, %v7917
        %v7920 = vsel %vm7031, %v7013, %v7919
        %v7921 = vrot.slane %v7015, 7
        %v7922 = vsel %vm7034, %v7921, %v7920
        %v7923 = vrot.slane %v7017, 6
        %v7924 = vsel %vm7037, %v7923, %v7922
        %v7925 = vpack.c.b16 %v7910, %v7910
        %v7926 = vpack.c.b16 %v7924, %v7924
        %v7954 = vunpack.c.l.b16 %v7871
        %v7955 = vunpack.c.l.b16 %v7872
        %v7956 = vunpack.c.l.b16 %v7873
        %v7957 = vunpack.c.l.b16 %v7874
        %v7958 = vunpack.c.l.b16 %v7875
        %v7959 = vunpack.c.l.b16 %v7876
        %v7960 = vunpack.c.l.b16 %v7877
        %v7961 = vunpack.c.l.b16 %v7878
        %v7962 = vunpack.c.l.b16 %v7879
        %v7963 = vunpack.c.l.b16 %v7880
        %v7964 = vunpack.c.l.b16 %v7881
        %v7965 = vunpack.c.l.b16 %v7882
        %v7966 = vunpack.c.l.b16 %v7883
        %v7967 = vunpack.c.l.b16 %v7884
        %v7968 = vunpack.c.l.b16 %v7885
        %v7969 = vunpack.c.l.b16 %v7886
        %v7970 = vunpack.c.l.b16 %v7887
        %v7971 = vunpack.c.l.b16 %v7888
        %v7972 = vunpack.c.l.b16 %v7889
        %v7973 = vunpack.c.l.b16 %v7890
        %v7974 = vunpack.c.l.b16 %v7891
        %v7975 = vunpack.c.l.b16 %v7892
        %v7976 = vunpack.c.l.b16 %v7893
        %v7977 = vunpack.c.l.b16 %v7894
        %v7978 = vunpack.c.l.b16 %v7895
        %v7979 = vunpack.c.l.b16 %v7896
        %v7980 = vpack.c.b16 %v7955, %v7954
        %v7981 = vpack.c.b16 %v7957, %v7956
        %v7982 = vpack.c.b16 %v7959, %v7958
        %v7983 = vpack.c.b16 %v7961, %v7960
        %v7984 = vpack.c.b16 %v7963, %v7962
        %v7985 = vpack.c.b16 %v7965, %v7964
        %v7986 = vpack.c.b16 %v7967, %v7966
        %v7987 = vpack.c.b16 %v7969, %v7968
        %v7988 = vpack.c.b16 %v7971, %v7970
        %v7989 = vpack.c.b16 %v7973, %v7972
        %v7990 = vpack.c.b16 %v7975, %v7974
        %v7991 = vpack.c.b16 %v7977, %v7976
        %v7992 = vpack.c.b16 %v7979, %v7978
        %v8007 = vsel %vm7134, %v7926, 0
        %8009 = vmatprep.subr.bf16.mxu0 0
        %8010 = vmatpush1.bf16.msra.mxu0 %v7980
        %8011 = vmatprep.subr.bf16.mxu0 0
        %8012 = vmatpush1.bf16.msra.mxu0 %v7981
        %8013 = vmatprep.subr.bf16.mxu0 0
        %8014 = vmatpush1.bf16.msra.mxu0 %v7982
        %8015 = vmatprep.subr.bf16.mxu0 0
        %8016 = vmatpush1.bf16.msra.mxu0 %v7983
        %8017 = vmatprep.subr.bf16.mxu0 0
        %8018 = vmatpush1.bf16.msra.mxu0 %v7984
        %8019 = vmatprep.subr.bf16.mxu0 0
        %8020 = vmatpush1.bf16.msra.mxu0 %v7985
        %8021 = vmatprep.subr.bf16.mxu0 0
        %8022 = vmatpush1.bf16.msra.mxu0 %v7986
        %8023 = vmatprep.subr.bf16.mxu0 0
        %8024 = vmatpush1.bf16.msra.mxu0 %v7987
        %8025 = vmatprep.subr.bf16.mxu0 0
        %8026 = vmatpush1.bf16.msra.mxu0 %v7988
        %8027 = vmatprep.subr.bf16.mxu0 0
        %8028 = vmatpush1.bf16.msra.mxu0 %v7989
        %8029 = vmatprep.subr.bf16.mxu0 0
        %8030 = vmatpush1.bf16.msra.mxu0 %v7990
        %8031 = vmatprep.subr.bf16.mxu0 0
        %8032 = vmatpush1.bf16.msra.mxu0 %v7991
        %8033 = vmatprep.subr.bf16.mxu0 0
        %8034 = vmatpush1.bf16.msra.mxu0 %v7992
        %8035 = vmatprep.subr.bf16.mxu0 0
        %8036 = vmatpush1.bf16.msra.mxu0 0
        %8037 = vmatprep.subr.bf16.mxu0 0
        %8038 = vmatpush1.bf16.msra.mxu0 0
        %8039 = vmatprep.subr.bf16.mxu0 0
        %8040 = vmatpush1.bf16.msra.mxu0 0
        %8041 = vmatprep.mubr.bf16.mxu0 %v8007
        %8042 = vmatmul.mubr.bf16.gmra.mrb[0].mxu0 %v7925
        %v8043 = vpop.f32.mrb[0].mxu0
        %v8044 = vadd.f32 0.0, %v8043
        %v8045 = vpop.f32.mrb[0].mxu0
        %v8046 = vpop.f32.mrb[0].mxu0
        %v8047 = vpop.f32.mrb[0].mxu0
        %8048 = vdwg.mxu0
        %v8049 = vadd.f32 %v7869, %v8044
        %s8050 = scalar_lea.vmem %s6, 624
        %v8051 = vld [vmem:[%s8050] sm:$0xf]
        %v8052 = vld [vmem:[%s8050 + $0x4] sm:$0xf]
        %v8053 = vld [vmem:[%s8050 + $0x8] sm:$0xf]
        %v8054 = vld [vmem:[%s8050 + $0xc] sm:$0xf]
        %v8055 = vld [vmem:[%s8050 + $0x10] sm:$0xf]
        %v8056 = vld [vmem:[%s8050 + $0x14] sm:$0xf]
        %v8057 = vld [vmem:[%s8050 + $0x18] sm:$0xf]
        %v8058 = vld [vmem:[%s8050 + $0x1c] sm:$0xf]
        %v8059 = vld [vmem:[%s8050 + $0x20] sm:$0xf]
        %v8060 = vld [vmem:[%s8050 + $0x24] sm:$0xf]
        %v8061 = vld [vmem:[%s8050 + $0x28] sm:$0xf]
        %v8062 = vld [vmem:[%s8050 + $0x2c] sm:$0xf]
        %v8063 = vld [vmem:[%s8050 + $0x30] sm:$0xf]
        %v8064 = vld [vmem:[%s8050 + $0x34] sm:$0xf]
        %v8065 = vld [vmem:[%s8050 + $0x38] sm:$0xf]
        %v8066 = vld [vmem:[%s8050 + $0x3c] sm:$0xf]
        %v8067 = vld [vmem:[%s8050 + $0x40] sm:$0xf]
        %v8068 = vld [vmem:[%s8050 + $0x44] sm:$0xf]
        %v8069 = vld [vmem:[%s8050 + $0x48] sm:$0xf]
        %v8070 = vld [vmem:[%s8050 + $0x4c] sm:$0xf]
        %v8071 = vld [vmem:[%s8050 + $0x50] sm:$0xf]
        %v8072 = vld [vmem:[%s8050 + $0x54] sm:$0xf]
        %v8073 = vld [vmem:[%s8050 + $0x58] sm:$0xf]
        %v8074 = vld [vmem:[%s8050 + $0x5c] sm:$0xf]
        %v8075 = vld [vmem:[%s8050 + $0x60] sm:$0xf]
        %v8076 = vld [vmem:[%s8050 + $0x64] sm:$0xf]
        %v8077 = vrot.slane %v7002, 6
        %v8078 = vrot.slane %v7004, 5
        %v8079 = vsel %vm7019, %v8078, %v8077
        %v8080 = vrot.slane %v7006, 4
        %v8081 = vsel %vm7022, %v8080, %v8079
        %v8082 = vrot.slane %v7008, 3
        %v8083 = vsel %vm7025, %v8082, %v8081
        %v8084 = vrot.slane %v7010, 2
        %v8085 = vsel %vm7028, %v8084, %v8083
        %v8086 = vrot.slane %v7012, 1
        %v8087 = vsel %vm7031, %v8086, %v8085
        %v8088 = vsel %vm7034, %v7014, %v8087
        %v8089 = vrot.slane %v7016, 7
        %v8090 = vsel %vm7037, %v8089, %v8088
        %v8091 = vrot.slane %v7003, 6
        %v8092 = vrot.slane %v7005, 5
        %v8093 = vsel %vm7019, %v8092, %v8091
        %v8094 = vrot.slane %v7007, 4
        %v8095 = vsel %vm7022, %v8094, %v8093
        %v8096 = vrot.slane %v7009, 3
        %v8097 = vsel %vm7025, %v8096, %v8095
        %v8098 = vrot.slane %v7011, 2
        %v8099 = vsel %vm7028, %v8098, %v8097
        %v8100 = vrot.slane %v7013, 1
        %v8101 = vsel %vm7031, %v8100, %v8099
        %v8102 = vsel %vm7034, %v7015, %v8101
        %v8103 = vrot.slane %v7017, 7
        %v8104 = vsel %vm7037, %v8103, %v8102
        %v8105 = vpack.c.b16 %v8090, %v8090
        %v8106 = vpack.c.b16 %v8104, %v8104
        %v8134 = vunpack.c.l.b16 %v8051
        %v8135 = vunpack.c.l.b16 %v8052
        %v8136 = vunpack.c.l.b16 %v8053
        %v8137 = vunpack.c.l.b16 %v8054
        %v8138 = vunpack.c.l.b16 %v8055
        %v8139 = vunpack.c.l.b16 %v8056
        %v8140 = vunpack.c.l.b16 %v8057
        %v8141 = vunpack.c.l.b16 %v8058
        %v8142 = vunpack.c.l.b16 %v8059
        %v8143 = vunpack.c.l.b16 %v8060
        %v8144 = vunpack.c.l.b16 %v8061
        %v8145 = vunpack.c.l.b16 %v8062
        %v8146 = vunpack.c.l.b16 %v8063
        %v8147 = vunpack.c.l.b16 %v8064
        %v8148 = vunpack.c.l.b16 %v8065
        %v8149 = vunpack.c.l.b16 %v8066
        %v8150 = vunpack.c.l.b16 %v8067
        %v8151 = vunpack.c.l.b16 %v8068
        %v8152 = vunpack.c.l.b16 %v8069
        %v8153 = vunpack.c.l.b16 %v8070
        %v8154 = vunpack.c.l.b16 %v8071
        %v8155 = vunpack.c.l.b16 %v8072
        %v8156 = vunpack.c.l.b16 %v8073
        %v8157 = vunpack.c.l.b16 %v8074
        %v8158 = vunpack.c.l.b16 %v8075
        %v8159 = vunpack.c.l.b16 %v8076
        %v8160 = vpack.c.b16 %v8135, %v8134
        %v8161 = vpack.c.b16 %v8137, %v8136
        %v8162 = vpack.c.b16 %v8139, %v8138
        %v8163 = vpack.c.b16 %v8141, %v8140
        %v8164 = vpack.c.b16 %v8143, %v8142
        %v8165 = vpack.c.b16 %v8145, %v8144
        %v8166 = vpack.c.b16 %v8147, %v8146
        %v8167 = vpack.c.b16 %v8149, %v8148
        %v8168 = vpack.c.b16 %v8151, %v8150
        %v8169 = vpack.c.b16 %v8153, %v8152
        %v8170 = vpack.c.b16 %v8155, %v8154
        %v8171 = vpack.c.b16 %v8157, %v8156
        %v8172 = vpack.c.b16 %v8159, %v8158
        %v8187 = vsel %vm7134, %v8106, 0
        %8189 = vmatprep.subr.bf16.mxu0 0
        %8190 = vmatpush1.bf16.msra.mxu0 %v8160
        %8191 = vmatprep.subr.bf16.mxu0 0
        %8192 = vmatpush1.bf16.msra.mxu0 %v8161
        %8193 = vmatprep.subr.bf16.mxu0 0
        %8194 = vmatpush1.bf16.msra.mxu0 %v8162
        %8195 = vmatprep.subr.bf16.mxu0 0
        %8196 = vmatpush1.bf16.msra.mxu0 %v8163
        %8197 = vmatprep.subr.bf16.mxu0 0
        %8198 = vmatpush1.bf16.msra.mxu0 %v8164
        %8199 = vmatprep.subr.bf16.mxu0 0
        %8200 = vmatpush1.bf16.msra.mxu0 %v8165
        %8201 = vmatprep.subr.bf16.mxu0 0
        %8202 = vmatpush1.bf16.msra.mxu0 %v8166
        %8203 = vmatprep.subr.bf16.mxu0 0
        %8204 = vmatpush1.bf16.msra.mxu0 %v8167
        %8205 = vmatprep.subr.bf16.mxu0 0
        %8206 = vmatpush1.bf16.msra.mxu0 %v8168
        %8207 = vmatprep.subr.bf16.mxu0 0
        %8208 = vmatpush1.bf16.msra.mxu0 %v8169
        %8209 = vmatprep.subr.bf16.mxu0 0
        %8210 = vmatpush1.bf16.msra.mxu0 %v8170
        %8211 = vmatprep.subr.bf16.mxu0 0
        %8212 = vmatpush1.bf16.msra.mxu0 %v8171
        %8213 = vmatprep.subr.bf16.mxu0 0
        %8214 = vmatpush1.bf16.msra.mxu0 %v8172
        %8215 = vmatprep.subr.bf16.mxu0 0
        %8216 = vmatpush1.bf16.msra.mxu0 0
        %8217 = vmatprep.subr.bf16.mxu0 0
        %8218 = vmatpush1.bf16.msra.mxu0 0
        %8219 = vmatprep.subr.bf16.mxu0 0
        %8220 = vmatpush1.bf16.msra.mxu0 0
        %8221 = vmatprep.mubr.bf16.mxu0 %v8187
        %8222 = vmatmul.mubr.bf16.gmra.mrb[0].mxu0 %v8105
        %v8223 = vpop.f32.mrb[0].mxu0
        %v8224 = vadd.f32 0.0, %v8223
        %v8225 = vpop.f32.mrb[0].mxu0
        %v8226 = vpop.f32.mrb[0].mxu0
        %v8227 = vpop.f32.mrb[0].mxu0
        %8228 = vdwg.mxu0
        %v8229 = vadd.f32 %v8049, %v8224
        %v8230 = vld [vmem:[%s7] sm:$0x1]
        %v8232 = vlaneseq
        %v8233 = vshrl.u32 %v8232, 7
        %v8234 = vsub.s32 0, %v8233
        %v8235 = vrot.slane %v8230, %v8234
        %v8237 = vadd.f32 %v8229, %v8235
        %8238 = vst [vmem:[%s301] sm:$0xff] %v8237
        %s8239 = sand.u32 %s203, 1
        %s8240 = scalar_lea.sflag [#allocation5], %s8239
        %s8241 = sand.u32 %s203, 1
        %s8242 = smul.addr %s8241, 8
        %s8243 = scalar_lea.vmem [#allocation4], %s8242
        // Predicated region
        $region53: #{cnn_forward.1} parent=51 // pred_check
          %p8244 = pneg %p213
        $region54: #{cnn_forward.1} parent=51 // pred_check_branch
          %8246 = sbr.rel (%p8244) target = $region56
        $region55: #{cnn_forward.1} parent=51 // pred_region
          %s8248 = ssub.s32 128, 128
          %8249 = vsyncadd %s8240, %s8248
          %s8250 = smul.addr %s22, 128
          %s8251 = scalar_lea.hbm %s8, %s8250
          %s8253 = sshll.u32 %s8243, 4
          %s8254 = int_to_ptr.vmem [resolvable:$true] %s8253
          %8256 = dma.vmem_to_hbm [thread:$0]  %s8254, 128, %s8251, %s8240
        $region56: #{cnn_forward.1} parent=51 // pred_fallthru
          _
      $region52: #{cnn_forward.1} parent=5 // pred_fallthru
        _
      %p8257 = scmp.le.s32.totalorder 2, %s17
      // Predicated region
      $region57: #{cnn_forward.1} parent=5 // pred_check
        %p8258 = pneg %p8257
      $region58: #{cnn_forward.1} parent=5 // pred_check_branch
        %8260 = sbr.rel (%p8258) target = $region60
      $region59: #{cnn_forward.1} parent=5 // pred_region
        %s8261 = ssub.s32 %s17, 2
        // Predicated region
        $region61: #{cnn_forward.1} parent=59 // pred_check
          %p8262 = pneg %p219
        $region62: #{cnn_forward.1} parent=59 // pred_check_branch
          %8264 = sbr.rel (%p8262) target = $region64
        $region63: #{cnn_forward.1} parent=59 // pred_region
          %s8265 = sand.u32 %s204, 1
          %s8266 = scalar_lea.sflag [#allocation5], %s8265
          %s8267 = sand.u32 %s204, 1
          %s8268 = smul.addr %s8267, 8
          %s8269 = scalar_lea.vmem [#allocation4], %s8268
          %8270 = dma.done %s8266, 128
        $region64: #{cnn_forward.1} parent=59 // pred_fallthru
          _
      $region60: #{cnn_forward.1} parent=5 // pred_fallthru
        _
    $region6: #{cnn_forward.1} parent=1 // loop_footer
      %s21 = sadd.s32 1, %s17
    $region7: #{cnn_forward.1} parent=1 // loop_footer_branch
      %16 = sbr.rel target = $region3
    $region8: #{cnn_forward.1} parent=1 // loop_exit
      _
    %8271 = vsyncpa [#allocation5], 1
    %s8272 = scalar_lea.sflag [#allocation5], 1
    %8273 = vsyncpa %s8272, 1

</llo_original>
